<compile_context>
chip_gen: v6e
topology: v6e:2x2x1
jax: 0.10.0
libtpu: 0.0.40
codegen_flags: <defaults>
</compile_context>

<pallas_src>
import functools

import jax
import jax.numpy as jnp
import numpy as np
from jax import lax
from jax.experimental import pallas as pl
from jax.experimental.pallas import tpu as pltpu


def _resblock_kernel(x_ref, w1_ref, b1_ref, w2_ref, b2_ref, o_ref, pad_ref):
    """One batch-block per grid step.

    x_ref   : (BN, H, W, C)        unpadded NHWC input block
    w*_ref  : (9, C, C)            per-tap conv weights, tap t = kh*3 + kw, (Cin, Cout)
    b*_ref  : (1, C)               conv biases
    o_ref   : (BN, H, W, C)        output block
    pad_ref : (BN, H+2, W+2, C)    VMEM scratch with a 1-pixel zero border
    """
    BN, H, W, C = x_ref.shape
    M = BN * H * W

    # Re-establish the zero border every step (cheap, O((H+W)*C)); the interior writes
    # below never touch it, so the kernel is independent of cross-step scratch state and
    # safe to shard "parallel" across TensorCores.
    pad_ref[:, 0:1, :, :] = jnp.zeros((BN, 1, W + 2, C), jnp.float32)
    pad_ref[:, H + 1:H + 2, :, :] = jnp.zeros((BN, 1, W + 2, C), jnp.float32)
    pad_ref[:, :, 0:1, :] = jnp.zeros((BN, H + 2, 1, C), jnp.float32)
    pad_ref[:, :, W + 1:W + 2, :] = jnp.zeros((BN, H + 2, 1, C), jnp.float32)

    def conv3x3(w_ref):
        # 9 accumulating MXU matmuls; taps are read directly from the padded scratch,
        # no im2col patch materialization.
        acc = None
        for kh in range(3):
            for kw in range(3):
                tap = pad_ref[:, kh:kh + H, kw:kw + W, :].reshape(M, C)
                part = jnp.dot(tap, w_ref[kh * 3 + kw],
                               preferred_element_type=jnp.float32)
                acc = part if acc is None else acc + part
        return acc

    # ---- conv1 + leaky_relu(0.2) ----
    pad_ref[:, 1:H + 1, 1:W + 1, :] = x_ref[...].astype(jnp.float32)
    y = conv3x3(w1_ref) + b1_ref[...]                 # bias hoisted out of the tap loop
    y = jnp.where(y >= 0.0, y, 0.2 * y)               # leaky_relu(0.2)

    # ---- conv2 (reuse the same zero-border scratch for padding) ----
    pad_ref[:, 1:H + 1, 1:W + 1, :] = y.reshape(BN, H, W, C)
    out = conv3x3(w2_ref) + b2_ref[...]

    # ---- residual add (re-read x_ref; nothing block-sized kept live across the convs) ----
    res = x_ref[...].astype(jnp.float32).reshape(M, C) + out
    o_ref[...] = res.reshape(BN, H, W, C).astype(o_ref.dtype)


@functools.partial(jax.jit, static_argnames=("batch_block",))
def residual_block_no_bn(x_nchw, w1_oihw, b1, w2_oihw, b2, *, batch_block=1):
    """Forward pass of ResidualBlockNoBN. Input/output are NCHW float32."""
    N, C, H, W = x_nchw.shape
    bn = batch_block
    if N % bn != 0:
        raise ValueError("batch_block must divide the batch size")

    # NCHW -> NHWC so channels sit on the lane axis for the in-kernel matmuls.
    x_nhwc = jnp.transpose(x_nchw, (0, 2, 3, 1))

    # OIHW -> (kh, kw, Cin, Cout) -> (9, Cin, Cout): one (C, C) slab per tap.
    w1m = jnp.transpose(w1_oihw, (2, 3, 1, 0)).reshape(9, C, C)
    w2m = jnp.transpose(w2_oihw, (2, 3, 1, 0)).reshape(9, C, C)
    b1_2d = b1.reshape(1, C)
    b2_2d = b2.reshape(1, C)

    grid_spec = pltpu.PrefetchScalarGridSpec(
        num_scalar_prefetch=0,
        grid=(N // bn,),
        in_specs=[
            pl.BlockSpec((bn, H, W, C), lambda n: (n, 0, 0, 0)),
            pl.BlockSpec((9, C, C), lambda n: (0, 0, 0)),
            pl.BlockSpec((1, C), lambda n: (0, 0)),
            pl.BlockSpec((9, C, C), lambda n: (0, 0, 0)),
            pl.BlockSpec((1, C), lambda n: (0, 0)),
        ],
        out_specs=pl.BlockSpec((bn, H, W, C), lambda n: (n, 0, 0, 0)),
        scratch_shapes=[
            pltpu.VMEM((bn, H + 2, W + 2, C), jnp.float32),   # zero-border pad buffer
        ],
    )

    out_nhwc = pl.pallas_call(
        _resblock_kernel,
        out_shape=jax.ShapeDtypeStruct((N, H, W, C), x_nchw.dtype),
        grid_spec=grid_spec,
        compiler_params=pltpu.CompilerParams(
            dimension_semantics=("parallel",),
            vmem_limit_bytes=32 * 1024 * 1024),
    )(x_nhwc, w1m, b1_2d, w2m, b2_2d)

    # NHWC -> NCHW
    return jnp.transpose(out_nhwc, (0, 3, 1, 2))


def _init_conv_params(key, nf, scale=0.1):
    """kaiming_normal_(a=0, mode='fan_in') * scale, bias = 0 (matches default_init_weights)."""
    fan_in = nf * 3 * 3
    std = np.sqrt(2.0 / fan_in)  # gain=sqrt(2) for a=0
    w = jax.random.normal(key, (nf, nf, 3, 3), dtype=jnp.float32) * std * scale
    b = jnp.zeros((nf,), dtype=jnp.float32)
    return w, b


def _reference(x_nchw, w1, b1, w2, b2):
    """Pure-JAX reference using lax.conv_general_dilated (NCHW / OIHW)."""
    dn = lax.conv_dimension_numbers(x_nchw.shape, w1.shape,
                                    ("NCHW", "OIHW", "NCHW"))
    y = lax.conv_general_dilated(x_nchw, w1, (1, 1), ((1, 1), (1, 1)),
                                 dimension_numbers=dn)
    y = y + b1[None, :, None, None]
    y = jnp.where(y >= 0, y, 0.2 * y)
    y = lax.conv_general_dilated(y, w2, (1, 1), ((1, 1), (1, 1)),
                                 dimension_numbers=dn)
    y = y + b2[None, :, None, None]
    return x_nchw + y


if __name__ == "__main__":
    nf = 64          # module default width
    N, H, W = 2, 16, 16

    key = jax.random.PRNGKey(0)
    k_x, k_w1, k_w2 = jax.random.split(key, 3)

    x = jax.random.normal(k_x, (N, nf, H, W), dtype=jnp.float32)
    w1, b1 = _init_conv_params(k_w1, nf, scale=0.1)
    w2, b2 = _init_conv_params(k_w2, nf, scale=0.1)

    out = residual_block_no_bn(x, w1, b1, w2, b2)
    out = jax.block_until_ready(out)

    ref = jax.block_until_ready(_reference(x, w1, b1, w2, b2))
    np.testing.assert_allclose(np.asarray(out), np.asarray(ref),
                               rtol=1e-4, atol=1e-4)

    print("KERNEL_OK")
</pallas_src>

<mosaic_0001>
module attributes {stable_mosaic.version = 11 : i64} {
  func.func @_resblock_kernel(%arg0: i32, %arg1: memref<1x16x16x64xf32, #tpu.memory_space<vmem>>, %arg2: memref<9x64x64xf32, #tpu.memory_space<vmem>>, %arg3: memref<1x64xf32, #tpu.memory_space<vmem>>, %arg4: memref<9x64x64xf32, #tpu.memory_space<vmem>>, %arg5: memref<1x64xf32, #tpu.memory_space<vmem>>, %arg6: memref<1x16x16x64xf32, #tpu.memory_space<vmem>>, %arg7: memref<1x18x18x64xf32, #tpu.memory_space<vmem>>) attributes {dimension_semantics = [#tpu.dimension_semantics<parallel>], iteration_bounds = array<i64: 2>, scalar_prefetch = 0 : i64, scratch_operands = 1 : i64, tpu.core_type = #tpu.core_type<tc>, window_params = [{transform_indices = @transform_0, window_bounds = array<i64: 1, 16, 16, 64>}, {pipeline_mode = #tpu.pipeline_mode<synchronous>, transform_indices = @transform_1, window_bounds = array<i64: 9, 64, 64>}, {pipeline_mode = #tpu.pipeline_mode<synchronous>, transform_indices = @transform_2, window_bounds = array<i64: 1, 64>}, {pipeline_mode = #tpu.pipeline_mode<synchronous>, transform_indices = @transform_3, window_bounds = array<i64: 9, 64, 64>}, {pipeline_mode = #tpu.pipeline_mode<synchronous>, transform_indices = @transform_4, window_bounds = array<i64: 1, 64>}, {transform_indices = @transform_5, window_bounds = array<i64: 1, 16, 16, 64>}]} {
    %cst = arith.constant 0.000000e+00 : f32
    %0 = vector.broadcast %cst : f32 to vector<1x1x18x64xf32>
    %c0 = arith.constant 0 : index
    %c0_0 = arith.constant 0 : index
    %c0_1 = arith.constant 0 : index
    %c0_2 = arith.constant 0 : index
    %1 = vector.load %arg7[%c0, %c0_0, %c0_1, %c0_2] : memref<1x18x18x64xf32, #tpu.memory_space<vmem>>, vector<1x1x18x64xf32>
    tpu.vector_store %arg7[%c0, %c0_0, %c0_1, %c0_2], %0 {strides = array<i32>} : memref<1x18x18x64xf32, #tpu.memory_space<vmem>>, vector<1x1x18x64xf32>,
    %cst_3 = arith.constant 0.000000e+00 : f32
    %2 = vector.broadcast %cst_3 : f32 to vector<1x1x18x64xf32>
    %c0_4 = arith.constant 0 : index
    %c17 = arith.constant 17 : index
    %c0_5 = arith.constant 0 : index
    %c0_6 = arith.constant 0 : index
    %3 = vector.load %arg7[%c0_4, %c17, %c0_5, %c0_6] : memref<1x18x18x64xf32, #tpu.memory_space<vmem>>, vector<1x1x18x64xf32>
    tpu.vector_store %arg7[%c0_4, %c17, %c0_5, %c0_6], %2 {strides = array<i32>} : memref<1x18x18x64xf32, #tpu.memory_space<vmem>>, vector<1x1x18x64xf32>,
    %cst_7 = arith.constant 0.000000e+00 : f32
    %4 = vector.broadcast %cst_7 : f32 to vector<1x18x1x64xf32>
    %c0_8 = arith.constant 0 : index
    %c0_9 = arith.constant 0 : index
    %c0_10 = arith.constant 0 : index
    %c0_11 = arith.constant 0 : index
    %5 = vector.load %arg7[%c0_8, %c0_9, %c0_10, %c0_11] : memref<1x18x18x64xf32, #tpu.memory_space<vmem>>, vector<1x18x1x64xf32>
    tpu.vector_store %arg7[%c0_8, %c0_9, %c0_10, %c0_11], %4 {strides = array<i32>} : memref<1x18x18x64xf32, #tpu.memory_space<vmem>>, vector<1x18x1x64xf32>,
    %cst_12 = arith.constant 0.000000e+00 : f32
    %6 = vector.broadcast %cst_12 : f32 to vector<1x18x1x64xf32>
    %c0_13 = arith.constant 0 : index
    %c0_14 = arith.constant 0 : index
    %c17_15 = arith.constant 17 : index
    %c0_16 = arith.constant 0 : index
    %7 = vector.load %arg7[%c0_13, %c0_14, %c17_15, %c0_16] : memref<1x18x18x64xf32, #tpu.memory_space<vmem>>, vector<1x18x1x64xf32>
    tpu.vector_store %arg7[%c0_13, %c0_14, %c17_15, %c0_16], %6 {strides = array<i32>} : memref<1x18x18x64xf32, #tpu.memory_space<vmem>>, vector<1x18x1x64xf32>,
    %c0_17 = arith.constant 0 : index
    %c0_18 = arith.constant 0 : index
    %c0_19 = arith.constant 0 : index
    %c0_20 = arith.constant 0 : index
    %8 = vector.load %arg1[%c0_17, %c0_18, %c0_19, %c0_20] : memref<1x16x16x64xf32, #tpu.memory_space<vmem>>, vector<1x16x16x64xf32>
    %c0_21 = arith.constant 0 : index
    %c1 = arith.constant 1 : index
    %c1_22 = arith.constant 1 : index
    %c0_23 = arith.constant 0 : index
    %9 = vector.load %arg7[%c0_21, %c1, %c1_22, %c0_23] : memref<1x18x18x64xf32, #tpu.memory_space<vmem>>, vector<1x16x16x64xf32>
    tpu.vector_store %arg7[%c0_21, %c1, %c1_22, %c0_23], %8 {strides = array<i32>} : memref<1x18x18x64xf32, #tpu.memory_space<vmem>>, vector<1x16x16x64xf32>,
    %c0_24 = arith.constant 0 : index
    %c0_25 = arith.constant 0 : index
    %c0_26 = arith.constant 0 : index
    %c0_27 = arith.constant 0 : index
    %10 = vector.load %arg7[%c0_24, %c0_25, %c0_26, %c0_27] : memref<1x18x18x64xf32, #tpu.memory_space<vmem>>, vector<1x16x16x64xf32>
    %11 = vector.shape_cast %10 : vector<1x16x16x64xf32> to vector<256x64xf32>
    %c0_28 = arith.constant 0 : index
    %c0_29 = arith.constant 0 : index
    %c0_30 = arith.constant 0 : index
    %12 = vector.load %arg2[%c0_28, %c0_29, %c0_30] : memref<9x64x64xf32, #tpu.memory_space<vmem>>, vector<1x64x64xf32>
    %13 = vector.shape_cast %12 : vector<1x64x64xf32> to vector<64x64xf32>
    %cst_31 = arith.constant dense<0.000000e+00> : vector<256x64xf32>
    %14 = tpu.matmul %11, %13, %cst_31 {dimension_numbers = #tpu.dot_dimension_numbers<[1], [0], [0], [1], [0, 0, 1, 1], [], []>} : vector<256x64xf32>, vector<64x64xf32>, vector<256x64xf32> -> vector<256x64xf32>
    %c0_32 = arith.constant 0 : index
    %c0_33 = arith.constant 0 : index
    %c1_34 = arith.constant 1 : index
    %c0_35 = arith.constant 0 : index
    %15 = vector.load %arg7[%c0_32, %c0_33, %c1_34, %c0_35] : memref<1x18x18x64xf32, #tpu.memory_space<vmem>>, vector<1x16x16x64xf32>
    %16 = vector.shape_cast %15 : vector<1x16x16x64xf32> to vector<256x64xf32>
    %c1_36 = arith.constant 1 : index
    %c0_37 = arith.constant 0 : index
    %c0_38 = arith.constant 0 : index
    %17 = vector.load %arg2[%c1_36, %c0_37, %c0_38] : memref<9x64x64xf32, #tpu.memory_space<vmem>>, vector<1x64x64xf32>
    %18 = vector.shape_cast %17 : vector<1x64x64xf32> to vector<64x64xf32>
    %cst_39 = arith.constant dense<0.000000e+00> : vector<256x64xf32>
    %19 = tpu.matmul %16, %18, %cst_39 {dimension_numbers = #tpu.dot_dimension_numbers<[1], [0], [0], [1], [0, 0, 1, 1], [], []>} : vector<256x64xf32>, vector<64x64xf32>, vector<256x64xf32> -> vector<256x64xf32>
    %20 = arith.addf %14, %19 : vector<256x64xf32>
    %c0_40 = arith.constant 0 : index
    %c0_41 = arith.constant 0 : index
    %c2 = arith.constant 2 : index
    %c0_42 = arith.constant 0 : index
    %21 = vector.load %arg7[%c0_40, %c0_41, %c2, %c0_42] : memref<1x18x18x64xf32, #tpu.memory_space<vmem>>, vector<1x16x16x64xf32>
    %22 = vector.shape_cast %21 : vector<1x16x16x64xf32> to vector<256x64xf32>
    %c2_43 = arith.constant 2 : index
    %c0_44 = arith.constant 0 : index
    %c0_45 = arith.constant 0 : index
    %23 = vector.load %arg2[%c2_43, %c0_44, %c0_45] : memref<9x64x64xf32, #tpu.memory_space<vmem>>, vector<1x64x64xf32>
    %24 = vector.shape_cast %23 : vector<1x64x64xf32> to vector<64x64xf32>
    %cst_46 = arith.constant dense<0.000000e+00> : vector<256x64xf32>
    %25 = tpu.matmul %22, %24, %cst_46 {dimension_numbers = #tpu.dot_dimension_numbers<[1], [0], [0], [1], [0, 0, 1, 1], [], []>} : vector<256x64xf32>, vector<64x64xf32>, vector<256x64xf32> -> vector<256x64xf32>
    %26 = arith.addf %20, %25 : vector<256x64xf32>
    %c0_47 = arith.constant 0 : index
    %c1_48 = arith.constant 1 : index
    %c0_49 = arith.constant 0 : index
    %c0_50 = arith.constant 0 : index
    %27 = vector.load %arg7[%c0_47, %c1_48, %c0_49, %c0_50] : memref<1x18x18x64xf32, #tpu.memory_space<vmem>>, vector<1x16x16x64xf32>
    %28 = vector.shape_cast %27 : vector<1x16x16x64xf32> to vector<256x64xf32>
    %c3 = arith.constant 3 : index
    %c0_51 = arith.constant 0 : index
    %c0_52 = arith.constant 0 : index
    %29 = vector.load %arg2[%c3, %c0_51, %c0_52] : memref<9x64x64xf32, #tpu.memory_space<vmem>>, vector<1x64x64xf32>
    %30 = vector.shape_cast %29 : vector<1x64x64xf32> to vector<64x64xf32>
    %cst_53 = arith.constant dense<0.000000e+00> : vector<256x64xf32>
    %31 = tpu.matmul %28, %30, %cst_53 {dimension_numbers = #tpu.dot_dimension_numbers<[1], [0], [0], [1], [0, 0, 1, 1], [], []>} : vector<256x64xf32>, vector<64x64xf32>, vector<256x64xf32> -> vector<256x64xf32>
    %32 = arith.addf %26, %31 : vector<256x64xf32>
    %c0_54 = arith.constant 0 : index
    %c1_55 = arith.constant 1 : index
    %c1_56 = arith.constant 1 : index
    %c0_57 = arith.constant 0 : index
    %33 = vector.load %arg7[%c0_54, %c1_55, %c1_56, %c0_57] : memref<1x18x18x64xf32, #tpu.memory_space<vmem>>, vector<1x16x16x64xf32>
    %34 = vector.shape_cast %33 : vector<1x16x16x64xf32> to vector<256x64xf32>
    %c4 = arith.constant 4 : index
    %c0_58 = arith.constant 0 : index
    %c0_59 = arith.constant 0 : index
    %35 = vector.load %arg2[%c4, %c0_58, %c0_59] : memref<9x64x64xf32, #tpu.memory_space<vmem>>, vector<1x64x64xf32>
    %36 = vector.shape_cast %35 : vector<1x64x64xf32> to vector<64x64xf32>
    %cst_60 = arith.constant dense<0.000000e+00> : vector<256x64xf32>
    %37 = tpu.matmul %34, %36, %cst_60 {dimension_numbers = #tpu.dot_dimension_numbers<[1], [0], [0], [1], [0, 0, 1, 1], [], []>} : vector<256x64xf32>, vector<64x64xf32>, vector<256x64xf32> -> vector<256x64xf32>
    %38 = arith.addf %32, %37 : vector<256x64xf32>
    %c0_61 = arith.constant 0 : index
    %c1_62 = arith.constant 1 : index
    %c2_63 = arith.constant 2 : index
    %c0_64 = arith.constant 0 : index
    %39 = vector.load %arg7[%c0_61, %c1_62, %c2_63, %c0_64] : memref<1x18x18x64xf32, #tpu.memory_space<vmem>>, vector<1x16x16x64xf32>
    %40 = vector.shape_cast %39 : vector<1x16x16x64xf32> to vector<256x64xf32>
    %c5 = arith.constant 5 : index
    %c0_65 = arith.constant 0 : index
    %c0_66 = arith.constant 0 : index
    %41 = vector.load %arg2[%c5, %c0_65, %c0_66] : memref<9x64x64xf32, #tpu.memory_space<vmem>>, vector<1x64x64xf32>
    %42 = vector.shape_cast %41 : vector<1x64x64xf32> to vector<64x64xf32>
    %cst_67 = arith.constant dense<0.000000e+00> : vector<256x64xf32>
    %43 = tpu.matmul %40, %42, %cst_67 {dimension_numbers = #tpu.dot_dimension_numbers<[1], [0], [0], [1], [0, 0, 1, 1], [], []>} : vector<256x64xf32>, vector<64x64xf32>, vector<256x64xf32> -> vector<256x64xf32>
    %44 = arith.addf %38, %43 : vector<256x64xf32>
    %c0_68 = arith.constant 0 : index
    %c2_69 = arith.constant 2 : index
    %c0_70 = arith.constant 0 : index
    %c0_71 = arith.constant 0 : index
    %45 = vector.load %arg7[%c0_68, %c2_69, %c0_70, %c0_71] : memref<1x18x18x64xf32, #tpu.memory_space<vmem>>, vector<1x16x16x64xf32>
    %46 = vector.shape_cast %45 : vector<1x16x16x64xf32> to vector<256x64xf32>
    %c6 = arith.constant 6 : index
    %c0_72 = arith.constant 0 : index
    %c0_73 = arith.constant 0 : index
    %47 = vector.load %arg2[%c6, %c0_72, %c0_73] : memref<9x64x64xf32, #tpu.memory_space<vmem>>, vector<1x64x64xf32>
    %48 = vector.shape_cast %47 : vector<1x64x64xf32> to vector<64x64xf32>
    %cst_74 = arith.constant dense<0.000000e+00> : vector<256x64xf32>
    %49 = tpu.matmul %46, %48, %cst_74 {dimension_numbers = #tpu.dot_dimension_numbers<[1], [0], [0], [1], [0, 0, 1, 1], [], []>} : vector<256x64xf32>, vector<64x64xf32>, vector<256x64xf32> -> vector<256x64xf32>
    %50 = arith.addf %44, %49 : vector<256x64xf32>
    %c0_75 = arith.constant 0 : index
    %c2_76 = arith.constant 2 : index
    %c1_77 = arith.constant 1 : index
    %c0_78 = arith.constant 0 : index
    %51 = vector.load %arg7[%c0_75, %c2_76, %c1_77, %c0_78] : memref<1x18x18x64xf32, #tpu.memory_space<vmem>>, vector<1x16x16x64xf32>
    %52 = vector.shape_cast %51 : vector<1x16x16x64xf32> to vector<256x64xf32>
    %c7 = arith.constant 7 : index
    %c0_79 = arith.constant 0 : index
    %c0_80 = arith.constant 0 : index
    %53 = vector.load %arg2[%c7, %c0_79, %c0_80] : memref<9x64x64xf32, #tpu.memory_space<vmem>>, vector<1x64x64xf32>
    %54 = vector.shape_cast %53 : vector<1x64x64xf32> to vector<64x64xf32>
    %cst_81 = arith.constant dense<0.000000e+00> : vector<256x64xf32>
    %55 = tpu.matmul %52, %54, %cst_81 {dimension_numbers = #tpu.dot_dimension_numbers<[1], [0], [0], [1], [0, 0, 1, 1], [], []>} : vector<256x64xf32>, vector<64x64xf32>, vector<256x64xf32> -> vector<256x64xf32>
    %56 = arith.addf %50, %55 : vector<256x64xf32>
    %c0_82 = arith.constant 0 : index
    %c2_83 = arith.constant 2 : index
    %c2_84 = arith.constant 2 : index
    %c0_85 = arith.constant 0 : index
    %57 = vector.load %arg7[%c0_82, %c2_83, %c2_84, %c0_85] : memref<1x18x18x64xf32, #tpu.memory_space<vmem>>, vector<1x16x16x64xf32>
    %58 = vector.shape_cast %57 : vector<1x16x16x64xf32> to vector<256x64xf32>
    %c8 = arith.constant 8 : index
    %c0_86 = arith.constant 0 : index
    %c0_87 = arith.constant 0 : index
    %59 = vector.load %arg2[%c8, %c0_86, %c0_87] : memref<9x64x64xf32, #tpu.memory_space<vmem>>, vector<1x64x64xf32>
    %60 = vector.shape_cast %59 : vector<1x64x64xf32> to vector<64x64xf32>
    %cst_88 = arith.constant dense<0.000000e+00> : vector<256x64xf32>
    %61 = tpu.matmul %58, %60, %cst_88 {dimension_numbers = #tpu.dot_dimension_numbers<[1], [0], [0], [1], [0, 0, 1, 1], [], []>} : vector<256x64xf32>, vector<64x64xf32>, vector<256x64xf32> -> vector<256x64xf32>
    %62 = arith.addf %56, %61 : vector<256x64xf32>
    %c0_89 = arith.constant 0 : index
    %c0_90 = arith.constant 0 : index
    %63 = vector.load %arg3[%c0_89, %c0_90] : memref<1x64xf32, #tpu.memory_space<vmem>>, vector<1x64xf32>
    %64 = vector.broadcast %63 : vector<1x64xf32> to vector<256x64xf32>
    %65 = arith.addf %62, %64 : vector<256x64xf32>
    %cst_91 = arith.constant 0.000000e+00 : f32
    %66 = vector.broadcast %cst_91 : f32 to vector<256x64xf32>
    %67 = arith.cmpf oge, %65, %66 : vector<256x64xf32>
    %cst_92 = arith.constant 2.000000e-01 : f32
    %68 = vector.broadcast %cst_92 : f32 to vector<256x64xf32>
    %69 = arith.mulf %68, %65 : vector<256x64xf32>
    %70 = arith.select %67, %65, %69 : vector<256x64xi1>, vector<256x64xf32>
    %71 = vector.shape_cast %70 : vector<256x64xf32> to vector<1x16x16x64xf32>
    %c0_93 = arith.constant 0 : index
    %c1_94 = arith.constant 1 : index
    %c1_95 = arith.constant 1 : index
    %c0_96 = arith.constant 0 : index
    %72 = vector.load %arg7[%c0_93, %c1_94, %c1_95, %c0_96] : memref<1x18x18x64xf32, #tpu.memory_space<vmem>>, vector<1x16x16x64xf32>
    tpu.vector_store %arg7[%c0_93, %c1_94, %c1_95, %c0_96], %71 {strides = array<i32>} : memref<1x18x18x64xf32, #tpu.memory_space<vmem>>, vector<1x16x16x64xf32>,
    %c0_97 = arith.constant 0 : index
    %c0_98 = arith.constant 0 : index
    %c0_99 = arith.constant 0 : index
    %c0_100 = arith.constant 0 : index
    %73 = vector.load %arg7[%c0_97, %c0_98, %c0_99, %c0_100] : memref<1x18x18x64xf32, #tpu.memory_space<vmem>>, vector<1x16x16x64xf32>
    %74 = vector.shape_cast %73 : vector<1x16x16x64xf32> to vector<256x64xf32>
    %c0_101 = arith.constant 0 : index
    %c0_102 = arith.constant 0 : index
    %c0_103 = arith.constant 0 : index
    %75 = vector.load %arg4[%c0_101, %c0_102, %c0_103] : memref<9x64x64xf32, #tpu.memory_space<vmem>>, vector<1x64x64xf32>
    %76 = vector.shape_cast %75 : vector<1x64x64xf32> to vector<64x64xf32>
    %cst_104 = arith.constant dense<0.000000e+00> : vector<256x64xf32>
    %77 = tpu.matmul %74, %76, %cst_104 {dimension_numbers = #tpu.dot_dimension_numbers<[1], [0], [0], [1], [0, 0, 1, 1], [], []>} : vector<256x64xf32>, vector<64x64xf32>, vector<256x64xf32> -> vector<256x64xf32>
    %c0_105 = arith.constant 0 : index
    %c0_106 = arith.constant 0 : index
    %c1_107 = arith.constant 1 : index
    %c0_108 = arith.constant 0 : index
    %78 = vector.load %arg7[%c0_105, %c0_106, %c1_107, %c0_108] : memref<1x18x18x64xf32, #tpu.memory_space<vmem>>, vector<1x16x16x64xf32>
    %79 = vector.shape_cast %78 : vector<1x16x16x64xf32> to vector<256x64xf32>
    %c1_109 = arith.constant 1 : index
    %c0_110 = arith.constant 0 : index
    %c0_111 = arith.constant 0 : index
    %80 = vector.load %arg4[%c1_109, %c0_110, %c0_111] : memref<9x64x64xf32, #tpu.memory_space<vmem>>, vector<1x64x64xf32>
    %81 = vector.shape_cast %80 : vector<1x64x64xf32> to vector<64x64xf32>
    %cst_112 = arith.constant dense<0.000000e+00> : vector<256x64xf32>
    %82 = tpu.matmul %79, %81, %cst_112 {dimension_numbers = #tpu.dot_dimension_numbers<[1], [0], [0], [1], [0, 0, 1, 1], [], []>} : vector<256x64xf32>, vector<64x64xf32>, vector<256x64xf32> -> vector<256x64xf32>
    %83 = arith.addf %77, %82 : vector<256x64xf32>
    %c0_113 = arith.constant 0 : index
    %c0_114 = arith.constant 0 : index
    %c2_115 = arith.constant 2 : index
    %c0_116 = arith.constant 0 : index
    %84 = vector.load %arg7[%c0_113, %c0_114, %c2_115, %c0_116] : memref<1x18x18x64xf32, #tpu.memory_space<vmem>>, vector<1x16x16x64xf32>
    %85 = vector.shape_cast %84 : vector<1x16x16x64xf32> to vector<256x64xf32>
    %c2_117 = arith.constant 2 : index
    %c0_118 = arith.constant 0 : index
    %c0_119 = arith.constant 0 : index
    %86 = vector.load %arg4[%c2_117, %c0_118, %c0_119] : memref<9x64x64xf32, #tpu.memory_space<vmem>>, vector<1x64x64xf32>
    %87 = vector.shape_cast %86 : vector<1x64x64xf32> to vector<64x64xf32>
    %cst_120 = arith.constant dense<0.000000e+00> : vector<256x64xf32>
    %88 = tpu.matmul %85, %87, %cst_120 {dimension_numbers = #tpu.dot_dimension_numbers<[1], [0], [0], [1], [0, 0, 1, 1], [], []>} : vector<256x64xf32>, vector<64x64xf32>, vector<256x64xf32> -> vector<256x64xf32>
    %89 = arith.addf %83, %88 : vector<256x64xf32>
    %c0_121 = arith.constant 0 : index
    %c1_122 = arith.constant 1 : index
    %c0_123 = arith.constant 0 : index
    %c0_124 = arith.constant 0 : index
    %90 = vector.load %arg7[%c0_121, %c1_122, %c0_123, %c0_124] : memref<1x18x18x64xf32, #tpu.memory_space<vmem>>, vector<1x16x16x64xf32>
    %91 = vector.shape_cast %90 : vector<1x16x16x64xf32> to vector<256x64xf32>
    %c3_125 = arith.constant 3 : index
    %c0_126 = arith.constant 0 : index
    %c0_127 = arith.constant 0 : index
    %92 = vector.load %arg4[%c3_125, %c0_126, %c0_127] : memref<9x64x64xf32, #tpu.memory_space<vmem>>, vector<1x64x64xf32>
    %93 = vector.shape_cast %92 : vector<1x64x64xf32> to vector<64x64xf32>
    %cst_128 = arith.constant dense<0.000000e+00> : vector<256x64xf32>
    %94 = tpu.matmul %91, %93, %cst_128 {dimension_numbers = #tpu.dot_dimension_numbers<[1], [0], [0], [1], [0, 0, 1, 1], [], []>} : vector<256x64xf32>, vector<64x64xf32>, vector<256x64xf32> -> vector<256x64xf32>
    %95 = arith.addf %89, %94 : vector<256x64xf32>
    %c0_129 = arith.constant 0 : index
    %c1_130 = arith.constant 1 : index
    %c1_131 = arith.constant 1 : index
    %c0_132 = arith.constant 0 : index
    %96 = vector.load %arg7[%c0_129, %c1_130, %c1_131, %c0_132] : memref<1x18x18x64xf32, #tpu.memory_space<vmem>>, vector<1x16x16x64xf32>
    %97 = vector.shape_cast %96 : vector<1x16x16x64xf32> to vector<256x64xf32>
    %c4_133 = arith.constant 4 : index
    %c0_134 = arith.constant 0 : index
    %c0_135 = arith.constant 0 : index
    %98 = vector.load %arg4[%c4_133, %c0_134, %c0_135] : memref<9x64x64xf32, #tpu.memory_space<vmem>>, vector<1x64x64xf32>
    %99 = vector.shape_cast %98 : vector<1x64x64xf32> to vector<64x64xf32>
    %cst_136 = arith.constant dense<0.000000e+00> : vector<256x64xf32>
    %100 = tpu.matmul %97, %99, %cst_136 {dimension_numbers = #tpu.dot_dimension_numbers<[1], [0], [0], [1], [0, 0, 1, 1], [], []>} : vector<256x64xf32>, vector<64x64xf32>, vector<256x64xf32> -> vector<256x64xf32>
    %101 = arith.addf %95, %100 : vector<256x64xf32>
    %c0_137 = arith.constant 0 : index
    %c1_138 = arith.constant 1 : index
    %c2_139 = arith.constant 2 : index
    %c0_140 = arith.constant 0 : index
    %102 = vector.load %arg7[%c0_137, %c1_138, %c2_139, %c0_140] : memref<1x18x18x64xf32, #tpu.memory_space<vmem>>, vector<1x16x16x64xf32>
    %103 = vector.shape_cast %102 : vector<1x16x16x64xf32> to vector<256x64xf32>
    %c5_141 = arith.constant 5 : index
    %c0_142 = arith.constant 0 : index
    %c0_143 = arith.constant 0 : index
    %104 = vector.load %arg4[%c5_141, %c0_142, %c0_143] : memref<9x64x64xf32, #tpu.memory_space<vmem>>, vector<1x64x64xf32>
    %105 = vector.shape_cast %104 : vector<1x64x64xf32> to vector<64x64xf32>
    %cst_144 = arith.constant dense<0.000000e+00> : vector<256x64xf32>
    %106 = tpu.matmul %103, %105, %cst_144 {dimension_numbers = #tpu.dot_dimension_numbers<[1], [0], [0], [1], [0, 0, 1, 1], [], []>} : vector<256x64xf32>, vector<64x64xf32>, vector<256x64xf32> -> vector<256x64xf32>
    %107 = arith.addf %101, %106 : vector<256x64xf32>
    %c0_145 = arith.constant 0 : index
    %c2_146 = arith.constant 2 : index
    %c0_147 = arith.constant 0 : index
    %c0_148 = arith.constant 0 : index
    %108 = vector.load %arg7[%c0_145, %c2_146, %c0_147, %c0_148] : memref<1x18x18x64xf32, #tpu.memory_space<vmem>>, vector<1x16x16x64xf32>
    %109 = vector.shape_cast %108 : vector<1x16x16x64xf32> to vector<256x64xf32>
    %c6_149 = arith.constant 6 : index
    %c0_150 = arith.constant 0 : index
    %c0_151 = arith.constant 0 : index
    %110 = vector.load %arg4[%c6_149, %c0_150, %c0_151] : memref<9x64x64xf32, #tpu.memory_space<vmem>>, vector<1x64x64xf32>
    %111 = vector.shape_cast %110 : vector<1x64x64xf32> to vector<64x64xf32>
    %cst_152 = arith.constant dense<0.000000e+00> : vector<256x64xf32>
    %112 = tpu.matmul %109, %111, %cst_152 {dimension_numbers = #tpu.dot_dimension_numbers<[1], [0], [0], [1], [0, 0, 1, 1], [], []>} : vector<256x64xf32>, vector<64x64xf32>, vector<256x64xf32> -> vector<256x64xf32>
    %113 = arith.addf %107, %112 : vector<256x64xf32>
    %c0_153 = arith.constant 0 : index
    %c2_154 = arith.constant 2 : index
    %c1_155 = arith.constant 1 : index
    %c0_156 = arith.constant 0 : index
    %114 = vector.load %arg7[%c0_153, %c2_154, %c1_155, %c0_156] : memref<1x18x18x64xf32, #tpu.memory_space<vmem>>, vector<1x16x16x64xf32>
    %115 = vector.shape_cast %114 : vector<1x16x16x64xf32> to vector<256x64xf32>
    %c7_157 = arith.constant 7 : index
    %c0_158 = arith.constant 0 : index
    %c0_159 = arith.constant 0 : index
    %116 = vector.load %arg4[%c7_157, %c0_158, %c0_159] : memref<9x64x64xf32, #tpu.memory_space<vmem>>, vector<1x64x64xf32>
    %117 = vector.shape_cast %116 : vector<1x64x64xf32> to vector<64x64xf32>
    %cst_160 = arith.constant dense<0.000000e+00> : vector<256x64xf32>
    %118 = tpu.matmul %115, %117, %cst_160 {dimension_numbers = #tpu.dot_dimension_numbers<[1], [0], [0], [1], [0, 0, 1, 1], [], []>} : vector<256x64xf32>, vector<64x64xf32>, vector<256x64xf32> -> vector<256x64xf32>
    %119 = arith.addf %113, %118 : vector<256x64xf32>
    %c0_161 = arith.constant 0 : index
    %c2_162 = arith.constant 2 : index
    %c2_163 = arith.constant 2 : index
    %c0_164 = arith.constant 0 : index
    %120 = vector.load %arg7[%c0_161, %c2_162, %c2_163, %c0_164] : memref<1x18x18x64xf32, #tpu.memory_space<vmem>>, vector<1x16x16x64xf32>
    %121 = vector.shape_cast %120 : vector<1x16x16x64xf32> to vector<256x64xf32>
    %c8_165 = arith.constant 8 : index
    %c0_166 = arith.constant 0 : index
    %c0_167 = arith.constant 0 : index
    %122 = vector.load %arg4[%c8_165, %c0_166, %c0_167] : memref<9x64x64xf32, #tpu.memory_space<vmem>>, vector<1x64x64xf32>
    %123 = vector.shape_cast %122 : vector<1x64x64xf32> to vector<64x64xf32>
    %cst_168 = arith.constant dense<0.000000e+00> : vector<256x64xf32>
    %124 = tpu.matmul %121, %123, %cst_168 {dimension_numbers = #tpu.dot_dimension_numbers<[1], [0], [0], [1], [0, 0, 1, 1], [], []>} : vector<256x64xf32>, vector<64x64xf32>, vector<256x64xf32> -> vector<256x64xf32>
    %125 = arith.addf %119, %124 : vector<256x64xf32>
    %c0_169 = arith.constant 0 : index
    %c0_170 = arith.constant 0 : index
    %126 = vector.load %arg5[%c0_169, %c0_170] : memref<1x64xf32, #tpu.memory_space<vmem>>, vector<1x64xf32>
    %127 = vector.broadcast %126 : vector<1x64xf32> to vector<256x64xf32>
    %128 = arith.addf %125, %127 : vector<256x64xf32>
    %c0_171 = arith.constant 0 : index
    %c0_172 = arith.constant 0 : index
    %c0_173 = arith.constant 0 : index
    %c0_174 = arith.constant 0 : index
    %129 = vector.load %arg1[%c0_171, %c0_172, %c0_173, %c0_174] : memref<1x16x16x64xf32, #tpu.memory_space<vmem>>, vector<1x16x16x64xf32>
    %130 = vector.shape_cast %129 : vector<1x16x16x64xf32> to vector<256x64xf32>
    %131 = arith.addf %130, %128 : vector<256x64xf32>
    %132 = vector.shape_cast %131 : vector<256x64xf32> to vector<1x16x16x64xf32>
    %c0_175 = arith.constant 0 : index
    %c0_176 = arith.constant 0 : index
    %c0_177 = arith.constant 0 : index
    %c0_178 = arith.constant 0 : index
    %133 = vector.load %arg6[%c0_175, %c0_176, %c0_177, %c0_178] : memref<1x16x16x64xf32, #tpu.memory_space<vmem>>, vector<1x16x16x64xf32>
    tpu.vector_store %arg6[%c0_175, %c0_176, %c0_177, %c0_178], %132 {strides = array<i32>} : memref<1x16x16x64xf32, #tpu.memory_space<vmem>>, vector<1x16x16x64xf32>,
    return
  }
  func.func @transform_0(%arg0: i32) -> (i32, i32, i32, i32) {
    %c0_i32 = arith.constant 0 : i32
    %c0_i32_0 = arith.constant 0 : i32
    %c0_i32_1 = arith.constant 0 : i32
    %c0_i32_2 = arith.constant 0 : i32
    return %arg0, %c0_i32, %c0_i32_0, %c0_i32_1 : i32, i32, i32, i32
  }
  func.func @transform_1(%arg0: i32) -> (i32, i32, i32) {
    %c0_i32 = arith.constant 0 : i32
    %c0_i32_0 = arith.constant 0 : i32
    %c0_i32_1 = arith.constant 0 : i32
    %c0_i32_2 = arith.constant 0 : i32
    return %c0_i32, %c0_i32_0, %c0_i32_1 : i32, i32, i32
  }
  func.func @transform_2(%arg0: i32) -> (i32, i32) {
    %c0_i32 = arith.constant 0 : i32
    %c0_i32_0 = arith.constant 0 : i32
    %c0_i32_1 = arith.constant 0 : i32
    return %c0_i32, %c0_i32_0 : i32, i32
  }
  func.func @transform_3(%arg0: i32) -> (i32, i32, i32) {
    %c0_i32 = arith.constant 0 : i32
    %c0_i32_0 = arith.constant 0 : i32
    %c0_i32_1 = arith.constant 0 : i32
    %c0_i32_2 = arith.constant 0 : i32
    return %c0_i32, %c0_i32_0, %c0_i32_1 : i32, i32, i32
  }
  func.func @transform_4(%arg0: i32) -> (i32, i32) {
    %c0_i32 = arith.constant 0 : i32
    %c0_i32_0 = arith.constant 0 : i32
    %c0_i32_1 = arith.constant 0 : i32
    return %c0_i32, %c0_i32_0 : i32, i32
  }
  func.func @transform_5(%arg0: i32) -> (i32, i32, i32, i32) {
    %c0_i32 = arith.constant 0 : i32
    %c0_i32_0 = arith.constant 0 : i32
    %c0_i32_1 = arith.constant 0 : i32
    %c0_i32_2 = arith.constant 0 : i32
    return %arg0, %c0_i32, %c0_i32_0, %c0_i32_1 : i32, i32, i32, i32
  }
}

</mosaic_0001>

<llo_original>
// kernel: residual_block_no_bn.1
$region0: #{residual_block_no_bn.1}
  #allocation0 [shape = 'u32[]', space=smem, size = 0x4, offset = 0x4, fixed_abs, tag = 'smem constant byte address 0x4 - core index']
  #allocation1 [shape = 'u32[144,128]{1,0:T(1,128)}', space=vmem, size = 0x12000, scoped, tag = 'internal scratch']
  #allocation2 [shape = 'f32[1,18,18,64]{3,2,1,0:T(8,128)}', space=vmem, size = 0x36000, scoped, tag = 'scratch operand']
  %s0 = inlined_call_operand.vmem [shape: f32[2,16,16,64], index: 0, kind: input, shape index: {}]
  %s1 = inlined_call_operand.vmem [shape: f32[9,64,64], index: 1, kind: input, shape index: {}]
  %s2 = inlined_call_operand.vmem [shape: f32[1,64], index: 2, kind: input, shape index: {}]
  %s3 = inlined_call_operand.vmem [shape: f32[9,64,64], index: 3, kind: input, shape index: {}]
  %s4 = inlined_call_operand.vmem [shape: f32[1,64], index: 4, kind: input, shape index: {}]
  %s5 = inlined_call_operand.hbm [shape: f32[2,16,16,64], index: 5, kind: output, shape index: {}]
  %s6 = sld [smem:[#allocation0]]
  $region53: #{residual_block_no_bn.1} parent=0
    _
  %s8 = ssub.s32 1, %s6
  %s9 = scalar_select 0, %s8, %s6
  $region1: #{residual_block_no_bn.1} parent=0
    #allocation3 [shape = 'u8[262144]{0}', space=vmem, size = 0x40000, scoped, tag = 'output window, operand 0']
    #allocation4 [shape = 's32[2]{0}', space=sflag, size = 0x8, scoped, tag = 'scoped memory for residual_block_no_bn.1']
    %10 = vsyncpa [#allocation4], 0
    %s11 = scalar_lea.sflag [#allocation4], 1
    %12 = vsyncpa %s11, 0
    loop: start=0, step=1, limit=4
    $region2: #{residual_block_no_bn.1} parent=1 // loop_pre_header
      _
    $region3: #{residual_block_no_bn.1} parent=1 // loop_header
      %s14 = sphi 0, %s18
      %p15 = scmp.ge.s32.totalorder %s14, 4
      %s24 = sphi 0, %s26
      %s27 = sphi 0, %s24
      %s28 = sphi 0, %s27
      %s44 = sphi 0, %s28
      %s48 = sphi 0, %s48
      %s50 = sphi 0, %s48
      %s51 = sphi 0, %s50
      %s65 = sphi 0, %s51
      %s69 = sphi 0, %s69
      %s71 = sphi 0, %s69
      %s72 = sphi 0, %s71
      %s86 = sphi 0, %s72
      %s90 = sphi 0, %s90
      %s92 = sphi 0, %s90
      %s93 = sphi 0, %s92
      %s107 = sphi 0, %s93
      %s111 = sphi 0, %s111
      %s113 = sphi 0, %s111
      %s114 = sphi 0, %s113
      %s128 = sphi 0, %s114
      %s134 = sphi 0, %s136
      %s137 = sphi 0, %s134
      %s138 = sphi 0, %s137
      %s154 = sphi 0, %s138
    $region4: #{residual_block_no_bn.1} parent=1 // loop_header_branch
      %17 = sbr.rel (%p15) target = $region8
    $region5: #{residual_block_no_bn.1} parent=1 // loop_body
      %s19 = ssub.s32 %s14, 1
      %s20 = ssub.s32 %s14, 2
      %s21 = sadd.s32 %s14, 1
      %s22 = ssub.s32 %s14, %s21
      %p23 = scmp.eq.s32.totalorder %s22, 0
      %s25 = sadd.s32 %s24, 1
      %s26 = scalar_select %p23, %s24, %s25
      %p29 = pneg %p23
      %p30 = scmp.eq.s32.totalorder %s14, 1
      %p31 = por %p29, %p30
      %p32 = scmp.ne.s32.totalorder %s24, %s27
      %p33 = scmp.eq.s32.totalorder %s14, 0
      %p34 = por %p32, %p33
      %p35 = scmp.ne.s32.totalorder %s24, %s27
      %p36 = scmp.eq.s32.totalorder %s19, 1
      %p37 = por %p35, %p36
      %p38 = scmp.ne.s32.totalorder %s27, %s28
      %p39 = scmp.eq.s32.totalorder %s19, 0
      %p40 = por %p38, %p39
      %p41 = scmp.ne.s32.totalorder %s27, %s28
      %p42 = scmp.eq.s32.totalorder %s20, 1
      %p43 = por %p41, %p42
      %p45 = scmp.ne.s32.totalorder %s28, %s44
      %p46 = scmp.eq.s32.totalorder %s20, 0
      %p47 = por %p45, %p46
      %s49 = sadd.s32 %s48, 1
      %p52 = scmp.eq.s32.totalorder %s14, 1
      %p53 = scmp.ne.s32.totalorder %s48, %s50
      %p54 = scmp.eq.s32.totalorder %s14, 0
      %p55 = por %p53, %p54
      %p56 = scmp.ne.s32.totalorder %s48, %s50
      %p57 = scmp.eq.s32.totalorder %s19, 1
      %p58 = por %p56, %p57
      %p59 = scmp.ne.s32.totalorder %s50, %s51
      %p60 = scmp.eq.s32.totalorder %s19, 0
      %p61 = por %p59, %p60
      %p62 = scmp.ne.s32.totalorder %s50, %s51
      %p63 = scmp.eq.s32.totalorder %s20, 1
      %p64 = por %p62, %p63
      %p66 = scmp.ne.s32.totalorder %s51, %s65
      %p67 = scmp.eq.s32.totalorder %s20, 0
      %p68 = por %p66, %p67
      %s70 = sadd.s32 %s69, 1
      %p73 = scmp.eq.s32.totalorder %s14, 1
      %p74 = scmp.ne.s32.totalorder %s69, %s71
      %p75 = scmp.eq.s32.totalorder %s14, 0
      %p76 = por %p74, %p75
      %p77 = scmp.ne.s32.totalorder %s69, %s71
      %p78 = scmp.eq.s32.totalorder %s19, 1
      %p79 = por %p77, %p78
      %p80 = scmp.ne.s32.totalorder %s71, %s72
      %p81 = scmp.eq.s32.totalorder %s19, 0
      %p82 = por %p80, %p81
      %p83 = scmp.ne.s32.totalorder %s71, %s72
      %p84 = scmp.eq.s32.totalorder %s20, 1
      %p85 = por %p83, %p84
      %p87 = scmp.ne.s32.totalorder %s72, %s86
      %p88 = scmp.eq.s32.totalorder %s20, 0
      %p89 = por %p87, %p88
      %s91 = sadd.s32 %s90, 1
      %p94 = scmp.eq.s32.totalorder %s14, 1
      %p95 = scmp.ne.s32.totalorder %s90, %s92
      %p96 = scmp.eq.s32.totalorder %s14, 0
      %p97 = por %p95, %p96
      %p98 = scmp.ne.s32.totalorder %s90, %s92
      %p99 = scmp.eq.s32.totalorder %s19, 1
      %p100 = por %p98, %p99
      %p101 = scmp.ne.s32.totalorder %s92, %s93
      %p102 = scmp.eq.s32.totalorder %s19, 0
      %p103 = por %p101, %p102
      %p104 = scmp.ne.s32.totalorder %s92, %s93
      %p105 = scmp.eq.s32.totalorder %s20, 1
      %p106 = por %p104, %p105
      %p108 = scmp.ne.s32.totalorder %s93, %s107
      %p109 = scmp.eq.s32.totalorder %s20, 0
      %p110 = por %p108, %p109
      %s112 = sadd.s32 %s111, 1
      %p115 = scmp.eq.s32.totalorder %s14, 1
      %p116 = scmp.ne.s32.totalorder %s111, %s113
      %p117 = scmp.eq.s32.totalorder %s14, 0
      %p118 = por %p116, %p117
      %p119 = scmp.ne.s32.totalorder %s111, %s113
      %p120 = scmp.eq.s32.totalorder %s19, 1
      %p121 = por %p119, %p120
      %p122 = scmp.ne.s32.totalorder %s113, %s114
      %p123 = scmp.eq.s32.totalorder %s19, 0
      %p124 = por %p122, %p123
      %p125 = scmp.ne.s32.totalorder %s113, %s114
      %p126 = scmp.eq.s32.totalorder %s20, 1
      %p127 = por %p125, %p126
      %p129 = scmp.ne.s32.totalorder %s114, %s128
      %p130 = scmp.eq.s32.totalorder %s20, 0
      %p131 = por %p129, %p130
      %s132 = ssub.s32 %s14, %s21
      %p133 = scmp.eq.s32.totalorder %s132, 0
      %s135 = sadd.s32 %s134, 1
      %s136 = scalar_select %p133, %s134, %s135
      %p139 = pneg %p133
      %p140 = scmp.eq.s32.totalorder %s14, 1
      %p141 = por %p139, %p140
      %p142 = scmp.ne.s32.totalorder %s134, %s137
      %p143 = scmp.eq.s32.totalorder %s14, 0
      %p144 = por %p142, %p143
      %p145 = scmp.ne.s32.totalorder %s134, %s137
      %p146 = scmp.eq.s32.totalorder %s19, 1
      %p147 = por %p145, %p146
      %p148 = scmp.ne.s32.totalorder %s137, %s138
      %p149 = scmp.eq.s32.totalorder %s19, 0
      %p150 = por %p148, %p149
      %p151 = scmp.ne.s32.totalorder %s137, %s138
      %p152 = scmp.eq.s32.totalorder %s20, 1
      %p153 = por %p151, %p152
      %p155 = scmp.ne.s32.totalorder %s138, %s154
      %p156 = scmp.eq.s32.totalorder %s20, 0
      %p157 = por %p155, %p156
      %p158 = scmp.le.s32.totalorder 1, %s14
      %p159 = scmp.lt.s32.totalorder %s14, 3
      %p160 = pnand %p158, %p159
      %p161 = pneg %p160
      // Predicated region
      $region9: #{residual_block_no_bn.1} parent=5 // pred_check
        _
      $region10: #{residual_block_no_bn.1} parent=5 // pred_check_branch
        %163 = sbr.rel (%p160) target = $region12
      $region11: #{residual_block_no_bn.1} parent=5 // pred_region
        %s164 = ssub.s32 %s14, 1
        // Predicated region
        $region13: #{residual_block_no_bn.1} parent=11 // pred_check
          %p165 = pneg %p61
        $region14: #{residual_block_no_bn.1} parent=11 // pred_check_branch
          %167 = sbr.rel (%p165) target = $region16
        $region15: #{residual_block_no_bn.1} parent=11 // pred_region
          _
        $region16: #{residual_block_no_bn.1} parent=11 // pred_fallthru
          _
        // Predicated region
        $region17: #{residual_block_no_bn.1} parent=11 // pred_check
          %p168 = pneg %p82
        $region18: #{residual_block_no_bn.1} parent=11 // pred_check_branch
          %170 = sbr.rel (%p168) target = $region20
        $region19: #{residual_block_no_bn.1} parent=11 // pred_region
          _
        $region20: #{residual_block_no_bn.1} parent=11 // pred_fallthru
          _
        // Predicated region
        $region21: #{residual_block_no_bn.1} parent=11 // pred_check
          %p171 = pneg %p103
        $region22: #{residual_block_no_bn.1} parent=11 // pred_check_branch
          %173 = sbr.rel (%p171) target = $region24
        $region23: #{residual_block_no_bn.1} parent=11 // pred_region
          _
        $region24: #{residual_block_no_bn.1} parent=11 // pred_fallthru
          _
        // Predicated region
        $region25: #{residual_block_no_bn.1} parent=11 // pred_check
          %p174 = pneg %p124
        $region26: #{residual_block_no_bn.1} parent=11 // pred_check_branch
          %176 = sbr.rel (%p174) target = $region28
        $region27: #{residual_block_no_bn.1} parent=11 // pred_region
          _
        $region28: #{residual_block_no_bn.1} parent=11 // pred_fallthru
          _
      $region12: #{residual_block_no_bn.1} parent=5 // pred_fallthru
        _
      %p177 = scmp.lt.s32.totalorder %s14, 2
      // Predicated region
      $region29: #{residual_block_no_bn.1} parent=5 // pred_check
        %p178 = pneg %p177
      $region30: #{residual_block_no_bn.1} parent=5 // pred_check_branch
        %180 = sbr.rel (%p178) target = $region32
      $region31: #{residual_block_no_bn.1} parent=5 // pred_region
        // Predicated region
        $region33: #{residual_block_no_bn.1} parent=31 // pred_check
          %p181 = pneg %p34
        $region34: #{residual_block_no_bn.1} parent=31 // pred_check_branch
          %183 = sbr.rel (%p181) target = $region36
        $region35: #{residual_block_no_bn.1} parent=31 // pred_region
          %p184 = scmp.lt.s32.totalorder %s14, 1
          %s185 = scalar_select %p184, %s14, 1
          %s186 = smul.addr %s185, 32
          %s187 = smul.addr %s186, 8
          %s188 = scalar_lea.vmem %s0, %s187
        $region36: #{residual_block_no_bn.1} parent=31 // pred_fallthru
          _
      $region32: #{residual_block_no_bn.1} parent=5 // pred_fallthru
        _
      %p189 = scmp.le.s32.totalorder 1, %s14
      %p190 = scmp.lt.s32.totalorder %s14, 3
      %p191 = pnand %p189, %p190
      %p192 = pneg %p191
      // Predicated region
      $region37: #{residual_block_no_bn.1} parent=5 // pred_check
        _
      $region38: #{residual_block_no_bn.1} parent=5 // pred_check_branch
        %194 = sbr.rel (%p191) target = $region40
      $region39: #{residual_block_no_bn.1} parent=5 // pred_region
        %s195 = ssub.s32 %s14, 1
        %p196 = scmp.lt.s32.totalorder %s19, 1
        %s197 = scalar_select %p196, %s19, 1
        %s198 = smul.addr %s197, 32
        %s199 = smul.addr %s198, 8
        %s200 = scalar_lea.vmem %s0, %s199
        %p201 = pneg %p40
        %p202 = pneg %p37
        %p203 = pneg %p61
        %p204 = pneg %p58
        %p205 = pneg %p82
        %p206 = pneg %p79
        %p207 = pneg %p103
        %p208 = pneg %p100
        %p209 = pneg %p124
        %p210 = pneg %p121
        %p211 = pneg %p150
        %p212 = pneg %p147
        %s213 = sand.u32 %s137, 1
        %s214 = scalar_lea.sflag [#allocation4], %s213
        %s215 = sand.u32 %s137, 1
        %s216 = smul.addr %s215, 256
        %s217 = scalar_lea.vmem [#allocation3], %s216
        %p218 = scmp.lt.s32.totalorder %s19, 1
        %s219 = scalar_select %p218, %s19, 1
        %s220 = smul.addr %s219, 32
        %s221 = smul.addr %s220, 8
        %s222 = scalar_lea.vmem %s0, %s221
        %vm223 = vcmask 523264
        %224 = vst.msk [vmem:[#allocation2] sm:$0xff] %vm223, 0.0
        %225 = vst.msk [vmem:[#allocation2 + $0x8] sm:$0xff] %vm223, 0.0
        %vm226 = vcmask 517120
        %227 = vst.msk [vmem:[#allocation2 + $0x10] sm:$0x3] %vm226, 0.0
        %s228 = scalar_lea.vmem [#allocation2], 408
        %229 = vst.msk [vmem:[%s228] sm:$0xff] %vm223, 0.0
        %230 = vst.msk [vmem:[%s228 + $0x8] sm:$0xff] %vm223, 0.0
        %231 = vst.msk [vmem:[%s228 + $0x10] sm:$0x3] %vm226, 0.0
        %vm232 = vcmask 516096
        %233 = vst.msk [vmem:[#allocation2] sm:$0x1] %vm232, 0.0
        %234 = vst.msk [vmem:[#allocation2 + $0x18] sm:$0x1] %vm232, 0.0
        %235 = vst.msk [vmem:[#allocation2 + $0x30] sm:$0x1] %vm232, 0.0
        %236 = vst.msk [vmem:[#allocation2 + $0x48] sm:$0x1] %vm232, 0.0
        %237 = vst.msk [vmem:[#allocation2 + $0x60] sm:$0x1] %vm232, 0.0
        %238 = vst.msk [vmem:[#allocation2 + $0x78] sm:$0x1] %vm232, 0.0
        %239 = vst.msk [vmem:[#allocation2 + $0x90] sm:$0x1] %vm232, 0.0
        %240 = vst.msk [vmem:[#allocation2 + $0xa8] sm:$0x1] %vm232, 0.0
        %241 = vst.msk [vmem:[#allocation2 + $0xc0] sm:$0x1] %vm232, 0.0
        %242 = vst.msk [vmem:[#allocation2 + $0xd8] sm:$0x1] %vm232, 0.0
        %243 = vst.msk [vmem:[#allocation2 + $0xf0] sm:$0x1] %vm232, 0.0
        %244 = vst.msk [vmem:[#allocation2 + $0x108] sm:$0x1] %vm232, 0.0
        %245 = vst.msk [vmem:[#allocation2 + $0x120] sm:$0x1] %vm232, 0.0
        %246 = vst.msk [vmem:[#allocation2 + $0x138] sm:$0x1] %vm232, 0.0
        %247 = vst.msk [vmem:[#allocation2 + $0x150] sm:$0x1] %vm232, 0.0
        %248 = vst.msk [vmem:[#allocation2 + $0x168] sm:$0x1] %vm232, 0.0
        %249 = vst.msk [vmem:[#allocation2 + $0x180] sm:$0x1] %vm232, 0.0
        %250 = vst.msk [vmem:[#allocation2 + $0x198] sm:$0x1] %vm232, 0.0
        %251 = vst.msk [vmem:[#allocation2 + $0x11] sm:$0x1] %vm232, 0.0
        %252 = vst.msk [vmem:[#allocation2 + $0x29] sm:$0x1] %vm232, 0.0
        %253 = vst.msk [vmem:[#allocation2 + $0x41] sm:$0x1] %vm232, 0.0
        %254 = vst.msk [vmem:[#allocation2 + $0x59] sm:$0x1] %vm232, 0.0
        %255 = vst.msk [vmem:[#allocation2 + $0x71] sm:$0x1] %vm232, 0.0
        %256 = vst.msk [vmem:[#allocation2 + $0x89] sm:$0x1] %vm232, 0.0
        %257 = vst.msk [vmem:[#allocation2 + $0xa1] sm:$0x1] %vm232, 0.0
        %258 = vst.msk [vmem:[#allocation2 + $0xb9] sm:$0x1] %vm232, 0.0
        %259 = vst.msk [vmem:[#allocation2 + $0xd1] sm:$0x1] %vm232, 0.0
        %260 = vst.msk [vmem:[#allocation2 + $0xe9] sm:$0x1] %vm232, 0.0
        %261 = vst.msk [vmem:[#allocation2 + $0x101] sm:$0x1] %vm232, 0.0
        %262 = vst.msk [vmem:[#allocation2 + $0x119] sm:$0x1] %vm232, 0.0
        %263 = vst.msk [vmem:[#allocation2 + $0x131] sm:$0x1] %vm232, 0.0
        %264 = vst.msk [vmem:[#allocation2 + $0x149] sm:$0x1] %vm232, 0.0
        %265 = vst.msk [vmem:[#allocation2 + $0x161] sm:$0x1] %vm232, 0.0
        %266 = vst.msk [vmem:[#allocation2 + $0x179] sm:$0x1] %vm232, 0.0
        %267 = vst.msk [vmem:[#allocation2 + $0x191] sm:$0x1] %vm232, 0.0
        %268 = vst.msk [vmem:[#allocation2 + $0x1a9] sm:$0x1] %vm232, 0.0
        %v269 = vld [vmem:[%s222] sm:$0xff]
        %v270 = vld [vmem:[%s222 + $0x8] sm:$0xff]
        %v271 = vld [vmem:[%s222 + $0x10] sm:$0xff]
        %v272 = vld [vmem:[%s222 + $0x18] sm:$0xff]
        %v273 = vld [vmem:[%s222 + $0x20] sm:$0xff]
        %v274 = vld [vmem:[%s222 + $0x28] sm:$0xff]
        %v275 = vld [vmem:[%s222 + $0x30] sm:$0xff]
        %v276 = vld [vmem:[%s222 + $0x38] sm:$0xff]
        %v277 = vld [vmem:[%s222 + $0x40] sm:$0xff]
        %v278 = vld [vmem:[%s222 + $0x48] sm:$0xff]
        %v279 = vld [vmem:[%s222 + $0x50] sm:$0xff]
        %v280 = vld [vmem:[%s222 + $0x58] sm:$0xff]
        %v281 = vld [vmem:[%s222 + $0x60] sm:$0xff]
        %v282 = vld [vmem:[%s222 + $0x68] sm:$0xff]
        %v283 = vld [vmem:[%s222 + $0x70] sm:$0xff]
        %v284 = vld [vmem:[%s222 + $0x78] sm:$0xff]
        %v285 = vld [vmem:[%s222 + $0x80] sm:$0xff]
        %v286 = vld [vmem:[%s222 + $0x88] sm:$0xff]
        %v287 = vld [vmem:[%s222 + $0x90] sm:$0xff]
        %v288 = vld [vmem:[%s222 + $0x98] sm:$0xff]
        %v289 = vld [vmem:[%s222 + $0xa0] sm:$0xff]
        %v290 = vld [vmem:[%s222 + $0xa8] sm:$0xff]
        %v291 = vld [vmem:[%s222 + $0xb0] sm:$0xff]
        %v292 = vld [vmem:[%s222 + $0xb8] sm:$0xff]
        %v293 = vld [vmem:[%s222 + $0xc0] sm:$0xff]
        %v294 = vld [vmem:[%s222 + $0xc8] sm:$0xff]
        %v295 = vld [vmem:[%s222 + $0xd0] sm:$0xff]
        %v296 = vld [vmem:[%s222 + $0xd8] sm:$0xff]
        %v297 = vld [vmem:[%s222 + $0xe0] sm:$0xff]
        %v298 = vld [vmem:[%s222 + $0xe8] sm:$0xff]
        %v299 = vld [vmem:[%s222 + $0xf0] sm:$0xff]
        %v300 = vld [vmem:[%s222 + $0xf8] sm:$0xff]
        %s301 = scalar_lea.vmem [#allocation2], 24
        %302 = vst.msk [vmem:[%s301 + $0x1] sm:$0xff] %vm223, %v269
        %303 = vst.msk [vmem:[%s301 + $0x9] sm:$0xff] %vm223, %v270
        %304 = vst.msk [vmem:[%s301 + $0x19] sm:$0xff] %vm223, %v271
        %305 = vst.msk [vmem:[%s301 + $0x21] sm:$0xff] %vm223, %v272
        %306 = vst.msk [vmem:[%s301 + $0x31] sm:$0xff] %vm223, %v273
        %307 = vst.msk [vmem:[%s301 + $0x39] sm:$0xff] %vm223, %v274
        %308 = vst.msk [vmem:[%s301 + $0x49] sm:$0xff] %vm223, %v275
        %309 = vst.msk [vmem:[%s301 + $0x51] sm:$0xff] %vm223, %v276
        %310 = vst.msk [vmem:[%s301 + $0x61] sm:$0xff] %vm223, %v277
        %311 = vst.msk [vmem:[%s301 + $0x69] sm:$0xff] %vm223, %v278
        %312 = vst.msk [vmem:[%s301 + $0x79] sm:$0xff] %vm223, %v279
        %313 = vst.msk [vmem:[%s301 + $0x81] sm:$0xff] %vm223, %v280
        %314 = vst.msk [vmem:[%s301 + $0x91] sm:$0xff] %vm223, %v281
        %315 = vst.msk [vmem:[%s301 + $0x99] sm:$0xff] %vm223, %v282
        %316 = vst.msk [vmem:[%s301 + $0xa9] sm:$0xff] %vm223, %v283
        %317 = vst.msk [vmem:[%s301 + $0xb1] sm:$0xff] %vm223, %v284
        %318 = vst.msk [vmem:[%s301 + $0xc1] sm:$0xff] %vm223, %v285
        %319 = vst.msk [vmem:[%s301 + $0xc9] sm:$0xff] %vm223, %v286
        %320 = vst.msk [vmem:[%s301 + $0xd9] sm:$0xff] %vm223, %v287
        %321 = vst.msk [vmem:[%s301 + $0xe1] sm:$0xff] %vm223, %v288
        %322 = vst.msk [vmem:[%s301 + $0xf1] sm:$0xff] %vm223, %v289
        %323 = vst.msk [vmem:[%s301 + $0xf9] sm:$0xff] %vm223, %v290
        %324 = vst.msk [vmem:[%s301 + $0x109] sm:$0xff] %vm223, %v291
        %325 = vst.msk [vmem:[%s301 + $0x111] sm:$0xff] %vm223, %v292
        %326 = vst.msk [vmem:[%s301 + $0x121] sm:$0xff] %vm223, %v293
        %327 = vst.msk [vmem:[%s301 + $0x129] sm:$0xff] %vm223, %v294
        %328 = vst.msk [vmem:[%s301 + $0x139] sm:$0xff] %vm223, %v295
        %329 = vst.msk [vmem:[%s301 + $0x141] sm:$0xff] %vm223, %v296
        %330 = vst.msk [vmem:[%s301 + $0x151] sm:$0xff] %vm223, %v297
        %331 = vst.msk [vmem:[%s301 + $0x159] sm:$0xff] %vm223, %v298
        %332 = vst.msk [vmem:[%s301 + $0x169] sm:$0xff] %vm223, %v299
        %333 = vst.msk [vmem:[%s301 + $0x171] sm:$0xff] %vm223, %v300
        %v334 = vld [vmem:[#allocation2] sm:$0xff]
        %v335 = vld [vmem:[#allocation2 + $0x8] sm:$0xff]
        %v336 = vld [vmem:[#allocation2 + $0x18] sm:$0xff]
        %v337 = vld [vmem:[#allocation2 + $0x20] sm:$0xff]
        %v338 = vld [vmem:[#allocation2 + $0x30] sm:$0xff]
        %v339 = vld [vmem:[#allocation2 + $0x38] sm:$0xff]
        %v340 = vld [vmem:[#allocation2 + $0x48] sm:$0xff]
        %v341 = vld [vmem:[#allocation2 + $0x50] sm:$0xff]
        %v342 = vld [vmem:[#allocation2 + $0x60] sm:$0xff]
        %v343 = vld [vmem:[#allocation2 + $0x68] sm:$0xff]
        %v344 = vld [vmem:[#allocation2 + $0x78] sm:$0xff]
        %v345 = vld [vmem:[#allocation2 + $0x80] sm:$0xff]
        %v346 = vld [vmem:[#allocation2 + $0x90] sm:$0xff]
        %v347 = vld [vmem:[#allocation2 + $0x98] sm:$0xff]
        %v348 = vld [vmem:[#allocation2 + $0xa8] sm:$0xff]
        %v349 = vld [vmem:[#allocation2 + $0xb0] sm:$0xff]
        %v350 = vld [vmem:[#allocation2 + $0xc0] sm:$0xff]
        %v351 = vld [vmem:[#allocation2 + $0xc8] sm:$0xff]
        %v352 = vld [vmem:[#allocation2 + $0xd8] sm:$0xff]
        %v353 = vld [vmem:[#allocation2 + $0xe0] sm:$0xff]
        %v354 = vld [vmem:[#allocation2 + $0xf0] sm:$0xff]
        %v355 = vld [vmem:[#allocation2 + $0xf8] sm:$0xff]
        %v356 = vld [vmem:[#allocation2 + $0x108] sm:$0xff]
        %v357 = vld [vmem:[#allocation2 + $0x110] sm:$0xff]
        %v358 = vld [vmem:[#allocation2 + $0x120] sm:$0xff]
        %v359 = vld [vmem:[#allocation2 + $0x128] sm:$0xff]
        %v360 = vld [vmem:[#allocation2 + $0x138] sm:$0xff]
        %v361 = vld [vmem:[#allocation2 + $0x140] sm:$0xff]
        %v362 = vld [vmem:[#allocation2 + $0x150] sm:$0xff]
        %v363 = vld [vmem:[#allocation2 + $0x158] sm:$0xff]
        %v364 = vld [vmem:[#allocation2 + $0x168] sm:$0xff]
        %v365 = vld [vmem:[#allocation2 + $0x170] sm:$0xff]
        %v366 = vld [vmem:[%s1] sm:$0xff]
        %v367 = vld [vmem:[%s1 + $0x8] sm:$0xff]
        %v368 = vld [vmem:[%s1 + $0x10] sm:$0xff]
        %v369 = vld [vmem:[%s1 + $0x18] sm:$0xff]
        %v370 = vld [vmem:[%s1 + $0x20] sm:$0xff]
        %v371 = vld [vmem:[%s1 + $0x28] sm:$0xff]
        %v372 = vld [vmem:[%s1 + $0x30] sm:$0xff]
        %v373 = vld [vmem:[%s1 + $0x38] sm:$0xff]
        %v374 = vld [vmem:[#allocation2 + $0x1] sm:$0xff]
        %v375 = vld [vmem:[#allocation2 + $0x9] sm:$0xff]
        %v376 = vld [vmem:[#allocation2 + $0x19] sm:$0xff]
        %v377 = vld [vmem:[#allocation2 + $0x21] sm:$0xff]
        %v378 = vld [vmem:[#allocation2 + $0x31] sm:$0xff]
        %v379 = vld [vmem:[#allocation2 + $0x39] sm:$0xff]
        %v380 = vld [vmem:[#allocation2 + $0x49] sm:$0xff]
        %v381 = vld [vmem:[#allocation2 + $0x51] sm:$0xff]
        %v382 = vld [vmem:[#allocation2 + $0x61] sm:$0xff]
        %v383 = vld [vmem:[#allocation2 + $0x69] sm:$0xff]
        %v384 = vld [vmem:[#allocation2 + $0x79] sm:$0xff]
        %v385 = vld [vmem:[#allocation2 + $0x81] sm:$0xff]
        %v386 = vld [vmem:[#allocation2 + $0x91] sm:$0xff]
        %v387 = vld [vmem:[#allocation2 + $0x99] sm:$0xff]
        %v388 = vld [vmem:[#allocation2 + $0xa9] sm:$0xff]
        %v389 = vld [vmem:[#allocation2 + $0xb1] sm:$0xff]
        %v390 = vld [vmem:[#allocation2 + $0xc1] sm:$0xff]
        %v391 = vld [vmem:[#allocation2 + $0xc9] sm:$0xff]
        %v392 = vld [vmem:[#allocation2 + $0xd9] sm:$0xff]
        %v393 = vld [vmem:[#allocation2 + $0xe1] sm:$0xff]
        %v394 = vld [vmem:[#allocation2 + $0xf1] sm:$0xff]
        %v395 = vld [vmem:[#allocation2 + $0xf9] sm:$0xff]
        %v396 = vld [vmem:[#allocation2 + $0x109] sm:$0xff]
        %v397 = vld [vmem:[#allocation2 + $0x111] sm:$0xff]
        %v398 = vld [vmem:[#allocation2 + $0x121] sm:$0xff]
        %v399 = vld [vmem:[#allocation2 + $0x129] sm:$0xff]
        %v400 = vld [vmem:[#allocation2 + $0x139] sm:$0xff]
        %v401 = vld [vmem:[#allocation2 + $0x141] sm:$0xff]
        %v402 = vld [vmem:[#allocation2 + $0x151] sm:$0xff]
        %v403 = vld [vmem:[#allocation2 + $0x159] sm:$0xff]
        %v404 = vld [vmem:[#allocation2 + $0x169] sm:$0xff]
        %v405 = vld [vmem:[#allocation2 + $0x171] sm:$0xff]
        %s406 = scalar_lea.vmem %s1, 64
        %v407 = vld [vmem:[%s406] sm:$0xff]
        %v408 = vld [vmem:[%s406 + $0x8] sm:$0xff]
        %v409 = vld [vmem:[%s406 + $0x10] sm:$0xff]
        %v410 = vld [vmem:[%s406 + $0x18] sm:$0xff]
        %v411 = vld [vmem:[%s406 + $0x20] sm:$0xff]
        %v412 = vld [vmem:[%s406 + $0x28] sm:$0xff]
        %v413 = vld [vmem:[%s406 + $0x30] sm:$0xff]
        %v414 = vld [vmem:[%s406 + $0x38] sm:$0xff]
        %v416 = vsel %vm223, %v374, 0
        %v419 = vsel %vm223, %v375, 0
        %v422 = vsel %vm223, %v376, 0
        %v425 = vsel %vm223, %v377, 0
        %v428 = vsel %vm223, %v378, 0
        %v431 = vsel %vm223, %v379, 0
        %v434 = vsel %vm223, %v380, 0
        %v437 = vsel %vm223, %v381, 0
        %v440 = vsel %vm223, %v382, 0
        %v443 = vsel %vm223, %v383, 0
        %v446 = vsel %vm223, %v384, 0
        %v449 = vsel %vm223, %v385, 0
        %v452 = vsel %vm223, %v386, 0
        %v455 = vsel %vm223, %v387, 0
        %v458 = vsel %vm223, %v388, 0
        %v461 = vsel %vm223, %v389, 0
        %v464 = vsel %vm223, %v390, 0
        %v467 = vsel %vm223, %v391, 0
        %v470 = vsel %vm223, %v392, 0
        %v473 = vsel %vm223, %v393, 0
        %v476 = vsel %vm223, %v394, 0
        %v479 = vsel %vm223, %v395, 0
        %v482 = vsel %vm223, %v396, 0
        %v485 = vsel %vm223, %v397, 0
        %v488 = vsel %vm223, %v398, 0
        %v491 = vsel %vm223, %v399, 0
        %v494 = vsel %vm223, %v400, 0
        %v497 = vsel %vm223, %v401, 0
        %v500 = vsel %vm223, %v402, 0
        %v503 = vsel %vm223, %v403, 0
        %v506 = vsel %vm223, %v404, 0
        %v509 = vsel %vm223, %v405, 0
        %511 = vmatprep.subr.mxu0 0.0
        %512 = vmatpush1.msra.mxu0 0.0
        %513 = vmatprep.subr.mxu0 0.0
        %514 = vmatpush1.msra.mxu0 0.0
        %515 = vmatprep.subr.mxu0 0.0
        %516 = vmatpush1.msra.mxu0 0.0
        %517 = vmatprep.subr.mxu0 0.0
        %518 = vmatpush1.msra.mxu0 0.0
        %519 = vmatprep.subr.mxu0 0.0
        %520 = vmatpush1.msra.mxu0 0.0
        %521 = vmatprep.subr.mxu0 0.0
        %522 = vmatpush1.msra.mxu0 0.0
        %523 = vmatprep.subr.mxu0 0.0
        %524 = vmatpush1.msra.mxu0 0.0
        %525 = vmatprep.subr.mxu0 0.0
        %526 = vmatpush1.msra.mxu0 0.0
        %527 = vmatprep.subr.mxu0 0.0
        %528 = vmatpush1.msra.mxu0 %v414
        %529 = vmatprep.subr.mxu0 0.0
        %530 = vmatpush1.msra.mxu0 %v413
        %531 = vmatprep.subr.mxu0 0.0
        %532 = vmatpush1.msra.mxu0 %v412
        %533 = vmatprep.subr.mxu0 0.0
        %534 = vmatpush1.msra.mxu0 %v411
        %535 = vmatprep.subr.mxu0 0.0
        %536 = vmatpush1.msra.mxu0 %v410
        %537 = vmatprep.subr.mxu0 0.0
        %538 = vmatpush1.msra.mxu0 %v409
        %539 = vmatprep.subr.mxu0 0.0
        %540 = vmatpush1.msra.mxu0 %v408
        %541 = vmatprep.subr.mxu0 0.0
        %542 = vmatpush1.msra.mxu0 %v407
        %543 = vmatprep.subr.mxu0 0.0
        %544 = vmatpush2.msra.mxu0 0.0
        %545 = vmatprep.subr.mxu0 0.0
        %546 = vmatpush2.msra.mxu0 0.0
        %547 = vmatprep.subr.mxu0 0.0
        %548 = vmatpush2.msra.mxu0 0.0
        %549 = vmatprep.subr.mxu0 0.0
        %550 = vmatpush2.msra.mxu0 0.0
        %551 = vmatprep.subr.mxu0 0.0
        %552 = vmatpush2.msra.mxu0 0.0
        %553 = vmatprep.subr.mxu0 0.0
        %554 = vmatpush2.msra.mxu0 0.0
        %555 = vmatprep.subr.mxu0 0.0
        %556 = vmatpush2.msra.mxu0 0.0
        %557 = vmatprep.subr.mxu0 0.0
        %558 = vmatpush2.msra.mxu0 0.0
        %559 = vmatprep.subr.mxu0 0.0
        %560 = vmatpush2.msra.mxu0 0.0
        %561 = vmatprep.subr.mxu0 0.0
        %562 = vmatpush2.msra.mxu0 0.0
        %563 = vmatprep.subr.mxu0 0.0
        %564 = vmatpush2.msra.mxu0 0.0
        %565 = vmatprep.subr.mxu0 0.0
        %566 = vmatpush2.msra.mxu0 0.0
        %567 = vmatprep.subr.mxu0 0.0
        %568 = vmatpush2.msra.mxu0 0.0
        %569 = vmatprep.subr.mxu0 0.0
        %570 = vmatpush2.msra.mxu0 0.0
        %571 = vmatprep.subr.mxu0 0.0
        %572 = vmatpush2.msra.mxu0 0.0
        %573 = vmatprep.subr.mxu0 0.0
        %574 = vmatpush2.msra.mxu0 0.0
        %575 = vmatprep.mubr.f32.mxu0 0.0
        %576 = vmatmul.mubr.f32.gmra.mxu0 %v416
        %v577 = vpop.f32.mrf.mxu0
        %v578 = vadd.f32 0.0, %v577
        %v579 = vpop.f32.mrf.mxu0
        %580 = vmatprep.mubr.f32.mxu0 0.0
        %581 = vmatmul.mubr.f32.gmra.mxu0 %v419
        %v582 = vpop.f32.mrf.mxu0
        %v583 = vadd.f32 0.0, %v582
        %v584 = vpop.f32.mrf.mxu0
        %585 = vmatprep.mubr.f32.mxu0 0.0
        %586 = vmatmul.mubr.f32.gmra.mxu0 %v422
        %v587 = vpop.f32.mrf.mxu0
        %v588 = vadd.f32 0.0, %v587
        %v589 = vpop.f32.mrf.mxu0
        %590 = vmatprep.mubr.f32.mxu0 0.0
        %591 = vmatmul.mubr.f32.gmra.mxu0 %v425
        %v592 = vpop.f32.mrf.mxu0
        %v593 = vadd.f32 0.0, %v592
        %v594 = vpop.f32.mrf.mxu0
        %595 = vmatprep.mubr.f32.mxu0 0.0
        %596 = vmatmul.mubr.f32.gmra.mxu0 %v428
        %v597 = vpop.f32.mrf.mxu0
        %v598 = vadd.f32 0.0, %v597
        %v599 = vpop.f32.mrf.mxu0
        %600 = vmatprep.mubr.f32.mxu0 0.0
        %601 = vmatmul.mubr.f32.gmra.mxu0 %v431
        %v602 = vpop.f32.mrf.mxu0
        %v603 = vadd.f32 0.0, %v602
        %v604 = vpop.f32.mrf.mxu0
        %605 = vmatprep.mubr.f32.mxu0 0.0
        %606 = vmatmul.mubr.f32.gmra.mxu0 %v434
        %v607 = vpop.f32.mrf.mxu0
        %v608 = vadd.f32 0.0, %v607
        %v609 = vpop.f32.mrf.mxu0
        %610 = vmatprep.mubr.f32.mxu0 0.0
        %611 = vmatmul.mubr.f32.gmra.mxu0 %v437
        %v612 = vpop.f32.mrf.mxu0
        %v613 = vadd.f32 0.0, %v612
        %v614 = vpop.f32.mrf.mxu0
        %615 = vmatprep.mubr.f32.mxu0 0.0
        %616 = vmatmul.mubr.f32.gmra.mxu0 %v440
        %v617 = vpop.f32.mrf.mxu0
        %v618 = vadd.f32 0.0, %v617
        %v619 = vpop.f32.mrf.mxu0
        %620 = vmatprep.mubr.f32.mxu0 0.0
        %621 = vmatmul.mubr.f32.gmra.mxu0 %v443
        %v622 = vpop.f32.mrf.mxu0
        %v623 = vadd.f32 0.0, %v622
        %v624 = vpop.f32.mrf.mxu0
        %625 = vmatprep.mubr.f32.mxu0 0.0
        %626 = vmatmul.mubr.f32.gmra.mxu0 %v446
        %v627 = vpop.f32.mrf.mxu0
        %v628 = vadd.f32 0.0, %v627
        %v629 = vpop.f32.mrf.mxu0
        %630 = vmatprep.mubr.f32.mxu0 0.0
        %631 = vmatmul.mubr.f32.gmra.mxu0 %v449
        %v632 = vpop.f32.mrf.mxu0
        %v633 = vadd.f32 0.0, %v632
        %v634 = vpop.f32.mrf.mxu0
        %635 = vmatprep.mubr.f32.mxu0 0.0
        %636 = vmatmul.mubr.f32.gmra.mxu0 %v452
        %v637 = vpop.f32.mrf.mxu0
        %v638 = vadd.f32 0.0, %v637
        %v639 = vpop.f32.mrf.mxu0
        %640 = vmatprep.mubr.f32.mxu0 0.0
        %641 = vmatmul.mubr.f32.gmra.mxu0 %v455
        %v642 = vpop.f32.mrf.mxu0
        %v643 = vadd.f32 0.0, %v642
        %v644 = vpop.f32.mrf.mxu0
        %645 = vmatprep.mubr.f32.mxu0 0.0
        %646 = vmatmul.mubr.f32.gmra.mxu0 %v458
        %v647 = vpop.f32.mrf.mxu0
        %v648 = vadd.f32 0.0, %v647
        %v649 = vpop.f32.mrf.mxu0
        %650 = vmatprep.mubr.f32.mxu0 0.0
        %651 = vmatmul.mubr.f32.gmra.mxu0 %v461
        %v652 = vpop.f32.mrf.mxu0
        %v653 = vadd.f32 0.0, %v652
        %v654 = vpop.f32.mrf.mxu0
        %655 = vmatprep.mubr.f32.mxu0 0.0
        %656 = vmatmul.mubr.f32.gmra.mxu0 %v464
        %v657 = vpop.f32.mrf.mxu0
        %v658 = vadd.f32 0.0, %v657
        %v659 = vpop.f32.mrf.mxu0
        %660 = vmatprep.mubr.f32.mxu0 0.0
        %661 = vmatmul.mubr.f32.gmra.mxu0 %v467
        %v662 = vpop.f32.mrf.mxu0
        %v663 = vadd.f32 0.0, %v662
        %v664 = vpop.f32.mrf.mxu0
        %665 = vmatprep.mubr.f32.mxu0 0.0
        %666 = vmatmul.mubr.f32.gmra.mxu0 %v470
        %v667 = vpop.f32.mrf.mxu0
        %v668 = vadd.f32 0.0, %v667
        %v669 = vpop.f32.mrf.mxu0
        %670 = vmatprep.mubr.f32.mxu0 0.0
        %671 = vmatmul.mubr.f32.gmra.mxu0 %v473
        %v672 = vpop.f32.mrf.mxu0
        %v673 = vadd.f32 0.0, %v672
        %v674 = vpop.f32.mrf.mxu0
        %675 = vmatprep.mubr.f32.mxu0 0.0
        %676 = vmatmul.mubr.f32.gmra.mxu0 %v476
        %v677 = vpop.f32.mrf.mxu0
        %v678 = vadd.f32 0.0, %v677
        %v679 = vpop.f32.mrf.mxu0
        %680 = vmatprep.mubr.f32.mxu0 0.0
        %681 = vmatmul.mubr.f32.gmra.mxu0 %v479
        %v682 = vpop.f32.mrf.mxu0
        %v683 = vadd.f32 0.0, %v682
        %v684 = vpop.f32.mrf.mxu0
        %685 = vmatprep.mubr.f32.mxu0 0.0
        %686 = vmatmul.mubr.f32.gmra.mxu0 %v482
        %v687 = vpop.f32.mrf.mxu0
        %v688 = vadd.f32 0.0, %v687
        %v689 = vpop.f32.mrf.mxu0
        %690 = vmatprep.mubr.f32.mxu0 0.0
        %691 = vmatmul.mubr.f32.gmra.mxu0 %v485
        %v692 = vpop.f32.mrf.mxu0
        %v693 = vadd.f32 0.0, %v692
        %v694 = vpop.f32.mrf.mxu0
        %695 = vmatprep.mubr.f32.mxu0 0.0
        %696 = vmatmul.mubr.f32.gmra.mxu0 %v488
        %v697 = vpop.f32.mrf.mxu0
        %v698 = vadd.f32 0.0, %v697
        %v699 = vpop.f32.mrf.mxu0
        %700 = vmatprep.mubr.f32.mxu0 0.0
        %701 = vmatmul.mubr.f32.gmra.mxu0 %v491
        %v702 = vpop.f32.mrf.mxu0
        %v703 = vadd.f32 0.0, %v702
        %v704 = vpop.f32.mrf.mxu0
        %705 = vmatprep.mubr.f32.mxu0 0.0
        %706 = vmatmul.mubr.f32.gmra.mxu0 %v494
        %v707 = vpop.f32.mrf.mxu0
        %v708 = vadd.f32 0.0, %v707
        %v709 = vpop.f32.mrf.mxu0
        %710 = vmatprep.mubr.f32.mxu0 0.0
        %711 = vmatmul.mubr.f32.gmra.mxu0 %v497
        %v712 = vpop.f32.mrf.mxu0
        %v713 = vadd.f32 0.0, %v712
        %v714 = vpop.f32.mrf.mxu0
        %715 = vmatprep.mubr.f32.mxu0 0.0
        %716 = vmatmul.mubr.f32.gmra.mxu0 %v500
        %v717 = vpop.f32.mrf.mxu0
        %v718 = vadd.f32 0.0, %v717
        %v719 = vpop.f32.mrf.mxu0
        %720 = vmatprep.mubr.f32.mxu0 0.0
        %721 = vmatmul.mubr.f32.gmra.mxu0 %v503
        %v722 = vpop.f32.mrf.mxu0
        %v723 = vadd.f32 0.0, %v722
        %v724 = vpop.f32.mrf.mxu0
        %725 = vmatprep.mubr.f32.mxu0 0.0
        %726 = vmatmul.mubr.f32.gmra.mxu0 %v506
        %v727 = vpop.f32.mrf.mxu0
        %v728 = vadd.f32 0.0, %v727
        %v729 = vpop.f32.mrf.mxu0
        %730 = vmatprep.mubr.f32.mxu0 0.0
        %731 = vmatmul.mubr.f32.gmra.mxu0 %v509
        %v732 = vpop.f32.mrf.mxu0
        %v733 = vadd.f32 0.0, %v732
        %v734 = vpop.f32.mrf.mxu0
        %735 = vdwg.mxu0
        %v737 = vsel %vm223, %v334, 0
        %v740 = vsel %vm223, %v335, 0
        %v743 = vsel %vm223, %v336, 0
        %v746 = vsel %vm223, %v337, 0
        %v749 = vsel %vm223, %v338, 0
        %v752 = vsel %vm223, %v339, 0
        %v755 = vsel %vm223, %v340, 0
        %v758 = vsel %vm223, %v341, 0
        %v761 = vsel %vm223, %v342, 0
        %v764 = vsel %vm223, %v343, 0
        %v767 = vsel %vm223, %v344, 0
        %v770 = vsel %vm223, %v345, 0
        %v773 = vsel %vm223, %v346, 0
        %v776 = vsel %vm223, %v347, 0
        %v779 = vsel %vm223, %v348, 0
        %v782 = vsel %vm223, %v349, 0
        %v785 = vsel %vm223, %v350, 0
        %v788 = vsel %vm223, %v351, 0
        %v791 = vsel %vm223, %v352, 0
        %v794 = vsel %vm223, %v353, 0
        %v797 = vsel %vm223, %v354, 0
        %v800 = vsel %vm223, %v355, 0
        %v803 = vsel %vm223, %v356, 0
        %v806 = vsel %vm223, %v357, 0
        %v809 = vsel %vm223, %v358, 0
        %v812 = vsel %vm223, %v359, 0
        %v815 = vsel %vm223, %v360, 0
        %v818 = vsel %vm223, %v361, 0
        %v821 = vsel %vm223, %v362, 0
        %v824 = vsel %vm223, %v363, 0
        %v827 = vsel %vm223, %v364, 0
        %v830 = vsel %vm223, %v365, 0
        %832 = vmatprep.subr.mxu0 0.0
        %833 = vmatpush1.msra.mxu0 0.0
        %834 = vmatprep.subr.mxu0 0.0
        %835 = vmatpush1.msra.mxu0 0.0
        %836 = vmatprep.subr.mxu0 0.0
        %837 = vmatpush1.msra.mxu0 0.0
        %838 = vmatprep.subr.mxu0 0.0
        %839 = vmatpush1.msra.mxu0 0.0
        %840 = vmatprep.subr.mxu0 0.0
        %841 = vmatpush1.msra.mxu0 0.0
        %842 = vmatprep.subr.mxu0 0.0
        %843 = vmatpush1.msra.mxu0 0.0
        %844 = vmatprep.subr.mxu0 0.0
        %845 = vmatpush1.msra.mxu0 0.0
        %846 = vmatprep.subr.mxu0 0.0
        %847 = vmatpush1.msra.mxu0 0.0
        %848 = vmatprep.subr.mxu0 0.0
        %849 = vmatpush1.msra.mxu0 %v373
        %850 = vmatprep.subr.mxu0 0.0
        %851 = vmatpush1.msra.mxu0 %v372
        %852 = vmatprep.subr.mxu0 0.0
        %853 = vmatpush1.msra.mxu0 %v371
        %854 = vmatprep.subr.mxu0 0.0
        %855 = vmatpush1.msra.mxu0 %v370
        %856 = vmatprep.subr.mxu0 0.0
        %857 = vmatpush1.msra.mxu0 %v369
        %858 = vmatprep.subr.mxu0 0.0
        %859 = vmatpush1.msra.mxu0 %v368
        %860 = vmatprep.subr.mxu0 0.0
        %861 = vmatpush1.msra.mxu0 %v367
        %862 = vmatprep.subr.mxu0 0.0
        %863 = vmatpush1.msra.mxu0 %v366
        %864 = vmatprep.subr.mxu0 0.0
        %865 = vmatpush2.msra.mxu0 0.0
        %866 = vmatprep.subr.mxu0 0.0
        %867 = vmatpush2.msra.mxu0 0.0
        %868 = vmatprep.subr.mxu0 0.0
        %869 = vmatpush2.msra.mxu0 0.0
        %870 = vmatprep.subr.mxu0 0.0
        %871 = vmatpush2.msra.mxu0 0.0
        %872 = vmatprep.subr.mxu0 0.0
        %873 = vmatpush2.msra.mxu0 0.0
        %874 = vmatprep.subr.mxu0 0.0
        %875 = vmatpush2.msra.mxu0 0.0
        %876 = vmatprep.subr.mxu0 0.0
        %877 = vmatpush2.msra.mxu0 0.0
        %878 = vmatprep.subr.mxu0 0.0
        %879 = vmatpush2.msra.mxu0 0.0
        %880 = vmatprep.subr.mxu0 0.0
        %881 = vmatpush2.msra.mxu0 0.0
        %882 = vmatprep.subr.mxu0 0.0
        %883 = vmatpush2.msra.mxu0 0.0
        %884 = vmatprep.subr.mxu0 0.0
        %885 = vmatpush2.msra.mxu0 0.0
        %886 = vmatprep.subr.mxu0 0.0
        %887 = vmatpush2.msra.mxu0 0.0
        %888 = vmatprep.subr.mxu0 0.0
        %889 = vmatpush2.msra.mxu0 0.0
        %890 = vmatprep.subr.mxu0 0.0
        %891 = vmatpush2.msra.mxu0 0.0
        %892 = vmatprep.subr.mxu0 0.0
        %893 = vmatpush2.msra.mxu0 0.0
        %894 = vmatprep.subr.mxu0 0.0
        %895 = vmatpush2.msra.mxu0 0.0
        %896 = vmatprep.mubr.f32.mxu0 0.0
        %897 = vmatmul.mubr.f32.gmra.mxu0 %v737
        %v898 = vpop.f32.mrf.mxu0
        %v899 = vadd.f32 %v578, %v898
        %v900 = vpop.f32.mrf.mxu0
        %901 = vmatprep.mubr.f32.mxu0 0.0
        %902 = vmatmul.mubr.f32.gmra.mxu0 %v740
        %v903 = vpop.f32.mrf.mxu0
        %v904 = vadd.f32 %v583, %v903
        %v905 = vpop.f32.mrf.mxu0
        %906 = vmatprep.mubr.f32.mxu0 0.0
        %907 = vmatmul.mubr.f32.gmra.mxu0 %v743
        %v908 = vpop.f32.mrf.mxu0
        %v909 = vadd.f32 %v588, %v908
        %v910 = vpop.f32.mrf.mxu0
        %911 = vmatprep.mubr.f32.mxu0 0.0
        %912 = vmatmul.mubr.f32.gmra.mxu0 %v746
        %v913 = vpop.f32.mrf.mxu0
        %v914 = vadd.f32 %v593, %v913
        %v915 = vpop.f32.mrf.mxu0
        %916 = vmatprep.mubr.f32.mxu0 0.0
        %917 = vmatmul.mubr.f32.gmra.mxu0 %v749
        %v918 = vpop.f32.mrf.mxu0
        %v919 = vadd.f32 %v598, %v918
        %v920 = vpop.f32.mrf.mxu0
        %921 = vmatprep.mubr.f32.mxu0 0.0
        %922 = vmatmul.mubr.f32.gmra.mxu0 %v752
        %v923 = vpop.f32.mrf.mxu0
        %v924 = vadd.f32 %v603, %v923
        %v925 = vpop.f32.mrf.mxu0
        %926 = vmatprep.mubr.f32.mxu0 0.0
        %927 = vmatmul.mubr.f32.gmra.mxu0 %v755
        %v928 = vpop.f32.mrf.mxu0
        %v929 = vadd.f32 %v608, %v928
        %v930 = vpop.f32.mrf.mxu0
        %931 = vmatprep.mubr.f32.mxu0 0.0
        %932 = vmatmul.mubr.f32.gmra.mxu0 %v758
        %v933 = vpop.f32.mrf.mxu0
        %v934 = vadd.f32 %v613, %v933
        %v935 = vpop.f32.mrf.mxu0
        %936 = vmatprep.mubr.f32.mxu0 0.0
        %937 = vmatmul.mubr.f32.gmra.mxu0 %v761
        %v938 = vpop.f32.mrf.mxu0
        %v939 = vadd.f32 %v618, %v938
        %v940 = vpop.f32.mrf.mxu0
        %941 = vmatprep.mubr.f32.mxu0 0.0
        %942 = vmatmul.mubr.f32.gmra.mxu0 %v764
        %v943 = vpop.f32.mrf.mxu0
        %v944 = vadd.f32 %v623, %v943
        %v945 = vpop.f32.mrf.mxu0
        %946 = vmatprep.mubr.f32.mxu0 0.0
        %947 = vmatmul.mubr.f32.gmra.mxu0 %v767
        %v948 = vpop.f32.mrf.mxu0
        %v949 = vadd.f32 %v628, %v948
        %v950 = vpop.f32.mrf.mxu0
        %951 = vmatprep.mubr.f32.mxu0 0.0
        %952 = vmatmul.mubr.f32.gmra.mxu0 %v770
        %v953 = vpop.f32.mrf.mxu0
        %v954 = vadd.f32 %v633, %v953
        %v955 = vpop.f32.mrf.mxu0
        %956 = vmatprep.mubr.f32.mxu0 0.0
        %957 = vmatmul.mubr.f32.gmra.mxu0 %v773
        %v958 = vpop.f32.mrf.mxu0
        %v959 = vadd.f32 %v638, %v958
        %v960 = vpop.f32.mrf.mxu0
        %961 = vmatprep.mubr.f32.mxu0 0.0
        %962 = vmatmul.mubr.f32.gmra.mxu0 %v776
        %v963 = vpop.f32.mrf.mxu0
        %v964 = vadd.f32 %v643, %v963
        %v965 = vpop.f32.mrf.mxu0
        %966 = vmatprep.mubr.f32.mxu0 0.0
        %967 = vmatmul.mubr.f32.gmra.mxu0 %v779
        %v968 = vpop.f32.mrf.mxu0
        %v969 = vadd.f32 %v648, %v968
        %v970 = vpop.f32.mrf.mxu0
        %971 = vmatprep.mubr.f32.mxu0 0.0
        %972 = vmatmul.mubr.f32.gmra.mxu0 %v782
        %v973 = vpop.f32.mrf.mxu0
        %v974 = vadd.f32 %v653, %v973
        %v975 = vpop.f32.mrf.mxu0
        %976 = vmatprep.mubr.f32.mxu0 0.0
        %977 = vmatmul.mubr.f32.gmra.mxu0 %v785
        %v978 = vpop.f32.mrf.mxu0
        %v979 = vadd.f32 %v658, %v978
        %v980 = vpop.f32.mrf.mxu0
        %981 = vmatprep.mubr.f32.mxu0 0.0
        %982 = vmatmul.mubr.f32.gmra.mxu0 %v788
        %v983 = vpop.f32.mrf.mxu0
        %v984 = vadd.f32 %v663, %v983
        %v985 = vpop.f32.mrf.mxu0
        %986 = vmatprep.mubr.f32.mxu0 0.0
        %987 = vmatmul.mubr.f32.gmra.mxu0 %v791
        %v988 = vpop.f32.mrf.mxu0
        %v989 = vadd.f32 %v668, %v988
        %v990 = vpop.f32.mrf.mxu0
        %991 = vmatprep.mubr.f32.mxu0 0.0
        %992 = vmatmul.mubr.f32.gmra.mxu0 %v794
        %v993 = vpop.f32.mrf.mxu0
        %v994 = vadd.f32 %v673, %v993
        %v995 = vpop.f32.mrf.mxu0
        %996 = vmatprep.mubr.f32.mxu0 0.0
        %997 = vmatmul.mubr.f32.gmra.mxu0 %v797
        %v998 = vpop.f32.mrf.mxu0
        %v999 = vadd.f32 %v678, %v998
        %v1000 = vpop.f32.mrf.mxu0
        %1001 = vmatprep.mubr.f32.mxu0 0.0
        %1002 = vmatmul.mubr.f32.gmra.mxu0 %v800
        %v1003 = vpop.f32.mrf.mxu0
        %v1004 = vadd.f32 %v683, %v1003
        %v1005 = vpop.f32.mrf.mxu0
        %1006 = vmatprep.mubr.f32.mxu0 0.0
        %1007 = vmatmul.mubr.f32.gmra.mxu0 %v803
        %v1008 = vpop.f32.mrf.mxu0
        %v1009 = vadd.f32 %v688, %v1008
        %v1010 = vpop.f32.mrf.mxu0
        %1011 = vmatprep.mubr.f32.mxu0 0.0
        %1012 = vmatmul.mubr.f32.gmra.mxu0 %v806
        %v1013 = vpop.f32.mrf.mxu0
        %v1014 = vadd.f32 %v693, %v1013
        %v1015 = vpop.f32.mrf.mxu0
        %1016 = vmatprep.mubr.f32.mxu0 0.0
        %1017 = vmatmul.mubr.f32.gmra.mxu0 %v809
        %v1018 = vpop.f32.mrf.mxu0
        %v1019 = vadd.f32 %v698, %v1018
        %v1020 = vpop.f32.mrf.mxu0
        %1021 = vmatprep.mubr.f32.mxu0 0.0
        %1022 = vmatmul.mubr.f32.gmra.mxu0 %v812
        %v1023 = vpop.f32.mrf.mxu0
        %v1024 = vadd.f32 %v703, %v1023
        %v1025 = vpop.f32.mrf.mxu0
        %1026 = vmatprep.mubr.f32.mxu0 0.0
        %1027 = vmatmul.mubr.f32.gmra.mxu0 %v815
        %v1028 = vpop.f32.mrf.mxu0
        %v1029 = vadd.f32 %v708, %v1028
        %v1030 = vpop.f32.mrf.mxu0
        %1031 = vmatprep.mubr.f32.mxu0 0.0
        %1032 = vmatmul.mubr.f32.gmra.mxu0 %v818
        %v1033 = vpop.f32.mrf.mxu0
        %v1034 = vadd.f32 %v713, %v1033
        %v1035 = vpop.f32.mrf.mxu0
        %1036 = vmatprep.mubr.f32.mxu0 0.0
        %1037 = vmatmul.mubr.f32.gmra.mxu0 %v821
        %v1038 = vpop.f32.mrf.mxu0
        %v1039 = vadd.f32 %v718, %v1038
        %v1040 = vpop.f32.mrf.mxu0
        %1041 = vmatprep.mubr.f32.mxu0 0.0
        %1042 = vmatmul.mubr.f32.gmra.mxu0 %v824
        %v1043 = vpop.f32.mrf.mxu0
        %v1044 = vadd.f32 %v723, %v1043
        %v1045 = vpop.f32.mrf.mxu0
        %1046 = vmatprep.mubr.f32.mxu0 0.0
        %1047 = vmatmul.mubr.f32.gmra.mxu0 %v827
        %v1048 = vpop.f32.mrf.mxu0
        %v1049 = vadd.f32 %v728, %v1048
        %v1050 = vpop.f32.mrf.mxu0
        %1051 = vmatprep.mubr.f32.mxu0 0.0
        %1052 = vmatmul.mubr.f32.gmra.mxu0 %v830
        %v1053 = vpop.f32.mrf.mxu0
        %v1054 = vadd.f32 %v733, %v1053
        %v1055 = vpop.f32.mrf.mxu0
        %1056 = vdwg.mxu0
        %v1057 = vld [vmem:[#allocation2 + $0x2] sm:$0xff]
        %v1058 = vld [vmem:[#allocation2 + $0xa] sm:$0xff]
        %v1059 = vld [vmem:[#allocation2 + $0x1a] sm:$0xff]
        %v1060 = vld [vmem:[#allocation2 + $0x22] sm:$0xff]
        %v1061 = vld [vmem:[#allocation2 + $0x32] sm:$0xff]
        %v1062 = vld [vmem:[#allocation2 + $0x3a] sm:$0xff]
        %v1063 = vld [vmem:[#allocation2 + $0x4a] sm:$0xff]
        %v1064 = vld [vmem:[#allocation2 + $0x52] sm:$0xff]
        %v1065 = vld [vmem:[#allocation2 + $0x62] sm:$0xff]
        %v1066 = vld [vmem:[#allocation2 + $0x6a] sm:$0xff]
        %v1067 = vld [vmem:[#allocation2 + $0x7a] sm:$0xff]
        %v1068 = vld [vmem:[#allocation2 + $0x82] sm:$0xff]
        %v1069 = vld [vmem:[#allocation2 + $0x92] sm:$0xff]
        %v1070 = vld [vmem:[#allocation2 + $0x9a] sm:$0xff]
        %v1071 = vld [vmem:[#allocation2 + $0xaa] sm:$0xff]
        %v1072 = vld [vmem:[#allocation2 + $0xb2] sm:$0xff]
        %v1073 = vld [vmem:[#allocation2 + $0xc2] sm:$0xff]
        %v1074 = vld [vmem:[#allocation2 + $0xca] sm:$0xff]
        %v1075 = vld [vmem:[#allocation2 + $0xda] sm:$0xff]
        %v1076 = vld [vmem:[#allocation2 + $0xe2] sm:$0xff]
        %v1077 = vld [vmem:[#allocation2 + $0xf2] sm:$0xff]
        %v1078 = vld [vmem:[#allocation2 + $0xfa] sm:$0xff]
        %v1079 = vld [vmem:[#allocation2 + $0x10a] sm:$0xff]
        %v1080 = vld [vmem:[#allocation2 + $0x112] sm:$0xff]
        %v1081 = vld [vmem:[#allocation2 + $0x122] sm:$0xff]
        %v1082 = vld [vmem:[#allocation2 + $0x12a] sm:$0xff]
        %v1083 = vld [vmem:[#allocation2 + $0x13a] sm:$0xff]
        %v1084 = vld [vmem:[#allocation2 + $0x142] sm:$0xff]
        %v1085 = vld [vmem:[#allocation2 + $0x152] sm:$0xff]
        %v1086 = vld [vmem:[#allocation2 + $0x15a] sm:$0xff]
        %v1087 = vld [vmem:[#allocation2 + $0x16a] sm:$0xff]
        %v1088 = vld [vmem:[#allocation2 + $0x172] sm:$0xff]
        %s1089 = scalar_lea.vmem %s1, 128
        %v1090 = vld [vmem:[%s1089] sm:$0xff]
        %v1091 = vld [vmem:[%s1089 + $0x8] sm:$0xff]
        %v1092 = vld [vmem:[%s1089 + $0x10] sm:$0xff]
        %v1093 = vld [vmem:[%s1089 + $0x18] sm:$0xff]
        %v1094 = vld [vmem:[%s1089 + $0x20] sm:$0xff]
        %v1095 = vld [vmem:[%s1089 + $0x28] sm:$0xff]
        %v1096 = vld [vmem:[%s1089 + $0x30] sm:$0xff]
        %v1097 = vld [vmem:[%s1089 + $0x38] sm:$0xff]
        %v1099 = vsel %vm223, %v1057, 0
        %v1102 = vsel %vm223, %v1058, 0
        %v1105 = vsel %vm223, %v1059, 0
        %v1108 = vsel %vm223, %v1060, 0
        %v1111 = vsel %vm223, %v1061, 0
        %v1114 = vsel %vm223, %v1062, 0
        %v1117 = vsel %vm223, %v1063, 0
        %v1120 = vsel %vm223, %v1064, 0
        %v1123 = vsel %vm223, %v1065, 0
        %v1126 = vsel %vm223, %v1066, 0
        %v1129 = vsel %vm223, %v1067, 0
        %v1132 = vsel %vm223, %v1068, 0
        %v1135 = vsel %vm223, %v1069, 0
        %v1138 = vsel %vm223, %v1070, 0
        %v1141 = vsel %vm223, %v1071, 0
        %v1144 = vsel %vm223, %v1072, 0
        %v1147 = vsel %vm223, %v1073, 0
        %v1150 = vsel %vm223, %v1074, 0
        %v1153 = vsel %vm223, %v1075, 0
        %v1156 = vsel %vm223, %v1076, 0
        %v1159 = vsel %vm223, %v1077, 0
        %v1162 = vsel %vm223, %v1078, 0
        %v1165 = vsel %vm223, %v1079, 0
        %v1168 = vsel %vm223, %v1080, 0
        %v1171 = vsel %vm223, %v1081, 0
        %v1174 = vsel %vm223, %v1082, 0
        %v1177 = vsel %vm223, %v1083, 0
        %v1180 = vsel %vm223, %v1084, 0
        %v1183 = vsel %vm223, %v1085, 0
        %v1186 = vsel %vm223, %v1086, 0
        %v1189 = vsel %vm223, %v1087, 0
        %v1192 = vsel %vm223, %v1088, 0
        %1194 = vmatprep.subr.mxu0 0.0
        %1195 = vmatpush1.msra.mxu0 0.0
        %1196 = vmatprep.subr.mxu0 0.0
        %1197 = vmatpush1.msra.mxu0 0.0
        %1198 = vmatprep.subr.mxu0 0.0
        %1199 = vmatpush1.msra.mxu0 0.0
        %1200 = vmatprep.subr.mxu0 0.0
        %1201 = vmatpush1.msra.mxu0 0.0
        %1202 = vmatprep.subr.mxu0 0.0
        %1203 = vmatpush1.msra.mxu0 0.0
        %1204 = vmatprep.subr.mxu0 0.0
        %1205 = vmatpush1.msra.mxu0 0.0
        %1206 = vmatprep.subr.mxu0 0.0
        %1207 = vmatpush1.msra.mxu0 0.0
        %1208 = vmatprep.subr.mxu0 0.0
        %1209 = vmatpush1.msra.mxu0 0.0
        %1210 = vmatprep.subr.mxu0 0.0
        %1211 = vmatpush1.msra.mxu0 %v1097
        %1212 = vmatprep.subr.mxu0 0.0
        %1213 = vmatpush1.msra.mxu0 %v1096
        %1214 = vmatprep.subr.mxu0 0.0
        %1215 = vmatpush1.msra.mxu0 %v1095
        %1216 = vmatprep.subr.mxu0 0.0
        %1217 = vmatpush1.msra.mxu0 %v1094
        %1218 = vmatprep.subr.mxu0 0.0
        %1219 = vmatpush1.msra.mxu0 %v1093
        %1220 = vmatprep.subr.mxu0 0.0
        %1221 = vmatpush1.msra.mxu0 %v1092
        %1222 = vmatprep.subr.mxu0 0.0
        %1223 = vmatpush1.msra.mxu0 %v1091
        %1224 = vmatprep.subr.mxu0 0.0
        %1225 = vmatpush1.msra.mxu0 %v1090
        %1226 = vmatprep.subr.mxu0 0.0
        %1227 = vmatpush2.msra.mxu0 0.0
        %1228 = vmatprep.subr.mxu0 0.0
        %1229 = vmatpush2.msra.mxu0 0.0
        %1230 = vmatprep.subr.mxu0 0.0
        %1231 = vmatpush2.msra.mxu0 0.0
        %1232 = vmatprep.subr.mxu0 0.0
        %1233 = vmatpush2.msra.mxu0 0.0
        %1234 = vmatprep.subr.mxu0 0.0
        %1235 = vmatpush2.msra.mxu0 0.0
        %1236 = vmatprep.subr.mxu0 0.0
        %1237 = vmatpush2.msra.mxu0 0.0
        %1238 = vmatprep.subr.mxu0 0.0
        %1239 = vmatpush2.msra.mxu0 0.0
        %1240 = vmatprep.subr.mxu0 0.0
        %1241 = vmatpush2.msra.mxu0 0.0
        %1242 = vmatprep.subr.mxu0 0.0
        %1243 = vmatpush2.msra.mxu0 0.0
        %1244 = vmatprep.subr.mxu0 0.0
        %1245 = vmatpush2.msra.mxu0 0.0
        %1246 = vmatprep.subr.mxu0 0.0
        %1247 = vmatpush2.msra.mxu0 0.0
        %1248 = vmatprep.subr.mxu0 0.0
        %1249 = vmatpush2.msra.mxu0 0.0
        %1250 = vmatprep.subr.mxu0 0.0
        %1251 = vmatpush2.msra.mxu0 0.0
        %1252 = vmatprep.subr.mxu0 0.0
        %1253 = vmatpush2.msra.mxu0 0.0
        %1254 = vmatprep.subr.mxu0 0.0
        %1255 = vmatpush2.msra.mxu0 0.0
        %1256 = vmatprep.subr.mxu0 0.0
        %1257 = vmatpush2.msra.mxu0 0.0
        %1258 = vmatprep.mubr.f32.mxu0 0.0
        %1259 = vmatmul.mubr.f32.gmra.mxu0 %v1099
        %v1260 = vpop.f32.mrf.mxu0
        %v1261 = vadd.f32 0.0, %v1260
        %v1262 = vpop.f32.mrf.mxu0
        %1263 = vmatprep.mubr.f32.mxu0 0.0
        %1264 = vmatmul.mubr.f32.gmra.mxu0 %v1102
        %v1265 = vpop.f32.mrf.mxu0
        %v1266 = vadd.f32 0.0, %v1265
        %v1267 = vpop.f32.mrf.mxu0
        %1268 = vmatprep.mubr.f32.mxu0 0.0
        %1269 = vmatmul.mubr.f32.gmra.mxu0 %v1105
        %v1270 = vpop.f32.mrf.mxu0
        %v1271 = vadd.f32 0.0, %v1270
        %v1272 = vpop.f32.mrf.mxu0
        %1273 = vmatprep.mubr.f32.mxu0 0.0
        %1274 = vmatmul.mubr.f32.gmra.mxu0 %v1108
        %v1275 = vpop.f32.mrf.mxu0
        %v1276 = vadd.f32 0.0, %v1275
        %v1277 = vpop.f32.mrf.mxu0
        %1278 = vmatprep.mubr.f32.mxu0 0.0
        %1279 = vmatmul.mubr.f32.gmra.mxu0 %v1111
        %v1280 = vpop.f32.mrf.mxu0
        %v1281 = vadd.f32 0.0, %v1280
        %v1282 = vpop.f32.mrf.mxu0
        %1283 = vmatprep.mubr.f32.mxu0 0.0
        %1284 = vmatmul.mubr.f32.gmra.mxu0 %v1114
        %v1285 = vpop.f32.mrf.mxu0
        %v1286 = vadd.f32 0.0, %v1285
        %v1287 = vpop.f32.mrf.mxu0
        %1288 = vmatprep.mubr.f32.mxu0 0.0
        %1289 = vmatmul.mubr.f32.gmra.mxu0 %v1117
        %v1290 = vpop.f32.mrf.mxu0
        %v1291 = vadd.f32 0.0, %v1290
        %v1292 = vpop.f32.mrf.mxu0
        %1293 = vmatprep.mubr.f32.mxu0 0.0
        %1294 = vmatmul.mubr.f32.gmra.mxu0 %v1120
        %v1295 = vpop.f32.mrf.mxu0
        %v1296 = vadd.f32 0.0, %v1295
        %v1297 = vpop.f32.mrf.mxu0
        %1298 = vmatprep.mubr.f32.mxu0 0.0
        %1299 = vmatmul.mubr.f32.gmra.mxu0 %v1123
        %v1300 = vpop.f32.mrf.mxu0
        %v1301 = vadd.f32 0.0, %v1300
        %v1302 = vpop.f32.mrf.mxu0
        %1303 = vmatprep.mubr.f32.mxu0 0.0
        %1304 = vmatmul.mubr.f32.gmra.mxu0 %v1126
        %v1305 = vpop.f32.mrf.mxu0
        %v1306 = vadd.f32 0.0, %v1305
        %v1307 = vpop.f32.mrf.mxu0
        %1308 = vmatprep.mubr.f32.mxu0 0.0
        %1309 = vmatmul.mubr.f32.gmra.mxu0 %v1129
        %v1310 = vpop.f32.mrf.mxu0
        %v1311 = vadd.f32 0.0, %v1310
        %v1312 = vpop.f32.mrf.mxu0
        %1313 = vmatprep.mubr.f32.mxu0 0.0
        %1314 = vmatmul.mubr.f32.gmra.mxu0 %v1132
        %v1315 = vpop.f32.mrf.mxu0
        %v1316 = vadd.f32 0.0, %v1315
        %v1317 = vpop.f32.mrf.mxu0
        %1318 = vmatprep.mubr.f32.mxu0 0.0
        %1319 = vmatmul.mubr.f32.gmra.mxu0 %v1135
        %v1320 = vpop.f32.mrf.mxu0
        %v1321 = vadd.f32 0.0, %v1320
        %v1322 = vpop.f32.mrf.mxu0
        %1323 = vmatprep.mubr.f32.mxu0 0.0
        %1324 = vmatmul.mubr.f32.gmra.mxu0 %v1138
        %v1325 = vpop.f32.mrf.mxu0
        %v1326 = vadd.f32 0.0, %v1325
        %v1327 = vpop.f32.mrf.mxu0
        %1328 = vmatprep.mubr.f32.mxu0 0.0
        %1329 = vmatmul.mubr.f32.gmra.mxu0 %v1141
        %v1330 = vpop.f32.mrf.mxu0
        %v1331 = vadd.f32 0.0, %v1330
        %v1332 = vpop.f32.mrf.mxu0
        %1333 = vmatprep.mubr.f32.mxu0 0.0
        %1334 = vmatmul.mubr.f32.gmra.mxu0 %v1144
        %v1335 = vpop.f32.mrf.mxu0
        %v1336 = vadd.f32 0.0, %v1335
        %v1337 = vpop.f32.mrf.mxu0
        %1338 = vmatprep.mubr.f32.mxu0 0.0
        %1339 = vmatmul.mubr.f32.gmra.mxu0 %v1147
        %v1340 = vpop.f32.mrf.mxu0
        %v1341 = vadd.f32 0.0, %v1340
        %v1342 = vpop.f32.mrf.mxu0
        %1343 = vmatprep.mubr.f32.mxu0 0.0
        %1344 = vmatmul.mubr.f32.gmra.mxu0 %v1150
        %v1345 = vpop.f32.mrf.mxu0
        %v1346 = vadd.f32 0.0, %v1345
        %v1347 = vpop.f32.mrf.mxu0
        %1348 = vmatprep.mubr.f32.mxu0 0.0
        %1349 = vmatmul.mubr.f32.gmra.mxu0 %v1153
        %v1350 = vpop.f32.mrf.mxu0
        %v1351 = vadd.f32 0.0, %v1350
        %v1352 = vpop.f32.mrf.mxu0
        %1353 = vmatprep.mubr.f32.mxu0 0.0
        %1354 = vmatmul.mubr.f32.gmra.mxu0 %v1156
        %v1355 = vpop.f32.mrf.mxu0
        %v1356 = vadd.f32 0.0, %v1355
        %v1357 = vpop.f32.mrf.mxu0
        %1358 = vmatprep.mubr.f32.mxu0 0.0
        %1359 = vmatmul.mubr.f32.gmra.mxu0 %v1159
        %v1360 = vpop.f32.mrf.mxu0
        %v1361 = vadd.f32 0.0, %v1360
        %v1362 = vpop.f32.mrf.mxu0
        %1363 = vmatprep.mubr.f32.mxu0 0.0
        %1364 = vmatmul.mubr.f32.gmra.mxu0 %v1162
        %v1365 = vpop.f32.mrf.mxu0
        %v1366 = vadd.f32 0.0, %v1365
        %v1367 = vpop.f32.mrf.mxu0
        %1368 = vmatprep.mubr.f32.mxu0 0.0
        %1369 = vmatmul.mubr.f32.gmra.mxu0 %v1165
        %v1370 = vpop.f32.mrf.mxu0
        %v1371 = vadd.f32 0.0, %v1370
        %v1372 = vpop.f32.mrf.mxu0
        %1373 = vmatprep.mubr.f32.mxu0 0.0
        %1374 = vmatmul.mubr.f32.gmra.mxu0 %v1168
        %v1375 = vpop.f32.mrf.mxu0
        %v1376 = vadd.f32 0.0, %v1375
        %v1377 = vpop.f32.mrf.mxu0
        %1378 = vmatprep.mubr.f32.mxu0 0.0
        %1379 = vmatmul.mubr.f32.gmra.mxu0 %v1171
        %v1380 = vpop.f32.mrf.mxu0
        %v1381 = vadd.f32 0.0, %v1380
        %v1382 = vpop.f32.mrf.mxu0
        %1383 = vmatprep.mubr.f32.mxu0 0.0
        %1384 = vmatmul.mubr.f32.gmra.mxu0 %v1174
        %v1385 = vpop.f32.mrf.mxu0
        %v1386 = vadd.f32 0.0, %v1385
        %v1387 = vpop.f32.mrf.mxu0
        %1388 = vmatprep.mubr.f32.mxu0 0.0
        %1389 = vmatmul.mubr.f32.gmra.mxu0 %v1177
        %v1390 = vpop.f32.mrf.mxu0
        %v1391 = vadd.f32 0.0, %v1390
        %v1392 = vpop.f32.mrf.mxu0
        %1393 = vmatprep.mubr.f32.mxu0 0.0
        %1394 = vmatmul.mubr.f32.gmra.mxu0 %v1180
        %v1395 = vpop.f32.mrf.mxu0
        %v1396 = vadd.f32 0.0, %v1395
        %v1397 = vpop.f32.mrf.mxu0
        %1398 = vmatprep.mubr.f32.mxu0 0.0
        %1399 = vmatmul.mubr.f32.gmra.mxu0 %v1183
        %v1400 = vpop.f32.mrf.mxu0
        %v1401 = vadd.f32 0.0, %v1400
        %v1402 = vpop.f32.mrf.mxu0
        %1403 = vmatprep.mubr.f32.mxu0 0.0
        %1404 = vmatmul.mubr.f32.gmra.mxu0 %v1186
        %v1405 = vpop.f32.mrf.mxu0
        %v1406 = vadd.f32 0.0, %v1405
        %v1407 = vpop.f32.mrf.mxu0
        %1408 = vmatprep.mubr.f32.mxu0 0.0
        %1409 = vmatmul.mubr.f32.gmra.mxu0 %v1189
        %v1410 = vpop.f32.mrf.mxu0
        %v1411 = vadd.f32 0.0, %v1410
        %v1412 = vpop.f32.mrf.mxu0
        %1413 = vmatprep.mubr.f32.mxu0 0.0
        %1414 = vmatmul.mubr.f32.gmra.mxu0 %v1192
        %v1415 = vpop.f32.mrf.mxu0
        %v1416 = vadd.f32 0.0, %v1415
        %v1417 = vpop.f32.mrf.mxu0
        %1418 = vdwg.mxu0
        %v1419 = vadd.f32 %v899, %v1261
        %v1420 = vadd.f32 %v904, %v1266
        %v1421 = vadd.f32 %v909, %v1271
        %v1422 = vadd.f32 %v914, %v1276
        %v1423 = vadd.f32 %v919, %v1281
        %v1424 = vadd.f32 %v924, %v1286
        %v1425 = vadd.f32 %v929, %v1291
        %v1426 = vadd.f32 %v934, %v1296
        %v1427 = vadd.f32 %v939, %v1301
        %v1428 = vadd.f32 %v944, %v1306
        %v1429 = vadd.f32 %v949, %v1311
        %v1430 = vadd.f32 %v954, %v1316
        %v1431 = vadd.f32 %v959, %v1321
        %v1432 = vadd.f32 %v964, %v1326
        %v1433 = vadd.f32 %v969, %v1331
        %v1434 = vadd.f32 %v974, %v1336
        %v1435 = vadd.f32 %v979, %v1341
        %v1436 = vadd.f32 %v984, %v1346
        %v1437 = vadd.f32 %v989, %v1351
        %v1438 = vadd.f32 %v994, %v1356
        %v1439 = vadd.f32 %v999, %v1361
        %v1440 = vadd.f32 %v1004, %v1366
        %v1441 = vadd.f32 %v1009, %v1371
        %v1442 = vadd.f32 %v1014, %v1376
        %v1443 = vadd.f32 %v1019, %v1381
        %v1444 = vadd.f32 %v1024, %v1386
        %v1445 = vadd.f32 %v1029, %v1391
        %v1446 = vadd.f32 %v1034, %v1396
        %v1447 = vadd.f32 %v1039, %v1401
        %v1448 = vadd.f32 %v1044, %v1406
        %v1449 = vadd.f32 %v1049, %v1411
        %v1450 = vadd.f32 %v1054, %v1416
        %v1451 = vld [vmem:[%s301] sm:$0xff]
        %v1452 = vld [vmem:[%s301 + $0x8] sm:$0xff]
        %v1453 = vld [vmem:[%s301 + $0x18] sm:$0xff]
        %v1454 = vld [vmem:[%s301 + $0x20] sm:$0xff]
        %v1455 = vld [vmem:[%s301 + $0x30] sm:$0xff]
        %v1456 = vld [vmem:[%s301 + $0x38] sm:$0xff]
        %v1457 = vld [vmem:[%s301 + $0x48] sm:$0xff]
        %v1458 = vld [vmem:[%s301 + $0x50] sm:$0xff]
        %v1459 = vld [vmem:[%s301 + $0x60] sm:$0xff]
        %v1460 = vld [vmem:[%s301 + $0x68] sm:$0xff]
        %v1461 = vld [vmem:[%s301 + $0x78] sm:$0xff]
        %v1462 = vld [vmem:[%s301 + $0x80] sm:$0xff]
        %v1463 = vld [vmem:[%s301 + $0x90] sm:$0xff]
        %v1464 = vld [vmem:[%s301 + $0x98] sm:$0xff]
        %v1465 = vld [vmem:[%s301 + $0xa8] sm:$0xff]
        %v1466 = vld [vmem:[%s301 + $0xb0] sm:$0xff]
        %v1467 = vld [vmem:[%s301 + $0xc0] sm:$0xff]
        %v1468 = vld [vmem:[%s301 + $0xc8] sm:$0xff]
        %v1469 = vld [vmem:[%s301 + $0xd8] sm:$0xff]
        %v1470 = vld [vmem:[%s301 + $0xe0] sm:$0xff]
        %v1471 = vld [vmem:[%s301 + $0xf0] sm:$0xff]
        %v1472 = vld [vmem:[%s301 + $0xf8] sm:$0xff]
        %v1473 = vld [vmem:[%s301 + $0x108] sm:$0xff]
        %v1474 = vld [vmem:[%s301 + $0x110] sm:$0xff]
        %v1475 = vld [vmem:[%s301 + $0x120] sm:$0xff]
        %v1476 = vld [vmem:[%s301 + $0x128] sm:$0xff]
        %v1477 = vld [vmem:[%s301 + $0x138] sm:$0xff]
        %v1478 = vld [vmem:[%s301 + $0x140] sm:$0xff]
        %v1479 = vld [vmem:[%s301 + $0x150] sm:$0xff]
        %v1480 = vld [vmem:[%s301 + $0x158] sm:$0xff]
        %v1481 = vld [vmem:[%s301 + $0x168] sm:$0xff]
        %v1482 = vld [vmem:[%s301 + $0x170] sm:$0xff]
        %s1483 = scalar_lea.vmem %s1, 192
        %v1484 = vld [vmem:[%s1483] sm:$0xff]
        %v1485 = vld [vmem:[%s1483 + $0x8] sm:$0xff]
        %v1486 = vld [vmem:[%s1483 + $0x10] sm:$0xff]
        %v1487 = vld [vmem:[%s1483 + $0x18] sm:$0xff]
        %v1488 = vld [vmem:[%s1483 + $0x20] sm:$0xff]
        %v1489 = vld [vmem:[%s1483 + $0x28] sm:$0xff]
        %v1490 = vld [vmem:[%s1483 + $0x30] sm:$0xff]
        %v1491 = vld [vmem:[%s1483 + $0x38] sm:$0xff]
        %v1493 = vsel %vm223, %v1451, 0
        %v1496 = vsel %vm223, %v1452, 0
        %v1499 = vsel %vm223, %v1453, 0
        %v1502 = vsel %vm223, %v1454, 0
        %v1505 = vsel %vm223, %v1455, 0
        %v1508 = vsel %vm223, %v1456, 0
        %v1511 = vsel %vm223, %v1457, 0
        %v1514 = vsel %vm223, %v1458, 0
        %v1517 = vsel %vm223, %v1459, 0
        %v1520 = vsel %vm223, %v1460, 0
        %v1523 = vsel %vm223, %v1461, 0
        %v1526 = vsel %vm223, %v1462, 0
        %v1529 = vsel %vm223, %v1463, 0
        %v1532 = vsel %vm223, %v1464, 0
        %v1535 = vsel %vm223, %v1465, 0
        %v1538 = vsel %vm223, %v1466, 0
        %v1541 = vsel %vm223, %v1467, 0
        %v1544 = vsel %vm223, %v1468, 0
        %v1547 = vsel %vm223, %v1469, 0
        %v1550 = vsel %vm223, %v1470, 0
        %v1553 = vsel %vm223, %v1471, 0
        %v1556 = vsel %vm223, %v1472, 0
        %v1559 = vsel %vm223, %v1473, 0
        %v1562 = vsel %vm223, %v1474, 0
        %v1565 = vsel %vm223, %v1475, 0
        %v1568 = vsel %vm223, %v1476, 0
        %v1571 = vsel %vm223, %v1477, 0
        %v1574 = vsel %vm223, %v1478, 0
        %v1577 = vsel %vm223, %v1479, 0
        %v1580 = vsel %vm223, %v1480, 0
        %v1583 = vsel %vm223, %v1481, 0
        %v1586 = vsel %vm223, %v1482, 0
        %1588 = vmatprep.subr.mxu0 0.0
        %1589 = vmatpush1.msra.mxu0 0.0
        %1590 = vmatprep.subr.mxu0 0.0
        %1591 = vmatpush1.msra.mxu0 0.0
        %1592 = vmatprep.subr.mxu0 0.0
        %1593 = vmatpush1.msra.mxu0 0.0
        %1594 = vmatprep.subr.mxu0 0.0
        %1595 = vmatpush1.msra.mxu0 0.0
        %1596 = vmatprep.subr.mxu0 0.0
        %1597 = vmatpush1.msra.mxu0 0.0
        %1598 = vmatprep.subr.mxu0 0.0
        %1599 = vmatpush1.msra.mxu0 0.0
        %1600 = vmatprep.subr.mxu0 0.0
        %1601 = vmatpush1.msra.mxu0 0.0
        %1602 = vmatprep.subr.mxu0 0.0
        %1603 = vmatpush1.msra.mxu0 0.0
        %1604 = vmatprep.subr.mxu0 0.0
        %1605 = vmatpush1.msra.mxu0 %v1491
        %1606 = vmatprep.subr.mxu0 0.0
        %1607 = vmatpush1.msra.mxu0 %v1490
        %1608 = vmatprep.subr.mxu0 0.0
        %1609 = vmatpush1.msra.mxu0 %v1489
        %1610 = vmatprep.subr.mxu0 0.0
        %1611 = vmatpush1.msra.mxu0 %v1488
        %1612 = vmatprep.subr.mxu0 0.0
        %1613 = vmatpush1.msra.mxu0 %v1487
        %1614 = vmatprep.subr.mxu0 0.0
        %1615 = vmatpush1.msra.mxu0 %v1486
        %1616 = vmatprep.subr.mxu0 0.0
        %1617 = vmatpush1.msra.mxu0 %v1485
        %1618 = vmatprep.subr.mxu0 0.0
        %1619 = vmatpush1.msra.mxu0 %v1484
        %1620 = vmatprep.subr.mxu0 0.0
        %1621 = vmatpush2.msra.mxu0 0.0
        %1622 = vmatprep.subr.mxu0 0.0
        %1623 = vmatpush2.msra.mxu0 0.0
        %1624 = vmatprep.subr.mxu0 0.0
        %1625 = vmatpush2.msra.mxu0 0.0
        %1626 = vmatprep.subr.mxu0 0.0
        %1627 = vmatpush2.msra.mxu0 0.0
        %1628 = vmatprep.subr.mxu0 0.0
        %1629 = vmatpush2.msra.mxu0 0.0
        %1630 = vmatprep.subr.mxu0 0.0
        %1631 = vmatpush2.msra.mxu0 0.0
        %1632 = vmatprep.subr.mxu0 0.0
        %1633 = vmatpush2.msra.mxu0 0.0
        %1634 = vmatprep.subr.mxu0 0.0
        %1635 = vmatpush2.msra.mxu0 0.0
        %1636 = vmatprep.subr.mxu0 0.0
        %1637 = vmatpush2.msra.mxu0 0.0
        %1638 = vmatprep.subr.mxu0 0.0
        %1639 = vmatpush2.msra.mxu0 0.0
        %1640 = vmatprep.subr.mxu0 0.0
        %1641 = vmatpush2.msra.mxu0 0.0
        %1642 = vmatprep.subr.mxu0 0.0
        %1643 = vmatpush2.msra.mxu0 0.0
        %1644 = vmatprep.subr.mxu0 0.0
        %1645 = vmatpush2.msra.mxu0 0.0
        %1646 = vmatprep.subr.mxu0 0.0
        %1647 = vmatpush2.msra.mxu0 0.0
        %1648 = vmatprep.subr.mxu0 0.0
        %1649 = vmatpush2.msra.mxu0 0.0
        %1650 = vmatprep.subr.mxu0 0.0
        %1651 = vmatpush2.msra.mxu0 0.0
        %1652 = vmatprep.mubr.f32.mxu0 0.0
        %1653 = vmatmul.mubr.f32.gmra.mxu0 %v1493
        %v1654 = vpop.f32.mrf.mxu0
        %v1655 = vadd.f32 0.0, %v1654
        %v1656 = vpop.f32.mrf.mxu0
        %1657 = vmatprep.mubr.f32.mxu0 0.0
        %1658 = vmatmul.mubr.f32.gmra.mxu0 %v1496
        %v1659 = vpop.f32.mrf.mxu0
        %v1660 = vadd.f32 0.0, %v1659
        %v1661 = vpop.f32.mrf.mxu0
        %1662 = vmatprep.mubr.f32.mxu0 0.0
        %1663 = vmatmul.mubr.f32.gmra.mxu0 %v1499
        %v1664 = vpop.f32.mrf.mxu0
        %v1665 = vadd.f32 0.0, %v1664
        %v1666 = vpop.f32.mrf.mxu0
        %1667 = vmatprep.mubr.f32.mxu0 0.0
        %1668 = vmatmul.mubr.f32.gmra.mxu0 %v1502
        %v1669 = vpop.f32.mrf.mxu0
        %v1670 = vadd.f32 0.0, %v1669
        %v1671 = vpop.f32.mrf.mxu0
        %1672 = vmatprep.mubr.f32.mxu0 0.0
        %1673 = vmatmul.mubr.f32.gmra.mxu0 %v1505
        %v1674 = vpop.f32.mrf.mxu0
        %v1675 = vadd.f32 0.0, %v1674
        %v1676 = vpop.f32.mrf.mxu0
        %1677 = vmatprep.mubr.f32.mxu0 0.0
        %1678 = vmatmul.mubr.f32.gmra.mxu0 %v1508
        %v1679 = vpop.f32.mrf.mxu0
        %v1680 = vadd.f32 0.0, %v1679
        %v1681 = vpop.f32.mrf.mxu0
        %1682 = vmatprep.mubr.f32.mxu0 0.0
        %1683 = vmatmul.mubr.f32.gmra.mxu0 %v1511
        %v1684 = vpop.f32.mrf.mxu0
        %v1685 = vadd.f32 0.0, %v1684
        %v1686 = vpop.f32.mrf.mxu0
        %1687 = vmatprep.mubr.f32.mxu0 0.0
        %1688 = vmatmul.mubr.f32.gmra.mxu0 %v1514
        %v1689 = vpop.f32.mrf.mxu0
        %v1690 = vadd.f32 0.0, %v1689
        %v1691 = vpop.f32.mrf.mxu0
        %1692 = vmatprep.mubr.f32.mxu0 0.0
        %1693 = vmatmul.mubr.f32.gmra.mxu0 %v1517
        %v1694 = vpop.f32.mrf.mxu0
        %v1695 = vadd.f32 0.0, %v1694
        %v1696 = vpop.f32.mrf.mxu0
        %1697 = vmatprep.mubr.f32.mxu0 0.0
        %1698 = vmatmul.mubr.f32.gmra.mxu0 %v1520
        %v1699 = vpop.f32.mrf.mxu0
        %v1700 = vadd.f32 0.0, %v1699
        %v1701 = vpop.f32.mrf.mxu0
        %1702 = vmatprep.mubr.f32.mxu0 0.0
        %1703 = vmatmul.mubr.f32.gmra.mxu0 %v1523
        %v1704 = vpop.f32.mrf.mxu0
        %v1705 = vadd.f32 0.0, %v1704
        %v1706 = vpop.f32.mrf.mxu0
        %1707 = vmatprep.mubr.f32.mxu0 0.0
        %1708 = vmatmul.mubr.f32.gmra.mxu0 %v1526
        %v1709 = vpop.f32.mrf.mxu0
        %v1710 = vadd.f32 0.0, %v1709
        %v1711 = vpop.f32.mrf.mxu0
        %1712 = vmatprep.mubr.f32.mxu0 0.0
        %1713 = vmatmul.mubr.f32.gmra.mxu0 %v1529
        %v1714 = vpop.f32.mrf.mxu0
        %v1715 = vadd.f32 0.0, %v1714
        %v1716 = vpop.f32.mrf.mxu0
        %1717 = vmatprep.mubr.f32.mxu0 0.0
        %1718 = vmatmul.mubr.f32.gmra.mxu0 %v1532
        %v1719 = vpop.f32.mrf.mxu0
        %v1720 = vadd.f32 0.0, %v1719
        %v1721 = vpop.f32.mrf.mxu0
        %1722 = vmatprep.mubr.f32.mxu0 0.0
        %1723 = vmatmul.mubr.f32.gmra.mxu0 %v1535
        %v1724 = vpop.f32.mrf.mxu0
        %v1725 = vadd.f32 0.0, %v1724
        %v1726 = vpop.f32.mrf.mxu0
        %1727 = vmatprep.mubr.f32.mxu0 0.0
        %1728 = vmatmul.mubr.f32.gmra.mxu0 %v1538
        %v1729 = vpop.f32.mrf.mxu0
        %v1730 = vadd.f32 0.0, %v1729
        %v1731 = vpop.f32.mrf.mxu0
        %1732 = vmatprep.mubr.f32.mxu0 0.0
        %1733 = vmatmul.mubr.f32.gmra.mxu0 %v1541
        %v1734 = vpop.f32.mrf.mxu0
        %v1735 = vadd.f32 0.0, %v1734
        %v1736 = vpop.f32.mrf.mxu0
        %1737 = vmatprep.mubr.f32.mxu0 0.0
        %1738 = vmatmul.mubr.f32.gmra.mxu0 %v1544
        %v1739 = vpop.f32.mrf.mxu0
        %v1740 = vadd.f32 0.0, %v1739
        %v1741 = vpop.f32.mrf.mxu0
        %1742 = vmatprep.mubr.f32.mxu0 0.0
        %1743 = vmatmul.mubr.f32.gmra.mxu0 %v1547
        %v1744 = vpop.f32.mrf.mxu0
        %v1745 = vadd.f32 0.0, %v1744
        %v1746 = vpop.f32.mrf.mxu0
        %1747 = vmatprep.mubr.f32.mxu0 0.0
        %1748 = vmatmul.mubr.f32.gmra.mxu0 %v1550
        %v1749 = vpop.f32.mrf.mxu0
        %v1750 = vadd.f32 0.0, %v1749
        %v1751 = vpop.f32.mrf.mxu0
        %1752 = vmatprep.mubr.f32.mxu0 0.0
        %1753 = vmatmul.mubr.f32.gmra.mxu0 %v1553
        %v1754 = vpop.f32.mrf.mxu0
        %v1755 = vadd.f32 0.0, %v1754
        %v1756 = vpop.f32.mrf.mxu0
        %1757 = vmatprep.mubr.f32.mxu0 0.0
        %1758 = vmatmul.mubr.f32.gmra.mxu0 %v1556
        %v1759 = vpop.f32.mrf.mxu0
        %v1760 = vadd.f32 0.0, %v1759
        %v1761 = vpop.f32.mrf.mxu0
        %1762 = vmatprep.mubr.f32.mxu0 0.0
        %1763 = vmatmul.mubr.f32.gmra.mxu0 %v1559
        %v1764 = vpop.f32.mrf.mxu0
        %v1765 = vadd.f32 0.0, %v1764
        %v1766 = vpop.f32.mrf.mxu0
        %1767 = vmatprep.mubr.f32.mxu0 0.0
        %1768 = vmatmul.mubr.f32.gmra.mxu0 %v1562
        %v1769 = vpop.f32.mrf.mxu0
        %v1770 = vadd.f32 0.0, %v1769
        %v1771 = vpop.f32.mrf.mxu0
        %1772 = vmatprep.mubr.f32.mxu0 0.0
        %1773 = vmatmul.mubr.f32.gmra.mxu0 %v1565
        %v1774 = vpop.f32.mrf.mxu0
        %v1775 = vadd.f32 0.0, %v1774
        %v1776 = vpop.f32.mrf.mxu0
        %1777 = vmatprep.mubr.f32.mxu0 0.0
        %1778 = vmatmul.mubr.f32.gmra.mxu0 %v1568
        %v1779 = vpop.f32.mrf.mxu0
        %v1780 = vadd.f32 0.0, %v1779
        %v1781 = vpop.f32.mrf.mxu0
        %1782 = vmatprep.mubr.f32.mxu0 0.0
        %1783 = vmatmul.mubr.f32.gmra.mxu0 %v1571
        %v1784 = vpop.f32.mrf.mxu0
        %v1785 = vadd.f32 0.0, %v1784
        %v1786 = vpop.f32.mrf.mxu0
        %1787 = vmatprep.mubr.f32.mxu0 0.0
        %1788 = vmatmul.mubr.f32.gmra.mxu0 %v1574
        %v1789 = vpop.f32.mrf.mxu0
        %v1790 = vadd.f32 0.0, %v1789
        %v1791 = vpop.f32.mrf.mxu0
        %1792 = vmatprep.mubr.f32.mxu0 0.0
        %1793 = vmatmul.mubr.f32.gmra.mxu0 %v1577
        %v1794 = vpop.f32.mrf.mxu0
        %v1795 = vadd.f32 0.0, %v1794
        %v1796 = vpop.f32.mrf.mxu0
        %1797 = vmatprep.mubr.f32.mxu0 0.0
        %1798 = vmatmul.mubr.f32.gmra.mxu0 %v1580
        %v1799 = vpop.f32.mrf.mxu0
        %v1800 = vadd.f32 0.0, %v1799
        %v1801 = vpop.f32.mrf.mxu0
        %1802 = vmatprep.mubr.f32.mxu0 0.0
        %1803 = vmatmul.mubr.f32.gmra.mxu0 %v1583
        %v1804 = vpop.f32.mrf.mxu0
        %v1805 = vadd.f32 0.0, %v1804
        %v1806 = vpop.f32.mrf.mxu0
        %1807 = vmatprep.mubr.f32.mxu0 0.0
        %1808 = vmatmul.mubr.f32.gmra.mxu0 %v1586
        %v1809 = vpop.f32.mrf.mxu0
        %v1810 = vadd.f32 0.0, %v1809
        %v1811 = vpop.f32.mrf.mxu0
        %1812 = vdwg.mxu0
        %v1813 = vadd.f32 %v1419, %v1655
        %v1814 = vadd.f32 %v1420, %v1660
        %v1815 = vadd.f32 %v1421, %v1665
        %v1816 = vadd.f32 %v1422, %v1670
        %v1817 = vadd.f32 %v1423, %v1675
        %v1818 = vadd.f32 %v1424, %v1680
        %v1819 = vadd.f32 %v1425, %v1685
        %v1820 = vadd.f32 %v1426, %v1690
        %v1821 = vadd.f32 %v1427, %v1695
        %v1822 = vadd.f32 %v1428, %v1700
        %v1823 = vadd.f32 %v1429, %v1705
        %v1824 = vadd.f32 %v1430, %v1710
        %v1825 = vadd.f32 %v1431, %v1715
        %v1826 = vadd.f32 %v1432, %v1720
        %v1827 = vadd.f32 %v1433, %v1725
        %v1828 = vadd.f32 %v1434, %v1730
        %v1829 = vadd.f32 %v1435, %v1735
        %v1830 = vadd.f32 %v1436, %v1740
        %v1831 = vadd.f32 %v1437, %v1745
        %v1832 = vadd.f32 %v1438, %v1750
        %v1833 = vadd.f32 %v1439, %v1755
        %v1834 = vadd.f32 %v1440, %v1760
        %v1835 = vadd.f32 %v1441, %v1765
        %v1836 = vadd.f32 %v1442, %v1770
        %v1837 = vadd.f32 %v1443, %v1775
        %v1838 = vadd.f32 %v1444, %v1780
        %v1839 = vadd.f32 %v1445, %v1785
        %v1840 = vadd.f32 %v1446, %v1790
        %v1841 = vadd.f32 %v1447, %v1795
        %v1842 = vadd.f32 %v1448, %v1800
        %v1843 = vadd.f32 %v1449, %v1805
        %v1844 = vadd.f32 %v1450, %v1810
        %v1845 = vld [vmem:[%s301 + $0x1] sm:$0xff]
        %v1846 = vld [vmem:[%s301 + $0x9] sm:$0xff]
        %v1847 = vld [vmem:[%s301 + $0x19] sm:$0xff]
        %v1848 = vld [vmem:[%s301 + $0x21] sm:$0xff]
        %v1849 = vld [vmem:[%s301 + $0x31] sm:$0xff]
        %v1850 = vld [vmem:[%s301 + $0x39] sm:$0xff]
        %v1851 = vld [vmem:[%s301 + $0x49] sm:$0xff]
        %v1852 = vld [vmem:[%s301 + $0x51] sm:$0xff]
        %v1853 = vld [vmem:[%s301 + $0x61] sm:$0xff]
        %v1854 = vld [vmem:[%s301 + $0x69] sm:$0xff]
        %v1855 = vld [vmem:[%s301 + $0x79] sm:$0xff]
        %v1856 = vld [vmem:[%s301 + $0x81] sm:$0xff]
        %v1857 = vld [vmem:[%s301 + $0x91] sm:$0xff]
        %v1858 = vld [vmem:[%s301 + $0x99] sm:$0xff]
        %v1859 = vld [vmem:[%s301 + $0xa9] sm:$0xff]
        %v1860 = vld [vmem:[%s301 + $0xb1] sm:$0xff]
        %v1861 = vld [vmem:[%s301 + $0xc1] sm:$0xff]
        %v1862 = vld [vmem:[%s301 + $0xc9] sm:$0xff]
        %v1863 = vld [vmem:[%s301 + $0xd9] sm:$0xff]
        %v1864 = vld [vmem:[%s301 + $0xe1] sm:$0xff]
        %v1865 = vld [vmem:[%s301 + $0xf1] sm:$0xff]
        %v1866 = vld [vmem:[%s301 + $0xf9] sm:$0xff]
        %v1867 = vld [vmem:[%s301 + $0x109] sm:$0xff]
        %v1868 = vld [vmem:[%s301 + $0x111] sm:$0xff]
        %v1869 = vld [vmem:[%s301 + $0x121] sm:$0xff]
        %v1870 = vld [vmem:[%s301 + $0x129] sm:$0xff]
        %v1871 = vld [vmem:[%s301 + $0x139] sm:$0xff]
        %v1872 = vld [vmem:[%s301 + $0x141] sm:$0xff]
        %v1873 = vld [vmem:[%s301 + $0x151] sm:$0xff]
        %v1874 = vld [vmem:[%s301 + $0x159] sm:$0xff]
        %v1875 = vld [vmem:[%s301 + $0x169] sm:$0xff]
        %v1876 = vld [vmem:[%s301 + $0x171] sm:$0xff]
        %s1877 = scalar_lea.vmem %s1, 256
        %v1878 = vld [vmem:[%s1877] sm:$0xff]
        %v1879 = vld [vmem:[%s1877 + $0x8] sm:$0xff]
        %v1880 = vld [vmem:[%s1877 + $0x10] sm:$0xff]
        %v1881 = vld [vmem:[%s1877 + $0x18] sm:$0xff]
        %v1882 = vld [vmem:[%s1877 + $0x20] sm:$0xff]
        %v1883 = vld [vmem:[%s1877 + $0x28] sm:$0xff]
        %v1884 = vld [vmem:[%s1877 + $0x30] sm:$0xff]
        %v1885 = vld [vmem:[%s1877 + $0x38] sm:$0xff]
        %v1887 = vsel %vm223, %v1845, 0
        %v1890 = vsel %vm223, %v1846, 0
        %v1893 = vsel %vm223, %v1847, 0
        %v1896 = vsel %vm223, %v1848, 0
        %v1899 = vsel %vm223, %v1849, 0
        %v1902 = vsel %vm223, %v1850, 0
        %v1905 = vsel %vm223, %v1851, 0
        %v1908 = vsel %vm223, %v1852, 0
        %v1911 = vsel %vm223, %v1853, 0
        %v1914 = vsel %vm223, %v1854, 0
        %v1917 = vsel %vm223, %v1855, 0
        %v1920 = vsel %vm223, %v1856, 0
        %v1923 = vsel %vm223, %v1857, 0
        %v1926 = vsel %vm223, %v1858, 0
        %v1929 = vsel %vm223, %v1859, 0
        %v1932 = vsel %vm223, %v1860, 0
        %v1935 = vsel %vm223, %v1861, 0
        %v1938 = vsel %vm223, %v1862, 0
        %v1941 = vsel %vm223, %v1863, 0
        %v1944 = vsel %vm223, %v1864, 0
        %v1947 = vsel %vm223, %v1865, 0
        %v1950 = vsel %vm223, %v1866, 0
        %v1953 = vsel %vm223, %v1867, 0
        %v1956 = vsel %vm223, %v1868, 0
        %v1959 = vsel %vm223, %v1869, 0
        %v1962 = vsel %vm223, %v1870, 0
        %v1965 = vsel %vm223, %v1871, 0
        %v1968 = vsel %vm223, %v1872, 0
        %v1971 = vsel %vm223, %v1873, 0
        %v1974 = vsel %vm223, %v1874, 0
        %v1977 = vsel %vm223, %v1875, 0
        %v1980 = vsel %vm223, %v1876, 0
        %1982 = vmatprep.subr.mxu0 0.0
        %1983 = vmatpush1.msra.mxu0 0.0
        %1984 = vmatprep.subr.mxu0 0.0
        %1985 = vmatpush1.msra.mxu0 0.0
        %1986 = vmatprep.subr.mxu0 0.0
        %1987 = vmatpush1.msra.mxu0 0.0
        %1988 = vmatprep.subr.mxu0 0.0
        %1989 = vmatpush1.msra.mxu0 0.0
        %1990 = vmatprep.subr.mxu0 0.0
        %1991 = vmatpush1.msra.mxu0 0.0
        %1992 = vmatprep.subr.mxu0 0.0
        %1993 = vmatpush1.msra.mxu0 0.0
        %1994 = vmatprep.subr.mxu0 0.0
        %1995 = vmatpush1.msra.mxu0 0.0
        %1996 = vmatprep.subr.mxu0 0.0
        %1997 = vmatpush1.msra.mxu0 0.0
        %1998 = vmatprep.subr.mxu0 0.0
        %1999 = vmatpush1.msra.mxu0 %v1885
        %2000 = vmatprep.subr.mxu0 0.0
        %2001 = vmatpush1.msra.mxu0 %v1884
        %2002 = vmatprep.subr.mxu0 0.0
        %2003 = vmatpush1.msra.mxu0 %v1883
        %2004 = vmatprep.subr.mxu0 0.0
        %2005 = vmatpush1.msra.mxu0 %v1882
        %2006 = vmatprep.subr.mxu0 0.0
        %2007 = vmatpush1.msra.mxu0 %v1881
        %2008 = vmatprep.subr.mxu0 0.0
        %2009 = vmatpush1.msra.mxu0 %v1880
        %2010 = vmatprep.subr.mxu0 0.0
        %2011 = vmatpush1.msra.mxu0 %v1879
        %2012 = vmatprep.subr.mxu0 0.0
        %2013 = vmatpush1.msra.mxu0 %v1878
        %2014 = vmatprep.subr.mxu0 0.0
        %2015 = vmatpush2.msra.mxu0 0.0
        %2016 = vmatprep.subr.mxu0 0.0
        %2017 = vmatpush2.msra.mxu0 0.0
        %2018 = vmatprep.subr.mxu0 0.0
        %2019 = vmatpush2.msra.mxu0 0.0
        %2020 = vmatprep.subr.mxu0 0.0
        %2021 = vmatpush2.msra.mxu0 0.0
        %2022 = vmatprep.subr.mxu0 0.0
        %2023 = vmatpush2.msra.mxu0 0.0
        %2024 = vmatprep.subr.mxu0 0.0
        %2025 = vmatpush2.msra.mxu0 0.0
        %2026 = vmatprep.subr.mxu0 0.0
        %2027 = vmatpush2.msra.mxu0 0.0
        %2028 = vmatprep.subr.mxu0 0.0
        %2029 = vmatpush2.msra.mxu0 0.0
        %2030 = vmatprep.subr.mxu0 0.0
        %2031 = vmatpush2.msra.mxu0 0.0
        %2032 = vmatprep.subr.mxu0 0.0
        %2033 = vmatpush2.msra.mxu0 0.0
        %2034 = vmatprep.subr.mxu0 0.0
        %2035 = vmatpush2.msra.mxu0 0.0
        %2036 = vmatprep.subr.mxu0 0.0
        %2037 = vmatpush2.msra.mxu0 0.0
        %2038 = vmatprep.subr.mxu0 0.0
        %2039 = vmatpush2.msra.mxu0 0.0
        %2040 = vmatprep.subr.mxu0 0.0
        %2041 = vmatpush2.msra.mxu0 0.0
        %2042 = vmatprep.subr.mxu0 0.0
        %2043 = vmatpush2.msra.mxu0 0.0
        %2044 = vmatprep.subr.mxu0 0.0
        %2045 = vmatpush2.msra.mxu0 0.0
        %2046 = vmatprep.mubr.f32.mxu0 0.0
        %2047 = vmatmul.mubr.f32.gmra.mxu0 %v1887
        %v2048 = vpop.f32.mrf.mxu0
        %v2049 = vadd.f32 0.0, %v2048
        %v2050 = vpop.f32.mrf.mxu0
        %2051 = vmatprep.mubr.f32.mxu0 0.0
        %2052 = vmatmul.mubr.f32.gmra.mxu0 %v1890
        %v2053 = vpop.f32.mrf.mxu0
        %v2054 = vadd.f32 0.0, %v2053
        %v2055 = vpop.f32.mrf.mxu0
        %2056 = vmatprep.mubr.f32.mxu0 0.0
        %2057 = vmatmul.mubr.f32.gmra.mxu0 %v1893
        %v2058 = vpop.f32.mrf.mxu0
        %v2059 = vadd.f32 0.0, %v2058
        %v2060 = vpop.f32.mrf.mxu0
        %2061 = vmatprep.mubr.f32.mxu0 0.0
        %2062 = vmatmul.mubr.f32.gmra.mxu0 %v1896
        %v2063 = vpop.f32.mrf.mxu0
        %v2064 = vadd.f32 0.0, %v2063
        %v2065 = vpop.f32.mrf.mxu0
        %2066 = vmatprep.mubr.f32.mxu0 0.0
        %2067 = vmatmul.mubr.f32.gmra.mxu0 %v1899
        %v2068 = vpop.f32.mrf.mxu0
        %v2069 = vadd.f32 0.0, %v2068
        %v2070 = vpop.f32.mrf.mxu0
        %2071 = vmatprep.mubr.f32.mxu0 0.0
        %2072 = vmatmul.mubr.f32.gmra.mxu0 %v1902
        %v2073 = vpop.f32.mrf.mxu0
        %v2074 = vadd.f32 0.0, %v2073
        %v2075 = vpop.f32.mrf.mxu0
        %2076 = vmatprep.mubr.f32.mxu0 0.0
        %2077 = vmatmul.mubr.f32.gmra.mxu0 %v1905
        %v2078 = vpop.f32.mrf.mxu0
        %v2079 = vadd.f32 0.0, %v2078
        %v2080 = vpop.f32.mrf.mxu0
        %2081 = vmatprep.mubr.f32.mxu0 0.0
        %2082 = vmatmul.mubr.f32.gmra.mxu0 %v1908
        %v2083 = vpop.f32.mrf.mxu0
        %v2084 = vadd.f32 0.0, %v2083
        %v2085 = vpop.f32.mrf.mxu0
        %2086 = vmatprep.mubr.f32.mxu0 0.0
        %2087 = vmatmul.mubr.f32.gmra.mxu0 %v1911
        %v2088 = vpop.f32.mrf.mxu0
        %v2089 = vadd.f32 0.0, %v2088
        %v2090 = vpop.f32.mrf.mxu0
        %2091 = vmatprep.mubr.f32.mxu0 0.0
        %2092 = vmatmul.mubr.f32.gmra.mxu0 %v1914
        %v2093 = vpop.f32.mrf.mxu0
        %v2094 = vadd.f32 0.0, %v2093
        %v2095 = vpop.f32.mrf.mxu0
        %2096 = vmatprep.mubr.f32.mxu0 0.0
        %2097 = vmatmul.mubr.f32.gmra.mxu0 %v1917
        %v2098 = vpop.f32.mrf.mxu0
        %v2099 = vadd.f32 0.0, %v2098
        %v2100 = vpop.f32.mrf.mxu0
        %2101 = vmatprep.mubr.f32.mxu0 0.0
        %2102 = vmatmul.mubr.f32.gmra.mxu0 %v1920
        %v2103 = vpop.f32.mrf.mxu0
        %v2104 = vadd.f32 0.0, %v2103
        %v2105 = vpop.f32.mrf.mxu0
        %2106 = vmatprep.mubr.f32.mxu0 0.0
        %2107 = vmatmul.mubr.f32.gmra.mxu0 %v1923
        %v2108 = vpop.f32.mrf.mxu0
        %v2109 = vadd.f32 0.0, %v2108
        %v2110 = vpop.f32.mrf.mxu0
        %2111 = vmatprep.mubr.f32.mxu0 0.0
        %2112 = vmatmul.mubr.f32.gmra.mxu0 %v1926
        %v2113 = vpop.f32.mrf.mxu0
        %v2114 = vadd.f32 0.0, %v2113
        %v2115 = vpop.f32.mrf.mxu0
        %2116 = vmatprep.mubr.f32.mxu0 0.0
        %2117 = vmatmul.mubr.f32.gmra.mxu0 %v1929
        %v2118 = vpop.f32.mrf.mxu0
        %v2119 = vadd.f32 0.0, %v2118
        %v2120 = vpop.f32.mrf.mxu0
        %2121 = vmatprep.mubr.f32.mxu0 0.0
        %2122 = vmatmul.mubr.f32.gmra.mxu0 %v1932
        %v2123 = vpop.f32.mrf.mxu0
        %v2124 = vadd.f32 0.0, %v2123
        %v2125 = vpop.f32.mrf.mxu0
        %2126 = vmatprep.mubr.f32.mxu0 0.0
        %2127 = vmatmul.mubr.f32.gmra.mxu0 %v1935
        %v2128 = vpop.f32.mrf.mxu0
        %v2129 = vadd.f32 0.0, %v2128
        %v2130 = vpop.f32.mrf.mxu0
        %2131 = vmatprep.mubr.f32.mxu0 0.0
        %2132 = vmatmul.mubr.f32.gmra.mxu0 %v1938
        %v2133 = vpop.f32.mrf.mxu0
        %v2134 = vadd.f32 0.0, %v2133
        %v2135 = vpop.f32.mrf.mxu0
        %2136 = vmatprep.mubr.f32.mxu0 0.0
        %2137 = vmatmul.mubr.f32.gmra.mxu0 %v1941
        %v2138 = vpop.f32.mrf.mxu0
        %v2139 = vadd.f32 0.0, %v2138
        %v2140 = vpop.f32.mrf.mxu0
        %2141 = vmatprep.mubr.f32.mxu0 0.0
        %2142 = vmatmul.mubr.f32.gmra.mxu0 %v1944
        %v2143 = vpop.f32.mrf.mxu0
        %v2144 = vadd.f32 0.0, %v2143
        %v2145 = vpop.f32.mrf.mxu0
        %2146 = vmatprep.mubr.f32.mxu0 0.0
        %2147 = vmatmul.mubr.f32.gmra.mxu0 %v1947
        %v2148 = vpop.f32.mrf.mxu0
        %v2149 = vadd.f32 0.0, %v2148
        %v2150 = vpop.f32.mrf.mxu0
        %2151 = vmatprep.mubr.f32.mxu0 0.0
        %2152 = vmatmul.mubr.f32.gmra.mxu0 %v1950
        %v2153 = vpop.f32.mrf.mxu0
        %v2154 = vadd.f32 0.0, %v2153
        %v2155 = vpop.f32.mrf.mxu0
        %2156 = vmatprep.mubr.f32.mxu0 0.0
        %2157 = vmatmul.mubr.f32.gmra.mxu0 %v1953
        %v2158 = vpop.f32.mrf.mxu0
        %v2159 = vadd.f32 0.0, %v2158
        %v2160 = vpop.f32.mrf.mxu0
        %2161 = vmatprep.mubr.f32.mxu0 0.0
        %2162 = vmatmul.mubr.f32.gmra.mxu0 %v1956
        %v2163 = vpop.f32.mrf.mxu0
        %v2164 = vadd.f32 0.0, %v2163
        %v2165 = vpop.f32.mrf.mxu0
        %2166 = vmatprep.mubr.f32.mxu0 0.0
        %2167 = vmatmul.mubr.f32.gmra.mxu0 %v1959
        %v2168 = vpop.f32.mrf.mxu0
        %v2169 = vadd.f32 0.0, %v2168
        %v2170 = vpop.f32.mrf.mxu0
        %2171 = vmatprep.mubr.f32.mxu0 0.0
        %2172 = vmatmul.mubr.f32.gmra.mxu0 %v1962
        %v2173 = vpop.f32.mrf.mxu0
        %v2174 = vadd.f32 0.0, %v2173
        %v2175 = vpop.f32.mrf.mxu0
        %2176 = vmatprep.mubr.f32.mxu0 0.0
        %2177 = vmatmul.mubr.f32.gmra.mxu0 %v1965
        %v2178 = vpop.f32.mrf.mxu0
        %v2179 = vadd.f32 0.0, %v2178
        %v2180 = vpop.f32.mrf.mxu0
        %2181 = vmatprep.mubr.f32.mxu0 0.0
        %2182 = vmatmul.mubr.f32.gmra.mxu0 %v1968
        %v2183 = vpop.f32.mrf.mxu0
        %v2184 = vadd.f32 0.0, %v2183
        %v2185 = vpop.f32.mrf.mxu0
        %2186 = vmatprep.mubr.f32.mxu0 0.0
        %2187 = vmatmul.mubr.f32.gmra.mxu0 %v1971
        %v2188 = vpop.f32.mrf.mxu0
        %v2189 = vadd.f32 0.0, %v2188
        %v2190 = vpop.f32.mrf.mxu0
        %2191 = vmatprep.mubr.f32.mxu0 0.0
        %2192 = vmatmul.mubr.f32.gmra.mxu0 %v1974
        %v2193 = vpop.f32.mrf.mxu0
        %v2194 = vadd.f32 0.0, %v2193
        %v2195 = vpop.f32.mrf.mxu0
        %2196 = vmatprep.mubr.f32.mxu0 0.0
        %2197 = vmatmul.mubr.f32.gmra.mxu0 %v1977
        %v2198 = vpop.f32.mrf.mxu0
        %v2199 = vadd.f32 0.0, %v2198
        %v2200 = vpop.f32.mrf.mxu0
        %2201 = vmatprep.mubr.f32.mxu0 0.0
        %2202 = vmatmul.mubr.f32.gmra.mxu0 %v1980
        %v2203 = vpop.f32.mrf.mxu0
        %v2204 = vadd.f32 0.0, %v2203
        %v2205 = vpop.f32.mrf.mxu0
        %2206 = vdwg.mxu0
        %v2207 = vadd.f32 %v1813, %v2049
        %v2208 = vadd.f32 %v1814, %v2054
        %v2209 = vadd.f32 %v1815, %v2059
        %v2210 = vadd.f32 %v1816, %v2064
        %v2211 = vadd.f32 %v1817, %v2069
        %v2212 = vadd.f32 %v1818, %v2074
        %v2213 = vadd.f32 %v1819, %v2079
        %v2214 = vadd.f32 %v1820, %v2084
        %v2215 = vadd.f32 %v1821, %v2089
        %v2216 = vadd.f32 %v1822, %v2094
        %v2217 = vadd.f32 %v1823, %v2099
        %v2218 = vadd.f32 %v1824, %v2104
        %v2219 = vadd.f32 %v1825, %v2109
        %v2220 = vadd.f32 %v1826, %v2114
        %v2221 = vadd.f32 %v1827, %v2119
        %v2222 = vadd.f32 %v1828, %v2124
        %v2223 = vadd.f32 %v1829, %v2129
        %v2224 = vadd.f32 %v1830, %v2134
        %v2225 = vadd.f32 %v1831, %v2139
        %v2226 = vadd.f32 %v1832, %v2144
        %v2227 = vadd.f32 %v1833, %v2149
        %v2228 = vadd.f32 %v1834, %v2154
        %v2229 = vadd.f32 %v1835, %v2159
        %v2230 = vadd.f32 %v1836, %v2164
        %v2231 = vadd.f32 %v1837, %v2169
        %v2232 = vadd.f32 %v1838, %v2174
        %v2233 = vadd.f32 %v1839, %v2179
        %v2234 = vadd.f32 %v1840, %v2184
        %v2235 = vadd.f32 %v1841, %v2189
        %v2236 = vadd.f32 %v1842, %v2194
        %v2237 = vadd.f32 %v1843, %v2199
        %v2238 = vadd.f32 %v1844, %v2204
        %v2239 = vld [vmem:[%s301 + $0x2] sm:$0xff]
        %v2240 = vld [vmem:[%s301 + $0xa] sm:$0xff]
        %v2241 = vld [vmem:[%s301 + $0x1a] sm:$0xff]
        %v2242 = vld [vmem:[%s301 + $0x22] sm:$0xff]
        %v2243 = vld [vmem:[%s301 + $0x32] sm:$0xff]
        %v2244 = vld [vmem:[%s301 + $0x3a] sm:$0xff]
        %v2245 = vld [vmem:[%s301 + $0x4a] sm:$0xff]
        %v2246 = vld [vmem:[%s301 + $0x52] sm:$0xff]
        %v2247 = vld [vmem:[%s301 + $0x62] sm:$0xff]
        %v2248 = vld [vmem:[%s301 + $0x6a] sm:$0xff]
        %v2249 = vld [vmem:[%s301 + $0x7a] sm:$0xff]
        %v2250 = vld [vmem:[%s301 + $0x82] sm:$0xff]
        %v2251 = vld [vmem:[%s301 + $0x92] sm:$0xff]
        %v2252 = vld [vmem:[%s301 + $0x9a] sm:$0xff]
        %v2253 = vld [vmem:[%s301 + $0xaa] sm:$0xff]
        %v2254 = vld [vmem:[%s301 + $0xb2] sm:$0xff]
        %v2255 = vld [vmem:[%s301 + $0xc2] sm:$0xff]
        %v2256 = vld [vmem:[%s301 + $0xca] sm:$0xff]
        %v2257 = vld [vmem:[%s301 + $0xda] sm:$0xff]
        %v2258 = vld [vmem:[%s301 + $0xe2] sm:$0xff]
        %v2259 = vld [vmem:[%s301 + $0xf2] sm:$0xff]
        %v2260 = vld [vmem:[%s301 + $0xfa] sm:$0xff]
        %v2261 = vld [vmem:[%s301 + $0x10a] sm:$0xff]
        %v2262 = vld [vmem:[%s301 + $0x112] sm:$0xff]
        %v2263 = vld [vmem:[%s301 + $0x122] sm:$0xff]
        %v2264 = vld [vmem:[%s301 + $0x12a] sm:$0xff]
        %v2265 = vld [vmem:[%s301 + $0x13a] sm:$0xff]
        %v2266 = vld [vmem:[%s301 + $0x142] sm:$0xff]
        %v2267 = vld [vmem:[%s301 + $0x152] sm:$0xff]
        %v2268 = vld [vmem:[%s301 + $0x15a] sm:$0xff]
        %v2269 = vld [vmem:[%s301 + $0x16a] sm:$0xff]
        %v2270 = vld [vmem:[%s301 + $0x172] sm:$0xff]
        %s2271 = scalar_lea.vmem %s1, 320
        %v2272 = vld [vmem:[%s2271] sm:$0xff]
        %v2273 = vld [vmem:[%s2271 + $0x8] sm:$0xff]
        %v2274 = vld [vmem:[%s2271 + $0x10] sm:$0xff]
        %v2275 = vld [vmem:[%s2271 + $0x18] sm:$0xff]
        %v2276 = vld [vmem:[%s2271 + $0x20] sm:$0xff]
        %v2277 = vld [vmem:[%s2271 + $0x28] sm:$0xff]
        %v2278 = vld [vmem:[%s2271 + $0x30] sm:$0xff]
        %v2279 = vld [vmem:[%s2271 + $0x38] sm:$0xff]
        %v2281 = vsel %vm223, %v2239, 0
        %v2284 = vsel %vm223, %v2240, 0
        %v2287 = vsel %vm223, %v2241, 0
        %v2290 = vsel %vm223, %v2242, 0
        %v2293 = vsel %vm223, %v2243, 0
        %v2296 = vsel %vm223, %v2244, 0
        %v2299 = vsel %vm223, %v2245, 0
        %v2302 = vsel %vm223, %v2246, 0
        %v2305 = vsel %vm223, %v2247, 0
        %v2308 = vsel %vm223, %v2248, 0
        %v2311 = vsel %vm223, %v2249, 0
        %v2314 = vsel %vm223, %v2250, 0
        %v2317 = vsel %vm223, %v2251, 0
        %v2320 = vsel %vm223, %v2252, 0
        %v2323 = vsel %vm223, %v2253, 0
        %v2326 = vsel %vm223, %v2254, 0
        %v2329 = vsel %vm223, %v2255, 0
        %v2332 = vsel %vm223, %v2256, 0
        %v2335 = vsel %vm223, %v2257, 0
        %v2338 = vsel %vm223, %v2258, 0
        %v2341 = vsel %vm223, %v2259, 0
        %v2344 = vsel %vm223, %v2260, 0
        %v2347 = vsel %vm223, %v2261, 0
        %v2350 = vsel %vm223, %v2262, 0
        %v2353 = vsel %vm223, %v2263, 0
        %v2356 = vsel %vm223, %v2264, 0
        %v2359 = vsel %vm223, %v2265, 0
        %v2362 = vsel %vm223, %v2266, 0
        %v2365 = vsel %vm223, %v2267, 0
        %v2368 = vsel %vm223, %v2268, 0
        %v2371 = vsel %vm223, %v2269, 0
        %v2374 = vsel %vm223, %v2270, 0
        %2376 = vmatprep.subr.mxu0 0.0
        %2377 = vmatpush1.msra.mxu0 0.0
        %2378 = vmatprep.subr.mxu0 0.0
        %2379 = vmatpush1.msra.mxu0 0.0
        %2380 = vmatprep.subr.mxu0 0.0
        %2381 = vmatpush1.msra.mxu0 0.0
        %2382 = vmatprep.subr.mxu0 0.0
        %2383 = vmatpush1.msra.mxu0 0.0
        %2384 = vmatprep.subr.mxu0 0.0
        %2385 = vmatpush1.msra.mxu0 0.0
        %2386 = vmatprep.subr.mxu0 0.0
        %2387 = vmatpush1.msra.mxu0 0.0
        %2388 = vmatprep.subr.mxu0 0.0
        %2389 = vmatpush1.msra.mxu0 0.0
        %2390 = vmatprep.subr.mxu0 0.0
        %2391 = vmatpush1.msra.mxu0 0.0
        %2392 = vmatprep.subr.mxu0 0.0
        %2393 = vmatpush1.msra.mxu0 %v2279
        %2394 = vmatprep.subr.mxu0 0.0
        %2395 = vmatpush1.msra.mxu0 %v2278
        %2396 = vmatprep.subr.mxu0 0.0
        %2397 = vmatpush1.msra.mxu0 %v2277
        %2398 = vmatprep.subr.mxu0 0.0
        %2399 = vmatpush1.msra.mxu0 %v2276
        %2400 = vmatprep.subr.mxu0 0.0
        %2401 = vmatpush1.msra.mxu0 %v2275
        %2402 = vmatprep.subr.mxu0 0.0
        %2403 = vmatpush1.msra.mxu0 %v2274
        %2404 = vmatprep.subr.mxu0 0.0
        %2405 = vmatpush1.msra.mxu0 %v2273
        %2406 = vmatprep.subr.mxu0 0.0
        %2407 = vmatpush1.msra.mxu0 %v2272
        %2408 = vmatprep.subr.mxu0 0.0
        %2409 = vmatpush2.msra.mxu0 0.0
        %2410 = vmatprep.subr.mxu0 0.0
        %2411 = vmatpush2.msra.mxu0 0.0
        %2412 = vmatprep.subr.mxu0 0.0
        %2413 = vmatpush2.msra.mxu0 0.0
        %2414 = vmatprep.subr.mxu0 0.0
        %2415 = vmatpush2.msra.mxu0 0.0
        %2416 = vmatprep.subr.mxu0 0.0
        %2417 = vmatpush2.msra.mxu0 0.0
        %2418 = vmatprep.subr.mxu0 0.0
        %2419 = vmatpush2.msra.mxu0 0.0
        %2420 = vmatprep.subr.mxu0 0.0
        %2421 = vmatpush2.msra.mxu0 0.0
        %2422 = vmatprep.subr.mxu0 0.0
        %2423 = vmatpush2.msra.mxu0 0.0
        %2424 = vmatprep.subr.mxu0 0.0
        %2425 = vmatpush2.msra.mxu0 0.0
        %2426 = vmatprep.subr.mxu0 0.0
        %2427 = vmatpush2.msra.mxu0 0.0
        %2428 = vmatprep.subr.mxu0 0.0
        %2429 = vmatpush2.msra.mxu0 0.0
        %2430 = vmatprep.subr.mxu0 0.0
        %2431 = vmatpush2.msra.mxu0 0.0
        %2432 = vmatprep.subr.mxu0 0.0
        %2433 = vmatpush2.msra.mxu0 0.0
        %2434 = vmatprep.subr.mxu0 0.0
        %2435 = vmatpush2.msra.mxu0 0.0
        %2436 = vmatprep.subr.mxu0 0.0
        %2437 = vmatpush2.msra.mxu0 0.0
        %2438 = vmatprep.subr.mxu0 0.0
        %2439 = vmatpush2.msra.mxu0 0.0
        %2440 = vmatprep.mubr.f32.mxu0 0.0
        %2441 = vmatmul.mubr.f32.gmra.mxu0 %v2281
        %v2442 = vpop.f32.mrf.mxu0
        %v2443 = vadd.f32 0.0, %v2442
        %v2444 = vpop.f32.mrf.mxu0
        %2445 = vmatprep.mubr.f32.mxu0 0.0
        %2446 = vmatmul.mubr.f32.gmra.mxu0 %v2284
        %v2447 = vpop.f32.mrf.mxu0
        %v2448 = vadd.f32 0.0, %v2447
        %v2449 = vpop.f32.mrf.mxu0
        %2450 = vmatprep.mubr.f32.mxu0 0.0
        %2451 = vmatmul.mubr.f32.gmra.mxu0 %v2287
        %v2452 = vpop.f32.mrf.mxu0
        %v2453 = vadd.f32 0.0, %v2452
        %v2454 = vpop.f32.mrf.mxu0
        %2455 = vmatprep.mubr.f32.mxu0 0.0
        %2456 = vmatmul.mubr.f32.gmra.mxu0 %v2290
        %v2457 = vpop.f32.mrf.mxu0
        %v2458 = vadd.f32 0.0, %v2457
        %v2459 = vpop.f32.mrf.mxu0
        %2460 = vmatprep.mubr.f32.mxu0 0.0
        %2461 = vmatmul.mubr.f32.gmra.mxu0 %v2293
        %v2462 = vpop.f32.mrf.mxu0
        %v2463 = vadd.f32 0.0, %v2462
        %v2464 = vpop.f32.mrf.mxu0
        %2465 = vmatprep.mubr.f32.mxu0 0.0
        %2466 = vmatmul.mubr.f32.gmra.mxu0 %v2296
        %v2467 = vpop.f32.mrf.mxu0
        %v2468 = vadd.f32 0.0, %v2467
        %v2469 = vpop.f32.mrf.mxu0
        %2470 = vmatprep.mubr.f32.mxu0 0.0
        %2471 = vmatmul.mubr.f32.gmra.mxu0 %v2299
        %v2472 = vpop.f32.mrf.mxu0
        %v2473 = vadd.f32 0.0, %v2472
        %v2474 = vpop.f32.mrf.mxu0
        %2475 = vmatprep.mubr.f32.mxu0 0.0
        %2476 = vmatmul.mubr.f32.gmra.mxu0 %v2302
        %v2477 = vpop.f32.mrf.mxu0
        %v2478 = vadd.f32 0.0, %v2477
        %v2479 = vpop.f32.mrf.mxu0
        %2480 = vmatprep.mubr.f32.mxu0 0.0
        %2481 = vmatmul.mubr.f32.gmra.mxu0 %v2305
        %v2482 = vpop.f32.mrf.mxu0
        %v2483 = vadd.f32 0.0, %v2482
        %v2484 = vpop.f32.mrf.mxu0
        %2485 = vmatprep.mubr.f32.mxu0 0.0
        %2486 = vmatmul.mubr.f32.gmra.mxu0 %v2308
        %v2487 = vpop.f32.mrf.mxu0
        %v2488 = vadd.f32 0.0, %v2487
        %v2489 = vpop.f32.mrf.mxu0
        %2490 = vmatprep.mubr.f32.mxu0 0.0
        %2491 = vmatmul.mubr.f32.gmra.mxu0 %v2311
        %v2492 = vpop.f32.mrf.mxu0
        %v2493 = vadd.f32 0.0, %v2492
        %v2494 = vpop.f32.mrf.mxu0
        %2495 = vmatprep.mubr.f32.mxu0 0.0
        %2496 = vmatmul.mubr.f32.gmra.mxu0 %v2314
        %v2497 = vpop.f32.mrf.mxu0
        %v2498 = vadd.f32 0.0, %v2497
        %v2499 = vpop.f32.mrf.mxu0
        %2500 = vmatprep.mubr.f32.mxu0 0.0
        %2501 = vmatmul.mubr.f32.gmra.mxu0 %v2317
        %v2502 = vpop.f32.mrf.mxu0
        %v2503 = vadd.f32 0.0, %v2502
        %v2504 = vpop.f32.mrf.mxu0
        %2505 = vmatprep.mubr.f32.mxu0 0.0
        %2506 = vmatmul.mubr.f32.gmra.mxu0 %v2320
        %v2507 = vpop.f32.mrf.mxu0
        %v2508 = vadd.f32 0.0, %v2507
        %v2509 = vpop.f32.mrf.mxu0
        %2510 = vmatprep.mubr.f32.mxu0 0.0
        %2511 = vmatmul.mubr.f32.gmra.mxu0 %v2323
        %v2512 = vpop.f32.mrf.mxu0
        %v2513 = vadd.f32 0.0, %v2512
        %v2514 = vpop.f32.mrf.mxu0
        %2515 = vmatprep.mubr.f32.mxu0 0.0
        %2516 = vmatmul.mubr.f32.gmra.mxu0 %v2326
        %v2517 = vpop.f32.mrf.mxu0
        %v2518 = vadd.f32 0.0, %v2517
        %v2519 = vpop.f32.mrf.mxu0
        %2520 = vmatprep.mubr.f32.mxu0 0.0
        %2521 = vmatmul.mubr.f32.gmra.mxu0 %v2329
        %v2522 = vpop.f32.mrf.mxu0
        %v2523 = vadd.f32 0.0, %v2522
        %v2524 = vpop.f32.mrf.mxu0
        %2525 = vmatprep.mubr.f32.mxu0 0.0
        %2526 = vmatmul.mubr.f32.gmra.mxu0 %v2332
        %v2527 = vpop.f32.mrf.mxu0
        %v2528 = vadd.f32 0.0, %v2527
        %v2529 = vpop.f32.mrf.mxu0
        %2530 = vmatprep.mubr.f32.mxu0 0.0
        %2531 = vmatmul.mubr.f32.gmra.mxu0 %v2335
        %v2532 = vpop.f32.mrf.mxu0
        %v2533 = vadd.f32 0.0, %v2532
        %v2534 = vpop.f32.mrf.mxu0
        %2535 = vmatprep.mubr.f32.mxu0 0.0
        %2536 = vmatmul.mubr.f32.gmra.mxu0 %v2338
        %v2537 = vpop.f32.mrf.mxu0
        %v2538 = vadd.f32 0.0, %v2537
        %v2539 = vpop.f32.mrf.mxu0
        %2540 = vmatprep.mubr.f32.mxu0 0.0
        %2541 = vmatmul.mubr.f32.gmra.mxu0 %v2341
        %v2542 = vpop.f32.mrf.mxu0
        %v2543 = vadd.f32 0.0, %v2542
        %v2544 = vpop.f32.mrf.mxu0
        %2545 = vmatprep.mubr.f32.mxu0 0.0
        %2546 = vmatmul.mubr.f32.gmra.mxu0 %v2344
        %v2547 = vpop.f32.mrf.mxu0
        %v2548 = vadd.f32 0.0, %v2547
        %v2549 = vpop.f32.mrf.mxu0
        %2550 = vmatprep.mubr.f32.mxu0 0.0
        %2551 = vmatmul.mubr.f32.gmra.mxu0 %v2347
        %v2552 = vpop.f32.mrf.mxu0
        %v2553 = vadd.f32 0.0, %v2552
        %v2554 = vpop.f32.mrf.mxu0
        %2555 = vmatprep.mubr.f32.mxu0 0.0
        %2556 = vmatmul.mubr.f32.gmra.mxu0 %v2350
        %v2557 = vpop.f32.mrf.mxu0
        %v2558 = vadd.f32 0.0, %v2557
        %v2559 = vpop.f32.mrf.mxu0
        %2560 = vmatprep.mubr.f32.mxu0 0.0
        %2561 = vmatmul.mubr.f32.gmra.mxu0 %v2353
        %v2562 = vpop.f32.mrf.mxu0
        %v2563 = vadd.f32 0.0, %v2562
        %v2564 = vpop.f32.mrf.mxu0
        %2565 = vmatprep.mubr.f32.mxu0 0.0
        %2566 = vmatmul.mubr.f32.gmra.mxu0 %v2356
        %v2567 = vpop.f32.mrf.mxu0
        %v2568 = vadd.f32 0.0, %v2567
        %v2569 = vpop.f32.mrf.mxu0
        %2570 = vmatprep.mubr.f32.mxu0 0.0
        %2571 = vmatmul.mubr.f32.gmra.mxu0 %v2359
        %v2572 = vpop.f32.mrf.mxu0
        %v2573 = vadd.f32 0.0, %v2572
        %v2574 = vpop.f32.mrf.mxu0
        %2575 = vmatprep.mubr.f32.mxu0 0.0
        %2576 = vmatmul.mubr.f32.gmra.mxu0 %v2362
        %v2577 = vpop.f32.mrf.mxu0
        %v2578 = vadd.f32 0.0, %v2577
        %v2579 = vpop.f32.mrf.mxu0
        %2580 = vmatprep.mubr.f32.mxu0 0.0
        %2581 = vmatmul.mubr.f32.gmra.mxu0 %v2365
        %v2582 = vpop.f32.mrf.mxu0
        %v2583 = vadd.f32 0.0, %v2582
        %v2584 = vpop.f32.mrf.mxu0
        %2585 = vmatprep.mubr.f32.mxu0 0.0
        %2586 = vmatmul.mubr.f32.gmra.mxu0 %v2368
        %v2587 = vpop.f32.mrf.mxu0
        %v2588 = vadd.f32 0.0, %v2587
        %v2589 = vpop.f32.mrf.mxu0
        %2590 = vmatprep.mubr.f32.mxu0 0.0
        %2591 = vmatmul.mubr.f32.gmra.mxu0 %v2371
        %v2592 = vpop.f32.mrf.mxu0
        %v2593 = vadd.f32 0.0, %v2592
        %v2594 = vpop.f32.mrf.mxu0
        %2595 = vmatprep.mubr.f32.mxu0 0.0
        %2596 = vmatmul.mubr.f32.gmra.mxu0 %v2374
        %v2597 = vpop.f32.mrf.mxu0
        %v2598 = vadd.f32 0.0, %v2597
        %v2599 = vpop.f32.mrf.mxu0
        %2600 = vdwg.mxu0
        %v2601 = vadd.f32 %v2207, %v2443
        %v2602 = vadd.f32 %v2208, %v2448
        %v2603 = vadd.f32 %v2209, %v2453
        %v2604 = vadd.f32 %v2210, %v2458
        %v2605 = vadd.f32 %v2211, %v2463
        %v2606 = vadd.f32 %v2212, %v2468
        %v2607 = vadd.f32 %v2213, %v2473
        %v2608 = vadd.f32 %v2214, %v2478
        %v2609 = vadd.f32 %v2215, %v2483
        %v2610 = vadd.f32 %v2216, %v2488
        %v2611 = vadd.f32 %v2217, %v2493
        %v2612 = vadd.f32 %v2218, %v2498
        %v2613 = vadd.f32 %v2219, %v2503
        %v2614 = vadd.f32 %v2220, %v2508
        %v2615 = vadd.f32 %v2221, %v2513
        %v2616 = vadd.f32 %v2222, %v2518
        %v2617 = vadd.f32 %v2223, %v2523
        %v2618 = vadd.f32 %v2224, %v2528
        %v2619 = vadd.f32 %v2225, %v2533
        %v2620 = vadd.f32 %v2226, %v2538
        %v2621 = vadd.f32 %v2227, %v2543
        %v2622 = vadd.f32 %v2228, %v2548
        %v2623 = vadd.f32 %v2229, %v2553
        %v2624 = vadd.f32 %v2230, %v2558
        %v2625 = vadd.f32 %v2231, %v2563
        %v2626 = vadd.f32 %v2232, %v2568
        %v2627 = vadd.f32 %v2233, %v2573
        %v2628 = vadd.f32 %v2234, %v2578
        %v2629 = vadd.f32 %v2235, %v2583
        %v2630 = vadd.f32 %v2236, %v2588
        %v2631 = vadd.f32 %v2237, %v2593
        %v2632 = vadd.f32 %v2238, %v2598
        %s2633 = scalar_lea.vmem [#allocation2], 48
        %v2634 = vld [vmem:[%s2633] sm:$0xff]
        %v2635 = vld [vmem:[%s2633 + $0x8] sm:$0xff]
        %v2636 = vld [vmem:[%s2633 + $0x18] sm:$0xff]
        %v2637 = vld [vmem:[%s2633 + $0x20] sm:$0xff]
        %v2638 = vld [vmem:[%s2633 + $0x30] sm:$0xff]
        %v2639 = vld [vmem:[%s2633 + $0x38] sm:$0xff]
        %v2640 = vld [vmem:[%s2633 + $0x48] sm:$0xff]
        %v2641 = vld [vmem:[%s2633 + $0x50] sm:$0xff]
        %v2642 = vld [vmem:[%s2633 + $0x60] sm:$0xff]
        %v2643 = vld [vmem:[%s2633 + $0x68] sm:$0xff]
        %v2644 = vld [vmem:[%s2633 + $0x78] sm:$0xff]
        %v2645 = vld [vmem:[%s2633 + $0x80] sm:$0xff]
        %v2646 = vld [vmem:[%s2633 + $0x90] sm:$0xff]
        %v2647 = vld [vmem:[%s2633 + $0x98] sm:$0xff]
        %v2648 = vld [vmem:[%s2633 + $0xa8] sm:$0xff]
        %v2649 = vld [vmem:[%s2633 + $0xb0] sm:$0xff]
        %v2650 = vld [vmem:[%s2633 + $0xc0] sm:$0xff]
        %v2651 = vld [vmem:[%s2633 + $0xc8] sm:$0xff]
        %v2652 = vld [vmem:[%s2633 + $0xd8] sm:$0xff]
        %v2653 = vld [vmem:[%s2633 + $0xe0] sm:$0xff]
        %v2654 = vld [vmem:[%s2633 + $0xf0] sm:$0xff]
        %v2655 = vld [vmem:[%s2633 + $0xf8] sm:$0xff]
        %v2656 = vld [vmem:[%s2633 + $0x108] sm:$0xff]
        %v2657 = vld [vmem:[%s2633 + $0x110] sm:$0xff]
        %v2658 = vld [vmem:[%s2633 + $0x120] sm:$0xff]
        %v2659 = vld [vmem:[%s2633 + $0x128] sm:$0xff]
        %v2660 = vld [vmem:[%s2633 + $0x138] sm:$0xff]
        %v2661 = vld [vmem:[%s2633 + $0x140] sm:$0xff]
        %v2662 = vld [vmem:[%s2633 + $0x150] sm:$0xff]
        %v2663 = vld [vmem:[%s2633 + $0x158] sm:$0xff]
        %v2664 = vld [vmem:[%s2633 + $0x168] sm:$0xff]
        %v2665 = vld [vmem:[%s2633 + $0x170] sm:$0xff]
        %s2666 = scalar_lea.vmem %s1, 384
        %v2667 = vld [vmem:[%s2666] sm:$0xff]
        %v2668 = vld [vmem:[%s2666 + $0x8] sm:$0xff]
        %v2669 = vld [vmem:[%s2666 + $0x10] sm:$0xff]
        %v2670 = vld [vmem:[%s2666 + $0x18] sm:$0xff]
        %v2671 = vld [vmem:[%s2666 + $0x20] sm:$0xff]
        %v2672 = vld [vmem:[%s2666 + $0x28] sm:$0xff]
        %v2673 = vld [vmem:[%s2666 + $0x30] sm:$0xff]
        %v2674 = vld [vmem:[%s2666 + $0x38] sm:$0xff]
        %v2676 = vsel %vm223, %v2634, 0
        %v2679 = vsel %vm223, %v2635, 0
        %v2682 = vsel %vm223, %v2636, 0
        %v2685 = vsel %vm223, %v2637, 0
        %v2688 = vsel %vm223, %v2638, 0
        %v2691 = vsel %vm223, %v2639, 0
        %v2694 = vsel %vm223, %v2640, 0
        %v2697 = vsel %vm223, %v2641, 0
        %v2700 = vsel %vm223, %v2642, 0
        %v2703 = vsel %vm223, %v2643, 0
        %v2706 = vsel %vm223, %v2644, 0
        %v2709 = vsel %vm223, %v2645, 0
        %v2712 = vsel %vm223, %v2646, 0
        %v2715 = vsel %vm223, %v2647, 0
        %v2718 = vsel %vm223, %v2648, 0
        %v2721 = vsel %vm223, %v2649, 0
        %v2724 = vsel %vm223, %v2650, 0
        %v2727 = vsel %vm223, %v2651, 0
        %v2730 = vsel %vm223, %v2652, 0
        %v2733 = vsel %vm223, %v2653, 0
        %v2736 = vsel %vm223, %v2654, 0
        %v2739 = vsel %vm223, %v2655, 0
        %v2742 = vsel %vm223, %v2656, 0
        %v2745 = vsel %vm223, %v2657, 0
        %v2748 = vsel %vm223, %v2658, 0
        %v2751 = vsel %vm223, %v2659, 0
        %v2754 = vsel %vm223, %v2660, 0
        %v2757 = vsel %vm223, %v2661, 0
        %v2760 = vsel %vm223, %v2662, 0
        %v2763 = vsel %vm223, %v2663, 0
        %v2766 = vsel %vm223, %v2664, 0
        %v2769 = vsel %vm223, %v2665, 0
        %2771 = vmatprep.subr.mxu0 0.0
        %2772 = vmatpush1.msra.mxu0 0.0
        %2773 = vmatprep.subr.mxu0 0.0
        %2774 = vmatpush1.msra.mxu0 0.0
        %2775 = vmatprep.subr.mxu0 0.0
        %2776 = vmatpush1.msra.mxu0 0.0
        %2777 = vmatprep.subr.mxu0 0.0
        %2778 = vmatpush1.msra.mxu0 0.0
        %2779 = vmatprep.subr.mxu0 0.0
        %2780 = vmatpush1.msra.mxu0 0.0
        %2781 = vmatprep.subr.mxu0 0.0
        %2782 = vmatpush1.msra.mxu0 0.0
        %2783 = vmatprep.subr.mxu0 0.0
        %2784 = vmatpush1.msra.mxu0 0.0
        %2785 = vmatprep.subr.mxu0 0.0
        %2786 = vmatpush1.msra.mxu0 0.0
        %2787 = vmatprep.subr.mxu0 0.0
        %2788 = vmatpush1.msra.mxu0 %v2674
        %2789 = vmatprep.subr.mxu0 0.0
        %2790 = vmatpush1.msra.mxu0 %v2673
        %2791 = vmatprep.subr.mxu0 0.0
        %2792 = vmatpush1.msra.mxu0 %v2672
        %2793 = vmatprep.subr.mxu0 0.0
        %2794 = vmatpush1.msra.mxu0 %v2671
        %2795 = vmatprep.subr.mxu0 0.0
        %2796 = vmatpush1.msra.mxu0 %v2670
        %2797 = vmatprep.subr.mxu0 0.0
        %2798 = vmatpush1.msra.mxu0 %v2669
        %2799 = vmatprep.subr.mxu0 0.0
        %2800 = vmatpush1.msra.mxu0 %v2668
        %2801 = vmatprep.subr.mxu0 0.0
        %2802 = vmatpush1.msra.mxu0 %v2667
        %2803 = vmatprep.subr.mxu0 0.0
        %2804 = vmatpush2.msra.mxu0 0.0
        %2805 = vmatprep.subr.mxu0 0.0
        %2806 = vmatpush2.msra.mxu0 0.0
        %2807 = vmatprep.subr.mxu0 0.0
        %2808 = vmatpush2.msra.mxu0 0.0
        %2809 = vmatprep.subr.mxu0 0.0
        %2810 = vmatpush2.msra.mxu0 0.0
        %2811 = vmatprep.subr.mxu0 0.0
        %2812 = vmatpush2.msra.mxu0 0.0
        %2813 = vmatprep.subr.mxu0 0.0
        %2814 = vmatpush2.msra.mxu0 0.0
        %2815 = vmatprep.subr.mxu0 0.0
        %2816 = vmatpush2.msra.mxu0 0.0
        %2817 = vmatprep.subr.mxu0 0.0
        %2818 = vmatpush2.msra.mxu0 0.0
        %2819 = vmatprep.subr.mxu0 0.0
        %2820 = vmatpush2.msra.mxu0 0.0
        %2821 = vmatprep.subr.mxu0 0.0
        %2822 = vmatpush2.msra.mxu0 0.0
        %2823 = vmatprep.subr.mxu0 0.0
        %2824 = vmatpush2.msra.mxu0 0.0
        %2825 = vmatprep.subr.mxu0 0.0
        %2826 = vmatpush2.msra.mxu0 0.0
        %2827 = vmatprep.subr.mxu0 0.0
        %2828 = vmatpush2.msra.mxu0 0.0
        %2829 = vmatprep.subr.mxu0 0.0
        %2830 = vmatpush2.msra.mxu0 0.0
        %2831 = vmatprep.subr.mxu0 0.0
        %2832 = vmatpush2.msra.mxu0 0.0
        %2833 = vmatprep.subr.mxu0 0.0
        %2834 = vmatpush2.msra.mxu0 0.0
        %2835 = vmatprep.mubr.f32.mxu0 0.0
        %2836 = vmatmul.mubr.f32.gmra.mxu0 %v2676
        %v2837 = vpop.f32.mrf.mxu0
        %v2838 = vadd.f32 0.0, %v2837
        %v2839 = vpop.f32.mrf.mxu0
        %2840 = vmatprep.mubr.f32.mxu0 0.0
        %2841 = vmatmul.mubr.f32.gmra.mxu0 %v2679
        %v2842 = vpop.f32.mrf.mxu0
        %v2843 = vadd.f32 0.0, %v2842
        %v2844 = vpop.f32.mrf.mxu0
        %2845 = vmatprep.mubr.f32.mxu0 0.0
        %2846 = vmatmul.mubr.f32.gmra.mxu0 %v2682
        %v2847 = vpop.f32.mrf.mxu0
        %v2848 = vadd.f32 0.0, %v2847
        %v2849 = vpop.f32.mrf.mxu0
        %2850 = vmatprep.mubr.f32.mxu0 0.0
        %2851 = vmatmul.mubr.f32.gmra.mxu0 %v2685
        %v2852 = vpop.f32.mrf.mxu0
        %v2853 = vadd.f32 0.0, %v2852
        %v2854 = vpop.f32.mrf.mxu0
        %2855 = vmatprep.mubr.f32.mxu0 0.0
        %2856 = vmatmul.mubr.f32.gmra.mxu0 %v2688
        %v2857 = vpop.f32.mrf.mxu0
        %v2858 = vadd.f32 0.0, %v2857
        %v2859 = vpop.f32.mrf.mxu0
        %2860 = vmatprep.mubr.f32.mxu0 0.0
        %2861 = vmatmul.mubr.f32.gmra.mxu0 %v2691
        %v2862 = vpop.f32.mrf.mxu0
        %v2863 = vadd.f32 0.0, %v2862
        %v2864 = vpop.f32.mrf.mxu0
        %2865 = vmatprep.mubr.f32.mxu0 0.0
        %2866 = vmatmul.mubr.f32.gmra.mxu0 %v2694
        %v2867 = vpop.f32.mrf.mxu0
        %v2868 = vadd.f32 0.0, %v2867
        %v2869 = vpop.f32.mrf.mxu0
        %2870 = vmatprep.mubr.f32.mxu0 0.0
        %2871 = vmatmul.mubr.f32.gmra.mxu0 %v2697
        %v2872 = vpop.f32.mrf.mxu0
        %v2873 = vadd.f32 0.0, %v2872
        %v2874 = vpop.f32.mrf.mxu0
        %2875 = vmatprep.mubr.f32.mxu0 0.0
        %2876 = vmatmul.mubr.f32.gmra.mxu0 %v2700
        %v2877 = vpop.f32.mrf.mxu0
        %v2878 = vadd.f32 0.0, %v2877
        %v2879 = vpop.f32.mrf.mxu0
        %2880 = vmatprep.mubr.f32.mxu0 0.0
        %2881 = vmatmul.mubr.f32.gmra.mxu0 %v2703
        %v2882 = vpop.f32.mrf.mxu0
        %v2883 = vadd.f32 0.0, %v2882
        %v2884 = vpop.f32.mrf.mxu0
        %2885 = vmatprep.mubr.f32.mxu0 0.0
        %2886 = vmatmul.mubr.f32.gmra.mxu0 %v2706
        %v2887 = vpop.f32.mrf.mxu0
        %v2888 = vadd.f32 0.0, %v2887
        %v2889 = vpop.f32.mrf.mxu0
        %2890 = vmatprep.mubr.f32.mxu0 0.0
        %2891 = vmatmul.mubr.f32.gmra.mxu0 %v2709
        %v2892 = vpop.f32.mrf.mxu0
        %v2893 = vadd.f32 0.0, %v2892
        %v2894 = vpop.f32.mrf.mxu0
        %2895 = vmatprep.mubr.f32.mxu0 0.0
        %2896 = vmatmul.mubr.f32.gmra.mxu0 %v2712
        %v2897 = vpop.f32.mrf.mxu0
        %v2898 = vadd.f32 0.0, %v2897
        %v2899 = vpop.f32.mrf.mxu0
        %2900 = vmatprep.mubr.f32.mxu0 0.0
        %2901 = vmatmul.mubr.f32.gmra.mxu0 %v2715
        %v2902 = vpop.f32.mrf.mxu0
        %v2903 = vadd.f32 0.0, %v2902
        %v2904 = vpop.f32.mrf.mxu0
        %2905 = vmatprep.mubr.f32.mxu0 0.0
        %2906 = vmatmul.mubr.f32.gmra.mxu0 %v2718
        %v2907 = vpop.f32.mrf.mxu0
        %v2908 = vadd.f32 0.0, %v2907
        %v2909 = vpop.f32.mrf.mxu0
        %2910 = vmatprep.mubr.f32.mxu0 0.0
        %2911 = vmatmul.mubr.f32.gmra.mxu0 %v2721
        %v2912 = vpop.f32.mrf.mxu0
        %v2913 = vadd.f32 0.0, %v2912
        %v2914 = vpop.f32.mrf.mxu0
        %2915 = vmatprep.mubr.f32.mxu0 0.0
        %2916 = vmatmul.mubr.f32.gmra.mxu0 %v2724
        %v2917 = vpop.f32.mrf.mxu0
        %v2918 = vadd.f32 0.0, %v2917
        %v2919 = vpop.f32.mrf.mxu0
        %2920 = vmatprep.mubr.f32.mxu0 0.0
        %2921 = vmatmul.mubr.f32.gmra.mxu0 %v2727
        %v2922 = vpop.f32.mrf.mxu0
        %v2923 = vadd.f32 0.0, %v2922
        %v2924 = vpop.f32.mrf.mxu0
        %2925 = vmatprep.mubr.f32.mxu0 0.0
        %2926 = vmatmul.mubr.f32.gmra.mxu0 %v2730
        %v2927 = vpop.f32.mrf.mxu0
        %v2928 = vadd.f32 0.0, %v2927
        %v2929 = vpop.f32.mrf.mxu0
        %2930 = vmatprep.mubr.f32.mxu0 0.0
        %2931 = vmatmul.mubr.f32.gmra.mxu0 %v2733
        %v2932 = vpop.f32.mrf.mxu0
        %v2933 = vadd.f32 0.0, %v2932
        %v2934 = vpop.f32.mrf.mxu0
        %2935 = vmatprep.mubr.f32.mxu0 0.0
        %2936 = vmatmul.mubr.f32.gmra.mxu0 %v2736
        %v2937 = vpop.f32.mrf.mxu0
        %v2938 = vadd.f32 0.0, %v2937
        %v2939 = vpop.f32.mrf.mxu0
        %2940 = vmatprep.mubr.f32.mxu0 0.0
        %2941 = vmatmul.mubr.f32.gmra.mxu0 %v2739
        %v2942 = vpop.f32.mrf.mxu0
        %v2943 = vadd.f32 0.0, %v2942
        %v2944 = vpop.f32.mrf.mxu0
        %2945 = vmatprep.mubr.f32.mxu0 0.0
        %2946 = vmatmul.mubr.f32.gmra.mxu0 %v2742
        %v2947 = vpop.f32.mrf.mxu0
        %v2948 = vadd.f32 0.0, %v2947
        %v2949 = vpop.f32.mrf.mxu0
        %2950 = vmatprep.mubr.f32.mxu0 0.0
        %2951 = vmatmul.mubr.f32.gmra.mxu0 %v2745
        %v2952 = vpop.f32.mrf.mxu0
        %v2953 = vadd.f32 0.0, %v2952
        %v2954 = vpop.f32.mrf.mxu0
        %2955 = vmatprep.mubr.f32.mxu0 0.0
        %2956 = vmatmul.mubr.f32.gmra.mxu0 %v2748
        %v2957 = vpop.f32.mrf.mxu0
        %v2958 = vadd.f32 0.0, %v2957
        %v2959 = vpop.f32.mrf.mxu0
        %2960 = vmatprep.mubr.f32.mxu0 0.0
        %2961 = vmatmul.mubr.f32.gmra.mxu0 %v2751
        %v2962 = vpop.f32.mrf.mxu0
        %v2963 = vadd.f32 0.0, %v2962
        %v2964 = vpop.f32.mrf.mxu0
        %2965 = vmatprep.mubr.f32.mxu0 0.0
        %2966 = vmatmul.mubr.f32.gmra.mxu0 %v2754
        %v2967 = vpop.f32.mrf.mxu0
        %v2968 = vadd.f32 0.0, %v2967
        %v2969 = vpop.f32.mrf.mxu0
        %2970 = vmatprep.mubr.f32.mxu0 0.0
        %2971 = vmatmul.mubr.f32.gmra.mxu0 %v2757
        %v2972 = vpop.f32.mrf.mxu0
        %v2973 = vadd.f32 0.0, %v2972
        %v2974 = vpop.f32.mrf.mxu0
        %2975 = vmatprep.mubr.f32.mxu0 0.0
        %2976 = vmatmul.mubr.f32.gmra.mxu0 %v2760
        %v2977 = vpop.f32.mrf.mxu0
        %v2978 = vadd.f32 0.0, %v2977
        %v2979 = vpop.f32.mrf.mxu0
        %2980 = vmatprep.mubr.f32.mxu0 0.0
        %2981 = vmatmul.mubr.f32.gmra.mxu0 %v2763
        %v2982 = vpop.f32.mrf.mxu0
        %v2983 = vadd.f32 0.0, %v2982
        %v2984 = vpop.f32.mrf.mxu0
        %2985 = vmatprep.mubr.f32.mxu0 0.0
        %2986 = vmatmul.mubr.f32.gmra.mxu0 %v2766
        %v2987 = vpop.f32.mrf.mxu0
        %v2988 = vadd.f32 0.0, %v2987
        %v2989 = vpop.f32.mrf.mxu0
        %2990 = vmatprep.mubr.f32.mxu0 0.0
        %2991 = vmatmul.mubr.f32.gmra.mxu0 %v2769
        %v2992 = vpop.f32.mrf.mxu0
        %v2993 = vadd.f32 0.0, %v2992
        %v2994 = vpop.f32.mrf.mxu0
        %2995 = vdwg.mxu0
        %v2996 = vadd.f32 %v2601, %v2838
        %v2997 = vadd.f32 %v2602, %v2843
        %v2998 = vadd.f32 %v2603, %v2848
        %v2999 = vadd.f32 %v2604, %v2853
        %v3000 = vadd.f32 %v2605, %v2858
        %v3001 = vadd.f32 %v2606, %v2863
        %v3002 = vadd.f32 %v2607, %v2868
        %v3003 = vadd.f32 %v2608, %v2873
        %v3004 = vadd.f32 %v2609, %v2878
        %v3005 = vadd.f32 %v2610, %v2883
        %v3006 = vadd.f32 %v2611, %v2888
        %v3007 = vadd.f32 %v2612, %v2893
        %v3008 = vadd.f32 %v2613, %v2898
        %v3009 = vadd.f32 %v2614, %v2903
        %v3010 = vadd.f32 %v2615, %v2908
        %v3011 = vadd.f32 %v2616, %v2913
        %v3012 = vadd.f32 %v2617, %v2918
        %v3013 = vadd.f32 %v2618, %v2923
        %v3014 = vadd.f32 %v2619, %v2928
        %v3015 = vadd.f32 %v2620, %v2933
        %v3016 = vadd.f32 %v2621, %v2938
        %v3017 = vadd.f32 %v2622, %v2943
        %v3018 = vadd.f32 %v2623, %v2948
        %v3019 = vadd.f32 %v2624, %v2953
        %v3020 = vadd.f32 %v2625, %v2958
        %v3021 = vadd.f32 %v2626, %v2963
        %v3022 = vadd.f32 %v2627, %v2968
        %v3023 = vadd.f32 %v2628, %v2973
        %v3024 = vadd.f32 %v2629, %v2978
        %v3025 = vadd.f32 %v2630, %v2983
        %v3026 = vadd.f32 %v2631, %v2988
        %v3027 = vadd.f32 %v2632, %v2993
        %v3028 = vld [vmem:[%s2633 + $0x1] sm:$0xff]
        %v3029 = vld [vmem:[%s2633 + $0x9] sm:$0xff]
        %v3030 = vld [vmem:[%s2633 + $0x19] sm:$0xff]
        %v3031 = vld [vmem:[%s2633 + $0x21] sm:$0xff]
        %v3032 = vld [vmem:[%s2633 + $0x31] sm:$0xff]
        %v3033 = vld [vmem:[%s2633 + $0x39] sm:$0xff]
        %v3034 = vld [vmem:[%s2633 + $0x49] sm:$0xff]
        %v3035 = vld [vmem:[%s2633 + $0x51] sm:$0xff]
        %v3036 = vld [vmem:[%s2633 + $0x61] sm:$0xff]
        %v3037 = vld [vmem:[%s2633 + $0x69] sm:$0xff]
        %v3038 = vld [vmem:[%s2633 + $0x79] sm:$0xff]
        %v3039 = vld [vmem:[%s2633 + $0x81] sm:$0xff]
        %v3040 = vld [vmem:[%s2633 + $0x91] sm:$0xff]
        %v3041 = vld [vmem:[%s2633 + $0x99] sm:$0xff]
        %v3042 = vld [vmem:[%s2633 + $0xa9] sm:$0xff]
        %v3043 = vld [vmem:[%s2633 + $0xb1] sm:$0xff]
        %v3044 = vld [vmem:[%s2633 + $0xc1] sm:$0xff]
        %v3045 = vld [vmem:[%s2633 + $0xc9] sm:$0xff]
        %v3046 = vld [vmem:[%s2633 + $0xd9] sm:$0xff]
        %v3047 = vld [vmem:[%s2633 + $0xe1] sm:$0xff]
        %v3048 = vld [vmem:[%s2633 + $0xf1] sm:$0xff]
        %v3049 = vld [vmem:[%s2633 + $0xf9] sm:$0xff]
        %v3050 = vld [vmem:[%s2633 + $0x109] sm:$0xff]
        %v3051 = vld [vmem:[%s2633 + $0x111] sm:$0xff]
        %v3052 = vld [vmem:[%s2633 + $0x121] sm:$0xff]
        %v3053 = vld [vmem:[%s2633 + $0x129] sm:$0xff]
        %v3054 = vld [vmem:[%s2633 + $0x139] sm:$0xff]
        %v3055 = vld [vmem:[%s2633 + $0x141] sm:$0xff]
        %v3056 = vld [vmem:[%s2633 + $0x151] sm:$0xff]
        %v3057 = vld [vmem:[%s2633 + $0x159] sm:$0xff]
        %v3058 = vld [vmem:[%s2633 + $0x169] sm:$0xff]
        %v3059 = vld [vmem:[%s2633 + $0x171] sm:$0xff]
        %s3060 = scalar_lea.vmem %s1, 448
        %v3061 = vld [vmem:[%s3060] sm:$0xff]
        %v3062 = vld [vmem:[%s3060 + $0x8] sm:$0xff]
        %v3063 = vld [vmem:[%s3060 + $0x10] sm:$0xff]
        %v3064 = vld [vmem:[%s3060 + $0x18] sm:$0xff]
        %v3065 = vld [vmem:[%s3060 + $0x20] sm:$0xff]
        %v3066 = vld [vmem:[%s3060 + $0x28] sm:$0xff]
        %v3067 = vld [vmem:[%s3060 + $0x30] sm:$0xff]
        %v3068 = vld [vmem:[%s3060 + $0x38] sm:$0xff]
        %v3070 = vsel %vm223, %v3028, 0
        %v3073 = vsel %vm223, %v3029, 0
        %v3076 = vsel %vm223, %v3030, 0
        %v3079 = vsel %vm223, %v3031, 0
        %v3082 = vsel %vm223, %v3032, 0
        %v3085 = vsel %vm223, %v3033, 0
        %v3088 = vsel %vm223, %v3034, 0
        %v3091 = vsel %vm223, %v3035, 0
        %v3094 = vsel %vm223, %v3036, 0
        %v3097 = vsel %vm223, %v3037, 0
        %v3100 = vsel %vm223, %v3038, 0
        %v3103 = vsel %vm223, %v3039, 0
        %v3106 = vsel %vm223, %v3040, 0
        %v3109 = vsel %vm223, %v3041, 0
        %v3112 = vsel %vm223, %v3042, 0
        %v3115 = vsel %vm223, %v3043, 0
        %v3118 = vsel %vm223, %v3044, 0
        %v3121 = vsel %vm223, %v3045, 0
        %v3124 = vsel %vm223, %v3046, 0
        %v3127 = vsel %vm223, %v3047, 0
        %v3130 = vsel %vm223, %v3048, 0
        %v3133 = vsel %vm223, %v3049, 0
        %v3136 = vsel %vm223, %v3050, 0
        %v3139 = vsel %vm223, %v3051, 0
        %v3142 = vsel %vm223, %v3052, 0
        %v3145 = vsel %vm223, %v3053, 0
        %v3148 = vsel %vm223, %v3054, 0
        %v3151 = vsel %vm223, %v3055, 0
        %v3154 = vsel %vm223, %v3056, 0
        %v3157 = vsel %vm223, %v3057, 0
        %v3160 = vsel %vm223, %v3058, 0
        %v3163 = vsel %vm223, %v3059, 0
        %3165 = vmatprep.subr.mxu0 0.0
        %3166 = vmatpush1.msra.mxu0 0.0
        %3167 = vmatprep.subr.mxu0 0.0
        %3168 = vmatpush1.msra.mxu0 0.0
        %3169 = vmatprep.subr.mxu0 0.0
        %3170 = vmatpush1.msra.mxu0 0.0
        %3171 = vmatprep.subr.mxu0 0.0
        %3172 = vmatpush1.msra.mxu0 0.0
        %3173 = vmatprep.subr.mxu0 0.0
        %3174 = vmatpush1.msra.mxu0 0.0
        %3175 = vmatprep.subr.mxu0 0.0
        %3176 = vmatpush1.msra.mxu0 0.0
        %3177 = vmatprep.subr.mxu0 0.0
        %3178 = vmatpush1.msra.mxu0 0.0
        %3179 = vmatprep.subr.mxu0 0.0
        %3180 = vmatpush1.msra.mxu0 0.0
        %3181 = vmatprep.subr.mxu0 0.0
        %3182 = vmatpush1.msra.mxu0 %v3068
        %3183 = vmatprep.subr.mxu0 0.0
        %3184 = vmatpush1.msra.mxu0 %v3067
        %3185 = vmatprep.subr.mxu0 0.0
        %3186 = vmatpush1.msra.mxu0 %v3066
        %3187 = vmatprep.subr.mxu0 0.0
        %3188 = vmatpush1.msra.mxu0 %v3065
        %3189 = vmatprep.subr.mxu0 0.0
        %3190 = vmatpush1.msra.mxu0 %v3064
        %3191 = vmatprep.subr.mxu0 0.0
        %3192 = vmatpush1.msra.mxu0 %v3063
        %3193 = vmatprep.subr.mxu0 0.0
        %3194 = vmatpush1.msra.mxu0 %v3062
        %3195 = vmatprep.subr.mxu0 0.0
        %3196 = vmatpush1.msra.mxu0 %v3061
        %3197 = vmatprep.subr.mxu0 0.0
        %3198 = vmatpush2.msra.mxu0 0.0
        %3199 = vmatprep.subr.mxu0 0.0
        %3200 = vmatpush2.msra.mxu0 0.0
        %3201 = vmatprep.subr.mxu0 0.0
        %3202 = vmatpush2.msra.mxu0 0.0
        %3203 = vmatprep.subr.mxu0 0.0
        %3204 = vmatpush2.msra.mxu0 0.0
        %3205 = vmatprep.subr.mxu0 0.0
        %3206 = vmatpush2.msra.mxu0 0.0
        %3207 = vmatprep.subr.mxu0 0.0
        %3208 = vmatpush2.msra.mxu0 0.0
        %3209 = vmatprep.subr.mxu0 0.0
        %3210 = vmatpush2.msra.mxu0 0.0
        %3211 = vmatprep.subr.mxu0 0.0
        %3212 = vmatpush2.msra.mxu0 0.0
        %3213 = vmatprep.subr.mxu0 0.0
        %3214 = vmatpush2.msra.mxu0 0.0
        %3215 = vmatprep.subr.mxu0 0.0
        %3216 = vmatpush2.msra.mxu0 0.0
        %3217 = vmatprep.subr.mxu0 0.0
        %3218 = vmatpush2.msra.mxu0 0.0
        %3219 = vmatprep.subr.mxu0 0.0
        %3220 = vmatpush2.msra.mxu0 0.0
        %3221 = vmatprep.subr.mxu0 0.0
        %3222 = vmatpush2.msra.mxu0 0.0
        %3223 = vmatprep.subr.mxu0 0.0
        %3224 = vmatpush2.msra.mxu0 0.0
        %3225 = vmatprep.subr.mxu0 0.0
        %3226 = vmatpush2.msra.mxu0 0.0
        %3227 = vmatprep.subr.mxu0 0.0
        %3228 = vmatpush2.msra.mxu0 0.0
        %3229 = vmatprep.mubr.f32.mxu0 0.0
        %3230 = vmatmul.mubr.f32.gmra.mxu0 %v3070
        %v3231 = vpop.f32.mrf.mxu0
        %v3232 = vadd.f32 0.0, %v3231
        %v3233 = vpop.f32.mrf.mxu0
        %3234 = vmatprep.mubr.f32.mxu0 0.0
        %3235 = vmatmul.mubr.f32.gmra.mxu0 %v3073
        %v3236 = vpop.f32.mrf.mxu0
        %v3237 = vadd.f32 0.0, %v3236
        %v3238 = vpop.f32.mrf.mxu0
        %3239 = vmatprep.mubr.f32.mxu0 0.0
        %3240 = vmatmul.mubr.f32.gmra.mxu0 %v3076
        %v3241 = vpop.f32.mrf.mxu0
        %v3242 = vadd.f32 0.0, %v3241
        %v3243 = vpop.f32.mrf.mxu0
        %3244 = vmatprep.mubr.f32.mxu0 0.0
        %3245 = vmatmul.mubr.f32.gmra.mxu0 %v3079
        %v3246 = vpop.f32.mrf.mxu0
        %v3247 = vadd.f32 0.0, %v3246
        %v3248 = vpop.f32.mrf.mxu0
        %3249 = vmatprep.mubr.f32.mxu0 0.0
        %3250 = vmatmul.mubr.f32.gmra.mxu0 %v3082
        %v3251 = vpop.f32.mrf.mxu0
        %v3252 = vadd.f32 0.0, %v3251
        %v3253 = vpop.f32.mrf.mxu0
        %3254 = vmatprep.mubr.f32.mxu0 0.0
        %3255 = vmatmul.mubr.f32.gmra.mxu0 %v3085
        %v3256 = vpop.f32.mrf.mxu0
        %v3257 = vadd.f32 0.0, %v3256
        %v3258 = vpop.f32.mrf.mxu0
        %3259 = vmatprep.mubr.f32.mxu0 0.0
        %3260 = vmatmul.mubr.f32.gmra.mxu0 %v3088
        %v3261 = vpop.f32.mrf.mxu0
        %v3262 = vadd.f32 0.0, %v3261
        %v3263 = vpop.f32.mrf.mxu0
        %3264 = vmatprep.mubr.f32.mxu0 0.0
        %3265 = vmatmul.mubr.f32.gmra.mxu0 %v3091
        %v3266 = vpop.f32.mrf.mxu0
        %v3267 = vadd.f32 0.0, %v3266
        %v3268 = vpop.f32.mrf.mxu0
        %3269 = vmatprep.mubr.f32.mxu0 0.0
        %3270 = vmatmul.mubr.f32.gmra.mxu0 %v3094
        %v3271 = vpop.f32.mrf.mxu0
        %v3272 = vadd.f32 0.0, %v3271
        %v3273 = vpop.f32.mrf.mxu0
        %3274 = vmatprep.mubr.f32.mxu0 0.0
        %3275 = vmatmul.mubr.f32.gmra.mxu0 %v3097
        %v3276 = vpop.f32.mrf.mxu0
        %v3277 = vadd.f32 0.0, %v3276
        %v3278 = vpop.f32.mrf.mxu0
        %3279 = vmatprep.mubr.f32.mxu0 0.0
        %3280 = vmatmul.mubr.f32.gmra.mxu0 %v3100
        %v3281 = vpop.f32.mrf.mxu0
        %v3282 = vadd.f32 0.0, %v3281
        %v3283 = vpop.f32.mrf.mxu0
        %3284 = vmatprep.mubr.f32.mxu0 0.0
        %3285 = vmatmul.mubr.f32.gmra.mxu0 %v3103
        %v3286 = vpop.f32.mrf.mxu0
        %v3287 = vadd.f32 0.0, %v3286
        %v3288 = vpop.f32.mrf.mxu0
        %3289 = vmatprep.mubr.f32.mxu0 0.0
        %3290 = vmatmul.mubr.f32.gmra.mxu0 %v3106
        %v3291 = vpop.f32.mrf.mxu0
        %v3292 = vadd.f32 0.0, %v3291
        %v3293 = vpop.f32.mrf.mxu0
        %3294 = vmatprep.mubr.f32.mxu0 0.0
        %3295 = vmatmul.mubr.f32.gmra.mxu0 %v3109
        %v3296 = vpop.f32.mrf.mxu0
        %v3297 = vadd.f32 0.0, %v3296
        %v3298 = vpop.f32.mrf.mxu0
        %3299 = vmatprep.mubr.f32.mxu0 0.0
        %3300 = vmatmul.mubr.f32.gmra.mxu0 %v3112
        %v3301 = vpop.f32.mrf.mxu0
        %v3302 = vadd.f32 0.0, %v3301
        %v3303 = vpop.f32.mrf.mxu0
        %3304 = vmatprep.mubr.f32.mxu0 0.0
        %3305 = vmatmul.mubr.f32.gmra.mxu0 %v3115
        %v3306 = vpop.f32.mrf.mxu0
        %v3307 = vadd.f32 0.0, %v3306
        %v3308 = vpop.f32.mrf.mxu0
        %3309 = vmatprep.mubr.f32.mxu0 0.0
        %3310 = vmatmul.mubr.f32.gmra.mxu0 %v3118
        %v3311 = vpop.f32.mrf.mxu0
        %v3312 = vadd.f32 0.0, %v3311
        %v3313 = vpop.f32.mrf.mxu0
        %3314 = vmatprep.mubr.f32.mxu0 0.0
        %3315 = vmatmul.mubr.f32.gmra.mxu0 %v3121
        %v3316 = vpop.f32.mrf.mxu0
        %v3317 = vadd.f32 0.0, %v3316
        %v3318 = vpop.f32.mrf.mxu0
        %3319 = vmatprep.mubr.f32.mxu0 0.0
        %3320 = vmatmul.mubr.f32.gmra.mxu0 %v3124
        %v3321 = vpop.f32.mrf.mxu0
        %v3322 = vadd.f32 0.0, %v3321
        %v3323 = vpop.f32.mrf.mxu0
        %3324 = vmatprep.mubr.f32.mxu0 0.0
        %3325 = vmatmul.mubr.f32.gmra.mxu0 %v3127
        %v3326 = vpop.f32.mrf.mxu0
        %v3327 = vadd.f32 0.0, %v3326
        %v3328 = vpop.f32.mrf.mxu0
        %3329 = vmatprep.mubr.f32.mxu0 0.0
        %3330 = vmatmul.mubr.f32.gmra.mxu0 %v3130
        %v3331 = vpop.f32.mrf.mxu0
        %v3332 = vadd.f32 0.0, %v3331
        %v3333 = vpop.f32.mrf.mxu0
        %3334 = vmatprep.mubr.f32.mxu0 0.0
        %3335 = vmatmul.mubr.f32.gmra.mxu0 %v3133
        %v3336 = vpop.f32.mrf.mxu0
        %v3337 = vadd.f32 0.0, %v3336
        %v3338 = vpop.f32.mrf.mxu0
        %3339 = vmatprep.mubr.f32.mxu0 0.0
        %3340 = vmatmul.mubr.f32.gmra.mxu0 %v3136
        %v3341 = vpop.f32.mrf.mxu0
        %v3342 = vadd.f32 0.0, %v3341
        %v3343 = vpop.f32.mrf.mxu0
        %3344 = vmatprep.mubr.f32.mxu0 0.0
        %3345 = vmatmul.mubr.f32.gmra.mxu0 %v3139
        %v3346 = vpop.f32.mrf.mxu0
        %v3347 = vadd.f32 0.0, %v3346
        %v3348 = vpop.f32.mrf.mxu0
        %3349 = vmatprep.mubr.f32.mxu0 0.0
        %3350 = vmatmul.mubr.f32.gmra.mxu0 %v3142
        %v3351 = vpop.f32.mrf.mxu0
        %v3352 = vadd.f32 0.0, %v3351
        %v3353 = vpop.f32.mrf.mxu0
        %3354 = vmatprep.mubr.f32.mxu0 0.0
        %3355 = vmatmul.mubr.f32.gmra.mxu0 %v3145
        %v3356 = vpop.f32.mrf.mxu0
        %v3357 = vadd.f32 0.0, %v3356
        %v3358 = vpop.f32.mrf.mxu0
        %3359 = vmatprep.mubr.f32.mxu0 0.0
        %3360 = vmatmul.mubr.f32.gmra.mxu0 %v3148
        %v3361 = vpop.f32.mrf.mxu0
        %v3362 = vadd.f32 0.0, %v3361
        %v3363 = vpop.f32.mrf.mxu0
        %3364 = vmatprep.mubr.f32.mxu0 0.0
        %3365 = vmatmul.mubr.f32.gmra.mxu0 %v3151
        %v3366 = vpop.f32.mrf.mxu0
        %v3367 = vadd.f32 0.0, %v3366
        %v3368 = vpop.f32.mrf.mxu0
        %3369 = vmatprep.mubr.f32.mxu0 0.0
        %3370 = vmatmul.mubr.f32.gmra.mxu0 %v3154
        %v3371 = vpop.f32.mrf.mxu0
        %v3372 = vadd.f32 0.0, %v3371
        %v3373 = vpop.f32.mrf.mxu0
        %3374 = vmatprep.mubr.f32.mxu0 0.0
        %3375 = vmatmul.mubr.f32.gmra.mxu0 %v3157
        %v3376 = vpop.f32.mrf.mxu0
        %v3377 = vadd.f32 0.0, %v3376
        %v3378 = vpop.f32.mrf.mxu0
        %3379 = vmatprep.mubr.f32.mxu0 0.0
        %3380 = vmatmul.mubr.f32.gmra.mxu0 %v3160
        %v3381 = vpop.f32.mrf.mxu0
        %v3382 = vadd.f32 0.0, %v3381
        %v3383 = vpop.f32.mrf.mxu0
        %3384 = vmatprep.mubr.f32.mxu0 0.0
        %3385 = vmatmul.mubr.f32.gmra.mxu0 %v3163
        %v3386 = vpop.f32.mrf.mxu0
        %v3387 = vadd.f32 0.0, %v3386
        %v3388 = vpop.f32.mrf.mxu0
        %3389 = vdwg.mxu0
        %v3390 = vadd.f32 %v2996, %v3232
        %v3391 = vadd.f32 %v2997, %v3237
        %v3392 = vadd.f32 %v2998, %v3242
        %v3393 = vadd.f32 %v2999, %v3247
        %v3394 = vadd.f32 %v3000, %v3252
        %v3395 = vadd.f32 %v3001, %v3257
        %v3396 = vadd.f32 %v3002, %v3262
        %v3397 = vadd.f32 %v3003, %v3267
        %v3398 = vadd.f32 %v3004, %v3272
        %v3399 = vadd.f32 %v3005, %v3277
        %v3400 = vadd.f32 %v3006, %v3282
        %v3401 = vadd.f32 %v3007, %v3287
        %v3402 = vadd.f32 %v3008, %v3292
        %v3403 = vadd.f32 %v3009, %v3297
        %v3404 = vadd.f32 %v3010, %v3302
        %v3405 = vadd.f32 %v3011, %v3307
        %v3406 = vadd.f32 %v3012, %v3312
        %v3407 = vadd.f32 %v3013, %v3317
        %v3408 = vadd.f32 %v3014, %v3322
        %v3409 = vadd.f32 %v3015, %v3327
        %v3410 = vadd.f32 %v3016, %v3332
        %v3411 = vadd.f32 %v3017, %v3337
        %v3412 = vadd.f32 %v3018, %v3342
        %v3413 = vadd.f32 %v3019, %v3347
        %v3414 = vadd.f32 %v3020, %v3352
        %v3415 = vadd.f32 %v3021, %v3357
        %v3416 = vadd.f32 %v3022, %v3362
        %v3417 = vadd.f32 %v3023, %v3367
        %v3418 = vadd.f32 %v3024, %v3372
        %v3419 = vadd.f32 %v3025, %v3377
        %v3420 = vadd.f32 %v3026, %v3382
        %v3421 = vadd.f32 %v3027, %v3387
        %v3422 = vld [vmem:[%s2633 + $0x2] sm:$0xff]
        %v3423 = vld [vmem:[%s2633 + $0xa] sm:$0xff]
        %v3424 = vld [vmem:[%s2633 + $0x1a] sm:$0xff]
        %v3425 = vld [vmem:[%s2633 + $0x22] sm:$0xff]
        %v3426 = vld [vmem:[%s2633 + $0x32] sm:$0xff]
        %v3427 = vld [vmem:[%s2633 + $0x3a] sm:$0xff]
        %v3428 = vld [vmem:[%s2633 + $0x4a] sm:$0xff]
        %v3429 = vld [vmem:[%s2633 + $0x52] sm:$0xff]
        %v3430 = vld [vmem:[%s2633 + $0x62] sm:$0xff]
        %v3431 = vld [vmem:[%s2633 + $0x6a] sm:$0xff]
        %v3432 = vld [vmem:[%s2633 + $0x7a] sm:$0xff]
        %v3433 = vld [vmem:[%s2633 + $0x82] sm:$0xff]
        %v3434 = vld [vmem:[%s2633 + $0x92] sm:$0xff]
        %v3435 = vld [vmem:[%s2633 + $0x9a] sm:$0xff]
        %v3436 = vld [vmem:[%s2633 + $0xaa] sm:$0xff]
        %v3437 = vld [vmem:[%s2633 + $0xb2] sm:$0xff]
        %v3438 = vld [vmem:[%s2633 + $0xc2] sm:$0xff]
        %v3439 = vld [vmem:[%s2633 + $0xca] sm:$0xff]
        %v3440 = vld [vmem:[%s2633 + $0xda] sm:$0xff]
        %v3441 = vld [vmem:[%s2633 + $0xe2] sm:$0xff]
        %v3442 = vld [vmem:[%s2633 + $0xf2] sm:$0xff]
        %v3443 = vld [vmem:[%s2633 + $0xfa] sm:$0xff]
        %v3444 = vld [vmem:[%s2633 + $0x10a] sm:$0xff]
        %v3445 = vld [vmem:[%s2633 + $0x112] sm:$0xff]
        %v3446 = vld [vmem:[%s2633 + $0x122] sm:$0xff]
        %v3447 = vld [vmem:[%s2633 + $0x12a] sm:$0xff]
        %v3448 = vld [vmem:[%s2633 + $0x13a] sm:$0xff]
        %v3449 = vld [vmem:[%s2633 + $0x142] sm:$0xff]
        %v3450 = vld [vmem:[%s2633 + $0x152] sm:$0xff]
        %v3451 = vld [vmem:[%s2633 + $0x15a] sm:$0xff]
        %v3452 = vld [vmem:[%s2633 + $0x16a] sm:$0xff]
        %v3453 = vld [vmem:[%s2633 + $0x172] sm:$0xff]
        %s3454 = scalar_lea.vmem %s1, 512
        %v3455 = vld [vmem:[%s3454] sm:$0xff]
        %v3456 = vld [vmem:[%s3454 + $0x8] sm:$0xff]
        %v3457 = vld [vmem:[%s3454 + $0x10] sm:$0xff]
        %v3458 = vld [vmem:[%s3454 + $0x18] sm:$0xff]
        %v3459 = vld [vmem:[%s3454 + $0x20] sm:$0xff]
        %v3460 = vld [vmem:[%s3454 + $0x28] sm:$0xff]
        %v3461 = vld [vmem:[%s3454 + $0x30] sm:$0xff]
        %v3462 = vld [vmem:[%s3454 + $0x38] sm:$0xff]
        %v3464 = vsel %vm223, %v3422, 0
        %v3467 = vsel %vm223, %v3423, 0
        %v3470 = vsel %vm223, %v3424, 0
        %v3473 = vsel %vm223, %v3425, 0
        %v3476 = vsel %vm223, %v3426, 0
        %v3479 = vsel %vm223, %v3427, 0
        %v3482 = vsel %vm223, %v3428, 0
        %v3485 = vsel %vm223, %v3429, 0
        %v3488 = vsel %vm223, %v3430, 0
        %v3491 = vsel %vm223, %v3431, 0
        %v3494 = vsel %vm223, %v3432, 0
        %v3497 = vsel %vm223, %v3433, 0
        %v3500 = vsel %vm223, %v3434, 0
        %v3503 = vsel %vm223, %v3435, 0
        %v3506 = vsel %vm223, %v3436, 0
        %v3509 = vsel %vm223, %v3437, 0
        %v3512 = vsel %vm223, %v3438, 0
        %v3515 = vsel %vm223, %v3439, 0
        %v3518 = vsel %vm223, %v3440, 0
        %v3521 = vsel %vm223, %v3441, 0
        %v3524 = vsel %vm223, %v3442, 0
        %v3527 = vsel %vm223, %v3443, 0
        %v3530 = vsel %vm223, %v3444, 0
        %v3533 = vsel %vm223, %v3445, 0
        %v3536 = vsel %vm223, %v3446, 0
        %v3539 = vsel %vm223, %v3447, 0
        %v3542 = vsel %vm223, %v3448, 0
        %v3545 = vsel %vm223, %v3449, 0
        %v3548 = vsel %vm223, %v3450, 0
        %v3551 = vsel %vm223, %v3451, 0
        %v3554 = vsel %vm223, %v3452, 0
        %v3557 = vsel %vm223, %v3453, 0
        %3559 = vmatprep.subr.mxu0 0.0
        %3560 = vmatpush1.msra.mxu0 0.0
        %3561 = vmatprep.subr.mxu0 0.0
        %3562 = vmatpush1.msra.mxu0 0.0
        %3563 = vmatprep.subr.mxu0 0.0
        %3564 = vmatpush1.msra.mxu0 0.0
        %3565 = vmatprep.subr.mxu0 0.0
        %3566 = vmatpush1.msra.mxu0 0.0
        %3567 = vmatprep.subr.mxu0 0.0
        %3568 = vmatpush1.msra.mxu0 0.0
        %3569 = vmatprep.subr.mxu0 0.0
        %3570 = vmatpush1.msra.mxu0 0.0
        %3571 = vmatprep.subr.mxu0 0.0
        %3572 = vmatpush1.msra.mxu0 0.0
        %3573 = vmatprep.subr.mxu0 0.0
        %3574 = vmatpush1.msra.mxu0 0.0
        %3575 = vmatprep.subr.mxu0 0.0
        %3576 = vmatpush1.msra.mxu0 %v3462
        %3577 = vmatprep.subr.mxu0 0.0
        %3578 = vmatpush1.msra.mxu0 %v3461
        %3579 = vmatprep.subr.mxu0 0.0
        %3580 = vmatpush1.msra.mxu0 %v3460
        %3581 = vmatprep.subr.mxu0 0.0
        %3582 = vmatpush1.msra.mxu0 %v3459
        %3583 = vmatprep.subr.mxu0 0.0
        %3584 = vmatpush1.msra.mxu0 %v3458
        %3585 = vmatprep.subr.mxu0 0.0
        %3586 = vmatpush1.msra.mxu0 %v3457
        %3587 = vmatprep.subr.mxu0 0.0
        %3588 = vmatpush1.msra.mxu0 %v3456
        %3589 = vmatprep.subr.mxu0 0.0
        %3590 = vmatpush1.msra.mxu0 %v3455
        %3591 = vmatprep.subr.mxu0 0.0
        %3592 = vmatpush2.msra.mxu0 0.0
        %3593 = vmatprep.subr.mxu0 0.0
        %3594 = vmatpush2.msra.mxu0 0.0
        %3595 = vmatprep.subr.mxu0 0.0
        %3596 = vmatpush2.msra.mxu0 0.0
        %3597 = vmatprep.subr.mxu0 0.0
        %3598 = vmatpush2.msra.mxu0 0.0
        %3599 = vmatprep.subr.mxu0 0.0
        %3600 = vmatpush2.msra.mxu0 0.0
        %3601 = vmatprep.subr.mxu0 0.0
        %3602 = vmatpush2.msra.mxu0 0.0
        %3603 = vmatprep.subr.mxu0 0.0
        %3604 = vmatpush2.msra.mxu0 0.0
        %3605 = vmatprep.subr.mxu0 0.0
        %3606 = vmatpush2.msra.mxu0 0.0
        %3607 = vmatprep.subr.mxu0 0.0
        %3608 = vmatpush2.msra.mxu0 0.0
        %3609 = vmatprep.subr.mxu0 0.0
        %3610 = vmatpush2.msra.mxu0 0.0
        %3611 = vmatprep.subr.mxu0 0.0
        %3612 = vmatpush2.msra.mxu0 0.0
        %3613 = vmatprep.subr.mxu0 0.0
        %3614 = vmatpush2.msra.mxu0 0.0
        %3615 = vmatprep.subr.mxu0 0.0
        %3616 = vmatpush2.msra.mxu0 0.0
        %3617 = vmatprep.subr.mxu0 0.0
        %3618 = vmatpush2.msra.mxu0 0.0
        %3619 = vmatprep.subr.mxu0 0.0
        %3620 = vmatpush2.msra.mxu0 0.0
        %3621 = vmatprep.subr.mxu0 0.0
        %3622 = vmatpush2.msra.mxu0 0.0
        %3623 = vmatprep.mubr.f32.mxu0 0.0
        %3624 = vmatmul.mubr.f32.gmra.mxu0 %v3464
        %v3625 = vpop.f32.mrf.mxu0
        %v3626 = vadd.f32 0.0, %v3625
        %v3627 = vpop.f32.mrf.mxu0
        %3628 = vmatprep.mubr.f32.mxu0 0.0
        %3629 = vmatmul.mubr.f32.gmra.mxu0 %v3467
        %v3630 = vpop.f32.mrf.mxu0
        %v3631 = vadd.f32 0.0, %v3630
        %v3632 = vpop.f32.mrf.mxu0
        %3633 = vmatprep.mubr.f32.mxu0 0.0
        %3634 = vmatmul.mubr.f32.gmra.mxu0 %v3470
        %v3635 = vpop.f32.mrf.mxu0
        %v3636 = vadd.f32 0.0, %v3635
        %v3637 = vpop.f32.mrf.mxu0
        %3638 = vmatprep.mubr.f32.mxu0 0.0
        %3639 = vmatmul.mubr.f32.gmra.mxu0 %v3473
        %v3640 = vpop.f32.mrf.mxu0
        %v3641 = vadd.f32 0.0, %v3640
        %v3642 = vpop.f32.mrf.mxu0
        %3643 = vmatprep.mubr.f32.mxu0 0.0
        %3644 = vmatmul.mubr.f32.gmra.mxu0 %v3476
        %v3645 = vpop.f32.mrf.mxu0
        %v3646 = vadd.f32 0.0, %v3645
        %v3647 = vpop.f32.mrf.mxu0
        %3648 = vmatprep.mubr.f32.mxu0 0.0
        %3649 = vmatmul.mubr.f32.gmra.mxu0 %v3479
        %v3650 = vpop.f32.mrf.mxu0
        %v3651 = vadd.f32 0.0, %v3650
        %v3652 = vpop.f32.mrf.mxu0
        %3653 = vmatprep.mubr.f32.mxu0 0.0
        %3654 = vmatmul.mubr.f32.gmra.mxu0 %v3482
        %v3655 = vpop.f32.mrf.mxu0
        %v3656 = vadd.f32 0.0, %v3655
        %v3657 = vpop.f32.mrf.mxu0
        %3658 = vmatprep.mubr.f32.mxu0 0.0
        %3659 = vmatmul.mubr.f32.gmra.mxu0 %v3485
        %v3660 = vpop.f32.mrf.mxu0
        %v3661 = vadd.f32 0.0, %v3660
        %v3662 = vpop.f32.mrf.mxu0
        %3663 = vmatprep.mubr.f32.mxu0 0.0
        %3664 = vmatmul.mubr.f32.gmra.mxu0 %v3488
        %v3665 = vpop.f32.mrf.mxu0
        %v3666 = vadd.f32 0.0, %v3665
        %v3667 = vpop.f32.mrf.mxu0
        %3668 = vmatprep.mubr.f32.mxu0 0.0
        %3669 = vmatmul.mubr.f32.gmra.mxu0 %v3491
        %v3670 = vpop.f32.mrf.mxu0
        %v3671 = vadd.f32 0.0, %v3670
        %v3672 = vpop.f32.mrf.mxu0
        %3673 = vmatprep.mubr.f32.mxu0 0.0
        %3674 = vmatmul.mubr.f32.gmra.mxu0 %v3494
        %v3675 = vpop.f32.mrf.mxu0
        %v3676 = vadd.f32 0.0, %v3675
        %v3677 = vpop.f32.mrf.mxu0
        %3678 = vmatprep.mubr.f32.mxu0 0.0
        %3679 = vmatmul.mubr.f32.gmra.mxu0 %v3497
        %v3680 = vpop.f32.mrf.mxu0
        %v3681 = vadd.f32 0.0, %v3680
        %v3682 = vpop.f32.mrf.mxu0
        %3683 = vmatprep.mubr.f32.mxu0 0.0
        %3684 = vmatmul.mubr.f32.gmra.mxu0 %v3500
        %v3685 = vpop.f32.mrf.mxu0
        %v3686 = vadd.f32 0.0, %v3685
        %v3687 = vpop.f32.mrf.mxu0
        %3688 = vmatprep.mubr.f32.mxu0 0.0
        %3689 = vmatmul.mubr.f32.gmra.mxu0 %v3503
        %v3690 = vpop.f32.mrf.mxu0
        %v3691 = vadd.f32 0.0, %v3690
        %v3692 = vpop.f32.mrf.mxu0
        %3693 = vmatprep.mubr.f32.mxu0 0.0
        %3694 = vmatmul.mubr.f32.gmra.mxu0 %v3506
        %v3695 = vpop.f32.mrf.mxu0
        %v3696 = vadd.f32 0.0, %v3695
        %v3697 = vpop.f32.mrf.mxu0
        %3698 = vmatprep.mubr.f32.mxu0 0.0
        %3699 = vmatmul.mubr.f32.gmra.mxu0 %v3509
        %v3700 = vpop.f32.mrf.mxu0
        %v3701 = vadd.f32 0.0, %v3700
        %v3702 = vpop.f32.mrf.mxu0
        %3703 = vmatprep.mubr.f32.mxu0 0.0
        %3704 = vmatmul.mubr.f32.gmra.mxu0 %v3512
        %v3705 = vpop.f32.mrf.mxu0
        %v3706 = vadd.f32 0.0, %v3705
        %v3707 = vpop.f32.mrf.mxu0
        %3708 = vmatprep.mubr.f32.mxu0 0.0
        %3709 = vmatmul.mubr.f32.gmra.mxu0 %v3515
        %v3710 = vpop.f32.mrf.mxu0
        %v3711 = vadd.f32 0.0, %v3710
        %v3712 = vpop.f32.mrf.mxu0
        %3713 = vmatprep.mubr.f32.mxu0 0.0
        %3714 = vmatmul.mubr.f32.gmra.mxu0 %v3518
        %v3715 = vpop.f32.mrf.mxu0
        %v3716 = vadd.f32 0.0, %v3715
        %v3717 = vpop.f32.mrf.mxu0
        %3718 = vmatprep.mubr.f32.mxu0 0.0
        %3719 = vmatmul.mubr.f32.gmra.mxu0 %v3521
        %v3720 = vpop.f32.mrf.mxu0
        %v3721 = vadd.f32 0.0, %v3720
        %v3722 = vpop.f32.mrf.mxu0
        %3723 = vmatprep.mubr.f32.mxu0 0.0
        %3724 = vmatmul.mubr.f32.gmra.mxu0 %v3524
        %v3725 = vpop.f32.mrf.mxu0
        %v3726 = vadd.f32 0.0, %v3725
        %v3727 = vpop.f32.mrf.mxu0
        %3728 = vmatprep.mubr.f32.mxu0 0.0
        %3729 = vmatmul.mubr.f32.gmra.mxu0 %v3527
        %v3730 = vpop.f32.mrf.mxu0
        %v3731 = vadd.f32 0.0, %v3730
        %v3732 = vpop.f32.mrf.mxu0
        %3733 = vmatprep.mubr.f32.mxu0 0.0
        %3734 = vmatmul.mubr.f32.gmra.mxu0 %v3530
        %v3735 = vpop.f32.mrf.mxu0
        %v3736 = vadd.f32 0.0, %v3735
        %v3737 = vpop.f32.mrf.mxu0
        %3738 = vmatprep.mubr.f32.mxu0 0.0
        %3739 = vmatmul.mubr.f32.gmra.mxu0 %v3533
        %v3740 = vpop.f32.mrf.mxu0
        %v3741 = vadd.f32 0.0, %v3740
        %v3742 = vpop.f32.mrf.mxu0
        %3743 = vmatprep.mubr.f32.mxu0 0.0
        %3744 = vmatmul.mubr.f32.gmra.mxu0 %v3536
        %v3745 = vpop.f32.mrf.mxu0
        %v3746 = vadd.f32 0.0, %v3745
        %v3747 = vpop.f32.mrf.mxu0
        %3748 = vmatprep.mubr.f32.mxu0 0.0
        %3749 = vmatmul.mubr.f32.gmra.mxu0 %v3539
        %v3750 = vpop.f32.mrf.mxu0
        %v3751 = vadd.f32 0.0, %v3750
        %v3752 = vpop.f32.mrf.mxu0
        %3753 = vmatprep.mubr.f32.mxu0 0.0
        %3754 = vmatmul.mubr.f32.gmra.mxu0 %v3542
        %v3755 = vpop.f32.mrf.mxu0
        %v3756 = vadd.f32 0.0, %v3755
        %v3757 = vpop.f32.mrf.mxu0
        %3758 = vmatprep.mubr.f32.mxu0 0.0
        %3759 = vmatmul.mubr.f32.gmra.mxu0 %v3545
        %v3760 = vpop.f32.mrf.mxu0
        %v3761 = vadd.f32 0.0, %v3760
        %v3762 = vpop.f32.mrf.mxu0
        %3763 = vmatprep.mubr.f32.mxu0 0.0
        %3764 = vmatmul.mubr.f32.gmra.mxu0 %v3548
        %v3765 = vpop.f32.mrf.mxu0
        %v3766 = vadd.f32 0.0, %v3765
        %v3767 = vpop.f32.mrf.mxu0
        %3768 = vmatprep.mubr.f32.mxu0 0.0
        %3769 = vmatmul.mubr.f32.gmra.mxu0 %v3551
        %v3770 = vpop.f32.mrf.mxu0
        %v3771 = vadd.f32 0.0, %v3770
        %v3772 = vpop.f32.mrf.mxu0
        %3773 = vmatprep.mubr.f32.mxu0 0.0
        %3774 = vmatmul.mubr.f32.gmra.mxu0 %v3554
        %v3775 = vpop.f32.mrf.mxu0
        %v3776 = vadd.f32 0.0, %v3775
        %v3777 = vpop.f32.mrf.mxu0
        %3778 = vmatprep.mubr.f32.mxu0 0.0
        %3779 = vmatmul.mubr.f32.gmra.mxu0 %v3557
        %v3780 = vpop.f32.mrf.mxu0
        %v3781 = vadd.f32 0.0, %v3780
        %v3782 = vpop.f32.mrf.mxu0
        %3783 = vdwg.mxu0
        %v3784 = vadd.f32 %v3390, %v3626
        %v3785 = vadd.f32 %v3391, %v3631
        %v3786 = vadd.f32 %v3392, %v3636
        %v3787 = vadd.f32 %v3393, %v3641
        %v3788 = vadd.f32 %v3394, %v3646
        %v3789 = vadd.f32 %v3395, %v3651
        %v3790 = vadd.f32 %v3396, %v3656
        %v3791 = vadd.f32 %v3397, %v3661
        %v3792 = vadd.f32 %v3398, %v3666
        %v3793 = vadd.f32 %v3399, %v3671
        %v3794 = vadd.f32 %v3400, %v3676
        %v3795 = vadd.f32 %v3401, %v3681
        %v3796 = vadd.f32 %v3402, %v3686
        %v3797 = vadd.f32 %v3403, %v3691
        %v3798 = vadd.f32 %v3404, %v3696
        %v3799 = vadd.f32 %v3405, %v3701
        %v3800 = vadd.f32 %v3406, %v3706
        %v3801 = vadd.f32 %v3407, %v3711
        %v3802 = vadd.f32 %v3408, %v3716
        %v3803 = vadd.f32 %v3409, %v3721
        %v3804 = vadd.f32 %v3410, %v3726
        %v3805 = vadd.f32 %v3411, %v3731
        %v3806 = vadd.f32 %v3412, %v3736
        %v3807 = vadd.f32 %v3413, %v3741
        %v3808 = vadd.f32 %v3414, %v3746
        %v3809 = vadd.f32 %v3415, %v3751
        %v3810 = vadd.f32 %v3416, %v3756
        %v3811 = vadd.f32 %v3417, %v3761
        %v3812 = vadd.f32 %v3418, %v3766
        %v3813 = vadd.f32 %v3419, %v3771
        %v3814 = vadd.f32 %v3420, %v3776
        %v3815 = vadd.f32 %v3421, %v3781
        %v3816 = vld [vmem:[%s2] sm:$0x1]
        %v3818 = vlaneseq
        %v3819 = vshrl.u32 %v3818, 7
        %v3820 = vsub.s32 0, %v3819
        %v3821 = vrot.slane %v3816, %v3820
        %v3823 = vadd.f32 %v3784, %v3821
        %v3824 = vadd.f32 %v3785, %v3821
        %v3825 = vadd.f32 %v3786, %v3821
        %v3826 = vadd.f32 %v3787, %v3821
        %v3827 = vadd.f32 %v3788, %v3821
        %v3828 = vadd.f32 %v3789, %v3821
        %v3829 = vadd.f32 %v3790, %v3821
        %v3830 = vadd.f32 %v3791, %v3821
        %v3831 = vadd.f32 %v3792, %v3821
        %v3832 = vadd.f32 %v3793, %v3821
        %v3833 = vadd.f32 %v3794, %v3821
        %v3834 = vadd.f32 %v3795, %v3821
        %v3835 = vadd.f32 %v3796, %v3821
        %v3836 = vadd.f32 %v3797, %v3821
        %v3837 = vadd.f32 %v3798, %v3821
        %v3838 = vadd.f32 %v3799, %v3821
        %v3839 = vadd.f32 %v3800, %v3821
        %v3840 = vadd.f32 %v3801, %v3821
        %v3841 = vadd.f32 %v3802, %v3821
        %v3842 = vadd.f32 %v3803, %v3821
        %v3843 = vadd.f32 %v3804, %v3821
        %v3844 = vadd.f32 %v3805, %v3821
        %v3845 = vadd.f32 %v3806, %v3821
        %v3846 = vadd.f32 %v3807, %v3821
        %v3847 = vadd.f32 %v3808, %v3821
        %v3848 = vadd.f32 %v3809, %v3821
        %v3849 = vadd.f32 %v3810, %v3821
        %v3850 = vadd.f32 %v3811, %v3821
        %v3851 = vadd.f32 %v3812, %v3821
        %v3852 = vadd.f32 %v3813, %v3821
        %v3853 = vadd.f32 %v3814, %v3821
        %v3854 = vadd.f32 %v3815, %v3821
        %vm3855 = vcmp.ge.f32.partialorder %v3823, 0.0
        %vm3856 = vcmp.ge.f32.partialorder %v3824, 0.0
        %vm3857 = vcmp.ge.f32.partialorder %v3825, 0.0
        %vm3858 = vcmp.ge.f32.partialorder %v3826, 0.0
        %vm3859 = vcmp.ge.f32.partialorder %v3827, 0.0
        %vm3860 = vcmp.ge.f32.partialorder %v3828, 0.0
        %vm3861 = vcmp.ge.f32.partialorder %v3829, 0.0
        %vm3862 = vcmp.ge.f32.partialorder %v3830, 0.0
        %vm3863 = vcmp.ge.f32.partialorder %v3831, 0.0
        %vm3864 = vcmp.ge.f32.partialorder %v3832, 0.0
        %vm3865 = vcmp.ge.f32.partialorder %v3833, 0.0
        %vm3866 = vcmp.ge.f32.partialorder %v3834, 0.0
        %vm3867 = vcmp.ge.f32.partialorder %v3835, 0.0
        %vm3868 = vcmp.ge.f32.partialorder %v3836, 0.0
        %vm3869 = vcmp.ge.f32.partialorder %v3837, 0.0
        %vm3870 = vcmp.ge.f32.partialorder %v3838, 0.0
        %vm3871 = vcmp.ge.f32.partialorder %v3839, 0.0
        %vm3872 = vcmp.ge.f32.partialorder %v3840, 0.0
        %vm3873 = vcmp.ge.f32.partialorder %v3841, 0.0
        %vm3874 = vcmp.ge.f32.partialorder %v3842, 0.0
        %vm3875 = vcmp.ge.f32.partialorder %v3843, 0.0
        %vm3876 = vcmp.ge.f32.partialorder %v3844, 0.0
        %vm3877 = vcmp.ge.f32.partialorder %v3845, 0.0
        %vm3878 = vcmp.ge.f32.partialorder %v3846, 0.0
        %vm3879 = vcmp.ge.f32.partialorder %v3847, 0.0
        %vm3880 = vcmp.ge.f32.partialorder %v3848, 0.0
        %vm3881 = vcmp.ge.f32.partialorder %v3849, 0.0
        %vm3882 = vcmp.ge.f32.partialorder %v3850, 0.0
        %vm3883 = vcmp.ge.f32.partialorder %v3851, 0.0
        %vm3884 = vcmp.ge.f32.partialorder %v3852, 0.0
        %vm3885 = vcmp.ge.f32.partialorder %v3853, 0.0
        %vm3886 = vcmp.ge.f32.partialorder %v3854, 0.0
        %v3887 = vmul.f32 %v3823, 0.2
        %v3888 = vmul.f32 %v3824, 0.2
        %v3889 = vmul.f32 %v3825, 0.2
        %v3890 = vmul.f32 %v3826, 0.2
        %v3891 = vmul.f32 %v3827, 0.2
        %v3892 = vmul.f32 %v3828, 0.2
        %v3893 = vmul.f32 %v3829, 0.2
        %v3894 = vmul.f32 %v3830, 0.2
        %v3895 = vmul.f32 %v3831, 0.2
        %v3896 = vmul.f32 %v3832, 0.2
        %v3897 = vmul.f32 %v3833, 0.2
        %v3898 = vmul.f32 %v3834, 0.2
        %v3899 = vmul.f32 %v3835, 0.2
        %v3900 = vmul.f32 %v3836, 0.2
        %v3901 = vmul.f32 %v3837, 0.2
        %v3902 = vmul.f32 %v3838, 0.2
        %v3903 = vmul.f32 %v3839, 0.2
        %v3904 = vmul.f32 %v3840, 0.2
        %v3905 = vmul.f32 %v3841, 0.2
        %v3906 = vmul.f32 %v3842, 0.2
        %v3907 = vmul.f32 %v3843, 0.2
        %v3908 = vmul.f32 %v3844, 0.2
        %v3909 = vmul.f32 %v3845, 0.2
        %v3910 = vmul.f32 %v3846, 0.2
        %v3911 = vmul.f32 %v3847, 0.2
        %v3912 = vmul.f32 %v3848, 0.2
        %v3913 = vmul.f32 %v3849, 0.2
        %v3914 = vmul.f32 %v3850, 0.2
        %v3915 = vmul.f32 %v3851, 0.2
        %v3916 = vmul.f32 %v3852, 0.2
        %v3917 = vmul.f32 %v3853, 0.2
        %v3918 = vmul.f32 %v3854, 0.2
        %v3919 = vsel %vm3855, %v3823, %v3887
        %v3920 = vsel %vm3856, %v3824, %v3888
        %v3921 = vsel %vm3857, %v3825, %v3889
        %v3922 = vsel %vm3858, %v3826, %v3890
        %v3923 = vsel %vm3859, %v3827, %v3891
        %v3924 = vsel %vm3860, %v3828, %v3892
        %v3925 = vsel %vm3861, %v3829, %v3893
        %v3926 = vsel %vm3862, %v3830, %v3894
        %v3927 = vsel %vm3863, %v3831, %v3895
        %v3928 = vsel %vm3864, %v3832, %v3896
        %v3929 = vsel %vm3865, %v3833, %v3897
        %v3930 = vsel %vm3866, %v3834, %v3898
        %v3931 = vsel %vm3867, %v3835, %v3899
        %v3932 = vsel %vm3868, %v3836, %v3900
        %v3933 = vsel %vm3869, %v3837, %v3901
        %v3934 = vsel %vm3870, %v3838, %v3902
        %v3935 = vsel %vm3871, %v3839, %v3903
        %v3936 = vsel %vm3872, %v3840, %v3904
        %v3937 = vsel %vm3873, %v3841, %v3905
        %v3938 = vsel %vm3874, %v3842, %v3906
        %v3939 = vsel %vm3875, %v3843, %v3907
        %v3940 = vsel %vm3876, %v3844, %v3908
        %v3941 = vsel %vm3877, %v3845, %v3909
        %v3942 = vsel %vm3878, %v3846, %v3910
        %v3943 = vsel %vm3879, %v3847, %v3911
        %v3944 = vsel %vm3880, %v3848, %v3912
        %v3945 = vsel %vm3881, %v3849, %v3913
        %v3946 = vsel %vm3882, %v3850, %v3914
        %v3947 = vsel %vm3883, %v3851, %v3915
        %v3948 = vsel %vm3884, %v3852, %v3916
        %v3949 = vsel %vm3885, %v3853, %v3917
        %v3950 = vsel %vm3886, %v3854, %v3918
        %3951 = vst.msk [vmem:[%s301 + $0x1] sm:$0xff] %vm223, %v3919
        %3952 = vst.msk [vmem:[%s301 + $0x9] sm:$0xff] %vm223, %v3920
        %3953 = vst.msk [vmem:[%s301 + $0x19] sm:$0xff] %vm223, %v3921
        %3954 = vst.msk [vmem:[%s301 + $0x21] sm:$0xff] %vm223, %v3922
        %3955 = vst.msk [vmem:[%s301 + $0x31] sm:$0xff] %vm223, %v3923
        %3956 = vst.msk [vmem:[%s301 + $0x39] sm:$0xff] %vm223, %v3924
        %3957 = vst.msk [vmem:[%s301 + $0x49] sm:$0xff] %vm223, %v3925
        %3958 = vst.msk [vmem:[%s301 + $0x51] sm:$0xff] %vm223, %v3926
        %3959 = vst.msk [vmem:[%s301 + $0x61] sm:$0xff] %vm223, %v3927
        %3960 = vst.msk [vmem:[%s301 + $0x69] sm:$0xff] %vm223, %v3928
        %3961 = vst.msk [vmem:[%s301 + $0x79] sm:$0xff] %vm223, %v3929
        %3962 = vst.msk [vmem:[%s301 + $0x81] sm:$0xff] %vm223, %v3930
        %3963 = vst.msk [vmem:[%s301 + $0x91] sm:$0xff] %vm223, %v3931
        %3964 = vst.msk [vmem:[%s301 + $0x99] sm:$0xff] %vm223, %v3932
        %3965 = vst.msk [vmem:[%s301 + $0xa9] sm:$0xff] %vm223, %v3933
        %3966 = vst.msk [vmem:[%s301 + $0xb1] sm:$0xff] %vm223, %v3934
        %3967 = vst.msk [vmem:[%s301 + $0xc1] sm:$0xff] %vm223, %v3935
        %3968 = vst.msk [vmem:[%s301 + $0xc9] sm:$0xff] %vm223, %v3936
        %3969 = vst.msk [vmem:[%s301 + $0xd9] sm:$0xff] %vm223, %v3937
        %3970 = vst.msk [vmem:[%s301 + $0xe1] sm:$0xff] %vm223, %v3938
        %3971 = vst.msk [vmem:[%s301 + $0xf1] sm:$0xff] %vm223, %v3939
        %3972 = vst.msk [vmem:[%s301 + $0xf9] sm:$0xff] %vm223, %v3940
        %3973 = vst.msk [vmem:[%s301 + $0x109] sm:$0xff] %vm223, %v3941
        %3974 = vst.msk [vmem:[%s301 + $0x111] sm:$0xff] %vm223, %v3942
        %3975 = vst.msk [vmem:[%s301 + $0x121] sm:$0xff] %vm223, %v3943
        %3976 = vst.msk [vmem:[%s301 + $0x129] sm:$0xff] %vm223, %v3944
        %3977 = vst.msk [vmem:[%s301 + $0x139] sm:$0xff] %vm223, %v3945
        %3978 = vst.msk [vmem:[%s301 + $0x141] sm:$0xff] %vm223, %v3946
        %3979 = vst.msk [vmem:[%s301 + $0x151] sm:$0xff] %vm223, %v3947
        %3980 = vst.msk [vmem:[%s301 + $0x159] sm:$0xff] %vm223, %v3948
        %3981 = vst.msk [vmem:[%s301 + $0x169] sm:$0xff] %vm223, %v3949
        %3982 = vst.msk [vmem:[%s301 + $0x171] sm:$0xff] %vm223, %v3950
        %v3983 = vld [vmem:[#allocation2] sm:$0xff]
        %v3984 = vld [vmem:[#allocation2 + $0x8] sm:$0xff]
        %v3985 = vld [vmem:[#allocation2 + $0x18] sm:$0xff]
        %v3986 = vld [vmem:[#allocation2 + $0x20] sm:$0xff]
        %v3987 = vld [vmem:[#allocation2 + $0x30] sm:$0xff]
        %v3988 = vld [vmem:[#allocation2 + $0x38] sm:$0xff]
        %v3989 = vld [vmem:[#allocation2 + $0x48] sm:$0xff]
        %v3990 = vld [vmem:[#allocation2 + $0x50] sm:$0xff]
        %v3991 = vld [vmem:[#allocation2 + $0x60] sm:$0xff]
        %v3992 = vld [vmem:[#allocation2 + $0x68] sm:$0xff]
        %v3993 = vld [vmem:[#allocation2 + $0x78] sm:$0xff]
        %v3994 = vld [vmem:[#allocation2 + $0x80] sm:$0xff]
        %v3995 = vld [vmem:[#allocation2 + $0x90] sm:$0xff]
        %v3996 = vld [vmem:[#allocation2 + $0x98] sm:$0xff]
        %v3997 = vld [vmem:[#allocation2 + $0xa8] sm:$0xff]
        %v3998 = vld [vmem:[#allocation2 + $0xb0] sm:$0xff]
        %v3999 = vld [vmem:[#allocation2 + $0xc0] sm:$0xff]
        %v4000 = vld [vmem:[#allocation2 + $0xc8] sm:$0xff]
        %v4001 = vld [vmem:[#allocation2 + $0xd8] sm:$0xff]
        %v4002 = vld [vmem:[#allocation2 + $0xe0] sm:$0xff]
        %v4003 = vld [vmem:[#allocation2 + $0xf0] sm:$0xff]
        %v4004 = vld [vmem:[#allocation2 + $0xf8] sm:$0xff]
        %v4005 = vld [vmem:[#allocation2 + $0x108] sm:$0xff]
        %v4006 = vld [vmem:[#allocation2 + $0x110] sm:$0xff]
        %v4007 = vld [vmem:[#allocation2 + $0x120] sm:$0xff]
        %v4008 = vld [vmem:[#allocation2 + $0x128] sm:$0xff]
        %v4009 = vld [vmem:[#allocation2 + $0x138] sm:$0xff]
        %v4010 = vld [vmem:[#allocation2 + $0x140] sm:$0xff]
        %v4011 = vld [vmem:[#allocation2 + $0x150] sm:$0xff]
        %v4012 = vld [vmem:[#allocation2 + $0x158] sm:$0xff]
        %v4013 = vld [vmem:[#allocation2 + $0x168] sm:$0xff]
        %v4014 = vld [vmem:[#allocation2 + $0x170] sm:$0xff]
        %v4015 = vld [vmem:[%s3] sm:$0xff]
        %v4016 = vld [vmem:[%s3 + $0x8] sm:$0xff]
        %v4017 = vld [vmem:[%s3 + $0x10] sm:$0xff]
        %v4018 = vld [vmem:[%s3 + $0x18] sm:$0xff]
        %v4019 = vld [vmem:[%s3 + $0x20] sm:$0xff]
        %v4020 = vld [vmem:[%s3 + $0x28] sm:$0xff]
        %v4021 = vld [vmem:[%s3 + $0x30] sm:$0xff]
        %v4022 = vld [vmem:[%s3 + $0x38] sm:$0xff]
        %v4023 = vld [vmem:[#allocation2 + $0x1] sm:$0xff]
        %v4024 = vld [vmem:[#allocation2 + $0x9] sm:$0xff]
        %v4025 = vld [vmem:[#allocation2 + $0x19] sm:$0xff]
        %v4026 = vld [vmem:[#allocation2 + $0x21] sm:$0xff]
        %v4027 = vld [vmem:[#allocation2 + $0x31] sm:$0xff]
        %v4028 = vld [vmem:[#allocation2 + $0x39] sm:$0xff]
        %v4029 = vld [vmem:[#allocation2 + $0x49] sm:$0xff]
        %v4030 = vld [vmem:[#allocation2 + $0x51] sm:$0xff]
        %v4031 = vld [vmem:[#allocation2 + $0x61] sm:$0xff]
        %v4032 = vld [vmem:[#allocation2 + $0x69] sm:$0xff]
        %v4033 = vld [vmem:[#allocation2 + $0x79] sm:$0xff]
        %v4034 = vld [vmem:[#allocation2 + $0x81] sm:$0xff]
        %v4035 = vld [vmem:[#allocation2 + $0x91] sm:$0xff]
        %v4036 = vld [vmem:[#allocation2 + $0x99] sm:$0xff]
        %v4037 = vld [vmem:[#allocation2 + $0xa9] sm:$0xff]
        %v4038 = vld [vmem:[#allocation2 + $0xb1] sm:$0xff]
        %v4039 = vld [vmem:[#allocation2 + $0xc1] sm:$0xff]
        %v4040 = vld [vmem:[#allocation2 + $0xc9] sm:$0xff]
        %v4041 = vld [vmem:[#allocation2 + $0xd9] sm:$0xff]
        %v4042 = vld [vmem:[#allocation2 + $0xe1] sm:$0xff]
        %v4043 = vld [vmem:[#allocation2 + $0xf1] sm:$0xff]
        %v4044 = vld [vmem:[#allocation2 + $0xf9] sm:$0xff]
        %v4045 = vld [vmem:[#allocation2 + $0x109] sm:$0xff]
        %v4046 = vld [vmem:[#allocation2 + $0x111] sm:$0xff]
        %v4047 = vld [vmem:[#allocation2 + $0x121] sm:$0xff]
        %v4048 = vld [vmem:[#allocation2 + $0x129] sm:$0xff]
        %v4049 = vld [vmem:[#allocation2 + $0x139] sm:$0xff]
        %v4050 = vld [vmem:[#allocation2 + $0x141] sm:$0xff]
        %v4051 = vld [vmem:[#allocation2 + $0x151] sm:$0xff]
        %v4052 = vld [vmem:[#allocation2 + $0x159] sm:$0xff]
        %v4053 = vld [vmem:[#allocation2 + $0x169] sm:$0xff]
        %v4054 = vld [vmem:[#allocation2 + $0x171] sm:$0xff]
        %s4055 = scalar_lea.vmem %s3, 64
        %v4056 = vld [vmem:[%s4055] sm:$0xff]
        %v4057 = vld [vmem:[%s4055 + $0x8] sm:$0xff]
        %v4058 = vld [vmem:[%s4055 + $0x10] sm:$0xff]
        %v4059 = vld [vmem:[%s4055 + $0x18] sm:$0xff]
        %v4060 = vld [vmem:[%s4055 + $0x20] sm:$0xff]
        %v4061 = vld [vmem:[%s4055 + $0x28] sm:$0xff]
        %v4062 = vld [vmem:[%s4055 + $0x30] sm:$0xff]
        %v4063 = vld [vmem:[%s4055 + $0x38] sm:$0xff]
        %v4065 = vsel %vm223, %v4023, 0
        %v4068 = vsel %vm223, %v4024, 0
        %v4071 = vsel %vm223, %v4025, 0
        %v4074 = vsel %vm223, %v4026, 0
        %v4077 = vsel %vm223, %v4027, 0
        %v4080 = vsel %vm223, %v4028, 0
        %v4083 = vsel %vm223, %v4029, 0
        %v4086 = vsel %vm223, %v4030, 0
        %v4089 = vsel %vm223, %v4031, 0
        %v4092 = vsel %vm223, %v4032, 0
        %v4095 = vsel %vm223, %v4033, 0
        %v4098 = vsel %vm223, %v4034, 0
        %v4101 = vsel %vm223, %v4035, 0
        %v4104 = vsel %vm223, %v4036, 0
        %v4107 = vsel %vm223, %v4037, 0
        %v4110 = vsel %vm223, %v4038, 0
        %v4113 = vsel %vm223, %v4039, 0
        %v4116 = vsel %vm223, %v4040, 0
        %v4119 = vsel %vm223, %v4041, 0
        %v4122 = vsel %vm223, %v4042, 0
        %v4125 = vsel %vm223, %v4043, 0
        %v4128 = vsel %vm223, %v4044, 0
        %v4131 = vsel %vm223, %v4045, 0
        %v4134 = vsel %vm223, %v4046, 0
        %v4137 = vsel %vm223, %v4047, 0
        %v4140 = vsel %vm223, %v4048, 0
        %v4143 = vsel %vm223, %v4049, 0
        %v4146 = vsel %vm223, %v4050, 0
        %v4149 = vsel %vm223, %v4051, 0
        %v4152 = vsel %vm223, %v4052, 0
        %v4155 = vsel %vm223, %v4053, 0
        %v4158 = vsel %vm223, %v4054, 0
        %4160 = vmatprep.subr.mxu0 0.0
        %4161 = vmatpush1.msra.mxu0 0.0
        %4162 = vmatprep.subr.mxu0 0.0
        %4163 = vmatpush1.msra.mxu0 0.0
        %4164 = vmatprep.subr.mxu0 0.0
        %4165 = vmatpush1.msra.mxu0 0.0
        %4166 = vmatprep.subr.mxu0 0.0
        %4167 = vmatpush1.msra.mxu0 0.0
        %4168 = vmatprep.subr.mxu0 0.0
        %4169 = vmatpush1.msra.mxu0 0.0
        %4170 = vmatprep.subr.mxu0 0.0
        %4171 = vmatpush1.msra.mxu0 0.0
        %4172 = vmatprep.subr.mxu0 0.0
        %4173 = vmatpush1.msra.mxu0 0.0
        %4174 = vmatprep.subr.mxu0 0.0
        %4175 = vmatpush1.msra.mxu0 0.0
        %4176 = vmatprep.subr.mxu0 0.0
        %4177 = vmatpush1.msra.mxu0 %v4063
        %4178 = vmatprep.subr.mxu0 0.0
        %4179 = vmatpush1.msra.mxu0 %v4062
        %4180 = vmatprep.subr.mxu0 0.0
        %4181 = vmatpush1.msra.mxu0 %v4061
        %4182 = vmatprep.subr.mxu0 0.0
        %4183 = vmatpush1.msra.mxu0 %v4060
        %4184 = vmatprep.subr.mxu0 0.0
        %4185 = vmatpush1.msra.mxu0 %v4059
        %4186 = vmatprep.subr.mxu0 0.0
        %4187 = vmatpush1.msra.mxu0 %v4058
        %4188 = vmatprep.subr.mxu0 0.0
        %4189 = vmatpush1.msra.mxu0 %v4057
        %4190 = vmatprep.subr.mxu0 0.0
        %4191 = vmatpush1.msra.mxu0 %v4056
        %4192 = vmatprep.subr.mxu0 0.0
        %4193 = vmatpush2.msra.mxu0 0.0
        %4194 = vmatprep.subr.mxu0 0.0
        %4195 = vmatpush2.msra.mxu0 0.0
        %4196 = vmatprep.subr.mxu0 0.0
        %4197 = vmatpush2.msra.mxu0 0.0
        %4198 = vmatprep.subr.mxu0 0.0
        %4199 = vmatpush2.msra.mxu0 0.0
        %4200 = vmatprep.subr.mxu0 0.0
        %4201 = vmatpush2.msra.mxu0 0.0
        %4202 = vmatprep.subr.mxu0 0.0
        %4203 = vmatpush2.msra.mxu0 0.0
        %4204 = vmatprep.subr.mxu0 0.0
        %4205 = vmatpush2.msra.mxu0 0.0
        %4206 = vmatprep.subr.mxu0 0.0
        %4207 = vmatpush2.msra.mxu0 0.0
        %4208 = vmatprep.subr.mxu0 0.0
        %4209 = vmatpush2.msra.mxu0 0.0
        %4210 = vmatprep.subr.mxu0 0.0
        %4211 = vmatpush2.msra.mxu0 0.0
        %4212 = vmatprep.subr.mxu0 0.0
        %4213 = vmatpush2.msra.mxu0 0.0
        %4214 = vmatprep.subr.mxu0 0.0
        %4215 = vmatpush2.msra.mxu0 0.0
        %4216 = vmatprep.subr.mxu0 0.0
        %4217 = vmatpush2.msra.mxu0 0.0
        %4218 = vmatprep.subr.mxu0 0.0
        %4219 = vmatpush2.msra.mxu0 0.0
        %4220 = vmatprep.subr.mxu0 0.0
        %4221 = vmatpush2.msra.mxu0 0.0
        %4222 = vmatprep.subr.mxu0 0.0
        %4223 = vmatpush2.msra.mxu0 0.0
        %4224 = vmatprep.mubr.f32.mxu0 0.0
        %4225 = vmatmul.mubr.f32.gmra.mxu0 %v4065
        %v4226 = vpop.f32.mrf.mxu0
        %v4227 = vadd.f32 0.0, %v4226
        %v4228 = vpop.f32.mrf.mxu0
        %4229 = vmatprep.mubr.f32.mxu0 0.0
        %4230 = vmatmul.mubr.f32.gmra.mxu0 %v4068
        %v4231 = vpop.f32.mrf.mxu0
        %v4232 = vadd.f32 0.0, %v4231
        %v4233 = vpop.f32.mrf.mxu0
        %4234 = vmatprep.mubr.f32.mxu0 0.0
        %4235 = vmatmul.mubr.f32.gmra.mxu0 %v4071
        %v4236 = vpop.f32.mrf.mxu0
        %v4237 = vadd.f32 0.0, %v4236
        %v4238 = vpop.f32.mrf.mxu0
        %4239 = vmatprep.mubr.f32.mxu0 0.0
        %4240 = vmatmul.mubr.f32.gmra.mxu0 %v4074
        %v4241 = vpop.f32.mrf.mxu0
        %v4242 = vadd.f32 0.0, %v4241
        %v4243 = vpop.f32.mrf.mxu0
        %4244 = vmatprep.mubr.f32.mxu0 0.0
        %4245 = vmatmul.mubr.f32.gmra.mxu0 %v4077
        %v4246 = vpop.f32.mrf.mxu0
        %v4247 = vadd.f32 0.0, %v4246
        %v4248 = vpop.f32.mrf.mxu0
        %4249 = vmatprep.mubr.f32.mxu0 0.0
        %4250 = vmatmul.mubr.f32.gmra.mxu0 %v4080
        %v4251 = vpop.f32.mrf.mxu0
        %v4252 = vadd.f32 0.0, %v4251
        %v4253 = vpop.f32.mrf.mxu0
        %4254 = vmatprep.mubr.f32.mxu0 0.0
        %4255 = vmatmul.mubr.f32.gmra.mxu0 %v4083
        %v4256 = vpop.f32.mrf.mxu0
        %v4257 = vadd.f32 0.0, %v4256
        %v4258 = vpop.f32.mrf.mxu0
        %4259 = vmatprep.mubr.f32.mxu0 0.0
        %4260 = vmatmul.mubr.f32.gmra.mxu0 %v4086
        %v4261 = vpop.f32.mrf.mxu0
        %v4262 = vadd.f32 0.0, %v4261
        %v4263 = vpop.f32.mrf.mxu0
        %4264 = vmatprep.mubr.f32.mxu0 0.0
        %4265 = vmatmul.mubr.f32.gmra.mxu0 %v4089
        %v4266 = vpop.f32.mrf.mxu0
        %v4267 = vadd.f32 0.0, %v4266
        %v4268 = vpop.f32.mrf.mxu0
        %4269 = vmatprep.mubr.f32.mxu0 0.0
        %4270 = vmatmul.mubr.f32.gmra.mxu0 %v4092
        %v4271 = vpop.f32.mrf.mxu0
        %v4272 = vadd.f32 0.0, %v4271
        %v4273 = vpop.f32.mrf.mxu0
        %4274 = vmatprep.mubr.f32.mxu0 0.0
        %4275 = vmatmul.mubr.f32.gmra.mxu0 %v4095
        %v4276 = vpop.f32.mrf.mxu0
        %v4277 = vadd.f32 0.0, %v4276
        %v4278 = vpop.f32.mrf.mxu0
        %4279 = vmatprep.mubr.f32.mxu0 0.0
        %4280 = vmatmul.mubr.f32.gmra.mxu0 %v4098
        %v4281 = vpop.f32.mrf.mxu0
        %v4282 = vadd.f32 0.0, %v4281
        %v4283 = vpop.f32.mrf.mxu0
        %4284 = vmatprep.mubr.f32.mxu0 0.0
        %4285 = vmatmul.mubr.f32.gmra.mxu0 %v4101
        %v4286 = vpop.f32.mrf.mxu0
        %v4287 = vadd.f32 0.0, %v4286
        %v4288 = vpop.f32.mrf.mxu0
        %4289 = vmatprep.mubr.f32.mxu0 0.0
        %4290 = vmatmul.mubr.f32.gmra.mxu0 %v4104
        %v4291 = vpop.f32.mrf.mxu0
        %v4292 = vadd.f32 0.0, %v4291
        %v4293 = vpop.f32.mrf.mxu0
        %4294 = vmatprep.mubr.f32.mxu0 0.0
        %4295 = vmatmul.mubr.f32.gmra.mxu0 %v4107
        %v4296 = vpop.f32.mrf.mxu0
        %v4297 = vadd.f32 0.0, %v4296
        %v4298 = vpop.f32.mrf.mxu0
        %4299 = vmatprep.mubr.f32.mxu0 0.0
        %4300 = vmatmul.mubr.f32.gmra.mxu0 %v4110
        %v4301 = vpop.f32.mrf.mxu0
        %v4302 = vadd.f32 0.0, %v4301
        %v4303 = vpop.f32.mrf.mxu0
        %4304 = vmatprep.mubr.f32.mxu0 0.0
        %4305 = vmatmul.mubr.f32.gmra.mxu0 %v4113
        %v4306 = vpop.f32.mrf.mxu0
        %v4307 = vadd.f32 0.0, %v4306
        %v4308 = vpop.f32.mrf.mxu0
        %4309 = vmatprep.mubr.f32.mxu0 0.0
        %4310 = vmatmul.mubr.f32.gmra.mxu0 %v4116
        %v4311 = vpop.f32.mrf.mxu0
        %v4312 = vadd.f32 0.0, %v4311
        %v4313 = vpop.f32.mrf.mxu0
        %4314 = vmatprep.mubr.f32.mxu0 0.0
        %4315 = vmatmul.mubr.f32.gmra.mxu0 %v4119
        %v4316 = vpop.f32.mrf.mxu0
        %v4317 = vadd.f32 0.0, %v4316
        %v4318 = vpop.f32.mrf.mxu0
        %4319 = vmatprep.mubr.f32.mxu0 0.0
        %4320 = vmatmul.mubr.f32.gmra.mxu0 %v4122
        %v4321 = vpop.f32.mrf.mxu0
        %v4322 = vadd.f32 0.0, %v4321
        %v4323 = vpop.f32.mrf.mxu0
        %4324 = vmatprep.mubr.f32.mxu0 0.0
        %4325 = vmatmul.mubr.f32.gmra.mxu0 %v4125
        %v4326 = vpop.f32.mrf.mxu0
        %v4327 = vadd.f32 0.0, %v4326
        %v4328 = vpop.f32.mrf.mxu0
        %4329 = vmatprep.mubr.f32.mxu0 0.0
        %4330 = vmatmul.mubr.f32.gmra.mxu0 %v4128
        %v4331 = vpop.f32.mrf.mxu0
        %v4332 = vadd.f32 0.0, %v4331
        %v4333 = vpop.f32.mrf.mxu0
        %4334 = vmatprep.mubr.f32.mxu0 0.0
        %4335 = vmatmul.mubr.f32.gmra.mxu0 %v4131
        %v4336 = vpop.f32.mrf.mxu0
        %v4337 = vadd.f32 0.0, %v4336
        %v4338 = vpop.f32.mrf.mxu0
        %4339 = vmatprep.mubr.f32.mxu0 0.0
        %4340 = vmatmul.mubr.f32.gmra.mxu0 %v4134
        %v4341 = vpop.f32.mrf.mxu0
        %v4342 = vadd.f32 0.0, %v4341
        %v4343 = vpop.f32.mrf.mxu0
        %4344 = vmatprep.mubr.f32.mxu0 0.0
        %4345 = vmatmul.mubr.f32.gmra.mxu0 %v4137
        %v4346 = vpop.f32.mrf.mxu0
        %v4347 = vadd.f32 0.0, %v4346
        %v4348 = vpop.f32.mrf.mxu0
        %4349 = vmatprep.mubr.f32.mxu0 0.0
        %4350 = vmatmul.mubr.f32.gmra.mxu0 %v4140
        %v4351 = vpop.f32.mrf.mxu0
        %v4352 = vadd.f32 0.0, %v4351
        %v4353 = vpop.f32.mrf.mxu0
        %4354 = vmatprep.mubr.f32.mxu0 0.0
        %4355 = vmatmul.mubr.f32.gmra.mxu0 %v4143
        %v4356 = vpop.f32.mrf.mxu0
        %v4357 = vadd.f32 0.0, %v4356
        %v4358 = vpop.f32.mrf.mxu0
        %4359 = vmatprep.mubr.f32.mxu0 0.0
        %4360 = vmatmul.mubr.f32.gmra.mxu0 %v4146
        %v4361 = vpop.f32.mrf.mxu0
        %v4362 = vadd.f32 0.0, %v4361
        %v4363 = vpop.f32.mrf.mxu0
        %4364 = vmatprep.mubr.f32.mxu0 0.0
        %4365 = vmatmul.mubr.f32.gmra.mxu0 %v4149
        %v4366 = vpop.f32.mrf.mxu0
        %v4367 = vadd.f32 0.0, %v4366
        %v4368 = vpop.f32.mrf.mxu0
        %4369 = vmatprep.mubr.f32.mxu0 0.0
        %4370 = vmatmul.mubr.f32.gmra.mxu0 %v4152
        %v4371 = vpop.f32.mrf.mxu0
        %v4372 = vadd.f32 0.0, %v4371
        %v4373 = vpop.f32.mrf.mxu0
        %4374 = vmatprep.mubr.f32.mxu0 0.0
        %4375 = vmatmul.mubr.f32.gmra.mxu0 %v4155
        %v4376 = vpop.f32.mrf.mxu0
        %v4377 = vadd.f32 0.0, %v4376
        %v4378 = vpop.f32.mrf.mxu0
        %4379 = vmatprep.mubr.f32.mxu0 0.0
        %4380 = vmatmul.mubr.f32.gmra.mxu0 %v4158
        %v4381 = vpop.f32.mrf.mxu0
        %v4382 = vadd.f32 0.0, %v4381
        %v4383 = vpop.f32.mrf.mxu0
        %4384 = vdwg.mxu0
        %v4386 = vsel %vm223, %v3983, 0
        %v4389 = vsel %vm223, %v3984, 0
        %v4392 = vsel %vm223, %v3985, 0
        %v4395 = vsel %vm223, %v3986, 0
        %v4398 = vsel %vm223, %v3987, 0
        %v4401 = vsel %vm223, %v3988, 0
        %v4404 = vsel %vm223, %v3989, 0
        %v4407 = vsel %vm223, %v3990, 0
        %v4410 = vsel %vm223, %v3991, 0
        %v4413 = vsel %vm223, %v3992, 0
        %v4416 = vsel %vm223, %v3993, 0
        %v4419 = vsel %vm223, %v3994, 0
        %v4422 = vsel %vm223, %v3995, 0
        %v4425 = vsel %vm223, %v3996, 0
        %v4428 = vsel %vm223, %v3997, 0
        %v4431 = vsel %vm223, %v3998, 0
        %v4434 = vsel %vm223, %v3999, 0
        %v4437 = vsel %vm223, %v4000, 0
        %v4440 = vsel %vm223, %v4001, 0
        %v4443 = vsel %vm223, %v4002, 0
        %v4446 = vsel %vm223, %v4003, 0
        %v4449 = vsel %vm223, %v4004, 0
        %v4452 = vsel %vm223, %v4005, 0
        %v4455 = vsel %vm223, %v4006, 0
        %v4458 = vsel %vm223, %v4007, 0
        %v4461 = vsel %vm223, %v4008, 0
        %v4464 = vsel %vm223, %v4009, 0
        %v4467 = vsel %vm223, %v4010, 0
        %v4470 = vsel %vm223, %v4011, 0
        %v4473 = vsel %vm223, %v4012, 0
        %v4476 = vsel %vm223, %v4013, 0
        %v4479 = vsel %vm223, %v4014, 0
        %4481 = vmatprep.subr.mxu0 0.0
        %4482 = vmatpush1.msra.mxu0 0.0
        %4483 = vmatprep.subr.mxu0 0.0
        %4484 = vmatpush1.msra.mxu0 0.0
        %4485 = vmatprep.subr.mxu0 0.0
        %4486 = vmatpush1.msra.mxu0 0.0
        %4487 = vmatprep.subr.mxu0 0.0
        %4488 = vmatpush1.msra.mxu0 0.0
        %4489 = vmatprep.subr.mxu0 0.0
        %4490 = vmatpush1.msra.mxu0 0.0
        %4491 = vmatprep.subr.mxu0 0.0
        %4492 = vmatpush1.msra.mxu0 0.0
        %4493 = vmatprep.subr.mxu0 0.0
        %4494 = vmatpush1.msra.mxu0 0.0
        %4495 = vmatprep.subr.mxu0 0.0
        %4496 = vmatpush1.msra.mxu0 0.0
        %4497 = vmatprep.subr.mxu0 0.0
        %4498 = vmatpush1.msra.mxu0 %v4022
        %4499 = vmatprep.subr.mxu0 0.0
        %4500 = vmatpush1.msra.mxu0 %v4021
        %4501 = vmatprep.subr.mxu0 0.0
        %4502 = vmatpush1.msra.mxu0 %v4020
        %4503 = vmatprep.subr.mxu0 0.0
        %4504 = vmatpush1.msra.mxu0 %v4019
        %4505 = vmatprep.subr.mxu0 0.0
        %4506 = vmatpush1.msra.mxu0 %v4018
        %4507 = vmatprep.subr.mxu0 0.0
        %4508 = vmatpush1.msra.mxu0 %v4017
        %4509 = vmatprep.subr.mxu0 0.0
        %4510 = vmatpush1.msra.mxu0 %v4016
        %4511 = vmatprep.subr.mxu0 0.0
        %4512 = vmatpush1.msra.mxu0 %v4015
        %4513 = vmatprep.subr.mxu0 0.0
        %4514 = vmatpush2.msra.mxu0 0.0
        %4515 = vmatprep.subr.mxu0 0.0
        %4516 = vmatpush2.msra.mxu0 0.0
        %4517 = vmatprep.subr.mxu0 0.0
        %4518 = vmatpush2.msra.mxu0 0.0
        %4519 = vmatprep.subr.mxu0 0.0
        %4520 = vmatpush2.msra.mxu0 0.0
        %4521 = vmatprep.subr.mxu0 0.0
        %4522 = vmatpush2.msra.mxu0 0.0
        %4523 = vmatprep.subr.mxu0 0.0
        %4524 = vmatpush2.msra.mxu0 0.0
        %4525 = vmatprep.subr.mxu0 0.0
        %4526 = vmatpush2.msra.mxu0 0.0
        %4527 = vmatprep.subr.mxu0 0.0
        %4528 = vmatpush2.msra.mxu0 0.0
        %4529 = vmatprep.subr.mxu0 0.0
        %4530 = vmatpush2.msra.mxu0 0.0
        %4531 = vmatprep.subr.mxu0 0.0
        %4532 = vmatpush2.msra.mxu0 0.0
        %4533 = vmatprep.subr.mxu0 0.0
        %4534 = vmatpush2.msra.mxu0 0.0
        %4535 = vmatprep.subr.mxu0 0.0
        %4536 = vmatpush2.msra.mxu0 0.0
        %4537 = vmatprep.subr.mxu0 0.0
        %4538 = vmatpush2.msra.mxu0 0.0
        %4539 = vmatprep.subr.mxu0 0.0
        %4540 = vmatpush2.msra.mxu0 0.0
        %4541 = vmatprep.subr.mxu0 0.0
        %4542 = vmatpush2.msra.mxu0 0.0
        %4543 = vmatprep.subr.mxu0 0.0
        %4544 = vmatpush2.msra.mxu0 0.0
        %4545 = vmatprep.mubr.f32.mxu0 0.0
        %4546 = vmatmul.mubr.f32.gmra.mxu0 %v4386
        %v4547 = vpop.f32.mrf.mxu0
        %v4548 = vadd.f32 %v4227, %v4547
        %v4549 = vpop.f32.mrf.mxu0
        %4550 = vmatprep.mubr.f32.mxu0 0.0
        %4551 = vmatmul.mubr.f32.gmra.mxu0 %v4389
        %v4552 = vpop.f32.mrf.mxu0
        %v4553 = vadd.f32 %v4232, %v4552
        %v4554 = vpop.f32.mrf.mxu0
        %4555 = vmatprep.mubr.f32.mxu0 0.0
        %4556 = vmatmul.mubr.f32.gmra.mxu0 %v4392
        %v4557 = vpop.f32.mrf.mxu0
        %v4558 = vadd.f32 %v4237, %v4557
        %v4559 = vpop.f32.mrf.mxu0
        %4560 = vmatprep.mubr.f32.mxu0 0.0
        %4561 = vmatmul.mubr.f32.gmra.mxu0 %v4395
        %v4562 = vpop.f32.mrf.mxu0
        %v4563 = vadd.f32 %v4242, %v4562
        %v4564 = vpop.f32.mrf.mxu0
        %4565 = vmatprep.mubr.f32.mxu0 0.0
        %4566 = vmatmul.mubr.f32.gmra.mxu0 %v4398
        %v4567 = vpop.f32.mrf.mxu0
        %v4568 = vadd.f32 %v4247, %v4567
        %v4569 = vpop.f32.mrf.mxu0
        %4570 = vmatprep.mubr.f32.mxu0 0.0
        %4571 = vmatmul.mubr.f32.gmra.mxu0 %v4401
        %v4572 = vpop.f32.mrf.mxu0
        %v4573 = vadd.f32 %v4252, %v4572
        %v4574 = vpop.f32.mrf.mxu0
        %4575 = vmatprep.mubr.f32.mxu0 0.0
        %4576 = vmatmul.mubr.f32.gmra.mxu0 %v4404
        %v4577 = vpop.f32.mrf.mxu0
        %v4578 = vadd.f32 %v4257, %v4577
        %v4579 = vpop.f32.mrf.mxu0
        %4580 = vmatprep.mubr.f32.mxu0 0.0
        %4581 = vmatmul.mubr.f32.gmra.mxu0 %v4407
        %v4582 = vpop.f32.mrf.mxu0
        %v4583 = vadd.f32 %v4262, %v4582
        %v4584 = vpop.f32.mrf.mxu0
        %4585 = vmatprep.mubr.f32.mxu0 0.0
        %4586 = vmatmul.mubr.f32.gmra.mxu0 %v4410
        %v4587 = vpop.f32.mrf.mxu0
        %v4588 = vadd.f32 %v4267, %v4587
        %v4589 = vpop.f32.mrf.mxu0
        %4590 = vmatprep.mubr.f32.mxu0 0.0
        %4591 = vmatmul.mubr.f32.gmra.mxu0 %v4413
        %v4592 = vpop.f32.mrf.mxu0
        %v4593 = vadd.f32 %v4272, %v4592
        %v4594 = vpop.f32.mrf.mxu0
        %4595 = vmatprep.mubr.f32.mxu0 0.0
        %4596 = vmatmul.mubr.f32.gmra.mxu0 %v4416
        %v4597 = vpop.f32.mrf.mxu0
        %v4598 = vadd.f32 %v4277, %v4597
        %v4599 = vpop.f32.mrf.mxu0
        %4600 = vmatprep.mubr.f32.mxu0 0.0
        %4601 = vmatmul.mubr.f32.gmra.mxu0 %v4419
        %v4602 = vpop.f32.mrf.mxu0
        %v4603 = vadd.f32 %v4282, %v4602
        %v4604 = vpop.f32.mrf.mxu0
        %4605 = vmatprep.mubr.f32.mxu0 0.0
        %4606 = vmatmul.mubr.f32.gmra.mxu0 %v4422
        %v4607 = vpop.f32.mrf.mxu0
        %v4608 = vadd.f32 %v4287, %v4607
        %v4609 = vpop.f32.mrf.mxu0
        %4610 = vmatprep.mubr.f32.mxu0 0.0
        %4611 = vmatmul.mubr.f32.gmra.mxu0 %v4425
        %v4612 = vpop.f32.mrf.mxu0
        %v4613 = vadd.f32 %v4292, %v4612
        %v4614 = vpop.f32.mrf.mxu0
        %4615 = vmatprep.mubr.f32.mxu0 0.0
        %4616 = vmatmul.mubr.f32.gmra.mxu0 %v4428
        %v4617 = vpop.f32.mrf.mxu0
        %v4618 = vadd.f32 %v4297, %v4617
        %v4619 = vpop.f32.mrf.mxu0
        %4620 = vmatprep.mubr.f32.mxu0 0.0
        %4621 = vmatmul.mubr.f32.gmra.mxu0 %v4431
        %v4622 = vpop.f32.mrf.mxu0
        %v4623 = vadd.f32 %v4302, %v4622
        %v4624 = vpop.f32.mrf.mxu0
        %4625 = vmatprep.mubr.f32.mxu0 0.0
        %4626 = vmatmul.mubr.f32.gmra.mxu0 %v4434
        %v4627 = vpop.f32.mrf.mxu0
        %v4628 = vadd.f32 %v4307, %v4627
        %v4629 = vpop.f32.mrf.mxu0
        %4630 = vmatprep.mubr.f32.mxu0 0.0
        %4631 = vmatmul.mubr.f32.gmra.mxu0 %v4437
        %v4632 = vpop.f32.mrf.mxu0
        %v4633 = vadd.f32 %v4312, %v4632
        %v4634 = vpop.f32.mrf.mxu0
        %4635 = vmatprep.mubr.f32.mxu0 0.0
        %4636 = vmatmul.mubr.f32.gmra.mxu0 %v4440
        %v4637 = vpop.f32.mrf.mxu0
        %v4638 = vadd.f32 %v4317, %v4637
        %v4639 = vpop.f32.mrf.mxu0
        %4640 = vmatprep.mubr.f32.mxu0 0.0
        %4641 = vmatmul.mubr.f32.gmra.mxu0 %v4443
        %v4642 = vpop.f32.mrf.mxu0
        %v4643 = vadd.f32 %v4322, %v4642
        %v4644 = vpop.f32.mrf.mxu0
        %4645 = vmatprep.mubr.f32.mxu0 0.0
        %4646 = vmatmul.mubr.f32.gmra.mxu0 %v4446
        %v4647 = vpop.f32.mrf.mxu0
        %v4648 = vadd.f32 %v4327, %v4647
        %v4649 = vpop.f32.mrf.mxu0
        %4650 = vmatprep.mubr.f32.mxu0 0.0
        %4651 = vmatmul.mubr.f32.gmra.mxu0 %v4449
        %v4652 = vpop.f32.mrf.mxu0
        %v4653 = vadd.f32 %v4332, %v4652
        %v4654 = vpop.f32.mrf.mxu0
        %4655 = vmatprep.mubr.f32.mxu0 0.0
        %4656 = vmatmul.mubr.f32.gmra.mxu0 %v4452
        %v4657 = vpop.f32.mrf.mxu0
        %v4658 = vadd.f32 %v4337, %v4657
        %v4659 = vpop.f32.mrf.mxu0
        %4660 = vmatprep.mubr.f32.mxu0 0.0
        %4661 = vmatmul.mubr.f32.gmra.mxu0 %v4455
        %v4662 = vpop.f32.mrf.mxu0
        %v4663 = vadd.f32 %v4342, %v4662
        %v4664 = vpop.f32.mrf.mxu0
        %4665 = vmatprep.mubr.f32.mxu0 0.0
        %4666 = vmatmul.mubr.f32.gmra.mxu0 %v4458
        %v4667 = vpop.f32.mrf.mxu0
        %v4668 = vadd.f32 %v4347, %v4667
        %v4669 = vpop.f32.mrf.mxu0
        %4670 = vmatprep.mubr.f32.mxu0 0.0
        %4671 = vmatmul.mubr.f32.gmra.mxu0 %v4461
        %v4672 = vpop.f32.mrf.mxu0
        %v4673 = vadd.f32 %v4352, %v4672
        %v4674 = vpop.f32.mrf.mxu0
        %4675 = vmatprep.mubr.f32.mxu0 0.0
        %4676 = vmatmul.mubr.f32.gmra.mxu0 %v4464
        %v4677 = vpop.f32.mrf.mxu0
        %v4678 = vadd.f32 %v4357, %v4677
        %v4679 = vpop.f32.mrf.mxu0
        %4680 = vmatprep.mubr.f32.mxu0 0.0
        %4681 = vmatmul.mubr.f32.gmra.mxu0 %v4467
        %v4682 = vpop.f32.mrf.mxu0
        %v4683 = vadd.f32 %v4362, %v4682
        %v4684 = vpop.f32.mrf.mxu0
        %4685 = vmatprep.mubr.f32.mxu0 0.0
        %4686 = vmatmul.mubr.f32.gmra.mxu0 %v4470
        %v4687 = vpop.f32.mrf.mxu0
        %v4688 = vadd.f32 %v4367, %v4687
        %v4689 = vpop.f32.mrf.mxu0
        %4690 = vmatprep.mubr.f32.mxu0 0.0
        %4691 = vmatmul.mubr.f32.gmra.mxu0 %v4473
        %v4692 = vpop.f32.mrf.mxu0
        %v4693 = vadd.f32 %v4372, %v4692
        %v4694 = vpop.f32.mrf.mxu0
        %4695 = vmatprep.mubr.f32.mxu0 0.0
        %4696 = vmatmul.mubr.f32.gmra.mxu0 %v4476
        %v4697 = vpop.f32.mrf.mxu0
        %v4698 = vadd.f32 %v4377, %v4697
        %v4699 = vpop.f32.mrf.mxu0
        %4700 = vmatprep.mubr.f32.mxu0 0.0
        %4701 = vmatmul.mubr.f32.gmra.mxu0 %v4479
        %v4702 = vpop.f32.mrf.mxu0
        %v4703 = vadd.f32 %v4382, %v4702
        %v4704 = vpop.f32.mrf.mxu0
        %4705 = vdwg.mxu0
        %v4706 = vld [vmem:[#allocation2 + $0x2] sm:$0xff]
        %v4707 = vld [vmem:[#allocation2 + $0xa] sm:$0xff]
        %v4708 = vld [vmem:[#allocation2 + $0x1a] sm:$0xff]
        %v4709 = vld [vmem:[#allocation2 + $0x22] sm:$0xff]
        %v4710 = vld [vmem:[#allocation2 + $0x32] sm:$0xff]
        %v4711 = vld [vmem:[#allocation2 + $0x3a] sm:$0xff]
        %v4712 = vld [vmem:[#allocation2 + $0x4a] sm:$0xff]
        %v4713 = vld [vmem:[#allocation2 + $0x52] sm:$0xff]
        %v4714 = vld [vmem:[#allocation2 + $0x62] sm:$0xff]
        %v4715 = vld [vmem:[#allocation2 + $0x6a] sm:$0xff]
        %v4716 = vld [vmem:[#allocation2 + $0x7a] sm:$0xff]
        %v4717 = vld [vmem:[#allocation2 + $0x82] sm:$0xff]
        %v4718 = vld [vmem:[#allocation2 + $0x92] sm:$0xff]
        %v4719 = vld [vmem:[#allocation2 + $0x9a] sm:$0xff]
        %v4720 = vld [vmem:[#allocation2 + $0xaa] sm:$0xff]
        %v4721 = vld [vmem:[#allocation2 + $0xb2] sm:$0xff]
        %v4722 = vld [vmem:[#allocation2 + $0xc2] sm:$0xff]
        %v4723 = vld [vmem:[#allocation2 + $0xca] sm:$0xff]
        %v4724 = vld [vmem:[#allocation2 + $0xda] sm:$0xff]
        %v4725 = vld [vmem:[#allocation2 + $0xe2] sm:$0xff]
        %v4726 = vld [vmem:[#allocation2 + $0xf2] sm:$0xff]
        %v4727 = vld [vmem:[#allocation2 + $0xfa] sm:$0xff]
        %v4728 = vld [vmem:[#allocation2 + $0x10a] sm:$0xff]
        %v4729 = vld [vmem:[#allocation2 + $0x112] sm:$0xff]
        %v4730 = vld [vmem:[#allocation2 + $0x122] sm:$0xff]
        %v4731 = vld [vmem:[#allocation2 + $0x12a] sm:$0xff]
        %v4732 = vld [vmem:[#allocation2 + $0x13a] sm:$0xff]
        %v4733 = vld [vmem:[#allocation2 + $0x142] sm:$0xff]
        %v4734 = vld [vmem:[#allocation2 + $0x152] sm:$0xff]
        %v4735 = vld [vmem:[#allocation2 + $0x15a] sm:$0xff]
        %v4736 = vld [vmem:[#allocation2 + $0x16a] sm:$0xff]
        %v4737 = vld [vmem:[#allocation2 + $0x172] sm:$0xff]
        %s4738 = scalar_lea.vmem %s3, 128
        %v4739 = vld [vmem:[%s4738] sm:$0xff]
        %v4740 = vld [vmem:[%s4738 + $0x8] sm:$0xff]
        %v4741 = vld [vmem:[%s4738 + $0x10] sm:$0xff]
        %v4742 = vld [vmem:[%s4738 + $0x18] sm:$0xff]
        %v4743 = vld [vmem:[%s4738 + $0x20] sm:$0xff]
        %v4744 = vld [vmem:[%s4738 + $0x28] sm:$0xff]
        %v4745 = vld [vmem:[%s4738 + $0x30] sm:$0xff]
        %v4746 = vld [vmem:[%s4738 + $0x38] sm:$0xff]
        %v4748 = vsel %vm223, %v4706, 0
        %v4751 = vsel %vm223, %v4707, 0
        %v4754 = vsel %vm223, %v4708, 0
        %v4757 = vsel %vm223, %v4709, 0
        %v4760 = vsel %vm223, %v4710, 0
        %v4763 = vsel %vm223, %v4711, 0
        %v4766 = vsel %vm223, %v4712, 0
        %v4769 = vsel %vm223, %v4713, 0
        %v4772 = vsel %vm223, %v4714, 0
        %v4775 = vsel %vm223, %v4715, 0
        %v4778 = vsel %vm223, %v4716, 0
        %v4781 = vsel %vm223, %v4717, 0
        %v4784 = vsel %vm223, %v4718, 0
        %v4787 = vsel %vm223, %v4719, 0
        %v4790 = vsel %vm223, %v4720, 0
        %v4793 = vsel %vm223, %v4721, 0
        %v4796 = vsel %vm223, %v4722, 0
        %v4799 = vsel %vm223, %v4723, 0
        %v4802 = vsel %vm223, %v4724, 0
        %v4805 = vsel %vm223, %v4725, 0
        %v4808 = vsel %vm223, %v4726, 0
        %v4811 = vsel %vm223, %v4727, 0
        %v4814 = vsel %vm223, %v4728, 0
        %v4817 = vsel %vm223, %v4729, 0
        %v4820 = vsel %vm223, %v4730, 0
        %v4823 = vsel %vm223, %v4731, 0
        %v4826 = vsel %vm223, %v4732, 0
        %v4829 = vsel %vm223, %v4733, 0
        %v4832 = vsel %vm223, %v4734, 0
        %v4835 = vsel %vm223, %v4735, 0
        %v4838 = vsel %vm223, %v4736, 0
        %v4841 = vsel %vm223, %v4737, 0
        %4843 = vmatprep.subr.mxu0 0.0
        %4844 = vmatpush1.msra.mxu0 0.0
        %4845 = vmatprep.subr.mxu0 0.0
        %4846 = vmatpush1.msra.mxu0 0.0
        %4847 = vmatprep.subr.mxu0 0.0
        %4848 = vmatpush1.msra.mxu0 0.0
        %4849 = vmatprep.subr.mxu0 0.0
        %4850 = vmatpush1.msra.mxu0 0.0
        %4851 = vmatprep.subr.mxu0 0.0
        %4852 = vmatpush1.msra.mxu0 0.0
        %4853 = vmatprep.subr.mxu0 0.0
        %4854 = vmatpush1.msra.mxu0 0.0
        %4855 = vmatprep.subr.mxu0 0.0
        %4856 = vmatpush1.msra.mxu0 0.0
        %4857 = vmatprep.subr.mxu0 0.0
        %4858 = vmatpush1.msra.mxu0 0.0
        %4859 = vmatprep.subr.mxu0 0.0
        %4860 = vmatpush1.msra.mxu0 %v4746
        %4861 = vmatprep.subr.mxu0 0.0
        %4862 = vmatpush1.msra.mxu0 %v4745
        %4863 = vmatprep.subr.mxu0 0.0
        %4864 = vmatpush1.msra.mxu0 %v4744
        %4865 = vmatprep.subr.mxu0 0.0
        %4866 = vmatpush1.msra.mxu0 %v4743
        %4867 = vmatprep.subr.mxu0 0.0
        %4868 = vmatpush1.msra.mxu0 %v4742
        %4869 = vmatprep.subr.mxu0 0.0
        %4870 = vmatpush1.msra.mxu0 %v4741
        %4871 = vmatprep.subr.mxu0 0.0
        %4872 = vmatpush1.msra.mxu0 %v4740
        %4873 = vmatprep.subr.mxu0 0.0
        %4874 = vmatpush1.msra.mxu0 %v4739
        %4875 = vmatprep.subr.mxu0 0.0
        %4876 = vmatpush2.msra.mxu0 0.0
        %4877 = vmatprep.subr.mxu0 0.0
        %4878 = vmatpush2.msra.mxu0 0.0
        %4879 = vmatprep.subr.mxu0 0.0
        %4880 = vmatpush2.msra.mxu0 0.0
        %4881 = vmatprep.subr.mxu0 0.0
        %4882 = vmatpush2.msra.mxu0 0.0
        %4883 = vmatprep.subr.mxu0 0.0
        %4884 = vmatpush2.msra.mxu0 0.0
        %4885 = vmatprep.subr.mxu0 0.0
        %4886 = vmatpush2.msra.mxu0 0.0
        %4887 = vmatprep.subr.mxu0 0.0
        %4888 = vmatpush2.msra.mxu0 0.0
        %4889 = vmatprep.subr.mxu0 0.0
        %4890 = vmatpush2.msra.mxu0 0.0
        %4891 = vmatprep.subr.mxu0 0.0
        %4892 = vmatpush2.msra.mxu0 0.0
        %4893 = vmatprep.subr.mxu0 0.0
        %4894 = vmatpush2.msra.mxu0 0.0
        %4895 = vmatprep.subr.mxu0 0.0
        %4896 = vmatpush2.msra.mxu0 0.0
        %4897 = vmatprep.subr.mxu0 0.0
        %4898 = vmatpush2.msra.mxu0 0.0
        %4899 = vmatprep.subr.mxu0 0.0
        %4900 = vmatpush2.msra.mxu0 0.0
        %4901 = vmatprep.subr.mxu0 0.0
        %4902 = vmatpush2.msra.mxu0 0.0
        %4903 = vmatprep.subr.mxu0 0.0
        %4904 = vmatpush2.msra.mxu0 0.0
        %4905 = vmatprep.subr.mxu0 0.0
        %4906 = vmatpush2.msra.mxu0 0.0
        %4907 = vmatprep.mubr.f32.mxu0 0.0
        %4908 = vmatmul.mubr.f32.gmra.mxu0 %v4748
        %v4909 = vpop.f32.mrf.mxu0
        %v4910 = vadd.f32 0.0, %v4909
        %v4911 = vpop.f32.mrf.mxu0
        %4912 = vmatprep.mubr.f32.mxu0 0.0
        %4913 = vmatmul.mubr.f32.gmra.mxu0 %v4751
        %v4914 = vpop.f32.mrf.mxu0
        %v4915 = vadd.f32 0.0, %v4914
        %v4916 = vpop.f32.mrf.mxu0
        %4917 = vmatprep.mubr.f32.mxu0 0.0
        %4918 = vmatmul.mubr.f32.gmra.mxu0 %v4754
        %v4919 = vpop.f32.mrf.mxu0
        %v4920 = vadd.f32 0.0, %v4919
        %v4921 = vpop.f32.mrf.mxu0
        %4922 = vmatprep.mubr.f32.mxu0 0.0
        %4923 = vmatmul.mubr.f32.gmra.mxu0 %v4757
        %v4924 = vpop.f32.mrf.mxu0
        %v4925 = vadd.f32 0.0, %v4924
        %v4926 = vpop.f32.mrf.mxu0
        %4927 = vmatprep.mubr.f32.mxu0 0.0
        %4928 = vmatmul.mubr.f32.gmra.mxu0 %v4760
        %v4929 = vpop.f32.mrf.mxu0
        %v4930 = vadd.f32 0.0, %v4929
        %v4931 = vpop.f32.mrf.mxu0
        %4932 = vmatprep.mubr.f32.mxu0 0.0
        %4933 = vmatmul.mubr.f32.gmra.mxu0 %v4763
        %v4934 = vpop.f32.mrf.mxu0
        %v4935 = vadd.f32 0.0, %v4934
        %v4936 = vpop.f32.mrf.mxu0
        %4937 = vmatprep.mubr.f32.mxu0 0.0
        %4938 = vmatmul.mubr.f32.gmra.mxu0 %v4766
        %v4939 = vpop.f32.mrf.mxu0
        %v4940 = vadd.f32 0.0, %v4939
        %v4941 = vpop.f32.mrf.mxu0
        %4942 = vmatprep.mubr.f32.mxu0 0.0
        %4943 = vmatmul.mubr.f32.gmra.mxu0 %v4769
        %v4944 = vpop.f32.mrf.mxu0
        %v4945 = vadd.f32 0.0, %v4944
        %v4946 = vpop.f32.mrf.mxu0
        %4947 = vmatprep.mubr.f32.mxu0 0.0
        %4948 = vmatmul.mubr.f32.gmra.mxu0 %v4772
        %v4949 = vpop.f32.mrf.mxu0
        %v4950 = vadd.f32 0.0, %v4949
        %v4951 = vpop.f32.mrf.mxu0
        %4952 = vmatprep.mubr.f32.mxu0 0.0
        %4953 = vmatmul.mubr.f32.gmra.mxu0 %v4775
        %v4954 = vpop.f32.mrf.mxu0
        %v4955 = vadd.f32 0.0, %v4954
        %v4956 = vpop.f32.mrf.mxu0
        %4957 = vmatprep.mubr.f32.mxu0 0.0
        %4958 = vmatmul.mubr.f32.gmra.mxu0 %v4778
        %v4959 = vpop.f32.mrf.mxu0
        %v4960 = vadd.f32 0.0, %v4959
        %v4961 = vpop.f32.mrf.mxu0
        %4962 = vmatprep.mubr.f32.mxu0 0.0
        %4963 = vmatmul.mubr.f32.gmra.mxu0 %v4781
        %v4964 = vpop.f32.mrf.mxu0
        %v4965 = vadd.f32 0.0, %v4964
        %v4966 = vpop.f32.mrf.mxu0
        %4967 = vmatprep.mubr.f32.mxu0 0.0
        %4968 = vmatmul.mubr.f32.gmra.mxu0 %v4784
        %v4969 = vpop.f32.mrf.mxu0
        %v4970 = vadd.f32 0.0, %v4969
        %v4971 = vpop.f32.mrf.mxu0
        %4972 = vmatprep.mubr.f32.mxu0 0.0
        %4973 = vmatmul.mubr.f32.gmra.mxu0 %v4787
        %v4974 = vpop.f32.mrf.mxu0
        %v4975 = vadd.f32 0.0, %v4974
        %v4976 = vpop.f32.mrf.mxu0
        %4977 = vmatprep.mubr.f32.mxu0 0.0
        %4978 = vmatmul.mubr.f32.gmra.mxu0 %v4790
        %v4979 = vpop.f32.mrf.mxu0
        %v4980 = vadd.f32 0.0, %v4979
        %v4981 = vpop.f32.mrf.mxu0
        %4982 = vmatprep.mubr.f32.mxu0 0.0
        %4983 = vmatmul.mubr.f32.gmra.mxu0 %v4793
        %v4984 = vpop.f32.mrf.mxu0
        %v4985 = vadd.f32 0.0, %v4984
        %v4986 = vpop.f32.mrf.mxu0
        %4987 = vmatprep.mubr.f32.mxu0 0.0
        %4988 = vmatmul.mubr.f32.gmra.mxu0 %v4796
        %v4989 = vpop.f32.mrf.mxu0
        %v4990 = vadd.f32 0.0, %v4989
        %v4991 = vpop.f32.mrf.mxu0
        %4992 = vmatprep.mubr.f32.mxu0 0.0
        %4993 = vmatmul.mubr.f32.gmra.mxu0 %v4799
        %v4994 = vpop.f32.mrf.mxu0
        %v4995 = vadd.f32 0.0, %v4994
        %v4996 = vpop.f32.mrf.mxu0
        %4997 = vmatprep.mubr.f32.mxu0 0.0
        %4998 = vmatmul.mubr.f32.gmra.mxu0 %v4802
        %v4999 = vpop.f32.mrf.mxu0
        %v5000 = vadd.f32 0.0, %v4999
        %v5001 = vpop.f32.mrf.mxu0
        %5002 = vmatprep.mubr.f32.mxu0 0.0
        %5003 = vmatmul.mubr.f32.gmra.mxu0 %v4805
        %v5004 = vpop.f32.mrf.mxu0
        %v5005 = vadd.f32 0.0, %v5004
        %v5006 = vpop.f32.mrf.mxu0
        %5007 = vmatprep.mubr.f32.mxu0 0.0
        %5008 = vmatmul.mubr.f32.gmra.mxu0 %v4808
        %v5009 = vpop.f32.mrf.mxu0
        %v5010 = vadd.f32 0.0, %v5009
        %v5011 = vpop.f32.mrf.mxu0
        %5012 = vmatprep.mubr.f32.mxu0 0.0
        %5013 = vmatmul.mubr.f32.gmra.mxu0 %v4811
        %v5014 = vpop.f32.mrf.mxu0
        %v5015 = vadd.f32 0.0, %v5014
        %v5016 = vpop.f32.mrf.mxu0
        %5017 = vmatprep.mubr.f32.mxu0 0.0
        %5018 = vmatmul.mubr.f32.gmra.mxu0 %v4814
        %v5019 = vpop.f32.mrf.mxu0
        %v5020 = vadd.f32 0.0, %v5019
        %v5021 = vpop.f32.mrf.mxu0
        %5022 = vmatprep.mubr.f32.mxu0 0.0
        %5023 = vmatmul.mubr.f32.gmra.mxu0 %v4817
        %v5024 = vpop.f32.mrf.mxu0
        %v5025 = vadd.f32 0.0, %v5024
        %v5026 = vpop.f32.mrf.mxu0
        %5027 = vmatprep.mubr.f32.mxu0 0.0
        %5028 = vmatmul.mubr.f32.gmra.mxu0 %v4820
        %v5029 = vpop.f32.mrf.mxu0
        %v5030 = vadd.f32 0.0, %v5029
        %v5031 = vpop.f32.mrf.mxu0
        %5032 = vmatprep.mubr.f32.mxu0 0.0
        %5033 = vmatmul.mubr.f32.gmra.mxu0 %v4823
        %v5034 = vpop.f32.mrf.mxu0
        %v5035 = vadd.f32 0.0, %v5034
        %v5036 = vpop.f32.mrf.mxu0
        %5037 = vmatprep.mubr.f32.mxu0 0.0
        %5038 = vmatmul.mubr.f32.gmra.mxu0 %v4826
        %v5039 = vpop.f32.mrf.mxu0
        %v5040 = vadd.f32 0.0, %v5039
        %v5041 = vpop.f32.mrf.mxu0
        %5042 = vmatprep.mubr.f32.mxu0 0.0
        %5043 = vmatmul.mubr.f32.gmra.mxu0 %v4829
        %v5044 = vpop.f32.mrf.mxu0
        %v5045 = vadd.f32 0.0, %v5044
        %v5046 = vpop.f32.mrf.mxu0
        %5047 = vmatprep.mubr.f32.mxu0 0.0
        %5048 = vmatmul.mubr.f32.gmra.mxu0 %v4832
        %v5049 = vpop.f32.mrf.mxu0
        %v5050 = vadd.f32 0.0, %v5049
        %v5051 = vpop.f32.mrf.mxu0
        %5052 = vmatprep.mubr.f32.mxu0 0.0
        %5053 = vmatmul.mubr.f32.gmra.mxu0 %v4835
        %v5054 = vpop.f32.mrf.mxu0
        %v5055 = vadd.f32 0.0, %v5054
        %v5056 = vpop.f32.mrf.mxu0
        %5057 = vmatprep.mubr.f32.mxu0 0.0
        %5058 = vmatmul.mubr.f32.gmra.mxu0 %v4838
        %v5059 = vpop.f32.mrf.mxu0
        %v5060 = vadd.f32 0.0, %v5059
        %v5061 = vpop.f32.mrf.mxu0
        %5062 = vmatprep.mubr.f32.mxu0 0.0
        %5063 = vmatmul.mubr.f32.gmra.mxu0 %v4841
        %v5064 = vpop.f32.mrf.mxu0
        %v5065 = vadd.f32 0.0, %v5064
        %v5066 = vpop.f32.mrf.mxu0
        %5067 = vdwg.mxu0
        %v5068 = vadd.f32 %v4548, %v4910
        %v5069 = vadd.f32 %v4553, %v4915
        %v5070 = vadd.f32 %v4558, %v4920
        %v5071 = vadd.f32 %v4563, %v4925
        %v5072 = vadd.f32 %v4568, %v4930
        %v5073 = vadd.f32 %v4573, %v4935
        %v5074 = vadd.f32 %v4578, %v4940
        %v5075 = vadd.f32 %v4583, %v4945
        %v5076 = vadd.f32 %v4588, %v4950
        %v5077 = vadd.f32 %v4593, %v4955
        %v5078 = vadd.f32 %v4598, %v4960
        %v5079 = vadd.f32 %v4603, %v4965
        %v5080 = vadd.f32 %v4608, %v4970
        %v5081 = vadd.f32 %v4613, %v4975
        %v5082 = vadd.f32 %v4618, %v4980
        %v5083 = vadd.f32 %v4623, %v4985
        %v5084 = vadd.f32 %v4628, %v4990
        %v5085 = vadd.f32 %v4633, %v4995
        %v5086 = vadd.f32 %v4638, %v5000
        %v5087 = vadd.f32 %v4643, %v5005
        %v5088 = vadd.f32 %v4648, %v5010
        %v5089 = vadd.f32 %v4653, %v5015
        %v5090 = vadd.f32 %v4658, %v5020
        %v5091 = vadd.f32 %v4663, %v5025
        %v5092 = vadd.f32 %v4668, %v5030
        %v5093 = vadd.f32 %v4673, %v5035
        %v5094 = vadd.f32 %v4678, %v5040
        %v5095 = vadd.f32 %v4683, %v5045
        %v5096 = vadd.f32 %v4688, %v5050
        %v5097 = vadd.f32 %v4693, %v5055
        %v5098 = vadd.f32 %v4698, %v5060
        %v5099 = vadd.f32 %v4703, %v5065
        %v5100 = vld [vmem:[%s301] sm:$0xff]
        %v5101 = vld [vmem:[%s301 + $0x8] sm:$0xff]
        %v5102 = vld [vmem:[%s301 + $0x18] sm:$0xff]
        %v5103 = vld [vmem:[%s301 + $0x20] sm:$0xff]
        %v5104 = vld [vmem:[%s301 + $0x30] sm:$0xff]
        %v5105 = vld [vmem:[%s301 + $0x38] sm:$0xff]
        %v5106 = vld [vmem:[%s301 + $0x48] sm:$0xff]
        %v5107 = vld [vmem:[%s301 + $0x50] sm:$0xff]
        %v5108 = vld [vmem:[%s301 + $0x60] sm:$0xff]
        %v5109 = vld [vmem:[%s301 + $0x68] sm:$0xff]
        %v5110 = vld [vmem:[%s301 + $0x78] sm:$0xff]
        %v5111 = vld [vmem:[%s301 + $0x80] sm:$0xff]
        %v5112 = vld [vmem:[%s301 + $0x90] sm:$0xff]
        %v5113 = vld [vmem:[%s301 + $0x98] sm:$0xff]
        %v5114 = vld [vmem:[%s301 + $0xa8] sm:$0xff]
        %v5115 = vld [vmem:[%s301 + $0xb0] sm:$0xff]
        %v5116 = vld [vmem:[%s301 + $0xc0] sm:$0xff]
        %v5117 = vld [vmem:[%s301 + $0xc8] sm:$0xff]
        %v5118 = vld [vmem:[%s301 + $0xd8] sm:$0xff]
        %v5119 = vld [vmem:[%s301 + $0xe0] sm:$0xff]
        %v5120 = vld [vmem:[%s301 + $0xf0] sm:$0xff]
        %v5121 = vld [vmem:[%s301 + $0xf8] sm:$0xff]
        %v5122 = vld [vmem:[%s301 + $0x108] sm:$0xff]
        %v5123 = vld [vmem:[%s301 + $0x110] sm:$0xff]
        %v5124 = vld [vmem:[%s301 + $0x120] sm:$0xff]
        %v5125 = vld [vmem:[%s301 + $0x128] sm:$0xff]
        %v5126 = vld [vmem:[%s301 + $0x138] sm:$0xff]
        %v5127 = vld [vmem:[%s301 + $0x140] sm:$0xff]
        %v5128 = vld [vmem:[%s301 + $0x150] sm:$0xff]
        %v5129 = vld [vmem:[%s301 + $0x158] sm:$0xff]
        %v5130 = vld [vmem:[%s301 + $0x168] sm:$0xff]
        %v5131 = vld [vmem:[%s301 + $0x170] sm:$0xff]
        %s5132 = scalar_lea.vmem %s3, 192
        %v5133 = vld [vmem:[%s5132] sm:$0xff]
        %v5134 = vld [vmem:[%s5132 + $0x8] sm:$0xff]
        %v5135 = vld [vmem:[%s5132 + $0x10] sm:$0xff]
        %v5136 = vld [vmem:[%s5132 + $0x18] sm:$0xff]
        %v5137 = vld [vmem:[%s5132 + $0x20] sm:$0xff]
        %v5138 = vld [vmem:[%s5132 + $0x28] sm:$0xff]
        %v5139 = vld [vmem:[%s5132 + $0x30] sm:$0xff]
        %v5140 = vld [vmem:[%s5132 + $0x38] sm:$0xff]
        %v5142 = vsel %vm223, %v5100, 0
        %v5145 = vsel %vm223, %v5101, 0
        %v5148 = vsel %vm223, %v5102, 0
        %v5151 = vsel %vm223, %v5103, 0
        %v5154 = vsel %vm223, %v5104, 0
        %v5157 = vsel %vm223, %v5105, 0
        %v5160 = vsel %vm223, %v5106, 0
        %v5163 = vsel %vm223, %v5107, 0
        %v5166 = vsel %vm223, %v5108, 0
        %v5169 = vsel %vm223, %v5109, 0
        %v5172 = vsel %vm223, %v5110, 0
        %v5175 = vsel %vm223, %v5111, 0
        %v5178 = vsel %vm223, %v5112, 0
        %v5181 = vsel %vm223, %v5113, 0
        %v5184 = vsel %vm223, %v5114, 0
        %v5187 = vsel %vm223, %v5115, 0
        %v5190 = vsel %vm223, %v5116, 0
        %v5193 = vsel %vm223, %v5117, 0
        %v5196 = vsel %vm223, %v5118, 0
        %v5199 = vsel %vm223, %v5119, 0
        %v5202 = vsel %vm223, %v5120, 0
        %v5205 = vsel %vm223, %v5121, 0
        %v5208 = vsel %vm223, %v5122, 0
        %v5211 = vsel %vm223, %v5123, 0
        %v5214 = vsel %vm223, %v5124, 0
        %v5217 = vsel %vm223, %v5125, 0
        %v5220 = vsel %vm223, %v5126, 0
        %v5223 = vsel %vm223, %v5127, 0
        %v5226 = vsel %vm223, %v5128, 0
        %v5229 = vsel %vm223, %v5129, 0
        %v5232 = vsel %vm223, %v5130, 0
        %v5235 = vsel %vm223, %v5131, 0
        %5237 = vmatprep.subr.mxu0 0.0
        %5238 = vmatpush1.msra.mxu0 0.0
        %5239 = vmatprep.subr.mxu0 0.0
        %5240 = vmatpush1.msra.mxu0 0.0
        %5241 = vmatprep.subr.mxu0 0.0
        %5242 = vmatpush1.msra.mxu0 0.0
        %5243 = vmatprep.subr.mxu0 0.0
        %5244 = vmatpush1.msra.mxu0 0.0
        %5245 = vmatprep.subr.mxu0 0.0
        %5246 = vmatpush1.msra.mxu0 0.0
        %5247 = vmatprep.subr.mxu0 0.0
        %5248 = vmatpush1.msra.mxu0 0.0
        %5249 = vmatprep.subr.mxu0 0.0
        %5250 = vmatpush1.msra.mxu0 0.0
        %5251 = vmatprep.subr.mxu0 0.0
        %5252 = vmatpush1.msra.mxu0 0.0
        %5253 = vmatprep.subr.mxu0 0.0
        %5254 = vmatpush1.msra.mxu0 %v5140
        %5255 = vmatprep.subr.mxu0 0.0
        %5256 = vmatpush1.msra.mxu0 %v5139
        %5257 = vmatprep.subr.mxu0 0.0
        %5258 = vmatpush1.msra.mxu0 %v5138
        %5259 = vmatprep.subr.mxu0 0.0
        %5260 = vmatpush1.msra.mxu0 %v5137
        %5261 = vmatprep.subr.mxu0 0.0
        %5262 = vmatpush1.msra.mxu0 %v5136
        %5263 = vmatprep.subr.mxu0 0.0
        %5264 = vmatpush1.msra.mxu0 %v5135
        %5265 = vmatprep.subr.mxu0 0.0
        %5266 = vmatpush1.msra.mxu0 %v5134
        %5267 = vmatprep.subr.mxu0 0.0
        %5268 = vmatpush1.msra.mxu0 %v5133
        %5269 = vmatprep.subr.mxu0 0.0
        %5270 = vmatpush2.msra.mxu0 0.0
        %5271 = vmatprep.subr.mxu0 0.0
        %5272 = vmatpush2.msra.mxu0 0.0
        %5273 = vmatprep.subr.mxu0 0.0
        %5274 = vmatpush2.msra.mxu0 0.0
        %5275 = vmatprep.subr.mxu0 0.0
        %5276 = vmatpush2.msra.mxu0 0.0
        %5277 = vmatprep.subr.mxu0 0.0
        %5278 = vmatpush2.msra.mxu0 0.0
        %5279 = vmatprep.subr.mxu0 0.0
        %5280 = vmatpush2.msra.mxu0 0.0
        %5281 = vmatprep.subr.mxu0 0.0
        %5282 = vmatpush2.msra.mxu0 0.0
        %5283 = vmatprep.subr.mxu0 0.0
        %5284 = vmatpush2.msra.mxu0 0.0
        %5285 = vmatprep.subr.mxu0 0.0
        %5286 = vmatpush2.msra.mxu0 0.0
        %5287 = vmatprep.subr.mxu0 0.0
        %5288 = vmatpush2.msra.mxu0 0.0
        %5289 = vmatprep.subr.mxu0 0.0
        %5290 = vmatpush2.msra.mxu0 0.0
        %5291 = vmatprep.subr.mxu0 0.0
        %5292 = vmatpush2.msra.mxu0 0.0
        %5293 = vmatprep.subr.mxu0 0.0
        %5294 = vmatpush2.msra.mxu0 0.0
        %5295 = vmatprep.subr.mxu0 0.0
        %5296 = vmatpush2.msra.mxu0 0.0
        %5297 = vmatprep.subr.mxu0 0.0
        %5298 = vmatpush2.msra.mxu0 0.0
        %5299 = vmatprep.subr.mxu0 0.0
        %5300 = vmatpush2.msra.mxu0 0.0
        %5301 = vmatprep.mubr.f32.mxu0 0.0
        %5302 = vmatmul.mubr.f32.gmra.mxu0 %v5142
        %v5303 = vpop.f32.mrf.mxu0
        %v5304 = vadd.f32 0.0, %v5303
        %v5305 = vpop.f32.mrf.mxu0
        %5306 = vmatprep.mubr.f32.mxu0 0.0
        %5307 = vmatmul.mubr.f32.gmra.mxu0 %v5145
        %v5308 = vpop.f32.mrf.mxu0
        %v5309 = vadd.f32 0.0, %v5308
        %v5310 = vpop.f32.mrf.mxu0
        %5311 = vmatprep.mubr.f32.mxu0 0.0
        %5312 = vmatmul.mubr.f32.gmra.mxu0 %v5148
        %v5313 = vpop.f32.mrf.mxu0
        %v5314 = vadd.f32 0.0, %v5313
        %v5315 = vpop.f32.mrf.mxu0
        %5316 = vmatprep.mubr.f32.mxu0 0.0
        %5317 = vmatmul.mubr.f32.gmra.mxu0 %v5151
        %v5318 = vpop.f32.mrf.mxu0
        %v5319 = vadd.f32 0.0, %v5318
        %v5320 = vpop.f32.mrf.mxu0
        %5321 = vmatprep.mubr.f32.mxu0 0.0
        %5322 = vmatmul.mubr.f32.gmra.mxu0 %v5154
        %v5323 = vpop.f32.mrf.mxu0
        %v5324 = vadd.f32 0.0, %v5323
        %v5325 = vpop.f32.mrf.mxu0
        %5326 = vmatprep.mubr.f32.mxu0 0.0
        %5327 = vmatmul.mubr.f32.gmra.mxu0 %v5157
        %v5328 = vpop.f32.mrf.mxu0
        %v5329 = vadd.f32 0.0, %v5328
        %v5330 = vpop.f32.mrf.mxu0
        %5331 = vmatprep.mubr.f32.mxu0 0.0
        %5332 = vmatmul.mubr.f32.gmra.mxu0 %v5160
        %v5333 = vpop.f32.mrf.mxu0
        %v5334 = vadd.f32 0.0, %v5333
        %v5335 = vpop.f32.mrf.mxu0
        %5336 = vmatprep.mubr.f32.mxu0 0.0
        %5337 = vmatmul.mubr.f32.gmra.mxu0 %v5163
        %v5338 = vpop.f32.mrf.mxu0
        %v5339 = vadd.f32 0.0, %v5338
        %v5340 = vpop.f32.mrf.mxu0
        %5341 = vmatprep.mubr.f32.mxu0 0.0
        %5342 = vmatmul.mubr.f32.gmra.mxu0 %v5166
        %v5343 = vpop.f32.mrf.mxu0
        %v5344 = vadd.f32 0.0, %v5343
        %v5345 = vpop.f32.mrf.mxu0
        %5346 = vmatprep.mubr.f32.mxu0 0.0
        %5347 = vmatmul.mubr.f32.gmra.mxu0 %v5169
        %v5348 = vpop.f32.mrf.mxu0
        %v5349 = vadd.f32 0.0, %v5348
        %v5350 = vpop.f32.mrf.mxu0
        %5351 = vmatprep.mubr.f32.mxu0 0.0
        %5352 = vmatmul.mubr.f32.gmra.mxu0 %v5172
        %v5353 = vpop.f32.mrf.mxu0
        %v5354 = vadd.f32 0.0, %v5353
        %v5355 = vpop.f32.mrf.mxu0
        %5356 = vmatprep.mubr.f32.mxu0 0.0
        %5357 = vmatmul.mubr.f32.gmra.mxu0 %v5175
        %v5358 = vpop.f32.mrf.mxu0
        %v5359 = vadd.f32 0.0, %v5358
        %v5360 = vpop.f32.mrf.mxu0
        %5361 = vmatprep.mubr.f32.mxu0 0.0
        %5362 = vmatmul.mubr.f32.gmra.mxu0 %v5178
        %v5363 = vpop.f32.mrf.mxu0
        %v5364 = vadd.f32 0.0, %v5363
        %v5365 = vpop.f32.mrf.mxu0
        %5366 = vmatprep.mubr.f32.mxu0 0.0
        %5367 = vmatmul.mubr.f32.gmra.mxu0 %v5181
        %v5368 = vpop.f32.mrf.mxu0
        %v5369 = vadd.f32 0.0, %v5368
        %v5370 = vpop.f32.mrf.mxu0
        %5371 = vmatprep.mubr.f32.mxu0 0.0
        %5372 = vmatmul.mubr.f32.gmra.mxu0 %v5184
        %v5373 = vpop.f32.mrf.mxu0
        %v5374 = vadd.f32 0.0, %v5373
        %v5375 = vpop.f32.mrf.mxu0
        %5376 = vmatprep.mubr.f32.mxu0 0.0
        %5377 = vmatmul.mubr.f32.gmra.mxu0 %v5187
        %v5378 = vpop.f32.mrf.mxu0
        %v5379 = vadd.f32 0.0, %v5378
        %v5380 = vpop.f32.mrf.mxu0
        %5381 = vmatprep.mubr.f32.mxu0 0.0
        %5382 = vmatmul.mubr.f32.gmra.mxu0 %v5190
        %v5383 = vpop.f32.mrf.mxu0
        %v5384 = vadd.f32 0.0, %v5383
        %v5385 = vpop.f32.mrf.mxu0
        %5386 = vmatprep.mubr.f32.mxu0 0.0
        %5387 = vmatmul.mubr.f32.gmra.mxu0 %v5193
        %v5388 = vpop.f32.mrf.mxu0
        %v5389 = vadd.f32 0.0, %v5388
        %v5390 = vpop.f32.mrf.mxu0
        %5391 = vmatprep.mubr.f32.mxu0 0.0
        %5392 = vmatmul.mubr.f32.gmra.mxu0 %v5196
        %v5393 = vpop.f32.mrf.mxu0
        %v5394 = vadd.f32 0.0, %v5393
        %v5395 = vpop.f32.mrf.mxu0
        %5396 = vmatprep.mubr.f32.mxu0 0.0
        %5397 = vmatmul.mubr.f32.gmra.mxu0 %v5199
        %v5398 = vpop.f32.mrf.mxu0
        %v5399 = vadd.f32 0.0, %v5398
        %v5400 = vpop.f32.mrf.mxu0
        %5401 = vmatprep.mubr.f32.mxu0 0.0
        %5402 = vmatmul.mubr.f32.gmra.mxu0 %v5202
        %v5403 = vpop.f32.mrf.mxu0
        %v5404 = vadd.f32 0.0, %v5403
        %v5405 = vpop.f32.mrf.mxu0
        %5406 = vmatprep.mubr.f32.mxu0 0.0
        %5407 = vmatmul.mubr.f32.gmra.mxu0 %v5205
        %v5408 = vpop.f32.mrf.mxu0
        %v5409 = vadd.f32 0.0, %v5408
        %v5410 = vpop.f32.mrf.mxu0
        %5411 = vmatprep.mubr.f32.mxu0 0.0
        %5412 = vmatmul.mubr.f32.gmra.mxu0 %v5208
        %v5413 = vpop.f32.mrf.mxu0
        %v5414 = vadd.f32 0.0, %v5413
        %v5415 = vpop.f32.mrf.mxu0
        %5416 = vmatprep.mubr.f32.mxu0 0.0
        %5417 = vmatmul.mubr.f32.gmra.mxu0 %v5211
        %v5418 = vpop.f32.mrf.mxu0
        %v5419 = vadd.f32 0.0, %v5418
        %v5420 = vpop.f32.mrf.mxu0
        %5421 = vmatprep.mubr.f32.mxu0 0.0
        %5422 = vmatmul.mubr.f32.gmra.mxu0 %v5214
        %v5423 = vpop.f32.mrf.mxu0
        %v5424 = vadd.f32 0.0, %v5423
        %v5425 = vpop.f32.mrf.mxu0
        %5426 = vmatprep.mubr.f32.mxu0 0.0
        %5427 = vmatmul.mubr.f32.gmra.mxu0 %v5217
        %v5428 = vpop.f32.mrf.mxu0
        %v5429 = vadd.f32 0.0, %v5428
        %v5430 = vpop.f32.mrf.mxu0
        %5431 = vmatprep.mubr.f32.mxu0 0.0
        %5432 = vmatmul.mubr.f32.gmra.mxu0 %v5220
        %v5433 = vpop.f32.mrf.mxu0
        %v5434 = vadd.f32 0.0, %v5433
        %v5435 = vpop.f32.mrf.mxu0
        %5436 = vmatprep.mubr.f32.mxu0 0.0
        %5437 = vmatmul.mubr.f32.gmra.mxu0 %v5223
        %v5438 = vpop.f32.mrf.mxu0
        %v5439 = vadd.f32 0.0, %v5438
        %v5440 = vpop.f32.mrf.mxu0
        %5441 = vmatprep.mubr.f32.mxu0 0.0
        %5442 = vmatmul.mubr.f32.gmra.mxu0 %v5226
        %v5443 = vpop.f32.mrf.mxu0
        %v5444 = vadd.f32 0.0, %v5443
        %v5445 = vpop.f32.mrf.mxu0
        %5446 = vmatprep.mubr.f32.mxu0 0.0
        %5447 = vmatmul.mubr.f32.gmra.mxu0 %v5229
        %v5448 = vpop.f32.mrf.mxu0
        %v5449 = vadd.f32 0.0, %v5448
        %v5450 = vpop.f32.mrf.mxu0
        %5451 = vmatprep.mubr.f32.mxu0 0.0
        %5452 = vmatmul.mubr.f32.gmra.mxu0 %v5232
        %v5453 = vpop.f32.mrf.mxu0
        %v5454 = vadd.f32 0.0, %v5453
        %v5455 = vpop.f32.mrf.mxu0
        %5456 = vmatprep.mubr.f32.mxu0 0.0
        %5457 = vmatmul.mubr.f32.gmra.mxu0 %v5235
        %v5458 = vpop.f32.mrf.mxu0
        %v5459 = vadd.f32 0.0, %v5458
        %v5460 = vpop.f32.mrf.mxu0
        %5461 = vdwg.mxu0
        %v5462 = vadd.f32 %v5068, %v5304
        %v5463 = vadd.f32 %v5069, %v5309
        %v5464 = vadd.f32 %v5070, %v5314
        %v5465 = vadd.f32 %v5071, %v5319
        %v5466 = vadd.f32 %v5072, %v5324
        %v5467 = vadd.f32 %v5073, %v5329
        %v5468 = vadd.f32 %v5074, %v5334
        %v5469 = vadd.f32 %v5075, %v5339
        %v5470 = vadd.f32 %v5076, %v5344
        %v5471 = vadd.f32 %v5077, %v5349
        %v5472 = vadd.f32 %v5078, %v5354
        %v5473 = vadd.f32 %v5079, %v5359
        %v5474 = vadd.f32 %v5080, %v5364
        %v5475 = vadd.f32 %v5081, %v5369
        %v5476 = vadd.f32 %v5082, %v5374
        %v5477 = vadd.f32 %v5083, %v5379
        %v5478 = vadd.f32 %v5084, %v5384
        %v5479 = vadd.f32 %v5085, %v5389
        %v5480 = vadd.f32 %v5086, %v5394
        %v5481 = vadd.f32 %v5087, %v5399
        %v5482 = vadd.f32 %v5088, %v5404
        %v5483 = vadd.f32 %v5089, %v5409
        %v5484 = vadd.f32 %v5090, %v5414
        %v5485 = vadd.f32 %v5091, %v5419
        %v5486 = vadd.f32 %v5092, %v5424
        %v5487 = vadd.f32 %v5093, %v5429
        %v5488 = vadd.f32 %v5094, %v5434
        %v5489 = vadd.f32 %v5095, %v5439
        %v5490 = vadd.f32 %v5096, %v5444
        %v5491 = vadd.f32 %v5097, %v5449
        %v5492 = vadd.f32 %v5098, %v5454
        %v5493 = vadd.f32 %v5099, %v5459
        %v5494 = vld [vmem:[%s301 + $0x1] sm:$0xff]
        %v5495 = vld [vmem:[%s301 + $0x9] sm:$0xff]
        %v5496 = vld [vmem:[%s301 + $0x19] sm:$0xff]
        %v5497 = vld [vmem:[%s301 + $0x21] sm:$0xff]
        %v5498 = vld [vmem:[%s301 + $0x31] sm:$0xff]
        %v5499 = vld [vmem:[%s301 + $0x39] sm:$0xff]
        %v5500 = vld [vmem:[%s301 + $0x49] sm:$0xff]
        %v5501 = vld [vmem:[%s301 + $0x51] sm:$0xff]
        %v5502 = vld [vmem:[%s301 + $0x61] sm:$0xff]
        %v5503 = vld [vmem:[%s301 + $0x69] sm:$0xff]
        %v5504 = vld [vmem:[%s301 + $0x79] sm:$0xff]
        %v5505 = vld [vmem:[%s301 + $0x81] sm:$0xff]
        %v5506 = vld [vmem:[%s301 + $0x91] sm:$0xff]
        %v5507 = vld [vmem:[%s301 + $0x99] sm:$0xff]
        %v5508 = vld [vmem:[%s301 + $0xa9] sm:$0xff]
        %v5509 = vld [vmem:[%s301 + $0xb1] sm:$0xff]
        %v5510 = vld [vmem:[%s301 + $0xc1] sm:$0xff]
        %v5511 = vld [vmem:[%s301 + $0xc9] sm:$0xff]
        %v5512 = vld [vmem:[%s301 + $0xd9] sm:$0xff]
        %v5513 = vld [vmem:[%s301 + $0xe1] sm:$0xff]
        %v5514 = vld [vmem:[%s301 + $0xf1] sm:$0xff]
        %v5515 = vld [vmem:[%s301 + $0xf9] sm:$0xff]
        %v5516 = vld [vmem:[%s301 + $0x109] sm:$0xff]
        %v5517 = vld [vmem:[%s301 + $0x111] sm:$0xff]
        %v5518 = vld [vmem:[%s301 + $0x121] sm:$0xff]
        %v5519 = vld [vmem:[%s301 + $0x129] sm:$0xff]
        %v5520 = vld [vmem:[%s301 + $0x139] sm:$0xff]
        %v5521 = vld [vmem:[%s301 + $0x141] sm:$0xff]
        %v5522 = vld [vmem:[%s301 + $0x151] sm:$0xff]
        %v5523 = vld [vmem:[%s301 + $0x159] sm:$0xff]
        %v5524 = vld [vmem:[%s301 + $0x169] sm:$0xff]
        %v5525 = vld [vmem:[%s301 + $0x171] sm:$0xff]
        %s5526 = scalar_lea.vmem %s3, 256
        %v5527 = vld [vmem:[%s5526] sm:$0xff]
        %v5528 = vld [vmem:[%s5526 + $0x8] sm:$0xff]
        %v5529 = vld [vmem:[%s5526 + $0x10] sm:$0xff]
        %v5530 = vld [vmem:[%s5526 + $0x18] sm:$0xff]
        %v5531 = vld [vmem:[%s5526 + $0x20] sm:$0xff]
        %v5532 = vld [vmem:[%s5526 + $0x28] sm:$0xff]
        %v5533 = vld [vmem:[%s5526 + $0x30] sm:$0xff]
        %v5534 = vld [vmem:[%s5526 + $0x38] sm:$0xff]
        %v5536 = vsel %vm223, %v5494, 0
        %v5539 = vsel %vm223, %v5495, 0
        %v5542 = vsel %vm223, %v5496, 0
        %v5545 = vsel %vm223, %v5497, 0
        %v5548 = vsel %vm223, %v5498, 0
        %v5551 = vsel %vm223, %v5499, 0
        %v5554 = vsel %vm223, %v5500, 0
        %v5557 = vsel %vm223, %v5501, 0
        %v5560 = vsel %vm223, %v5502, 0
        %v5563 = vsel %vm223, %v5503, 0
        %v5566 = vsel %vm223, %v5504, 0
        %v5569 = vsel %vm223, %v5505, 0
        %v5572 = vsel %vm223, %v5506, 0
        %v5575 = vsel %vm223, %v5507, 0
        %v5578 = vsel %vm223, %v5508, 0
        %v5581 = vsel %vm223, %v5509, 0
        %v5584 = vsel %vm223, %v5510, 0
        %v5587 = vsel %vm223, %v5511, 0
        %v5590 = vsel %vm223, %v5512, 0
        %v5593 = vsel %vm223, %v5513, 0
        %v5596 = vsel %vm223, %v5514, 0
        %v5599 = vsel %vm223, %v5515, 0
        %v5602 = vsel %vm223, %v5516, 0
        %v5605 = vsel %vm223, %v5517, 0
        %v5608 = vsel %vm223, %v5518, 0
        %v5611 = vsel %vm223, %v5519, 0
        %v5614 = vsel %vm223, %v5520, 0
        %v5617 = vsel %vm223, %v5521, 0
        %v5620 = vsel %vm223, %v5522, 0
        %v5623 = vsel %vm223, %v5523, 0
        %v5626 = vsel %vm223, %v5524, 0
        %v5629 = vsel %vm223, %v5525, 0
        %5631 = vmatprep.subr.mxu0 0.0
        %5632 = vmatpush1.msra.mxu0 0.0
        %5633 = vmatprep.subr.mxu0 0.0
        %5634 = vmatpush1.msra.mxu0 0.0
        %5635 = vmatprep.subr.mxu0 0.0
        %5636 = vmatpush1.msra.mxu0 0.0
        %5637 = vmatprep.subr.mxu0 0.0
        %5638 = vmatpush1.msra.mxu0 0.0
        %5639 = vmatprep.subr.mxu0 0.0
        %5640 = vmatpush1.msra.mxu0 0.0
        %5641 = vmatprep.subr.mxu0 0.0
        %5642 = vmatpush1.msra.mxu0 0.0
        %5643 = vmatprep.subr.mxu0 0.0
        %5644 = vmatpush1.msra.mxu0 0.0
        %5645 = vmatprep.subr.mxu0 0.0
        %5646 = vmatpush1.msra.mxu0 0.0
        %5647 = vmatprep.subr.mxu0 0.0
        %5648 = vmatpush1.msra.mxu0 %v5534
        %5649 = vmatprep.subr.mxu0 0.0
        %5650 = vmatpush1.msra.mxu0 %v5533
        %5651 = vmatprep.subr.mxu0 0.0
        %5652 = vmatpush1.msra.mxu0 %v5532
        %5653 = vmatprep.subr.mxu0 0.0
        %5654 = vmatpush1.msra.mxu0 %v5531
        %5655 = vmatprep.subr.mxu0 0.0
        %5656 = vmatpush1.msra.mxu0 %v5530
        %5657 = vmatprep.subr.mxu0 0.0
        %5658 = vmatpush1.msra.mxu0 %v5529
        %5659 = vmatprep.subr.mxu0 0.0
        %5660 = vmatpush1.msra.mxu0 %v5528
        %5661 = vmatprep.subr.mxu0 0.0
        %5662 = vmatpush1.msra.mxu0 %v5527
        %5663 = vmatprep.subr.mxu0 0.0
        %5664 = vmatpush2.msra.mxu0 0.0
        %5665 = vmatprep.subr.mxu0 0.0
        %5666 = vmatpush2.msra.mxu0 0.0
        %5667 = vmatprep.subr.mxu0 0.0
        %5668 = vmatpush2.msra.mxu0 0.0
        %5669 = vmatprep.subr.mxu0 0.0
        %5670 = vmatpush2.msra.mxu0 0.0
        %5671 = vmatprep.subr.mxu0 0.0
        %5672 = vmatpush2.msra.mxu0 0.0
        %5673 = vmatprep.subr.mxu0 0.0
        %5674 = vmatpush2.msra.mxu0 0.0
        %5675 = vmatprep.subr.mxu0 0.0
        %5676 = vmatpush2.msra.mxu0 0.0
        %5677 = vmatprep.subr.mxu0 0.0
        %5678 = vmatpush2.msra.mxu0 0.0
        %5679 = vmatprep.subr.mxu0 0.0
        %5680 = vmatpush2.msra.mxu0 0.0
        %5681 = vmatprep.subr.mxu0 0.0
        %5682 = vmatpush2.msra.mxu0 0.0
        %5683 = vmatprep.subr.mxu0 0.0
        %5684 = vmatpush2.msra.mxu0 0.0
        %5685 = vmatprep.subr.mxu0 0.0
        %5686 = vmatpush2.msra.mxu0 0.0
        %5687 = vmatprep.subr.mxu0 0.0
        %5688 = vmatpush2.msra.mxu0 0.0
        %5689 = vmatprep.subr.mxu0 0.0
        %5690 = vmatpush2.msra.mxu0 0.0
        %5691 = vmatprep.subr.mxu0 0.0
        %5692 = vmatpush2.msra.mxu0 0.0
        %5693 = vmatprep.subr.mxu0 0.0
        %5694 = vmatpush2.msra.mxu0 0.0
        %5695 = vmatprep.mubr.f32.mxu0 0.0
        %5696 = vmatmul.mubr.f32.gmra.mxu0 %v5536
        %v5697 = vpop.f32.mrf.mxu0
        %v5698 = vadd.f32 0.0, %v5697
        %v5699 = vpop.f32.mrf.mxu0
        %5700 = vmatprep.mubr.f32.mxu0 0.0
        %5701 = vmatmul.mubr.f32.gmra.mxu0 %v5539
        %v5702 = vpop.f32.mrf.mxu0
        %v5703 = vadd.f32 0.0, %v5702
        %v5704 = vpop.f32.mrf.mxu0
        %5705 = vmatprep.mubr.f32.mxu0 0.0
        %5706 = vmatmul.mubr.f32.gmra.mxu0 %v5542
        %v5707 = vpop.f32.mrf.mxu0
        %v5708 = vadd.f32 0.0, %v5707
        %v5709 = vpop.f32.mrf.mxu0
        %5710 = vmatprep.mubr.f32.mxu0 0.0
        %5711 = vmatmul.mubr.f32.gmra.mxu0 %v5545
        %v5712 = vpop.f32.mrf.mxu0
        %v5713 = vadd.f32 0.0, %v5712
        %v5714 = vpop.f32.mrf.mxu0
        %5715 = vmatprep.mubr.f32.mxu0 0.0
        %5716 = vmatmul.mubr.f32.gmra.mxu0 %v5548
        %v5717 = vpop.f32.mrf.mxu0
        %v5718 = vadd.f32 0.0, %v5717
        %v5719 = vpop.f32.mrf.mxu0
        %5720 = vmatprep.mubr.f32.mxu0 0.0
        %5721 = vmatmul.mubr.f32.gmra.mxu0 %v5551
        %v5722 = vpop.f32.mrf.mxu0
        %v5723 = vadd.f32 0.0, %v5722
        %v5724 = vpop.f32.mrf.mxu0
        %5725 = vmatprep.mubr.f32.mxu0 0.0
        %5726 = vmatmul.mubr.f32.gmra.mxu0 %v5554
        %v5727 = vpop.f32.mrf.mxu0
        %v5728 = vadd.f32 0.0, %v5727
        %v5729 = vpop.f32.mrf.mxu0
        %5730 = vmatprep.mubr.f32.mxu0 0.0
        %5731 = vmatmul.mubr.f32.gmra.mxu0 %v5557
        %v5732 = vpop.f32.mrf.mxu0
        %v5733 = vadd.f32 0.0, %v5732
        %v5734 = vpop.f32.mrf.mxu0
        %5735 = vmatprep.mubr.f32.mxu0 0.0
        %5736 = vmatmul.mubr.f32.gmra.mxu0 %v5560
        %v5737 = vpop.f32.mrf.mxu0
        %v5738 = vadd.f32 0.0, %v5737
        %v5739 = vpop.f32.mrf.mxu0
        %5740 = vmatprep.mubr.f32.mxu0 0.0
        %5741 = vmatmul.mubr.f32.gmra.mxu0 %v5563
        %v5742 = vpop.f32.mrf.mxu0
        %v5743 = vadd.f32 0.0, %v5742
        %v5744 = vpop.f32.mrf.mxu0
        %5745 = vmatprep.mubr.f32.mxu0 0.0
        %5746 = vmatmul.mubr.f32.gmra.mxu0 %v5566
        %v5747 = vpop.f32.mrf.mxu0
        %v5748 = vadd.f32 0.0, %v5747
        %v5749 = vpop.f32.mrf.mxu0
        %5750 = vmatprep.mubr.f32.mxu0 0.0
        %5751 = vmatmul.mubr.f32.gmra.mxu0 %v5569
        %v5752 = vpop.f32.mrf.mxu0
        %v5753 = vadd.f32 0.0, %v5752
        %v5754 = vpop.f32.mrf.mxu0
        %5755 = vmatprep.mubr.f32.mxu0 0.0
        %5756 = vmatmul.mubr.f32.gmra.mxu0 %v5572
        %v5757 = vpop.f32.mrf.mxu0
        %v5758 = vadd.f32 0.0, %v5757
        %v5759 = vpop.f32.mrf.mxu0
        %5760 = vmatprep.mubr.f32.mxu0 0.0
        %5761 = vmatmul.mubr.f32.gmra.mxu0 %v5575
        %v5762 = vpop.f32.mrf.mxu0
        %v5763 = vadd.f32 0.0, %v5762
        %v5764 = vpop.f32.mrf.mxu0
        %5765 = vmatprep.mubr.f32.mxu0 0.0
        %5766 = vmatmul.mubr.f32.gmra.mxu0 %v5578
        %v5767 = vpop.f32.mrf.mxu0
        %v5768 = vadd.f32 0.0, %v5767
        %v5769 = vpop.f32.mrf.mxu0
        %5770 = vmatprep.mubr.f32.mxu0 0.0
        %5771 = vmatmul.mubr.f32.gmra.mxu0 %v5581
        %v5772 = vpop.f32.mrf.mxu0
        %v5773 = vadd.f32 0.0, %v5772
        %v5774 = vpop.f32.mrf.mxu0
        %5775 = vmatprep.mubr.f32.mxu0 0.0
        %5776 = vmatmul.mubr.f32.gmra.mxu0 %v5584
        %v5777 = vpop.f32.mrf.mxu0
        %v5778 = vadd.f32 0.0, %v5777
        %v5779 = vpop.f32.mrf.mxu0
        %5780 = vmatprep.mubr.f32.mxu0 0.0
        %5781 = vmatmul.mubr.f32.gmra.mxu0 %v5587
        %v5782 = vpop.f32.mrf.mxu0
        %v5783 = vadd.f32 0.0, %v5782
        %v5784 = vpop.f32.mrf.mxu0
        %5785 = vmatprep.mubr.f32.mxu0 0.0
        %5786 = vmatmul.mubr.f32.gmra.mxu0 %v5590
        %v5787 = vpop.f32.mrf.mxu0
        %v5788 = vadd.f32 0.0, %v5787
        %v5789 = vpop.f32.mrf.mxu0
        %5790 = vmatprep.mubr.f32.mxu0 0.0
        %5791 = vmatmul.mubr.f32.gmra.mxu0 %v5593
        %v5792 = vpop.f32.mrf.mxu0
        %v5793 = vadd.f32 0.0, %v5792
        %v5794 = vpop.f32.mrf.mxu0
        %5795 = vmatprep.mubr.f32.mxu0 0.0
        %5796 = vmatmul.mubr.f32.gmra.mxu0 %v5596
        %v5797 = vpop.f32.mrf.mxu0
        %v5798 = vadd.f32 0.0, %v5797
        %v5799 = vpop.f32.mrf.mxu0
        %5800 = vmatprep.mubr.f32.mxu0 0.0
        %5801 = vmatmul.mubr.f32.gmra.mxu0 %v5599
        %v5802 = vpop.f32.mrf.mxu0
        %v5803 = vadd.f32 0.0, %v5802
        %v5804 = vpop.f32.mrf.mxu0
        %5805 = vmatprep.mubr.f32.mxu0 0.0
        %5806 = vmatmul.mubr.f32.gmra.mxu0 %v5602
        %v5807 = vpop.f32.mrf.mxu0
        %v5808 = vadd.f32 0.0, %v5807
        %v5809 = vpop.f32.mrf.mxu0
        %5810 = vmatprep.mubr.f32.mxu0 0.0
        %5811 = vmatmul.mubr.f32.gmra.mxu0 %v5605
        %v5812 = vpop.f32.mrf.mxu0
        %v5813 = vadd.f32 0.0, %v5812
        %v5814 = vpop.f32.mrf.mxu0
        %5815 = vmatprep.mubr.f32.mxu0 0.0
        %5816 = vmatmul.mubr.f32.gmra.mxu0 %v5608
        %v5817 = vpop.f32.mrf.mxu0
        %v5818 = vadd.f32 0.0, %v5817
        %v5819 = vpop.f32.mrf.mxu0
        %5820 = vmatprep.mubr.f32.mxu0 0.0
        %5821 = vmatmul.mubr.f32.gmra.mxu0 %v5611
        %v5822 = vpop.f32.mrf.mxu0
        %v5823 = vadd.f32 0.0, %v5822
        %v5824 = vpop.f32.mrf.mxu0
        %5825 = vmatprep.mubr.f32.mxu0 0.0
        %5826 = vmatmul.mubr.f32.gmra.mxu0 %v5614
        %v5827 = vpop.f32.mrf.mxu0
        %v5828 = vadd.f32 0.0, %v5827
        %v5829 = vpop.f32.mrf.mxu0
        %5830 = vmatprep.mubr.f32.mxu0 0.0
        %5831 = vmatmul.mubr.f32.gmra.mxu0 %v5617
        %v5832 = vpop.f32.mrf.mxu0
        %v5833 = vadd.f32 0.0, %v5832
        %v5834 = vpop.f32.mrf.mxu0
        %5835 = vmatprep.mubr.f32.mxu0 0.0
        %5836 = vmatmul.mubr.f32.gmra.mxu0 %v5620
        %v5837 = vpop.f32.mrf.mxu0
        %v5838 = vadd.f32 0.0, %v5837
        %v5839 = vpop.f32.mrf.mxu0
        %5840 = vmatprep.mubr.f32.mxu0 0.0
        %5841 = vmatmul.mubr.f32.gmra.mxu0 %v5623
        %v5842 = vpop.f32.mrf.mxu0
        %v5843 = vadd.f32 0.0, %v5842
        %v5844 = vpop.f32.mrf.mxu0
        %5845 = vmatprep.mubr.f32.mxu0 0.0
        %5846 = vmatmul.mubr.f32.gmra.mxu0 %v5626
        %v5847 = vpop.f32.mrf.mxu0
        %v5848 = vadd.f32 0.0, %v5847
        %v5849 = vpop.f32.mrf.mxu0
        %5850 = vmatprep.mubr.f32.mxu0 0.0
        %5851 = vmatmul.mubr.f32.gmra.mxu0 %v5629
        %v5852 = vpop.f32.mrf.mxu0
        %v5853 = vadd.f32 0.0, %v5852
        %v5854 = vpop.f32.mrf.mxu0
        %5855 = vdwg.mxu0
        %v5856 = vadd.f32 %v5462, %v5698
        %v5857 = vadd.f32 %v5463, %v5703
        %v5858 = vadd.f32 %v5464, %v5708
        %v5859 = vadd.f32 %v5465, %v5713
        %v5860 = vadd.f32 %v5466, %v5718
        %v5861 = vadd.f32 %v5467, %v5723
        %v5862 = vadd.f32 %v5468, %v5728
        %v5863 = vadd.f32 %v5469, %v5733
        %v5864 = vadd.f32 %v5470, %v5738
        %v5865 = vadd.f32 %v5471, %v5743
        %v5866 = vadd.f32 %v5472, %v5748
        %v5867 = vadd.f32 %v5473, %v5753
        %v5868 = vadd.f32 %v5474, %v5758
        %v5869 = vadd.f32 %v5475, %v5763
        %v5870 = vadd.f32 %v5476, %v5768
        %v5871 = vadd.f32 %v5477, %v5773
        %v5872 = vadd.f32 %v5478, %v5778
        %v5873 = vadd.f32 %v5479, %v5783
        %v5874 = vadd.f32 %v5480, %v5788
        %v5875 = vadd.f32 %v5481, %v5793
        %v5876 = vadd.f32 %v5482, %v5798
        %v5877 = vadd.f32 %v5483, %v5803
        %v5878 = vadd.f32 %v5484, %v5808
        %v5879 = vadd.f32 %v5485, %v5813
        %v5880 = vadd.f32 %v5486, %v5818
        %v5881 = vadd.f32 %v5487, %v5823
        %v5882 = vadd.f32 %v5488, %v5828
        %v5883 = vadd.f32 %v5489, %v5833
        %v5884 = vadd.f32 %v5490, %v5838
        %v5885 = vadd.f32 %v5491, %v5843
        %v5886 = vadd.f32 %v5492, %v5848
        %v5887 = vadd.f32 %v5493, %v5853
        %v5888 = vld [vmem:[%s301 + $0x2] sm:$0xff]
        %v5889 = vld [vmem:[%s301 + $0xa] sm:$0xff]
        %v5890 = vld [vmem:[%s301 + $0x1a] sm:$0xff]
        %v5891 = vld [vmem:[%s301 + $0x22] sm:$0xff]
        %v5892 = vld [vmem:[%s301 + $0x32] sm:$0xff]
        %v5893 = vld [vmem:[%s301 + $0x3a] sm:$0xff]
        %v5894 = vld [vmem:[%s301 + $0x4a] sm:$0xff]
        %v5895 = vld [vmem:[%s301 + $0x52] sm:$0xff]
        %v5896 = vld [vmem:[%s301 + $0x62] sm:$0xff]
        %v5897 = vld [vmem:[%s301 + $0x6a] sm:$0xff]
        %v5898 = vld [vmem:[%s301 + $0x7a] sm:$0xff]
        %v5899 = vld [vmem:[%s301 + $0x82] sm:$0xff]
        %v5900 = vld [vmem:[%s301 + $0x92] sm:$0xff]
        %v5901 = vld [vmem:[%s301 + $0x9a] sm:$0xff]
        %v5902 = vld [vmem:[%s301 + $0xaa] sm:$0xff]
        %v5903 = vld [vmem:[%s301 + $0xb2] sm:$0xff]
        %v5904 = vld [vmem:[%s301 + $0xc2] sm:$0xff]
        %v5905 = vld [vmem:[%s301 + $0xca] sm:$0xff]
        %v5906 = vld [vmem:[%s301 + $0xda] sm:$0xff]
        %v5907 = vld [vmem:[%s301 + $0xe2] sm:$0xff]
        %v5908 = vld [vmem:[%s301 + $0xf2] sm:$0xff]
        %v5909 = vld [vmem:[%s301 + $0xfa] sm:$0xff]
        %v5910 = vld [vmem:[%s301 + $0x10a] sm:$0xff]
        %v5911 = vld [vmem:[%s301 + $0x112] sm:$0xff]
        %v5912 = vld [vmem:[%s301 + $0x122] sm:$0xff]
        %v5913 = vld [vmem:[%s301 + $0x12a] sm:$0xff]
        %v5914 = vld [vmem:[%s301 + $0x13a] sm:$0xff]
        %v5915 = vld [vmem:[%s301 + $0x142] sm:$0xff]
        %v5916 = vld [vmem:[%s301 + $0x152] sm:$0xff]
        %v5917 = vld [vmem:[%s301 + $0x15a] sm:$0xff]
        %v5918 = vld [vmem:[%s301 + $0x16a] sm:$0xff]
        %v5919 = vld [vmem:[%s301 + $0x172] sm:$0xff]
        %s5920 = scalar_lea.vmem %s3, 320
        %v5921 = vld [vmem:[%s5920] sm:$0xff]
        %v5922 = vld [vmem:[%s5920 + $0x8] sm:$0xff]
        %v5923 = vld [vmem:[%s5920 + $0x10] sm:$0xff]
        %v5924 = vld [vmem:[%s5920 + $0x18] sm:$0xff]
        %v5925 = vld [vmem:[%s5920 + $0x20] sm:$0xff]
        %v5926 = vld [vmem:[%s5920 + $0x28] sm:$0xff]
        %v5927 = vld [vmem:[%s5920 + $0x30] sm:$0xff]
        %v5928 = vld [vmem:[%s5920 + $0x38] sm:$0xff]
        %v5930 = vsel %vm223, %v5888, 0
        %v5933 = vsel %vm223, %v5889, 0
        %v5936 = vsel %vm223, %v5890, 0
        %v5939 = vsel %vm223, %v5891, 0
        %v5942 = vsel %vm223, %v5892, 0
        %v5945 = vsel %vm223, %v5893, 0
        %v5948 = vsel %vm223, %v5894, 0
        %v5951 = vsel %vm223, %v5895, 0
        %v5954 = vsel %vm223, %v5896, 0
        %v5957 = vsel %vm223, %v5897, 0
        %v5960 = vsel %vm223, %v5898, 0
        %v5963 = vsel %vm223, %v5899, 0
        %v5966 = vsel %vm223, %v5900, 0
        %v5969 = vsel %vm223, %v5901, 0
        %v5972 = vsel %vm223, %v5902, 0
        %v5975 = vsel %vm223, %v5903, 0
        %v5978 = vsel %vm223, %v5904, 0
        %v5981 = vsel %vm223, %v5905, 0
        %v5984 = vsel %vm223, %v5906, 0
        %v5987 = vsel %vm223, %v5907, 0
        %v5990 = vsel %vm223, %v5908, 0
        %v5993 = vsel %vm223, %v5909, 0
        %v5996 = vsel %vm223, %v5910, 0
        %v5999 = vsel %vm223, %v5911, 0
        %v6002 = vsel %vm223, %v5912, 0
        %v6005 = vsel %vm223, %v5913, 0
        %v6008 = vsel %vm223, %v5914, 0
        %v6011 = vsel %vm223, %v5915, 0
        %v6014 = vsel %vm223, %v5916, 0
        %v6017 = vsel %vm223, %v5917, 0
        %v6020 = vsel %vm223, %v5918, 0
        %v6023 = vsel %vm223, %v5919, 0
        %6025 = vmatprep.subr.mxu0 0.0
        %6026 = vmatpush1.msra.mxu0 0.0
        %6027 = vmatprep.subr.mxu0 0.0
        %6028 = vmatpush1.msra.mxu0 0.0
        %6029 = vmatprep.subr.mxu0 0.0
        %6030 = vmatpush1.msra.mxu0 0.0
        %6031 = vmatprep.subr.mxu0 0.0
        %6032 = vmatpush1.msra.mxu0 0.0
        %6033 = vmatprep.subr.mxu0 0.0
        %6034 = vmatpush1.msra.mxu0 0.0
        %6035 = vmatprep.subr.mxu0 0.0
        %6036 = vmatpush1.msra.mxu0 0.0
        %6037 = vmatprep.subr.mxu0 0.0
        %6038 = vmatpush1.msra.mxu0 0.0
        %6039 = vmatprep.subr.mxu0 0.0
        %6040 = vmatpush1.msra.mxu0 0.0
        %6041 = vmatprep.subr.mxu0 0.0
        %6042 = vmatpush1.msra.mxu0 %v5928
        %6043 = vmatprep.subr.mxu0 0.0
        %6044 = vmatpush1.msra.mxu0 %v5927
        %6045 = vmatprep.subr.mxu0 0.0
        %6046 = vmatpush1.msra.mxu0 %v5926
        %6047 = vmatprep.subr.mxu0 0.0
        %6048 = vmatpush1.msra.mxu0 %v5925
        %6049 = vmatprep.subr.mxu0 0.0
        %6050 = vmatpush1.msra.mxu0 %v5924
        %6051 = vmatprep.subr.mxu0 0.0
        %6052 = vmatpush1.msra.mxu0 %v5923
        %6053 = vmatprep.subr.mxu0 0.0
        %6054 = vmatpush1.msra.mxu0 %v5922
        %6055 = vmatprep.subr.mxu0 0.0
        %6056 = vmatpush1.msra.mxu0 %v5921
        %6057 = vmatprep.subr.mxu0 0.0
        %6058 = vmatpush2.msra.mxu0 0.0
        %6059 = vmatprep.subr.mxu0 0.0
        %6060 = vmatpush2.msra.mxu0 0.0
        %6061 = vmatprep.subr.mxu0 0.0
        %6062 = vmatpush2.msra.mxu0 0.0
        %6063 = vmatprep.subr.mxu0 0.0
        %6064 = vmatpush2.msra.mxu0 0.0
        %6065 = vmatprep.subr.mxu0 0.0
        %6066 = vmatpush2.msra.mxu0 0.0
        %6067 = vmatprep.subr.mxu0 0.0
        %6068 = vmatpush2.msra.mxu0 0.0
        %6069 = vmatprep.subr.mxu0 0.0
        %6070 = vmatpush2.msra.mxu0 0.0
        %6071 = vmatprep.subr.mxu0 0.0
        %6072 = vmatpush2.msra.mxu0 0.0
        %6073 = vmatprep.subr.mxu0 0.0
        %6074 = vmatpush2.msra.mxu0 0.0
        %6075 = vmatprep.subr.mxu0 0.0
        %6076 = vmatpush2.msra.mxu0 0.0
        %6077 = vmatprep.subr.mxu0 0.0
        %6078 = vmatpush2.msra.mxu0 0.0
        %6079 = vmatprep.subr.mxu0 0.0
        %6080 = vmatpush2.msra.mxu0 0.0
        %6081 = vmatprep.subr.mxu0 0.0
        %6082 = vmatpush2.msra.mxu0 0.0
        %6083 = vmatprep.subr.mxu0 0.0
        %6084 = vmatpush2.msra.mxu0 0.0
        %6085 = vmatprep.subr.mxu0 0.0
        %6086 = vmatpush2.msra.mxu0 0.0
        %6087 = vmatprep.subr.mxu0 0.0
        %6088 = vmatpush2.msra.mxu0 0.0
        %6089 = vmatprep.mubr.f32.mxu0 0.0
        %6090 = vmatmul.mubr.f32.gmra.mxu0 %v5930
        %v6091 = vpop.f32.mrf.mxu0
        %v6092 = vadd.f32 0.0, %v6091
        %v6093 = vpop.f32.mrf.mxu0
        %6094 = vmatprep.mubr.f32.mxu0 0.0
        %6095 = vmatmul.mubr.f32.gmra.mxu0 %v5933
        %v6096 = vpop.f32.mrf.mxu0
        %v6097 = vadd.f32 0.0, %v6096
        %v6098 = vpop.f32.mrf.mxu0
        %6099 = vmatprep.mubr.f32.mxu0 0.0
        %6100 = vmatmul.mubr.f32.gmra.mxu0 %v5936
        %v6101 = vpop.f32.mrf.mxu0
        %v6102 = vadd.f32 0.0, %v6101
        %v6103 = vpop.f32.mrf.mxu0
        %6104 = vmatprep.mubr.f32.mxu0 0.0
        %6105 = vmatmul.mubr.f32.gmra.mxu0 %v5939
        %v6106 = vpop.f32.mrf.mxu0
        %v6107 = vadd.f32 0.0, %v6106
        %v6108 = vpop.f32.mrf.mxu0
        %6109 = vmatprep.mubr.f32.mxu0 0.0
        %6110 = vmatmul.mubr.f32.gmra.mxu0 %v5942
        %v6111 = vpop.f32.mrf.mxu0
        %v6112 = vadd.f32 0.0, %v6111
        %v6113 = vpop.f32.mrf.mxu0
        %6114 = vmatprep.mubr.f32.mxu0 0.0
        %6115 = vmatmul.mubr.f32.gmra.mxu0 %v5945
        %v6116 = vpop.f32.mrf.mxu0
        %v6117 = vadd.f32 0.0, %v6116
        %v6118 = vpop.f32.mrf.mxu0
        %6119 = vmatprep.mubr.f32.mxu0 0.0
        %6120 = vmatmul.mubr.f32.gmra.mxu0 %v5948
        %v6121 = vpop.f32.mrf.mxu0
        %v6122 = vadd.f32 0.0, %v6121
        %v6123 = vpop.f32.mrf.mxu0
        %6124 = vmatprep.mubr.f32.mxu0 0.0
        %6125 = vmatmul.mubr.f32.gmra.mxu0 %v5951
        %v6126 = vpop.f32.mrf.mxu0
        %v6127 = vadd.f32 0.0, %v6126
        %v6128 = vpop.f32.mrf.mxu0
        %6129 = vmatprep.mubr.f32.mxu0 0.0
        %6130 = vmatmul.mubr.f32.gmra.mxu0 %v5954
        %v6131 = vpop.f32.mrf.mxu0
        %v6132 = vadd.f32 0.0, %v6131
        %v6133 = vpop.f32.mrf.mxu0
        %6134 = vmatprep.mubr.f32.mxu0 0.0
        %6135 = vmatmul.mubr.f32.gmra.mxu0 %v5957
        %v6136 = vpop.f32.mrf.mxu0
        %v6137 = vadd.f32 0.0, %v6136
        %v6138 = vpop.f32.mrf.mxu0
        %6139 = vmatprep.mubr.f32.mxu0 0.0
        %6140 = vmatmul.mubr.f32.gmra.mxu0 %v5960
        %v6141 = vpop.f32.mrf.mxu0
        %v6142 = vadd.f32 0.0, %v6141
        %v6143 = vpop.f32.mrf.mxu0
        %6144 = vmatprep.mubr.f32.mxu0 0.0
        %6145 = vmatmul.mubr.f32.gmra.mxu0 %v5963
        %v6146 = vpop.f32.mrf.mxu0
        %v6147 = vadd.f32 0.0, %v6146
        %v6148 = vpop.f32.mrf.mxu0
        %6149 = vmatprep.mubr.f32.mxu0 0.0
        %6150 = vmatmul.mubr.f32.gmra.mxu0 %v5966
        %v6151 = vpop.f32.mrf.mxu0
        %v6152 = vadd.f32 0.0, %v6151
        %v6153 = vpop.f32.mrf.mxu0
        %6154 = vmatprep.mubr.f32.mxu0 0.0
        %6155 = vmatmul.mubr.f32.gmra.mxu0 %v5969
        %v6156 = vpop.f32.mrf.mxu0
        %v6157 = vadd.f32 0.0, %v6156
        %v6158 = vpop.f32.mrf.mxu0
        %6159 = vmatprep.mubr.f32.mxu0 0.0
        %6160 = vmatmul.mubr.f32.gmra.mxu0 %v5972
        %v6161 = vpop.f32.mrf.mxu0
        %v6162 = vadd.f32 0.0, %v6161
        %v6163 = vpop.f32.mrf.mxu0
        %6164 = vmatprep.mubr.f32.mxu0 0.0
        %6165 = vmatmul.mubr.f32.gmra.mxu0 %v5975
        %v6166 = vpop.f32.mrf.mxu0
        %v6167 = vadd.f32 0.0, %v6166
        %v6168 = vpop.f32.mrf.mxu0
        %6169 = vmatprep.mubr.f32.mxu0 0.0
        %6170 = vmatmul.mubr.f32.gmra.mxu0 %v5978
        %v6171 = vpop.f32.mrf.mxu0
        %v6172 = vadd.f32 0.0, %v6171
        %v6173 = vpop.f32.mrf.mxu0
        %6174 = vmatprep.mubr.f32.mxu0 0.0
        %6175 = vmatmul.mubr.f32.gmra.mxu0 %v5981
        %v6176 = vpop.f32.mrf.mxu0
        %v6177 = vadd.f32 0.0, %v6176
        %v6178 = vpop.f32.mrf.mxu0
        %6179 = vmatprep.mubr.f32.mxu0 0.0
        %6180 = vmatmul.mubr.f32.gmra.mxu0 %v5984
        %v6181 = vpop.f32.mrf.mxu0
        %v6182 = vadd.f32 0.0, %v6181
        %v6183 = vpop.f32.mrf.mxu0
        %6184 = vmatprep.mubr.f32.mxu0 0.0
        %6185 = vmatmul.mubr.f32.gmra.mxu0 %v5987
        %v6186 = vpop.f32.mrf.mxu0
        %v6187 = vadd.f32 0.0, %v6186
        %v6188 = vpop.f32.mrf.mxu0
        %6189 = vmatprep.mubr.f32.mxu0 0.0
        %6190 = vmatmul.mubr.f32.gmra.mxu0 %v5990
        %v6191 = vpop.f32.mrf.mxu0
        %v6192 = vadd.f32 0.0, %v6191
        %v6193 = vpop.f32.mrf.mxu0
        %6194 = vmatprep.mubr.f32.mxu0 0.0
        %6195 = vmatmul.mubr.f32.gmra.mxu0 %v5993
        %v6196 = vpop.f32.mrf.mxu0
        %v6197 = vadd.f32 0.0, %v6196
        %v6198 = vpop.f32.mrf.mxu0
        %6199 = vmatprep.mubr.f32.mxu0 0.0
        %6200 = vmatmul.mubr.f32.gmra.mxu0 %v5996
        %v6201 = vpop.f32.mrf.mxu0
        %v6202 = vadd.f32 0.0, %v6201
        %v6203 = vpop.f32.mrf.mxu0
        %6204 = vmatprep.mubr.f32.mxu0 0.0
        %6205 = vmatmul.mubr.f32.gmra.mxu0 %v5999
        %v6206 = vpop.f32.mrf.mxu0
        %v6207 = vadd.f32 0.0, %v6206
        %v6208 = vpop.f32.mrf.mxu0
        %6209 = vmatprep.mubr.f32.mxu0 0.0
        %6210 = vmatmul.mubr.f32.gmra.mxu0 %v6002
        %v6211 = vpop.f32.mrf.mxu0
        %v6212 = vadd.f32 0.0, %v6211
        %v6213 = vpop.f32.mrf.mxu0
        %6214 = vmatprep.mubr.f32.mxu0 0.0
        %6215 = vmatmul.mubr.f32.gmra.mxu0 %v6005
        %v6216 = vpop.f32.mrf.mxu0
        %v6217 = vadd.f32 0.0, %v6216
        %v6218 = vpop.f32.mrf.mxu0
        %6219 = vmatprep.mubr.f32.mxu0 0.0
        %6220 = vmatmul.mubr.f32.gmra.mxu0 %v6008
        %v6221 = vpop.f32.mrf.mxu0
        %v6222 = vadd.f32 0.0, %v6221
        %v6223 = vpop.f32.mrf.mxu0
        %6224 = vmatprep.mubr.f32.mxu0 0.0
        %6225 = vmatmul.mubr.f32.gmra.mxu0 %v6011
        %v6226 = vpop.f32.mrf.mxu0
        %v6227 = vadd.f32 0.0, %v6226
        %v6228 = vpop.f32.mrf.mxu0
        %6229 = vmatprep.mubr.f32.mxu0 0.0
        %6230 = vmatmul.mubr.f32.gmra.mxu0 %v6014
        %v6231 = vpop.f32.mrf.mxu0
        %v6232 = vadd.f32 0.0, %v6231
        %v6233 = vpop.f32.mrf.mxu0
        %6234 = vmatprep.mubr.f32.mxu0 0.0
        %6235 = vmatmul.mubr.f32.gmra.mxu0 %v6017
        %v6236 = vpop.f32.mrf.mxu0
        %v6237 = vadd.f32 0.0, %v6236
        %v6238 = vpop.f32.mrf.mxu0
        %6239 = vmatprep.mubr.f32.mxu0 0.0
        %6240 = vmatmul.mubr.f32.gmra.mxu0 %v6020
        %v6241 = vpop.f32.mrf.mxu0
        %v6242 = vadd.f32 0.0, %v6241
        %v6243 = vpop.f32.mrf.mxu0
        %6244 = vmatprep.mubr.f32.mxu0 0.0
        %6245 = vmatmul.mubr.f32.gmra.mxu0 %v6023
        %v6246 = vpop.f32.mrf.mxu0
        %v6247 = vadd.f32 0.0, %v6246
        %v6248 = vpop.f32.mrf.mxu0
        %6249 = vdwg.mxu0
        %v6250 = vadd.f32 %v5856, %v6092
        %v6251 = vadd.f32 %v5857, %v6097
        %v6252 = vadd.f32 %v5858, %v6102
        %v6253 = vadd.f32 %v5859, %v6107
        %v6254 = vadd.f32 %v5860, %v6112
        %v6255 = vadd.f32 %v5861, %v6117
        %v6256 = vadd.f32 %v5862, %v6122
        %v6257 = vadd.f32 %v5863, %v6127
        %v6258 = vadd.f32 %v5864, %v6132
        %v6259 = vadd.f32 %v5865, %v6137
        %v6260 = vadd.f32 %v5866, %v6142
        %v6261 = vadd.f32 %v5867, %v6147
        %v6262 = vadd.f32 %v5868, %v6152
        %v6263 = vadd.f32 %v5869, %v6157
        %v6264 = vadd.f32 %v5870, %v6162
        %v6265 = vadd.f32 %v5871, %v6167
        %v6266 = vadd.f32 %v5872, %v6172
        %v6267 = vadd.f32 %v5873, %v6177
        %v6268 = vadd.f32 %v5874, %v6182
        %v6269 = vadd.f32 %v5875, %v6187
        %v6270 = vadd.f32 %v5876, %v6192
        %v6271 = vadd.f32 %v5877, %v6197
        %v6272 = vadd.f32 %v5878, %v6202
        %v6273 = vadd.f32 %v5879, %v6207
        %v6274 = vadd.f32 %v5880, %v6212
        %v6275 = vadd.f32 %v5881, %v6217
        %v6276 = vadd.f32 %v5882, %v6222
        %v6277 = vadd.f32 %v5883, %v6227
        %v6278 = vadd.f32 %v5884, %v6232
        %v6279 = vadd.f32 %v5885, %v6237
        %v6280 = vadd.f32 %v5886, %v6242
        %v6281 = vadd.f32 %v5887, %v6247
        %v6282 = vld [vmem:[%s2633] sm:$0xff]
        %v6283 = vld [vmem:[%s2633 + $0x8] sm:$0xff]
        %v6284 = vld [vmem:[%s2633 + $0x18] sm:$0xff]
        %v6285 = vld [vmem:[%s2633 + $0x20] sm:$0xff]
        %v6286 = vld [vmem:[%s2633 + $0x30] sm:$0xff]
        %v6287 = vld [vmem:[%s2633 + $0x38] sm:$0xff]
        %v6288 = vld [vmem:[%s2633 + $0x48] sm:$0xff]
        %v6289 = vld [vmem:[%s2633 + $0x50] sm:$0xff]
        %v6290 = vld [vmem:[%s2633 + $0x60] sm:$0xff]
        %v6291 = vld [vmem:[%s2633 + $0x68] sm:$0xff]
        %v6292 = vld [vmem:[%s2633 + $0x78] sm:$0xff]
        %v6293 = vld [vmem:[%s2633 + $0x80] sm:$0xff]
        %v6294 = vld [vmem:[%s2633 + $0x90] sm:$0xff]
        %v6295 = vld [vmem:[%s2633 + $0x98] sm:$0xff]
        %v6296 = vld [vmem:[%s2633 + $0xa8] sm:$0xff]
        %v6297 = vld [vmem:[%s2633 + $0xb0] sm:$0xff]
        %v6298 = vld [vmem:[%s2633 + $0xc0] sm:$0xff]
        %v6299 = vld [vmem:[%s2633 + $0xc8] sm:$0xff]
        %v6300 = vld [vmem:[%s2633 + $0xd8] sm:$0xff]
        %v6301 = vld [vmem:[%s2633 + $0xe0] sm:$0xff]
        %v6302 = vld [vmem:[%s2633 + $0xf0] sm:$0xff]
        %v6303 = vld [vmem:[%s2633 + $0xf8] sm:$0xff]
        %v6304 = vld [vmem:[%s2633 + $0x108] sm:$0xff]
        %v6305 = vld [vmem:[%s2633 + $0x110] sm:$0xff]
        %v6306 = vld [vmem:[%s2633 + $0x120] sm:$0xff]
        %v6307 = vld [vmem:[%s2633 + $0x128] sm:$0xff]
        %v6308 = vld [vmem:[%s2633 + $0x138] sm:$0xff]
        %v6309 = vld [vmem:[%s2633 + $0x140] sm:$0xff]
        %v6310 = vld [vmem:[%s2633 + $0x150] sm:$0xff]
        %v6311 = vld [vmem:[%s2633 + $0x158] sm:$0xff]
        %v6312 = vld [vmem:[%s2633 + $0x168] sm:$0xff]
        %v6313 = vld [vmem:[%s2633 + $0x170] sm:$0xff]
        %s6314 = scalar_lea.vmem %s3, 384
        %v6315 = vld [vmem:[%s6314] sm:$0xff]
        %v6316 = vld [vmem:[%s6314 + $0x8] sm:$0xff]
        %v6317 = vld [vmem:[%s6314 + $0x10] sm:$0xff]
        %v6318 = vld [vmem:[%s6314 + $0x18] sm:$0xff]
        %v6319 = vld [vmem:[%s6314 + $0x20] sm:$0xff]
        %v6320 = vld [vmem:[%s6314 + $0x28] sm:$0xff]
        %v6321 = vld [vmem:[%s6314 + $0x30] sm:$0xff]
        %v6322 = vld [vmem:[%s6314 + $0x38] sm:$0xff]
        %v6324 = vsel %vm223, %v6282, 0
        %v6327 = vsel %vm223, %v6283, 0
        %v6330 = vsel %vm223, %v6284, 0
        %v6333 = vsel %vm223, %v6285, 0
        %v6336 = vsel %vm223, %v6286, 0
        %v6339 = vsel %vm223, %v6287, 0
        %v6342 = vsel %vm223, %v6288, 0
        %v6345 = vsel %vm223, %v6289, 0
        %v6348 = vsel %vm223, %v6290, 0
        %v6351 = vsel %vm223, %v6291, 0
        %v6354 = vsel %vm223, %v6292, 0
        %v6357 = vsel %vm223, %v6293, 0
        %v6360 = vsel %vm223, %v6294, 0
        %v6363 = vsel %vm223, %v6295, 0
        %v6366 = vsel %vm223, %v6296, 0
        %v6369 = vsel %vm223, %v6297, 0
        %v6372 = vsel %vm223, %v6298, 0
        %v6375 = vsel %vm223, %v6299, 0
        %v6378 = vsel %vm223, %v6300, 0
        %v6381 = vsel %vm223, %v6301, 0
        %v6384 = vsel %vm223, %v6302, 0
        %v6387 = vsel %vm223, %v6303, 0
        %v6390 = vsel %vm223, %v6304, 0
        %v6393 = vsel %vm223, %v6305, 0
        %v6396 = vsel %vm223, %v6306, 0
        %v6399 = vsel %vm223, %v6307, 0
        %v6402 = vsel %vm223, %v6308, 0
        %v6405 = vsel %vm223, %v6309, 0
        %v6408 = vsel %vm223, %v6310, 0
        %v6411 = vsel %vm223, %v6311, 0
        %v6414 = vsel %vm223, %v6312, 0
        %v6417 = vsel %vm223, %v6313, 0
        %6419 = vmatprep.subr.mxu0 0.0
        %6420 = vmatpush1.msra.mxu0 0.0
        %6421 = vmatprep.subr.mxu0 0.0
        %6422 = vmatpush1.msra.mxu0 0.0
        %6423 = vmatprep.subr.mxu0 0.0
        %6424 = vmatpush1.msra.mxu0 0.0
        %6425 = vmatprep.subr.mxu0 0.0
        %6426 = vmatpush1.msra.mxu0 0.0
        %6427 = vmatprep.subr.mxu0 0.0
        %6428 = vmatpush1.msra.mxu0 0.0
        %6429 = vmatprep.subr.mxu0 0.0
        %6430 = vmatpush1.msra.mxu0 0.0
        %6431 = vmatprep.subr.mxu0 0.0
        %6432 = vmatpush1.msra.mxu0 0.0
        %6433 = vmatprep.subr.mxu0 0.0
        %6434 = vmatpush1.msra.mxu0 0.0
        %6435 = vmatprep.subr.mxu0 0.0
        %6436 = vmatpush1.msra.mxu0 %v6322
        %6437 = vmatprep.subr.mxu0 0.0
        %6438 = vmatpush1.msra.mxu0 %v6321
        %6439 = vmatprep.subr.mxu0 0.0
        %6440 = vmatpush1.msra.mxu0 %v6320
        %6441 = vmatprep.subr.mxu0 0.0
        %6442 = vmatpush1.msra.mxu0 %v6319
        %6443 = vmatprep.subr.mxu0 0.0
        %6444 = vmatpush1.msra.mxu0 %v6318
        %6445 = vmatprep.subr.mxu0 0.0
        %6446 = vmatpush1.msra.mxu0 %v6317
        %6447 = vmatprep.subr.mxu0 0.0
        %6448 = vmatpush1.msra.mxu0 %v6316
        %6449 = vmatprep.subr.mxu0 0.0
        %6450 = vmatpush1.msra.mxu0 %v6315
        %6451 = vmatprep.subr.mxu0 0.0
        %6452 = vmatpush2.msra.mxu0 0.0
        %6453 = vmatprep.subr.mxu0 0.0
        %6454 = vmatpush2.msra.mxu0 0.0
        %6455 = vmatprep.subr.mxu0 0.0
        %6456 = vmatpush2.msra.mxu0 0.0
        %6457 = vmatprep.subr.mxu0 0.0
        %6458 = vmatpush2.msra.mxu0 0.0
        %6459 = vmatprep.subr.mxu0 0.0
        %6460 = vmatpush2.msra.mxu0 0.0
        %6461 = vmatprep.subr.mxu0 0.0
        %6462 = vmatpush2.msra.mxu0 0.0
        %6463 = vmatprep.subr.mxu0 0.0
        %6464 = vmatpush2.msra.mxu0 0.0
        %6465 = vmatprep.subr.mxu0 0.0
        %6466 = vmatpush2.msra.mxu0 0.0
        %6467 = vmatprep.subr.mxu0 0.0
        %6468 = vmatpush2.msra.mxu0 0.0
        %6469 = vmatprep.subr.mxu0 0.0
        %6470 = vmatpush2.msra.mxu0 0.0
        %6471 = vmatprep.subr.mxu0 0.0
        %6472 = vmatpush2.msra.mxu0 0.0
        %6473 = vmatprep.subr.mxu0 0.0
        %6474 = vmatpush2.msra.mxu0 0.0
        %6475 = vmatprep.subr.mxu0 0.0
        %6476 = vmatpush2.msra.mxu0 0.0
        %6477 = vmatprep.subr.mxu0 0.0
        %6478 = vmatpush2.msra.mxu0 0.0
        %6479 = vmatprep.subr.mxu0 0.0
        %6480 = vmatpush2.msra.mxu0 0.0
        %6481 = vmatprep.subr.mxu0 0.0
        %6482 = vmatpush2.msra.mxu0 0.0
        %6483 = vmatprep.mubr.f32.mxu0 0.0
        %6484 = vmatmul.mubr.f32.gmra.mxu0 %v6324
        %v6485 = vpop.f32.mrf.mxu0
        %v6486 = vadd.f32 0.0, %v6485
        %v6487 = vpop.f32.mrf.mxu0
        %6488 = vmatprep.mubr.f32.mxu0 0.0
        %6489 = vmatmul.mubr.f32.gmra.mxu0 %v6327
        %v6490 = vpop.f32.mrf.mxu0
        %v6491 = vadd.f32 0.0, %v6490
        %v6492 = vpop.f32.mrf.mxu0
        %6493 = vmatprep.mubr.f32.mxu0 0.0
        %6494 = vmatmul.mubr.f32.gmra.mxu0 %v6330
        %v6495 = vpop.f32.mrf.mxu0
        %v6496 = vadd.f32 0.0, %v6495
        %v6497 = vpop.f32.mrf.mxu0
        %6498 = vmatprep.mubr.f32.mxu0 0.0
        %6499 = vmatmul.mubr.f32.gmra.mxu0 %v6333
        %v6500 = vpop.f32.mrf.mxu0
        %v6501 = vadd.f32 0.0, %v6500
        %v6502 = vpop.f32.mrf.mxu0
        %6503 = vmatprep.mubr.f32.mxu0 0.0
        %6504 = vmatmul.mubr.f32.gmra.mxu0 %v6336
        %v6505 = vpop.f32.mrf.mxu0
        %v6506 = vadd.f32 0.0, %v6505
        %v6507 = vpop.f32.mrf.mxu0
        %6508 = vmatprep.mubr.f32.mxu0 0.0
        %6509 = vmatmul.mubr.f32.gmra.mxu0 %v6339
        %v6510 = vpop.f32.mrf.mxu0
        %v6511 = vadd.f32 0.0, %v6510
        %v6512 = vpop.f32.mrf.mxu0
        %6513 = vmatprep.mubr.f32.mxu0 0.0
        %6514 = vmatmul.mubr.f32.gmra.mxu0 %v6342
        %v6515 = vpop.f32.mrf.mxu0
        %v6516 = vadd.f32 0.0, %v6515
        %v6517 = vpop.f32.mrf.mxu0
        %6518 = vmatprep.mubr.f32.mxu0 0.0
        %6519 = vmatmul.mubr.f32.gmra.mxu0 %v6345
        %v6520 = vpop.f32.mrf.mxu0
        %v6521 = vadd.f32 0.0, %v6520
        %v6522 = vpop.f32.mrf.mxu0
        %6523 = vmatprep.mubr.f32.mxu0 0.0
        %6524 = vmatmul.mubr.f32.gmra.mxu0 %v6348
        %v6525 = vpop.f32.mrf.mxu0
        %v6526 = vadd.f32 0.0, %v6525
        %v6527 = vpop.f32.mrf.mxu0
        %6528 = vmatprep.mubr.f32.mxu0 0.0
        %6529 = vmatmul.mubr.f32.gmra.mxu0 %v6351
        %v6530 = vpop.f32.mrf.mxu0
        %v6531 = vadd.f32 0.0, %v6530
        %v6532 = vpop.f32.mrf.mxu0
        %6533 = vmatprep.mubr.f32.mxu0 0.0
        %6534 = vmatmul.mubr.f32.gmra.mxu0 %v6354
        %v6535 = vpop.f32.mrf.mxu0
        %v6536 = vadd.f32 0.0, %v6535
        %v6537 = vpop.f32.mrf.mxu0
        %6538 = vmatprep.mubr.f32.mxu0 0.0
        %6539 = vmatmul.mubr.f32.gmra.mxu0 %v6357
        %v6540 = vpop.f32.mrf.mxu0
        %v6541 = vadd.f32 0.0, %v6540
        %v6542 = vpop.f32.mrf.mxu0
        %6543 = vmatprep.mubr.f32.mxu0 0.0
        %6544 = vmatmul.mubr.f32.gmra.mxu0 %v6360
        %v6545 = vpop.f32.mrf.mxu0
        %v6546 = vadd.f32 0.0, %v6545
        %v6547 = vpop.f32.mrf.mxu0
        %6548 = vmatprep.mubr.f32.mxu0 0.0
        %6549 = vmatmul.mubr.f32.gmra.mxu0 %v6363
        %v6550 = vpop.f32.mrf.mxu0
        %v6551 = vadd.f32 0.0, %v6550
        %v6552 = vpop.f32.mrf.mxu0
        %6553 = vmatprep.mubr.f32.mxu0 0.0
        %6554 = vmatmul.mubr.f32.gmra.mxu0 %v6366
        %v6555 = vpop.f32.mrf.mxu0
        %v6556 = vadd.f32 0.0, %v6555
        %v6557 = vpop.f32.mrf.mxu0
        %6558 = vmatprep.mubr.f32.mxu0 0.0
        %6559 = vmatmul.mubr.f32.gmra.mxu0 %v6369
        %v6560 = vpop.f32.mrf.mxu0
        %v6561 = vadd.f32 0.0, %v6560
        %v6562 = vpop.f32.mrf.mxu0
        %6563 = vmatprep.mubr.f32.mxu0 0.0
        %6564 = vmatmul.mubr.f32.gmra.mxu0 %v6372
        %v6565 = vpop.f32.mrf.mxu0
        %v6566 = vadd.f32 0.0, %v6565
        %v6567 = vpop.f32.mrf.mxu0
        %6568 = vmatprep.mubr.f32.mxu0 0.0
        %6569 = vmatmul.mubr.f32.gmra.mxu0 %v6375
        %v6570 = vpop.f32.mrf.mxu0
        %v6571 = vadd.f32 0.0, %v6570
        %v6572 = vpop.f32.mrf.mxu0
        %6573 = vmatprep.mubr.f32.mxu0 0.0
        %6574 = vmatmul.mubr.f32.gmra.mxu0 %v6378
        %v6575 = vpop.f32.mrf.mxu0
        %v6576 = vadd.f32 0.0, %v6575
        %v6577 = vpop.f32.mrf.mxu0
        %6578 = vmatprep.mubr.f32.mxu0 0.0
        %6579 = vmatmul.mubr.f32.gmra.mxu0 %v6381
        %v6580 = vpop.f32.mrf.mxu0
        %v6581 = vadd.f32 0.0, %v6580
        %v6582 = vpop.f32.mrf.mxu0
        %6583 = vmatprep.mubr.f32.mxu0 0.0
        %6584 = vmatmul.mubr.f32.gmra.mxu0 %v6384
        %v6585 = vpop.f32.mrf.mxu0
        %v6586 = vadd.f32 0.0, %v6585
        %v6587 = vpop.f32.mrf.mxu0
        %6588 = vmatprep.mubr.f32.mxu0 0.0
        %6589 = vmatmul.mubr.f32.gmra.mxu0 %v6387
        %v6590 = vpop.f32.mrf.mxu0
        %v6591 = vadd.f32 0.0, %v6590
        %v6592 = vpop.f32.mrf.mxu0
        %6593 = vmatprep.mubr.f32.mxu0 0.0
        %6594 = vmatmul.mubr.f32.gmra.mxu0 %v6390
        %v6595 = vpop.f32.mrf.mxu0
        %v6596 = vadd.f32 0.0, %v6595
        %v6597 = vpop.f32.mrf.mxu0
        %6598 = vmatprep.mubr.f32.mxu0 0.0
        %6599 = vmatmul.mubr.f32.gmra.mxu0 %v6393
        %v6600 = vpop.f32.mrf.mxu0
        %v6601 = vadd.f32 0.0, %v6600
        %v6602 = vpop.f32.mrf.mxu0
        %6603 = vmatprep.mubr.f32.mxu0 0.0
        %6604 = vmatmul.mubr.f32.gmra.mxu0 %v6396
        %v6605 = vpop.f32.mrf.mxu0
        %v6606 = vadd.f32 0.0, %v6605
        %v6607 = vpop.f32.mrf.mxu0
        %6608 = vmatprep.mubr.f32.mxu0 0.0
        %6609 = vmatmul.mubr.f32.gmra.mxu0 %v6399
        %v6610 = vpop.f32.mrf.mxu0
        %v6611 = vadd.f32 0.0, %v6610
        %v6612 = vpop.f32.mrf.mxu0
        %6613 = vmatprep.mubr.f32.mxu0 0.0
        %6614 = vmatmul.mubr.f32.gmra.mxu0 %v6402
        %v6615 = vpop.f32.mrf.mxu0
        %v6616 = vadd.f32 0.0, %v6615
        %v6617 = vpop.f32.mrf.mxu0
        %6618 = vmatprep.mubr.f32.mxu0 0.0
        %6619 = vmatmul.mubr.f32.gmra.mxu0 %v6405
        %v6620 = vpop.f32.mrf.mxu0
        %v6621 = vadd.f32 0.0, %v6620
        %v6622 = vpop.f32.mrf.mxu0
        %6623 = vmatprep.mubr.f32.mxu0 0.0
        %6624 = vmatmul.mubr.f32.gmra.mxu0 %v6408
        %v6625 = vpop.f32.mrf.mxu0
        %v6626 = vadd.f32 0.0, %v6625
        %v6627 = vpop.f32.mrf.mxu0
        %6628 = vmatprep.mubr.f32.mxu0 0.0
        %6629 = vmatmul.mubr.f32.gmra.mxu0 %v6411
        %v6630 = vpop.f32.mrf.mxu0
        %v6631 = vadd.f32 0.0, %v6630
        %v6632 = vpop.f32.mrf.mxu0
        %6633 = vmatprep.mubr.f32.mxu0 0.0
        %6634 = vmatmul.mubr.f32.gmra.mxu0 %v6414
        %v6635 = vpop.f32.mrf.mxu0
        %v6636 = vadd.f32 0.0, %v6635
        %v6637 = vpop.f32.mrf.mxu0
        %6638 = vmatprep.mubr.f32.mxu0 0.0
        %6639 = vmatmul.mubr.f32.gmra.mxu0 %v6417
        %v6640 = vpop.f32.mrf.mxu0
        %v6641 = vadd.f32 0.0, %v6640
        %v6642 = vpop.f32.mrf.mxu0
        %6643 = vdwg.mxu0
        %v6644 = vadd.f32 %v6250, %v6486
        %v6645 = vadd.f32 %v6251, %v6491
        %v6646 = vadd.f32 %v6252, %v6496
        %v6647 = vadd.f32 %v6253, %v6501
        %v6648 = vadd.f32 %v6254, %v6506
        %v6649 = vadd.f32 %v6255, %v6511
        %v6650 = vadd.f32 %v6256, %v6516
        %v6651 = vadd.f32 %v6257, %v6521
        %v6652 = vadd.f32 %v6258, %v6526
        %v6653 = vadd.f32 %v6259, %v6531
        %v6654 = vadd.f32 %v6260, %v6536
        %v6655 = vadd.f32 %v6261, %v6541
        %v6656 = vadd.f32 %v6262, %v6546
        %v6657 = vadd.f32 %v6263, %v6551
        %v6658 = vadd.f32 %v6264, %v6556
        %v6659 = vadd.f32 %v6265, %v6561
        %v6660 = vadd.f32 %v6266, %v6566
        %v6661 = vadd.f32 %v6267, %v6571
        %v6662 = vadd.f32 %v6268, %v6576
        %v6663 = vadd.f32 %v6269, %v6581
        %v6664 = vadd.f32 %v6270, %v6586
        %v6665 = vadd.f32 %v6271, %v6591
        %v6666 = vadd.f32 %v6272, %v6596
        %v6667 = vadd.f32 %v6273, %v6601
        %v6668 = vadd.f32 %v6274, %v6606
        %v6669 = vadd.f32 %v6275, %v6611
        %v6670 = vadd.f32 %v6276, %v6616
        %v6671 = vadd.f32 %v6277, %v6621
        %v6672 = vadd.f32 %v6278, %v6626
        %v6673 = vadd.f32 %v6279, %v6631
        %v6674 = vadd.f32 %v6280, %v6636
        %v6675 = vadd.f32 %v6281, %v6641
        %v6676 = vld [vmem:[%s2633 + $0x1] sm:$0xff]
        %v6677 = vld [vmem:[%s2633 + $0x9] sm:$0xff]
        %v6678 = vld [vmem:[%s2633 + $0x19] sm:$0xff]
        %v6679 = vld [vmem:[%s2633 + $0x21] sm:$0xff]
        %v6680 = vld [vmem:[%s2633 + $0x31] sm:$0xff]
        %v6681 = vld [vmem:[%s2633 + $0x39] sm:$0xff]
        %v6682 = vld [vmem:[%s2633 + $0x49] sm:$0xff]
        %v6683 = vld [vmem:[%s2633 + $0x51] sm:$0xff]
        %v6684 = vld [vmem:[%s2633 + $0x61] sm:$0xff]
        %v6685 = vld [vmem:[%s2633 + $0x69] sm:$0xff]
        %v6686 = vld [vmem:[%s2633 + $0x79] sm:$0xff]
        %v6687 = vld [vmem:[%s2633 + $0x81] sm:$0xff]
        %v6688 = vld [vmem:[%s2633 + $0x91] sm:$0xff]
        %v6689 = vld [vmem:[%s2633 + $0x99] sm:$0xff]
        %v6690 = vld [vmem:[%s2633 + $0xa9] sm:$0xff]
        %v6691 = vld [vmem:[%s2633 + $0xb1] sm:$0xff]
        %v6692 = vld [vmem:[%s2633 + $0xc1] sm:$0xff]
        %v6693 = vld [vmem:[%s2633 + $0xc9] sm:$0xff]
        %v6694 = vld [vmem:[%s2633 + $0xd9] sm:$0xff]
        %v6695 = vld [vmem:[%s2633 + $0xe1] sm:$0xff]
        %v6696 = vld [vmem:[%s2633 + $0xf1] sm:$0xff]
        %v6697 = vld [vmem:[%s2633 + $0xf9] sm:$0xff]
        %v6698 = vld [vmem:[%s2633 + $0x109] sm:$0xff]
        %v6699 = vld [vmem:[%s2633 + $0x111] sm:$0xff]
        %v6700 = vld [vmem:[%s2633 + $0x121] sm:$0xff]
        %v6701 = vld [vmem:[%s2633 + $0x129] sm:$0xff]
        %v6702 = vld [vmem:[%s2633 + $0x139] sm:$0xff]
        %v6703 = vld [vmem:[%s2633 + $0x141] sm:$0xff]
        %v6704 = vld [vmem:[%s2633 + $0x151] sm:$0xff]
        %v6705 = vld [vmem:[%s2633 + $0x159] sm:$0xff]
        %v6706 = vld [vmem:[%s2633 + $0x169] sm:$0xff]
        %v6707 = vld [vmem:[%s2633 + $0x171] sm:$0xff]
        %s6708 = scalar_lea.vmem %s3, 448
        %v6709 = vld [vmem:[%s6708] sm:$0xff]
        %v6710 = vld [vmem:[%s6708 + $0x8] sm:$0xff]
        %v6711 = vld [vmem:[%s6708 + $0x10] sm:$0xff]
        %v6712 = vld [vmem:[%s6708 + $0x18] sm:$0xff]
        %v6713 = vld [vmem:[%s6708 + $0x20] sm:$0xff]
        %v6714 = vld [vmem:[%s6708 + $0x28] sm:$0xff]
        %v6715 = vld [vmem:[%s6708 + $0x30] sm:$0xff]
        %v6716 = vld [vmem:[%s6708 + $0x38] sm:$0xff]
        %v6718 = vsel %vm223, %v6676, 0
        %v6721 = vsel %vm223, %v6677, 0
        %v6724 = vsel %vm223, %v6678, 0
        %v6727 = vsel %vm223, %v6679, 0
        %v6730 = vsel %vm223, %v6680, 0
        %v6733 = vsel %vm223, %v6681, 0
        %v6736 = vsel %vm223, %v6682, 0
        %v6739 = vsel %vm223, %v6683, 0
        %v6742 = vsel %vm223, %v6684, 0
        %v6745 = vsel %vm223, %v6685, 0
        %v6748 = vsel %vm223, %v6686, 0
        %v6751 = vsel %vm223, %v6687, 0
        %v6754 = vsel %vm223, %v6688, 0
        %v6757 = vsel %vm223, %v6689, 0
        %v6760 = vsel %vm223, %v6690, 0
        %v6763 = vsel %vm223, %v6691, 0
        %v6766 = vsel %vm223, %v6692, 0
        %v6769 = vsel %vm223, %v6693, 0
        %v6772 = vsel %vm223, %v6694, 0
        %v6775 = vsel %vm223, %v6695, 0
        %v6778 = vsel %vm223, %v6696, 0
        %v6781 = vsel %vm223, %v6697, 0
        %v6784 = vsel %vm223, %v6698, 0
        %v6787 = vsel %vm223, %v6699, 0
        %v6790 = vsel %vm223, %v6700, 0
        %v6793 = vsel %vm223, %v6701, 0
        %v6796 = vsel %vm223, %v6702, 0
        %v6799 = vsel %vm223, %v6703, 0
        %v6802 = vsel %vm223, %v6704, 0
        %v6805 = vsel %vm223, %v6705, 0
        %v6808 = vsel %vm223, %v6706, 0
        %v6811 = vsel %vm223, %v6707, 0
        %6813 = vmatprep.subr.mxu0 0.0
        %6814 = vmatpush1.msra.mxu0 0.0
        %6815 = vmatprep.subr.mxu0 0.0
        %6816 = vmatpush1.msra.mxu0 0.0
        %6817 = vmatprep.subr.mxu0 0.0
        %6818 = vmatpush1.msra.mxu0 0.0
        %6819 = vmatprep.subr.mxu0 0.0
        %6820 = vmatpush1.msra.mxu0 0.0
        %6821 = vmatprep.subr.mxu0 0.0
        %6822 = vmatpush1.msra.mxu0 0.0
        %6823 = vmatprep.subr.mxu0 0.0
        %6824 = vmatpush1.msra.mxu0 0.0
        %6825 = vmatprep.subr.mxu0 0.0
        %6826 = vmatpush1.msra.mxu0 0.0
        %6827 = vmatprep.subr.mxu0 0.0
        %6828 = vmatpush1.msra.mxu0 0.0
        %6829 = vmatprep.subr.mxu0 0.0
        %6830 = vmatpush1.msra.mxu0 %v6716
        %6831 = vmatprep.subr.mxu0 0.0
        %6832 = vmatpush1.msra.mxu0 %v6715
        %6833 = vmatprep.subr.mxu0 0.0
        %6834 = vmatpush1.msra.mxu0 %v6714
        %6835 = vmatprep.subr.mxu0 0.0
        %6836 = vmatpush1.msra.mxu0 %v6713
        %6837 = vmatprep.subr.mxu0 0.0
        %6838 = vmatpush1.msra.mxu0 %v6712
        %6839 = vmatprep.subr.mxu0 0.0
        %6840 = vmatpush1.msra.mxu0 %v6711
        %6841 = vmatprep.subr.mxu0 0.0
        %6842 = vmatpush1.msra.mxu0 %v6710
        %6843 = vmatprep.subr.mxu0 0.0
        %6844 = vmatpush1.msra.mxu0 %v6709
        %6845 = vmatprep.subr.mxu0 0.0
        %6846 = vmatpush2.msra.mxu0 0.0
        %6847 = vmatprep.subr.mxu0 0.0
        %6848 = vmatpush2.msra.mxu0 0.0
        %6849 = vmatprep.subr.mxu0 0.0
        %6850 = vmatpush2.msra.mxu0 0.0
        %6851 = vmatprep.subr.mxu0 0.0
        %6852 = vmatpush2.msra.mxu0 0.0
        %6853 = vmatprep.subr.mxu0 0.0
        %6854 = vmatpush2.msra.mxu0 0.0
        %6855 = vmatprep.subr.mxu0 0.0
        %6856 = vmatpush2.msra.mxu0 0.0
        %6857 = vmatprep.subr.mxu0 0.0
        %6858 = vmatpush2.msra.mxu0 0.0
        %6859 = vmatprep.subr.mxu0 0.0
        %6860 = vmatpush2.msra.mxu0 0.0
        %6861 = vmatprep.subr.mxu0 0.0
        %6862 = vmatpush2.msra.mxu0 0.0
        %6863 = vmatprep.subr.mxu0 0.0
        %6864 = vmatpush2.msra.mxu0 0.0
        %6865 = vmatprep.subr.mxu0 0.0
        %6866 = vmatpush2.msra.mxu0 0.0
        %6867 = vmatprep.subr.mxu0 0.0
        %6868 = vmatpush2.msra.mxu0 0.0
        %6869 = vmatprep.subr.mxu0 0.0
        %6870 = vmatpush2.msra.mxu0 0.0
        %6871 = vmatprep.subr.mxu0 0.0
        %6872 = vmatpush2.msra.mxu0 0.0
        %6873 = vmatprep.subr.mxu0 0.0
        %6874 = vmatpush2.msra.mxu0 0.0
        %6875 = vmatprep.subr.mxu0 0.0
        %6876 = vmatpush2.msra.mxu0 0.0
        %6877 = vmatprep.mubr.f32.mxu0 0.0
        %6878 = vmatmul.mubr.f32.gmra.mxu0 %v6718
        %v6879 = vpop.f32.mrf.mxu0
        %v6880 = vadd.f32 0.0, %v6879
        %v6881 = vpop.f32.mrf.mxu0
        %6882 = vmatprep.mubr.f32.mxu0 0.0
        %6883 = vmatmul.mubr.f32.gmra.mxu0 %v6721
        %v6884 = vpop.f32.mrf.mxu0
        %v6885 = vadd.f32 0.0, %v6884
        %v6886 = vpop.f32.mrf.mxu0
        %6887 = vmatprep.mubr.f32.mxu0 0.0
        %6888 = vmatmul.mubr.f32.gmra.mxu0 %v6724
        %v6889 = vpop.f32.mrf.mxu0
        %v6890 = vadd.f32 0.0, %v6889
        %v6891 = vpop.f32.mrf.mxu0
        %6892 = vmatprep.mubr.f32.mxu0 0.0
        %6893 = vmatmul.mubr.f32.gmra.mxu0 %v6727
        %v6894 = vpop.f32.mrf.mxu0
        %v6895 = vadd.f32 0.0, %v6894
        %v6896 = vpop.f32.mrf.mxu0
        %6897 = vmatprep.mubr.f32.mxu0 0.0
        %6898 = vmatmul.mubr.f32.gmra.mxu0 %v6730
        %v6899 = vpop.f32.mrf.mxu0
        %v6900 = vadd.f32 0.0, %v6899
        %v6901 = vpop.f32.mrf.mxu0
        %6902 = vmatprep.mubr.f32.mxu0 0.0
        %6903 = vmatmul.mubr.f32.gmra.mxu0 %v6733
        %v6904 = vpop.f32.mrf.mxu0
        %v6905 = vadd.f32 0.0, %v6904
        %v6906 = vpop.f32.mrf.mxu0
        %6907 = vmatprep.mubr.f32.mxu0 0.0
        %6908 = vmatmul.mubr.f32.gmra.mxu0 %v6736
        %v6909 = vpop.f32.mrf.mxu0
        %v6910 = vadd.f32 0.0, %v6909
        %v6911 = vpop.f32.mrf.mxu0
        %6912 = vmatprep.mubr.f32.mxu0 0.0
        %6913 = vmatmul.mubr.f32.gmra.mxu0 %v6739
        %v6914 = vpop.f32.mrf.mxu0
        %v6915 = vadd.f32 0.0, %v6914
        %v6916 = vpop.f32.mrf.mxu0
        %6917 = vmatprep.mubr.f32.mxu0 0.0
        %6918 = vmatmul.mubr.f32.gmra.mxu0 %v6742
        %v6919 = vpop.f32.mrf.mxu0
        %v6920 = vadd.f32 0.0, %v6919
        %v6921 = vpop.f32.mrf.mxu0
        %6922 = vmatprep.mubr.f32.mxu0 0.0
        %6923 = vmatmul.mubr.f32.gmra.mxu0 %v6745
        %v6924 = vpop.f32.mrf.mxu0
        %v6925 = vadd.f32 0.0, %v6924
        %v6926 = vpop.f32.mrf.mxu0
        %6927 = vmatprep.mubr.f32.mxu0 0.0
        %6928 = vmatmul.mubr.f32.gmra.mxu0 %v6748
        %v6929 = vpop.f32.mrf.mxu0
        %v6930 = vadd.f32 0.0, %v6929
        %v6931 = vpop.f32.mrf.mxu0
        %6932 = vmatprep.mubr.f32.mxu0 0.0
        %6933 = vmatmul.mubr.f32.gmra.mxu0 %v6751
        %v6934 = vpop.f32.mrf.mxu0
        %v6935 = vadd.f32 0.0, %v6934
        %v6936 = vpop.f32.mrf.mxu0
        %6937 = vmatprep.mubr.f32.mxu0 0.0
        %6938 = vmatmul.mubr.f32.gmra.mxu0 %v6754
        %v6939 = vpop.f32.mrf.mxu0
        %v6940 = vadd.f32 0.0, %v6939
        %v6941 = vpop.f32.mrf.mxu0
        %6942 = vmatprep.mubr.f32.mxu0 0.0
        %6943 = vmatmul.mubr.f32.gmra.mxu0 %v6757
        %v6944 = vpop.f32.mrf.mxu0
        %v6945 = vadd.f32 0.0, %v6944
        %v6946 = vpop.f32.mrf.mxu0
        %6947 = vmatprep.mubr.f32.mxu0 0.0
        %6948 = vmatmul.mubr.f32.gmra.mxu0 %v6760
        %v6949 = vpop.f32.mrf.mxu0
        %v6950 = vadd.f32 0.0, %v6949
        %v6951 = vpop.f32.mrf.mxu0
        %6952 = vmatprep.mubr.f32.mxu0 0.0
        %6953 = vmatmul.mubr.f32.gmra.mxu0 %v6763
        %v6954 = vpop.f32.mrf.mxu0
        %v6955 = vadd.f32 0.0, %v6954
        %v6956 = vpop.f32.mrf.mxu0
        %6957 = vmatprep.mubr.f32.mxu0 0.0
        %6958 = vmatmul.mubr.f32.gmra.mxu0 %v6766
        %v6959 = vpop.f32.mrf.mxu0
        %v6960 = vadd.f32 0.0, %v6959
        %v6961 = vpop.f32.mrf.mxu0
        %6962 = vmatprep.mubr.f32.mxu0 0.0
        %6963 = vmatmul.mubr.f32.gmra.mxu0 %v6769
        %v6964 = vpop.f32.mrf.mxu0
        %v6965 = vadd.f32 0.0, %v6964
        %v6966 = vpop.f32.mrf.mxu0
        %6967 = vmatprep.mubr.f32.mxu0 0.0
        %6968 = vmatmul.mubr.f32.gmra.mxu0 %v6772
        %v6969 = vpop.f32.mrf.mxu0
        %v6970 = vadd.f32 0.0, %v6969
        %v6971 = vpop.f32.mrf.mxu0
        %6972 = vmatprep.mubr.f32.mxu0 0.0
        %6973 = vmatmul.mubr.f32.gmra.mxu0 %v6775
        %v6974 = vpop.f32.mrf.mxu0
        %v6975 = vadd.f32 0.0, %v6974
        %v6976 = vpop.f32.mrf.mxu0
        %6977 = vmatprep.mubr.f32.mxu0 0.0
        %6978 = vmatmul.mubr.f32.gmra.mxu0 %v6778
        %v6979 = vpop.f32.mrf.mxu0
        %v6980 = vadd.f32 0.0, %v6979
        %v6981 = vpop.f32.mrf.mxu0
        %6982 = vmatprep.mubr.f32.mxu0 0.0
        %6983 = vmatmul.mubr.f32.gmra.mxu0 %v6781
        %v6984 = vpop.f32.mrf.mxu0
        %v6985 = vadd.f32 0.0, %v6984
        %v6986 = vpop.f32.mrf.mxu0
        %6987 = vmatprep.mubr.f32.mxu0 0.0
        %6988 = vmatmul.mubr.f32.gmra.mxu0 %v6784
        %v6989 = vpop.f32.mrf.mxu0
        %v6990 = vadd.f32 0.0, %v6989
        %v6991 = vpop.f32.mrf.mxu0
        %6992 = vmatprep.mubr.f32.mxu0 0.0
        %6993 = vmatmul.mubr.f32.gmra.mxu0 %v6787
        %v6994 = vpop.f32.mrf.mxu0
        %v6995 = vadd.f32 0.0, %v6994
        %v6996 = vpop.f32.mrf.mxu0
        %6997 = vmatprep.mubr.f32.mxu0 0.0
        %6998 = vmatmul.mubr.f32.gmra.mxu0 %v6790
        %v6999 = vpop.f32.mrf.mxu0
        %v7000 = vadd.f32 0.0, %v6999
        %v7001 = vpop.f32.mrf.mxu0
        %7002 = vmatprep.mubr.f32.mxu0 0.0
        %7003 = vmatmul.mubr.f32.gmra.mxu0 %v6793
        %v7004 = vpop.f32.mrf.mxu0
        %v7005 = vadd.f32 0.0, %v7004
        %v7006 = vpop.f32.mrf.mxu0
        %7007 = vmatprep.mubr.f32.mxu0 0.0
        %7008 = vmatmul.mubr.f32.gmra.mxu0 %v6796
        %v7009 = vpop.f32.mrf.mxu0
        %v7010 = vadd.f32 0.0, %v7009
        %v7011 = vpop.f32.mrf.mxu0
        %7012 = vmatprep.mubr.f32.mxu0 0.0
        %7013 = vmatmul.mubr.f32.gmra.mxu0 %v6799
        %v7014 = vpop.f32.mrf.mxu0
        %v7015 = vadd.f32 0.0, %v7014
        %v7016 = vpop.f32.mrf.mxu0
        %7017 = vmatprep.mubr.f32.mxu0 0.0
        %7018 = vmatmul.mubr.f32.gmra.mxu0 %v6802
        %v7019 = vpop.f32.mrf.mxu0
        %v7020 = vadd.f32 0.0, %v7019
        %v7021 = vpop.f32.mrf.mxu0
        %7022 = vmatprep.mubr.f32.mxu0 0.0
        %7023 = vmatmul.mubr.f32.gmra.mxu0 %v6805
        %v7024 = vpop.f32.mrf.mxu0
        %v7025 = vadd.f32 0.0, %v7024
        %v7026 = vpop.f32.mrf.mxu0
        %7027 = vmatprep.mubr.f32.mxu0 0.0
        %7028 = vmatmul.mubr.f32.gmra.mxu0 %v6808
        %v7029 = vpop.f32.mrf.mxu0
        %v7030 = vadd.f32 0.0, %v7029
        %v7031 = vpop.f32.mrf.mxu0
        %7032 = vmatprep.mubr.f32.mxu0 0.0
        %7033 = vmatmul.mubr.f32.gmra.mxu0 %v6811
        %v7034 = vpop.f32.mrf.mxu0
        %v7035 = vadd.f32 0.0, %v7034
        %v7036 = vpop.f32.mrf.mxu0
        %7037 = vdwg.mxu0
        %v7038 = vadd.f32 %v6644, %v6880
        %v7039 = vadd.f32 %v6645, %v6885
        %v7040 = vadd.f32 %v6646, %v6890
        %v7041 = vadd.f32 %v6647, %v6895
        %v7042 = vadd.f32 %v6648, %v6900
        %v7043 = vadd.f32 %v6649, %v6905
        %v7044 = vadd.f32 %v6650, %v6910
        %v7045 = vadd.f32 %v6651, %v6915
        %v7046 = vadd.f32 %v6652, %v6920
        %v7047 = vadd.f32 %v6653, %v6925
        %v7048 = vadd.f32 %v6654, %v6930
        %v7049 = vadd.f32 %v6655, %v6935
        %v7050 = vadd.f32 %v6656, %v6940
        %v7051 = vadd.f32 %v6657, %v6945
        %v7052 = vadd.f32 %v6658, %v6950
        %v7053 = vadd.f32 %v6659, %v6955
        %v7054 = vadd.f32 %v6660, %v6960
        %v7055 = vadd.f32 %v6661, %v6965
        %v7056 = vadd.f32 %v6662, %v6970
        %v7057 = vadd.f32 %v6663, %v6975
        %v7058 = vadd.f32 %v6664, %v6980
        %v7059 = vadd.f32 %v6665, %v6985
        %v7060 = vadd.f32 %v6666, %v6990
        %v7061 = vadd.f32 %v6667, %v6995
        %v7062 = vadd.f32 %v6668, %v7000
        %v7063 = vadd.f32 %v6669, %v7005
        %v7064 = vadd.f32 %v6670, %v7010
        %v7065 = vadd.f32 %v6671, %v7015
        %v7066 = vadd.f32 %v6672, %v7020
        %v7067 = vadd.f32 %v6673, %v7025
        %v7068 = vadd.f32 %v6674, %v7030
        %v7069 = vadd.f32 %v6675, %v7035
        %v7070 = vld [vmem:[%s2633 + $0x2] sm:$0xff]
        %v7071 = vld [vmem:[%s2633 + $0xa] sm:$0xff]
        %v7072 = vld [vmem:[%s2633 + $0x1a] sm:$0xff]
        %v7073 = vld [vmem:[%s2633 + $0x22] sm:$0xff]
        %v7074 = vld [vmem:[%s2633 + $0x32] sm:$0xff]
        %v7075 = vld [vmem:[%s2633 + $0x3a] sm:$0xff]
        %v7076 = vld [vmem:[%s2633 + $0x4a] sm:$0xff]
        %v7077 = vld [vmem:[%s2633 + $0x52] sm:$0xff]
        %v7078 = vld [vmem:[%s2633 + $0x62] sm:$0xff]
        %v7079 = vld [vmem:[%s2633 + $0x6a] sm:$0xff]
        %v7080 = vld [vmem:[%s2633 + $0x7a] sm:$0xff]
        %v7081 = vld [vmem:[%s2633 + $0x82] sm:$0xff]
        %v7082 = vld [vmem:[%s2633 + $0x92] sm:$0xff]
        %v7083 = vld [vmem:[%s2633 + $0x9a] sm:$0xff]
        %v7084 = vld [vmem:[%s2633 + $0xaa] sm:$0xff]
        %v7085 = vld [vmem:[%s2633 + $0xb2] sm:$0xff]
        %v7086 = vld [vmem:[%s2633 + $0xc2] sm:$0xff]
        %v7087 = vld [vmem:[%s2633 + $0xca] sm:$0xff]
        %v7088 = vld [vmem:[%s2633 + $0xda] sm:$0xff]
        %v7089 = vld [vmem:[%s2633 + $0xe2] sm:$0xff]
        %v7090 = vld [vmem:[%s2633 + $0xf2] sm:$0xff]
        %v7091 = vld [vmem:[%s2633 + $0xfa] sm:$0xff]
        %v7092 = vld [vmem:[%s2633 + $0x10a] sm:$0xff]
        %v7093 = vld [vmem:[%s2633 + $0x112] sm:$0xff]
        %v7094 = vld [vmem:[%s2633 + $0x122] sm:$0xff]
        %v7095 = vld [vmem:[%s2633 + $0x12a] sm:$0xff]
        %v7096 = vld [vmem:[%s2633 + $0x13a] sm:$0xff]
        %v7097 = vld [vmem:[%s2633 + $0x142] sm:$0xff]
        %v7098 = vld [vmem:[%s2633 + $0x152] sm:$0xff]
        %v7099 = vld [vmem:[%s2633 + $0x15a] sm:$0xff]
        %v7100 = vld [vmem:[%s2633 + $0x16a] sm:$0xff]
        %v7101 = vld [vmem:[%s2633 + $0x172] sm:$0xff]
        %s7102 = scalar_lea.vmem %s3, 512
        %v7103 = vld [vmem:[%s7102] sm:$0xff]
        %v7104 = vld [vmem:[%s7102 + $0x8] sm:$0xff]
        %v7105 = vld [vmem:[%s7102 + $0x10] sm:$0xff]
        %v7106 = vld [vmem:[%s7102 + $0x18] sm:$0xff]
        %v7107 = vld [vmem:[%s7102 + $0x20] sm:$0xff]
        %v7108 = vld [vmem:[%s7102 + $0x28] sm:$0xff]
        %v7109 = vld [vmem:[%s7102 + $0x30] sm:$0xff]
        %v7110 = vld [vmem:[%s7102 + $0x38] sm:$0xff]
        %v7112 = vsel %vm223, %v7070, 0
        %v7115 = vsel %vm223, %v7071, 0
        %v7118 = vsel %vm223, %v7072, 0
        %v7121 = vsel %vm223, %v7073, 0
        %v7124 = vsel %vm223, %v7074, 0
        %v7127 = vsel %vm223, %v7075, 0
        %v7130 = vsel %vm223, %v7076, 0
        %v7133 = vsel %vm223, %v7077, 0
        %v7136 = vsel %vm223, %v7078, 0
        %v7139 = vsel %vm223, %v7079, 0
        %v7142 = vsel %vm223, %v7080, 0
        %v7145 = vsel %vm223, %v7081, 0
        %v7148 = vsel %vm223, %v7082, 0
        %v7151 = vsel %vm223, %v7083, 0
        %v7154 = vsel %vm223, %v7084, 0
        %v7157 = vsel %vm223, %v7085, 0
        %v7160 = vsel %vm223, %v7086, 0
        %v7163 = vsel %vm223, %v7087, 0
        %v7166 = vsel %vm223, %v7088, 0
        %v7169 = vsel %vm223, %v7089, 0
        %v7172 = vsel %vm223, %v7090, 0
        %v7175 = vsel %vm223, %v7091, 0
        %v7178 = vsel %vm223, %v7092, 0
        %v7181 = vsel %vm223, %v7093, 0
        %v7184 = vsel %vm223, %v7094, 0
        %v7187 = vsel %vm223, %v7095, 0
        %v7190 = vsel %vm223, %v7096, 0
        %v7193 = vsel %vm223, %v7097, 0
        %v7196 = vsel %vm223, %v7098, 0
        %v7199 = vsel %vm223, %v7099, 0
        %v7202 = vsel %vm223, %v7100, 0
        %v7205 = vsel %vm223, %v7101, 0
        %7207 = vmatprep.subr.mxu0 0.0
        %7208 = vmatpush1.msra.mxu0 0.0
        %7209 = vmatprep.subr.mxu0 0.0
        %7210 = vmatpush1.msra.mxu0 0.0
        %7211 = vmatprep.subr.mxu0 0.0
        %7212 = vmatpush1.msra.mxu0 0.0
        %7213 = vmatprep.subr.mxu0 0.0
        %7214 = vmatpush1.msra.mxu0 0.0
        %7215 = vmatprep.subr.mxu0 0.0
        %7216 = vmatpush1.msra.mxu0 0.0
        %7217 = vmatprep.subr.mxu0 0.0
        %7218 = vmatpush1.msra.mxu0 0.0
        %7219 = vmatprep.subr.mxu0 0.0
        %7220 = vmatpush1.msra.mxu0 0.0
        %7221 = vmatprep.subr.mxu0 0.0
        %7222 = vmatpush1.msra.mxu0 0.0
        %7223 = vmatprep.subr.mxu0 0.0
        %7224 = vmatpush1.msra.mxu0 %v7110
        %7225 = vmatprep.subr.mxu0 0.0
        %7226 = vmatpush1.msra.mxu0 %v7109
        %7227 = vmatprep.subr.mxu0 0.0
        %7228 = vmatpush1.msra.mxu0 %v7108
        %7229 = vmatprep.subr.mxu0 0.0
        %7230 = vmatpush1.msra.mxu0 %v7107
        %7231 = vmatprep.subr.mxu0 0.0
        %7232 = vmatpush1.msra.mxu0 %v7106
        %7233 = vmatprep.subr.mxu0 0.0
        %7234 = vmatpush1.msra.mxu0 %v7105
        %7235 = vmatprep.subr.mxu0 0.0
        %7236 = vmatpush1.msra.mxu0 %v7104
        %7237 = vmatprep.subr.mxu0 0.0
        %7238 = vmatpush1.msra.mxu0 %v7103
        %7239 = vmatprep.subr.mxu0 0.0
        %7240 = vmatpush2.msra.mxu0 0.0
        %7241 = vmatprep.subr.mxu0 0.0
        %7242 = vmatpush2.msra.mxu0 0.0
        %7243 = vmatprep.subr.mxu0 0.0
        %7244 = vmatpush2.msra.mxu0 0.0
        %7245 = vmatprep.subr.mxu0 0.0
        %7246 = vmatpush2.msra.mxu0 0.0
        %7247 = vmatprep.subr.mxu0 0.0
        %7248 = vmatpush2.msra.mxu0 0.0
        %7249 = vmatprep.subr.mxu0 0.0
        %7250 = vmatpush2.msra.mxu0 0.0
        %7251 = vmatprep.subr.mxu0 0.0
        %7252 = vmatpush2.msra.mxu0 0.0
        %7253 = vmatprep.subr.mxu0 0.0
        %7254 = vmatpush2.msra.mxu0 0.0
        %7255 = vmatprep.subr.mxu0 0.0
        %7256 = vmatpush2.msra.mxu0 0.0
        %7257 = vmatprep.subr.mxu0 0.0
        %7258 = vmatpush2.msra.mxu0 0.0
        %7259 = vmatprep.subr.mxu0 0.0
        %7260 = vmatpush2.msra.mxu0 0.0
        %7261 = vmatprep.subr.mxu0 0.0
        %7262 = vmatpush2.msra.mxu0 0.0
        %7263 = vmatprep.subr.mxu0 0.0
        %7264 = vmatpush2.msra.mxu0 0.0
        %7265 = vmatprep.subr.mxu0 0.0
        %7266 = vmatpush2.msra.mxu0 0.0
        %7267 = vmatprep.subr.mxu0 0.0
        %7268 = vmatpush2.msra.mxu0 0.0
        %7269 = vmatprep.subr.mxu0 0.0
        %7270 = vmatpush2.msra.mxu0 0.0
        %7271 = vmatprep.mubr.f32.mxu0 0.0
        %7272 = vmatmul.mubr.f32.gmra.mxu0 %v7112
        %v7273 = vpop.f32.mrf.mxu0
        %v7274 = vadd.f32 0.0, %v7273
        %v7275 = vpop.f32.mrf.mxu0
        %7276 = vmatprep.mubr.f32.mxu0 0.0
        %7277 = vmatmul.mubr.f32.gmra.mxu0 %v7115
        %v7278 = vpop.f32.mrf.mxu0
        %v7279 = vadd.f32 0.0, %v7278
        %v7280 = vpop.f32.mrf.mxu0
        %7281 = vmatprep.mubr.f32.mxu0 0.0
        %7282 = vmatmul.mubr.f32.gmra.mxu0 %v7118
        %v7283 = vpop.f32.mrf.mxu0
        %v7284 = vadd.f32 0.0, %v7283
        %v7285 = vpop.f32.mrf.mxu0
        %7286 = vmatprep.mubr.f32.mxu0 0.0
        %7287 = vmatmul.mubr.f32.gmra.mxu0 %v7121
        %v7288 = vpop.f32.mrf.mxu0
        %v7289 = vadd.f32 0.0, %v7288
        %v7290 = vpop.f32.mrf.mxu0
        %7291 = vmatprep.mubr.f32.mxu0 0.0
        %7292 = vmatmul.mubr.f32.gmra.mxu0 %v7124
        %v7293 = vpop.f32.mrf.mxu0
        %v7294 = vadd.f32 0.0, %v7293
        %v7295 = vpop.f32.mrf.mxu0
        %7296 = vmatprep.mubr.f32.mxu0 0.0
        %7297 = vmatmul.mubr.f32.gmra.mxu0 %v7127
        %v7298 = vpop.f32.mrf.mxu0
        %v7299 = vadd.f32 0.0, %v7298
        %v7300 = vpop.f32.mrf.mxu0
        %7301 = vmatprep.mubr.f32.mxu0 0.0
        %7302 = vmatmul.mubr.f32.gmra.mxu0 %v7130
        %v7303 = vpop.f32.mrf.mxu0
        %v7304 = vadd.f32 0.0, %v7303
        %v7305 = vpop.f32.mrf.mxu0
        %7306 = vmatprep.mubr.f32.mxu0 0.0
        %7307 = vmatmul.mubr.f32.gmra.mxu0 %v7133
        %v7308 = vpop.f32.mrf.mxu0
        %v7309 = vadd.f32 0.0, %v7308
        %v7310 = vpop.f32.mrf.mxu0
        %7311 = vmatprep.mubr.f32.mxu0 0.0
        %7312 = vmatmul.mubr.f32.gmra.mxu0 %v7136
        %v7313 = vpop.f32.mrf.mxu0
        %v7314 = vadd.f32 0.0, %v7313
        %v7315 = vpop.f32.mrf.mxu0
        %7316 = vmatprep.mubr.f32.mxu0 0.0
        %7317 = vmatmul.mubr.f32.gmra.mxu0 %v7139
        %v7318 = vpop.f32.mrf.mxu0
        %v7319 = vadd.f32 0.0, %v7318
        %v7320 = vpop.f32.mrf.mxu0
        %7321 = vmatprep.mubr.f32.mxu0 0.0
        %7322 = vmatmul.mubr.f32.gmra.mxu0 %v7142
        %v7323 = vpop.f32.mrf.mxu0
        %v7324 = vadd.f32 0.0, %v7323
        %v7325 = vpop.f32.mrf.mxu0
        %7326 = vmatprep.mubr.f32.mxu0 0.0
        %7327 = vmatmul.mubr.f32.gmra.mxu0 %v7145
        %v7328 = vpop.f32.mrf.mxu0
        %v7329 = vadd.f32 0.0, %v7328
        %v7330 = vpop.f32.mrf.mxu0
        %7331 = vmatprep.mubr.f32.mxu0 0.0
        %7332 = vmatmul.mubr.f32.gmra.mxu0 %v7148
        %v7333 = vpop.f32.mrf.mxu0
        %v7334 = vadd.f32 0.0, %v7333
        %v7335 = vpop.f32.mrf.mxu0
        %7336 = vmatprep.mubr.f32.mxu0 0.0
        %7337 = vmatmul.mubr.f32.gmra.mxu0 %v7151
        %v7338 = vpop.f32.mrf.mxu0
        %v7339 = vadd.f32 0.0, %v7338
        %v7340 = vpop.f32.mrf.mxu0
        %7341 = vmatprep.mubr.f32.mxu0 0.0
        %7342 = vmatmul.mubr.f32.gmra.mxu0 %v7154
        %v7343 = vpop.f32.mrf.mxu0
        %v7344 = vadd.f32 0.0, %v7343
        %v7345 = vpop.f32.mrf.mxu0
        %7346 = vmatprep.mubr.f32.mxu0 0.0
        %7347 = vmatmul.mubr.f32.gmra.mxu0 %v7157
        %v7348 = vpop.f32.mrf.mxu0
        %v7349 = vadd.f32 0.0, %v7348
        %v7350 = vpop.f32.mrf.mxu0
        %7351 = vmatprep.mubr.f32.mxu0 0.0
        %7352 = vmatmul.mubr.f32.gmra.mxu0 %v7160
        %v7353 = vpop.f32.mrf.mxu0
        %v7354 = vadd.f32 0.0, %v7353
        %v7355 = vpop.f32.mrf.mxu0
        %7356 = vmatprep.mubr.f32.mxu0 0.0
        %7357 = vmatmul.mubr.f32.gmra.mxu0 %v7163
        %v7358 = vpop.f32.mrf.mxu0
        %v7359 = vadd.f32 0.0, %v7358
        %v7360 = vpop.f32.mrf.mxu0
        %7361 = vmatprep.mubr.f32.mxu0 0.0
        %7362 = vmatmul.mubr.f32.gmra.mxu0 %v7166
        %v7363 = vpop.f32.mrf.mxu0
        %v7364 = vadd.f32 0.0, %v7363
        %v7365 = vpop.f32.mrf.mxu0
        %7366 = vmatprep.mubr.f32.mxu0 0.0
        %7367 = vmatmul.mubr.f32.gmra.mxu0 %v7169
        %v7368 = vpop.f32.mrf.mxu0
        %v7369 = vadd.f32 0.0, %v7368
        %v7370 = vpop.f32.mrf.mxu0
        %7371 = vmatprep.mubr.f32.mxu0 0.0
        %7372 = vmatmul.mubr.f32.gmra.mxu0 %v7172
        %v7373 = vpop.f32.mrf.mxu0
        %v7374 = vadd.f32 0.0, %v7373
        %v7375 = vpop.f32.mrf.mxu0
        %7376 = vmatprep.mubr.f32.mxu0 0.0
        %7377 = vmatmul.mubr.f32.gmra.mxu0 %v7175
        %v7378 = vpop.f32.mrf.mxu0
        %v7379 = vadd.f32 0.0, %v7378
        %v7380 = vpop.f32.mrf.mxu0
        %7381 = vmatprep.mubr.f32.mxu0 0.0
        %7382 = vmatmul.mubr.f32.gmra.mxu0 %v7178
        %v7383 = vpop.f32.mrf.mxu0
        %v7384 = vadd.f32 0.0, %v7383
        %v7385 = vpop.f32.mrf.mxu0
        %7386 = vmatprep.mubr.f32.mxu0 0.0
        %7387 = vmatmul.mubr.f32.gmra.mxu0 %v7181
        %v7388 = vpop.f32.mrf.mxu0
        %v7389 = vadd.f32 0.0, %v7388
        %v7390 = vpop.f32.mrf.mxu0
        %7391 = vmatprep.mubr.f32.mxu0 0.0
        %7392 = vmatmul.mubr.f32.gmra.mxu0 %v7184
        %v7393 = vpop.f32.mrf.mxu0
        %v7394 = vadd.f32 0.0, %v7393
        %v7395 = vpop.f32.mrf.mxu0
        %7396 = vmatprep.mubr.f32.mxu0 0.0
        %7397 = vmatmul.mubr.f32.gmra.mxu0 %v7187
        %v7398 = vpop.f32.mrf.mxu0
        %v7399 = vadd.f32 0.0, %v7398
        %v7400 = vpop.f32.mrf.mxu0
        %7401 = vmatprep.mubr.f32.mxu0 0.0
        %7402 = vmatmul.mubr.f32.gmra.mxu0 %v7190
        %v7403 = vpop.f32.mrf.mxu0
        %v7404 = vadd.f32 0.0, %v7403
        %v7405 = vpop.f32.mrf.mxu0
        %7406 = vmatprep.mubr.f32.mxu0 0.0
        %7407 = vmatmul.mubr.f32.gmra.mxu0 %v7193
        %v7408 = vpop.f32.mrf.mxu0
        %v7409 = vadd.f32 0.0, %v7408
        %v7410 = vpop.f32.mrf.mxu0
        %7411 = vmatprep.mubr.f32.mxu0 0.0
        %7412 = vmatmul.mubr.f32.gmra.mxu0 %v7196
        %v7413 = vpop.f32.mrf.mxu0
        %v7414 = vadd.f32 0.0, %v7413
        %v7415 = vpop.f32.mrf.mxu0
        %7416 = vmatprep.mubr.f32.mxu0 0.0
        %7417 = vmatmul.mubr.f32.gmra.mxu0 %v7199
        %v7418 = vpop.f32.mrf.mxu0
        %v7419 = vadd.f32 0.0, %v7418
        %v7420 = vpop.f32.mrf.mxu0
        %7421 = vmatprep.mubr.f32.mxu0 0.0
        %7422 = vmatmul.mubr.f32.gmra.mxu0 %v7202
        %v7423 = vpop.f32.mrf.mxu0
        %v7424 = vadd.f32 0.0, %v7423
        %v7425 = vpop.f32.mrf.mxu0
        %7426 = vmatprep.mubr.f32.mxu0 0.0
        %7427 = vmatmul.mubr.f32.gmra.mxu0 %v7205
        %v7428 = vpop.f32.mrf.mxu0
        %v7429 = vadd.f32 0.0, %v7428
        %v7430 = vpop.f32.mrf.mxu0
        %7431 = vdwg.mxu0
        %v7432 = vadd.f32 %v7038, %v7274
        %v7433 = vadd.f32 %v7039, %v7279
        %v7434 = vadd.f32 %v7040, %v7284
        %v7435 = vadd.f32 %v7041, %v7289
        %v7436 = vadd.f32 %v7042, %v7294
        %v7437 = vadd.f32 %v7043, %v7299
        %v7438 = vadd.f32 %v7044, %v7304
        %v7439 = vadd.f32 %v7045, %v7309
        %v7440 = vadd.f32 %v7046, %v7314
        %v7441 = vadd.f32 %v7047, %v7319
        %v7442 = vadd.f32 %v7048, %v7324
        %v7443 = vadd.f32 %v7049, %v7329
        %v7444 = vadd.f32 %v7050, %v7334
        %v7445 = vadd.f32 %v7051, %v7339
        %v7446 = vadd.f32 %v7052, %v7344
        %v7447 = vadd.f32 %v7053, %v7349
        %v7448 = vadd.f32 %v7054, %v7354
        %v7449 = vadd.f32 %v7055, %v7359
        %v7450 = vadd.f32 %v7056, %v7364
        %v7451 = vadd.f32 %v7057, %v7369
        %v7452 = vadd.f32 %v7058, %v7374
        %v7453 = vadd.f32 %v7059, %v7379
        %v7454 = vadd.f32 %v7060, %v7384
        %v7455 = vadd.f32 %v7061, %v7389
        %v7456 = vadd.f32 %v7062, %v7394
        %v7457 = vadd.f32 %v7063, %v7399
        %v7458 = vadd.f32 %v7064, %v7404
        %v7459 = vadd.f32 %v7065, %v7409
        %v7460 = vadd.f32 %v7066, %v7414
        %v7461 = vadd.f32 %v7067, %v7419
        %v7462 = vadd.f32 %v7068, %v7424
        %v7463 = vadd.f32 %v7069, %v7429
        %v7464 = vld [vmem:[%s4] sm:$0x1]
        %v7466 = vlaneseq
        %v7467 = vshrl.u32 %v7466, 7
        %v7468 = vsub.s32 0, %v7467
        %v7469 = vrot.slane %v7464, %v7468
        %v7471 = vadd.f32 %v7432, %v7469
        %v7472 = vadd.f32 %v7433, %v7469
        %v7473 = vadd.f32 %v7434, %v7469
        %v7474 = vadd.f32 %v7435, %v7469
        %v7475 = vadd.f32 %v7436, %v7469
        %v7476 = vadd.f32 %v7437, %v7469
        %v7477 = vadd.f32 %v7438, %v7469
        %v7478 = vadd.f32 %v7439, %v7469
        %v7479 = vadd.f32 %v7440, %v7469
        %v7480 = vadd.f32 %v7441, %v7469
        %v7481 = vadd.f32 %v7442, %v7469
        %v7482 = vadd.f32 %v7443, %v7469
        %v7483 = vadd.f32 %v7444, %v7469
        %v7484 = vadd.f32 %v7445, %v7469
        %v7485 = vadd.f32 %v7446, %v7469
        %v7486 = vadd.f32 %v7447, %v7469
        %v7487 = vadd.f32 %v7448, %v7469
        %v7488 = vadd.f32 %v7449, %v7469
        %v7489 = vadd.f32 %v7450, %v7469
        %v7490 = vadd.f32 %v7451, %v7469
        %v7491 = vadd.f32 %v7452, %v7469
        %v7492 = vadd.f32 %v7453, %v7469
        %v7493 = vadd.f32 %v7454, %v7469
        %v7494 = vadd.f32 %v7455, %v7469
        %v7495 = vadd.f32 %v7456, %v7469
        %v7496 = vadd.f32 %v7457, %v7469
        %v7497 = vadd.f32 %v7458, %v7469
        %v7498 = vadd.f32 %v7459, %v7469
        %v7499 = vadd.f32 %v7460, %v7469
        %v7500 = vadd.f32 %v7461, %v7469
        %v7501 = vadd.f32 %v7462, %v7469
        %v7502 = vadd.f32 %v7463, %v7469
        %v7503 = vld [vmem:[%s222] sm:$0xff]
        %v7504 = vld [vmem:[%s222 + $0x8] sm:$0xff]
        %v7505 = vld [vmem:[%s222 + $0x10] sm:$0xff]
        %v7506 = vld [vmem:[%s222 + $0x18] sm:$0xff]
        %v7507 = vld [vmem:[%s222 + $0x20] sm:$0xff]
        %v7508 = vld [vmem:[%s222 + $0x28] sm:$0xff]
        %v7509 = vld [vmem:[%s222 + $0x30] sm:$0xff]
        %v7510 = vld [vmem:[%s222 + $0x38] sm:$0xff]
        %v7511 = vld [vmem:[%s222 + $0x40] sm:$0xff]
        %v7512 = vld [vmem:[%s222 + $0x48] sm:$0xff]
        %v7513 = vld [vmem:[%s222 + $0x50] sm:$0xff]
        %v7514 = vld [vmem:[%s222 + $0x58] sm:$0xff]
        %v7515 = vld [vmem:[%s222 + $0x60] sm:$0xff]
        %v7516 = vld [vmem:[%s222 + $0x68] sm:$0xff]
        %v7517 = vld [vmem:[%s222 + $0x70] sm:$0xff]
        %v7518 = vld [vmem:[%s222 + $0x78] sm:$0xff]
        %v7519 = vld [vmem:[%s222 + $0x80] sm:$0xff]
        %v7520 = vld [vmem:[%s222 + $0x88] sm:$0xff]
        %v7521 = vld [vmem:[%s222 + $0x90] sm:$0xff]
        %v7522 = vld [vmem:[%s222 + $0x98] sm:$0xff]
        %v7523 = vld [vmem:[%s222 + $0xa0] sm:$0xff]
        %v7524 = vld [vmem:[%s222 + $0xa8] sm:$0xff]
        %v7525 = vld [vmem:[%s222 + $0xb0] sm:$0xff]
        %v7526 = vld [vmem:[%s222 + $0xb8] sm:$0xff]
        %v7527 = vld [vmem:[%s222 + $0xc0] sm:$0xff]
        %v7528 = vld [vmem:[%s222 + $0xc8] sm:$0xff]
        %v7529 = vld [vmem:[%s222 + $0xd0] sm:$0xff]
        %v7530 = vld [vmem:[%s222 + $0xd8] sm:$0xff]
        %v7531 = vld [vmem:[%s222 + $0xe0] sm:$0xff]
        %v7532 = vld [vmem:[%s222 + $0xe8] sm:$0xff]
        %v7533 = vld [vmem:[%s222 + $0xf0] sm:$0xff]
        %v7534 = vld [vmem:[%s222 + $0xf8] sm:$0xff]
        %v7535 = vadd.f32 %v7503, %v7471
        %v7536 = vadd.f32 %v7504, %v7472
        %v7537 = vadd.f32 %v7505, %v7473
        %v7538 = vadd.f32 %v7506, %v7474
        %v7539 = vadd.f32 %v7507, %v7475
        %v7540 = vadd.f32 %v7508, %v7476
        %v7541 = vadd.f32 %v7509, %v7477
        %v7542 = vadd.f32 %v7510, %v7478
        %v7543 = vadd.f32 %v7511, %v7479
        %v7544 = vadd.f32 %v7512, %v7480
        %v7545 = vadd.f32 %v7513, %v7481
        %v7546 = vadd.f32 %v7514, %v7482
        %v7547 = vadd.f32 %v7515, %v7483
        %v7548 = vadd.f32 %v7516, %v7484
        %v7549 = vadd.f32 %v7517, %v7485
        %v7550 = vadd.f32 %v7518, %v7486
        %v7551 = vadd.f32 %v7519, %v7487
        %v7552 = vadd.f32 %v7520, %v7488
        %v7553 = vadd.f32 %v7521, %v7489
        %v7554 = vadd.f32 %v7522, %v7490
        %v7555 = vadd.f32 %v7523, %v7491
        %v7556 = vadd.f32 %v7524, %v7492
        %v7557 = vadd.f32 %v7525, %v7493
        %v7558 = vadd.f32 %v7526, %v7494
        %v7559 = vadd.f32 %v7527, %v7495
        %v7560 = vadd.f32 %v7528, %v7496
        %v7561 = vadd.f32 %v7529, %v7497
        %v7562 = vadd.f32 %v7530, %v7498
        %v7563 = vadd.f32 %v7531, %v7499
        %v7564 = vadd.f32 %v7532, %v7500
        %v7565 = vadd.f32 %v7533, %v7501
        %v7566 = vadd.f32 %v7534, %v7502
        %7567 = vst.msk [vmem:[%s217] sm:$0xff] %vm223, %v7535
        %7568 = vst.msk [vmem:[%s217 + $0x8] sm:$0xff] %vm223, %v7536
        %7569 = vst.msk [vmem:[%s217 + $0x10] sm:$0xff] %vm223, %v7537
        %7570 = vst.msk [vmem:[%s217 + $0x18] sm:$0xff] %vm223, %v7538
        %7571 = vst.msk [vmem:[%s217 + $0x20] sm:$0xff] %vm223, %v7539
        %7572 = vst.msk [vmem:[%s217 + $0x28] sm:$0xff] %vm223, %v7540
        %7573 = vst.msk [vmem:[%s217 + $0x30] sm:$0xff] %vm223, %v7541
        %7574 = vst.msk [vmem:[%s217 + $0x38] sm:$0xff] %vm223, %v7542
        %7575 = vst.msk [vmem:[%s217 + $0x40] sm:$0xff] %vm223, %v7543
        %7576 = vst.msk [vmem:[%s217 + $0x48] sm:$0xff] %vm223, %v7544
        %7577 = vst.msk [vmem:[%s217 + $0x50] sm:$0xff] %vm223, %v7545
        %7578 = vst.msk [vmem:[%s217 + $0x58] sm:$0xff] %vm223, %v7546
        %7579 = vst.msk [vmem:[%s217 + $0x60] sm:$0xff] %vm223, %v7547
        %7580 = vst.msk [vmem:[%s217 + $0x68] sm:$0xff] %vm223, %v7548
        %7581 = vst.msk [vmem:[%s217 + $0x70] sm:$0xff] %vm223, %v7549
        %7582 = vst.msk [vmem:[%s217 + $0x78] sm:$0xff] %vm223, %v7550
        %7583 = vst.msk [vmem:[%s217 + $0x80] sm:$0xff] %vm223, %v7551
        %7584 = vst.msk [vmem:[%s217 + $0x88] sm:$0xff] %vm223, %v7552
        %7585 = vst.msk [vmem:[%s217 + $0x90] sm:$0xff] %vm223, %v7553
        %7586 = vst.msk [vmem:[%s217 + $0x98] sm:$0xff] %vm223, %v7554
        %7587 = vst.msk [vmem:[%s217 + $0xa0] sm:$0xff] %vm223, %v7555
        %7588 = vst.msk [vmem:[%s217 + $0xa8] sm:$0xff] %vm223, %v7556
        %7589 = vst.msk [vmem:[%s217 + $0xb0] sm:$0xff] %vm223, %v7557
        %7590 = vst.msk [vmem:[%s217 + $0xb8] sm:$0xff] %vm223, %v7558
        %7591 = vst.msk [vmem:[%s217 + $0xc0] sm:$0xff] %vm223, %v7559
        %7592 = vst.msk [vmem:[%s217 + $0xc8] sm:$0xff] %vm223, %v7560
        %7593 = vst.msk [vmem:[%s217 + $0xd0] sm:$0xff] %vm223, %v7561
        %7594 = vst.msk [vmem:[%s217 + $0xd8] sm:$0xff] %vm223, %v7562
        %7595 = vst.msk [vmem:[%s217 + $0xe0] sm:$0xff] %vm223, %v7563
        %7596 = vst.msk [vmem:[%s217 + $0xe8] sm:$0xff] %vm223, %v7564
        %7597 = vst.msk [vmem:[%s217 + $0xf0] sm:$0xff] %vm223, %v7565
        %7598 = vst.msk [vmem:[%s217 + $0xf8] sm:$0xff] %vm223, %v7566
        %s7599 = sand.u32 %s137, 1
        %s7600 = scalar_lea.sflag [#allocation4], %s7599
        %s7601 = sand.u32 %s137, 1
        %s7602 = smul.addr %s7601, 256
        %s7603 = scalar_lea.vmem [#allocation3], %s7602
        // Predicated region
        $region41: #{residual_block_no_bn.1} parent=39 // pred_check
          %p7604 = pneg %p147
        $region42: #{residual_block_no_bn.1} parent=39 // pred_check_branch
          %7606 = sbr.rel (%p7604) target = $region44
        $region43: #{residual_block_no_bn.1} parent=39 // pred_region
          %s7608 = ssub.s32 4096, 4096
          %7609 = vsyncadd %s7600, %s7608
          %s7610 = smul.addr %s19, 32
          %s7611 = smul.addr %s7610, 128
          %s7612 = scalar_lea.hbm %s5, %s7611
          %s7613 = sshll.u32 %s7603, 4
          %s7614 = int_to_ptr.vmem [resolvable:$true] %s7613
          %7619 = dma.vmem_to_hbm [thread:$0]  %s7614, 4096, %s7612, %s7600, 128, 128, 8
        $region44: #{residual_block_no_bn.1} parent=39 // pred_fallthru
          _
      $region40: #{residual_block_no_bn.1} parent=5 // pred_fallthru
        _
      %p7620 = scmp.le.s32.totalorder 2, %s14
      // Predicated region
      $region45: #{residual_block_no_bn.1} parent=5 // pred_check
        %p7621 = pneg %p7620
      $region46: #{residual_block_no_bn.1} parent=5 // pred_check_branch
        %7623 = sbr.rel (%p7621) target = $region48
      $region47: #{residual_block_no_bn.1} parent=5 // pred_region
        %s7624 = ssub.s32 %s14, 2
        // Predicated region
        $region49: #{residual_block_no_bn.1} parent=47 // pred_check
          %p7625 = pneg %p153
        $region50: #{residual_block_no_bn.1} parent=47 // pred_check_branch
          %7627 = sbr.rel (%p7625) target = $region52
        $region51: #{residual_block_no_bn.1} parent=47 // pred_region
          %s7628 = sand.u32 %s138, 1
          %s7629 = scalar_lea.sflag [#allocation4], %s7628
          %s7630 = sand.u32 %s138, 1
          %s7631 = smul.addr %s7630, 256
          %s7632 = scalar_lea.vmem [#allocation3], %s7631
          %7633 = dma.done %s7629, 4096
        $region52: #{residual_block_no_bn.1} parent=47 // pred_fallthru
          _
      $region48: #{residual_block_no_bn.1} parent=5 // pred_fallthru
        _
    $region6: #{residual_block_no_bn.1} parent=1 // loop_footer
      %s18 = sadd.s32 1, %s14
    $region7: #{residual_block_no_bn.1} parent=1 // loop_footer_branch
      %13 = sbr.rel target = $region3
    $region8: #{residual_block_no_bn.1} parent=1 // loop_exit
      _
    %7634 = vsyncpa [#allocation4], 1
    %s7635 = scalar_lea.sflag [#allocation4], 1
    %7636 = vsyncpa %s7635, 1

</llo_original>
